<compile_context>
chip_gen: v7x
topology: tpu7x:2x2x1
jax: 0.10.0
libtpu: 0.0.40
codegen_flags: <defaults>
</compile_context>

<pallas_src>
import math

import numpy as np
import jax
import jax.numpy as jnp
from jax.experimental import pallas as pl
from jax.experimental.pallas import tpu as pltpu


# ---------------------------------------------------------------------------
# Static conv stack definition: (kh, kw, stride, cout)
# ---------------------------------------------------------------------------
_CONV_DEFS = [
    (8, 8, 4, 32),
    (8, 8, 4, 32),
    (4, 4, 2, 64),
    (3, 3, 1, 64),
]


# ---------------------------------------------------------------------------
# Parameters (deterministic Kaiming-uniform, like initialize_weights_he)
# ---------------------------------------------------------------------------
def init_dqn_base_params(key, num_channels):
    cin = num_channels
    ws, bs = [], []
    for (kh, kw, _, cout) in _CONV_DEFS:
        key, sub = jax.random.split(key)
        fan_in = cin * kh * kw
        bound = math.sqrt(6.0 / fan_in)              # kaiming_uniform_, a=0
        w_hwio = jax.random.uniform(sub, (kh, kw, cin, cout),
                                    jnp.float32, -bound, bound)
        ws.append(w_hwio)
        bs.append(jnp.zeros((cout,), jnp.float32))   # constant_(bias, 0)
        cin = cout
    return dict(
        w1=ws[0].reshape(8 * 8 * num_channels, 32),  # (256, 32)
        b1=bs[0].reshape(1, 32),
        w2=ws[1].reshape(8 * 8 * 32, 32),            # (2048, 32)
        b2=bs[1].reshape(1, 32),
        w3=ws[2].reshape(4 * 4, 32, 64),             # per-offset blocks (16, 32, 64)
        b3=bs[2].reshape(1, 64),
        w4=ws[3].reshape(3 * 3, 64, 64),             # per-offset blocks (9, 64, 64)
        b4=bs[3].reshape(1, 64),
    )


# 0/1 row-selection matrices for conv3 (k=4, s=2 on the 8x8x32 conv2 output):
# G3[j, r, p] = 1  iff  input row p feeds output position r at kernel offset j.
def _build_conv3_gather():
    g = np.zeros((16, 9, 64), np.float32)
    for i in range(4):
        for j in range(4):
            for oh in range(3):
                for ow in range(3):
                    g[i * 4 + j, oh * 3 + ow, (2 * oh + i) * 8 + (2 * ow + j)] = 1.0
    return g


_G3 = _build_conv3_gather()


# ---------------------------------------------------------------------------
# Wrapper-side im2col (NHWC -> (N, OH*OW, KH*KW*C)); plain XLA glue, fused by jit
# ---------------------------------------------------------------------------
def _im2col(x, kh, kw, stride):
    n, h, w, c = x.shape
    oh = (h - kh) // stride + 1
    ow = (w - kw) // stride + 1
    cols = []
    for i in range(kh):
        for j in range(kw):
            cols.append(jax.lax.slice(
                x,
                (0, i, j, 0),
                (n, i + stride * (oh - 1) + 1, j + stride * (ow - 1) + 1, c),
                (1, stride, stride, 1)))
    cols = jnp.stack(cols, axis=3)                   # (n, oh, ow, kh*kw, c)
    return cols.reshape(n, oh * ow, kh * kw * c), oh, ow


# ---------------------------------------------------------------------------
# Pallas kernels
# ---------------------------------------------------------------------------
def _conv1_kernel(p_ref, w_ref, b_ref, o_ref):
    # (M1, 256) bf16 @ (256, 32) bf16 -> f32, bias + ReLU, store bf16
    acc = jnp.dot(p_ref[0], w_ref[...], preferred_element_type=jnp.float32)
    acc = jnp.maximum(acc + b_ref[...], 0.0)
    o_ref[0] = acc.astype(o_ref.dtype)


def _tail_kernel(p2_ref, w2_ref, b2_ref, g3_ref, w3_ref, b3_ref,
                 w4_ref, b4_ref, o_ref):
    # ---- conv2 ----  (64, 2048) bf16 @ (2048, 32) bf16 -> (64, 32) f32
    h2 = jnp.dot(p2_ref[0], w2_ref[...], preferred_element_type=jnp.float32)
    h2 = jnp.maximum(h2 + b2_ref[...], 0.0)

    # ---- conv3 ----  patches3 @ W3 == sum_j (G3_j @ h2) @ W3_j  (pure matmuls)
    h3 = jnp.zeros((9, 64), jnp.float32)
    for j in range(16):
        sel = jnp.dot(g3_ref[j], h2, preferred_element_type=jnp.float32)        # (9, 32)
        h3 = h3 + jnp.dot(sel, w3_ref[j], preferred_element_type=jnp.float32)   # (9, 64)
    h3 = jnp.maximum(h3 + b3_ref[...], 0.0)

    # ---- conv4 ----  3x3 kernel covers the whole 3x3 input: sum over 9 taps
    h4 = jnp.zeros((1, 64), jnp.float32)
    for j in range(9):
        h4 = h4 + jnp.dot(h3[j:j + 1, :], w4_ref[j],
                          preferred_element_type=jnp.float32)
    h4 = jnp.maximum(h4 + b4_ref[...], 0.0)
    o_ref[0] = h4.astype(o_ref.dtype)


# ---------------------------------------------------------------------------
# DQNBase.forward
# ---------------------------------------------------------------------------
def dqn_base_forward(states, params):
    """states: (N, H, W, C) float32 NHWC (as PyTorch receives before permute)."""
    n = states.shape[0]
    x = states.astype(jnp.bfloat16)

    # ----- conv1: im2col in wrapper, matmul+bias+ReLU in Pallas -----------
    p1, oh1, ow1 = _im2col(x, 8, 8, 4)                 # (N, 1296, 256) bf16
    m1, k1 = p1.shape[1], p1.shape[2]
    w1 = params["w1"].astype(jnp.bfloat16)
    h1 = pl.pallas_call(
        _conv1_kernel,
        out_shape=jax.ShapeDtypeStruct((n, m1, 32), jnp.bfloat16),
        grid=(n,),
        in_specs=[
            pl.BlockSpec((1, m1, k1), lambda b: (b, 0, 0)),
            pl.BlockSpec((k1, 32), lambda b: (0, 0)),
            pl.BlockSpec((1, 32), lambda b: (0, 0)),
        ],
        out_specs=pl.BlockSpec((1, m1, 32), lambda b: (b, 0, 0)),
        compiler_params=pltpu.CompilerParams(dimension_semantics=("parallel",)),
    )(p1, w1, params["b1"])

    # ----- conv2 + conv3 + conv4 fused in one Pallas call ------------------
    h1 = h1.reshape(n, oh1, ow1, 32)
    p2, _, _ = _im2col(h1, 8, 8, 4)                    # (N, 64, 2048) bf16
    m2, k2 = p2.shape[1], p2.shape[2]
    w2 = params["w2"].astype(jnp.bfloat16)
    g3 = jnp.asarray(_G3)
    out = pl.pallas_call(
        _tail_kernel,
        out_shape=jax.ShapeDtypeStruct((n, 1, 64), jnp.float32),
        grid=(n,),
        in_specs=[
            pl.BlockSpec((1, m2, k2), lambda b: (b, 0, 0)),
            pl.BlockSpec((k2, 32), lambda b: (0, 0)),
            pl.BlockSpec((1, 32), lambda b: (0, 0)),
            pl.BlockSpec((16, 9, 64), lambda b: (0, 0, 0)),
            pl.BlockSpec((16, 32, 64), lambda b: (0, 0, 0)),
            pl.BlockSpec((1, 64), lambda b: (0, 0)),
            pl.BlockSpec((9, 64, 64), lambda b: (0, 0, 0)),
            pl.BlockSpec((1, 64), lambda b: (0, 0)),
        ],
        out_specs=pl.BlockSpec((1, 1, 64), lambda b: (b, 0, 0)),
        compiler_params=pltpu.CompilerParams(dimension_semantics=("parallel",)),
    )(p2, w2, params["b2"], g3, params["w3"], params["b3"],
      params["w4"], params["b4"])

    # Flatten(): conv4 output is (N, 64, 1, 1) in NCHW -> (N, 64).
    return out.reshape(n, 64)


if __name__ == "__main__":
    # 148 is the smallest spatial size the (8/4, 8/4, 4/2, 3/1) stack accepts.
    N, H, W, C = 2, 148, 148, 4

    key = jax.random.PRNGKey(0)
    k_params, k_x = jax.random.split(key)
    params = init_dqn_base_params(k_params, num_channels=C)
    states = jax.random.uniform(k_x, (N, H, W, C), jnp.float32)

    fwd = jax.jit(dqn_base_forward)
    out = jax.block_until_ready(fwd(states, params))

    assert out.shape == (N, 64), out.shape   # 64 channels * 1 * 1 spatial
    assert out.dtype == jnp.float32
    print("KERNEL_OK")
</pallas_src>

<mosaic_0001>
module attributes {stable_mosaic.version = 11 : i64} {
  func.func @_conv1_kernel(%arg0: i32, %arg1: memref<1x1296x256xbf16, #tpu.memory_space<vmem>>, %arg2: memref<256x32xbf16, #tpu.memory_space<vmem>>, %arg3: memref<1x32xf32, #tpu.memory_space<vmem>>, %arg4: memref<1x1296x32xbf16, #tpu.memory_space<vmem>>) attributes {dimension_semantics = [#tpu.dimension_semantics<parallel>], iteration_bounds = array<i64: 2>, scalar_prefetch = 0 : i64, scratch_operands = 0 : i64, tpu.core_type = #tpu.core_type<tc>, window_params = [{transform_indices = @transform_0, window_bounds = array<i64: 1, 1296, 256>}, {pipeline_mode = #tpu.pipeline_mode<synchronous>, transform_indices = @transform_1, window_bounds = array<i64: 256, 32>}, {pipeline_mode = #tpu.pipeline_mode<synchronous>, transform_indices = @transform_2, window_bounds = array<i64: 1, 32>}, {transform_indices = @transform_3, window_bounds = array<i64: 1, 1296, 32>}]} {
    %c0 = arith.constant 0 : index
    %c0_0 = arith.constant 0 : index
    %c0_1 = arith.constant 0 : index
    %0 = vector.load %arg1[%c0, %c0_0, %c0_1] : memref<1x1296x256xbf16, #tpu.memory_space<vmem>>, vector<1x1296x256xbf16>
    %1 = vector.shape_cast %0 : vector<1x1296x256xbf16> to vector<1296x256xbf16>
    %c0_2 = arith.constant 0 : index
    %c0_3 = arith.constant 0 : index
    %2 = vector.load %arg2[%c0_2, %c0_3] : memref<256x32xbf16, #tpu.memory_space<vmem>>, vector<256x32xbf16>
    %cst = arith.constant dense<0.000000e+00> : vector<1296x32xf32>
    %3 = tpu.matmul %1, %2, %cst {dimension_numbers = #tpu.dot_dimension_numbers<[1], [0], [0], [1], [0, 0, 1, 1], [], []>} : vector<1296x256xbf16>, vector<256x32xbf16>, vector<1296x32xf32> -> vector<1296x32xf32>
    %c0_4 = arith.constant 0 : index
    %c0_5 = arith.constant 0 : index
    %4 = vector.load %arg3[%c0_4, %c0_5] : memref<1x32xf32, #tpu.memory_space<vmem>>, vector<1x32xf32>
    %5 = vector.broadcast %4 : vector<1x32xf32> to vector<1296x32xf32>
    %6 = arith.addf %3, %5 : vector<1296x32xf32>
    %cst_6 = arith.constant 0.000000e+00 : f32
    %7 = vector.broadcast %cst_6 : f32 to vector<1296x32xf32>
    %8 = arith.maximumf %6, %7 : vector<1296x32xf32>
    %9 = arith.truncf %8 : vector<1296x32xf32> to vector<1296x32xbf16>
    %c0_7 = arith.constant 0 : index
    %c0_8 = arith.constant 0 : index
    %c0_9 = arith.constant 0 : index
    %10 = vector.load %arg4[%c0_7, %c0_8, %c0_9] : memref<1x1296x32xbf16, #tpu.memory_space<vmem>>, vector<1x1296x32xbf16>
    %11 = vector.shape_cast %10 : vector<1x1296x32xbf16> to vector<1296x32xbf16>
    %12 = vector.shape_cast %9 : vector<1296x32xbf16> to vector<1x1296x32xbf16>
    tpu.vector_store %arg4[%c0_7, %c0_8, %c0_9], %12 {strides = array<i32>} : memref<1x1296x32xbf16, #tpu.memory_space<vmem>>, vector<1x1296x32xbf16>,
    return
  }
  func.func @transform_0(%arg0: i32) -> (i32, i32, i32) {
    %c0_i32 = arith.constant 0 : i32
    %c0_i32_0 = arith.constant 0 : i32
    %c0_i32_1 = arith.constant 0 : i32
    return %arg0, %c0_i32, %c0_i32_0 : i32, i32, i32
  }
  func.func @transform_1(%arg0: i32) -> (i32, i32) {
    %c0_i32 = arith.constant 0 : i32
    %c0_i32_0 = arith.constant 0 : i32
    %c0_i32_1 = arith.constant 0 : i32
    return %c0_i32, %c0_i32_0 : i32, i32
  }
  func.func @transform_2(%arg0: i32) -> (i32, i32) {
    %c0_i32 = arith.constant 0 : i32
    %c0_i32_0 = arith.constant 0 : i32
    %c0_i32_1 = arith.constant 0 : i32
    return %c0_i32, %c0_i32_0 : i32, i32
  }
  func.func @transform_3(%arg0: i32) -> (i32, i32, i32) {
    %c0_i32 = arith.constant 0 : i32
    %c0_i32_0 = arith.constant 0 : i32
    %c0_i32_1 = arith.constant 0 : i32
    return %arg0, %c0_i32, %c0_i32_0 : i32, i32, i32
  }
}

module attributes {stable_mosaic.version = 11 : i64} {
  func.func @_tail_kernel(%arg0: i32, %arg1: memref<1x64x2048xbf16, #tpu.memory_space<vmem>>, %arg2: memref<2048x32xbf16, #tpu.memory_space<vmem>>, %arg3: memref<1x32xf32, #tpu.memory_space<vmem>>, %arg4: memref<16x9x64xf32, #tpu.memory_space<vmem>>, %arg5: memref<16x32x64xf32, #tpu.memory_space<vmem>>, %arg6: memref<1x64xf32, #tpu.memory_space<vmem>>, %arg7: memref<9x64x64xf32, #tpu.memory_space<vmem>>, %arg8: memref<1x64xf32, #tpu.memory_space<vmem>>, %arg9: memref<1x1x64xf32, #tpu.memory_space<vmem>>) attributes {dimension_semantics = [#tpu.dimension_semantics<parallel>], iteration_bounds = array<i64: 2>, scalar_prefetch = 0 : i64, scratch_operands = 0 : i64, tpu.core_type = #tpu.core_type<tc>, window_params = [{transform_indices = @transform_0, window_bounds = array<i64: 1, 64, 2048>}, {pipeline_mode = #tpu.pipeline_mode<synchronous>, transform_indices = @transform_1, window_bounds = array<i64: 2048, 32>}, {pipeline_mode = #tpu.pipeline_mode<synchronous>, transform_indices = @transform_2, window_bounds = array<i64: 1, 32>}, {pipeline_mode = #tpu.pipeline_mode<synchronous>, transform_indices = @transform_3, window_bounds = array<i64: 16, 9, 64>}, {pipeline_mode = #tpu.pipeline_mode<synchronous>, transform_indices = @transform_4, window_bounds = array<i64: 16, 32, 64>}, {pipeline_mode = #tpu.pipeline_mode<synchronous>, transform_indices = @transform_5, window_bounds = array<i64: 1, 64>}, {pipeline_mode = #tpu.pipeline_mode<synchronous>, transform_indices = @transform_6, window_bounds = array<i64: 9, 64, 64>}, {pipeline_mode = #tpu.pipeline_mode<synchronous>, transform_indices = @transform_7, window_bounds = array<i64: 1, 64>}, {transform_indices = @transform_8, window_bounds = array<i64: 1, 1, 64>}]} {
    %c0 = arith.constant 0 : index
    %c0_0 = arith.constant 0 : index
    %c0_1 = arith.constant 0 : index
    %0 = vector.load %arg1[%c0, %c0_0, %c0_1] : memref<1x64x2048xbf16, #tpu.memory_space<vmem>>, vector<1x64x2048xbf16>
    %1 = vector.shape_cast %0 : vector<1x64x2048xbf16> to vector<64x2048xbf16>
    %c0_2 = arith.constant 0 : index
    %c0_3 = arith.constant 0 : index
    %2 = vector.load %arg2[%c0_2, %c0_3] : memref<2048x32xbf16, #tpu.memory_space<vmem>>, vector<2048x32xbf16>
    %cst = arith.constant dense<0.000000e+00> : vector<64x32xf32>
    %3 = tpu.matmul %1, %2, %cst {dimension_numbers = #tpu.dot_dimension_numbers<[1], [0], [0], [1], [0, 0, 1, 1], [], []>} : vector<64x2048xbf16>, vector<2048x32xbf16>, vector<64x32xf32> -> vector<64x32xf32>
    %c0_4 = arith.constant 0 : index
    %c0_5 = arith.constant 0 : index
    %4 = vector.load %arg3[%c0_4, %c0_5] : memref<1x32xf32, #tpu.memory_space<vmem>>, vector<1x32xf32>
    %5 = vector.broadcast %4 : vector<1x32xf32> to vector<64x32xf32>
    %6 = arith.addf %3, %5 : vector<64x32xf32>
    %cst_6 = arith.constant 0.000000e+00 : f32
    %7 = vector.broadcast %cst_6 : f32 to vector<64x32xf32>
    %8 = arith.maximumf %6, %7 : vector<64x32xf32>
    %cst_7 = arith.constant 0.000000e+00 : f32
    %9 = vector.broadcast %cst_7 : f32 to vector<9x64xf32>
    %c0_8 = arith.constant 0 : index
    %c0_9 = arith.constant 0 : index
    %c0_10 = arith.constant 0 : index
    %10 = vector.load %arg4[%c0_8, %c0_9, %c0_10] : memref<16x9x64xf32, #tpu.memory_space<vmem>>, vector<1x9x64xf32>
    %11 = vector.shape_cast %10 : vector<1x9x64xf32> to vector<9x64xf32>
    %cst_11 = arith.constant dense<0.000000e+00> : vector<9x32xf32>
    %12 = tpu.matmul %11, %8, %cst_11 {dimension_numbers = #tpu.dot_dimension_numbers<[1], [0], [0], [1], [0, 0, 1, 1], [], []>} : vector<9x64xf32>, vector<64x32xf32>, vector<9x32xf32> -> vector<9x32xf32>
    %c0_12 = arith.constant 0 : index
    %c0_13 = arith.constant 0 : index
    %c0_14 = arith.constant 0 : index
    %13 = vector.load %arg5[%c0_12, %c0_13, %c0_14] : memref<16x32x64xf32, #tpu.memory_space<vmem>>, vector<1x32x64xf32>
    %14 = vector.shape_cast %13 : vector<1x32x64xf32> to vector<32x64xf32>
    %cst_15 = arith.constant dense<0.000000e+00> : vector<9x64xf32>
    %15 = tpu.matmul %12, %14, %cst_15 {dimension_numbers = #tpu.dot_dimension_numbers<[1], [0], [0], [1], [0, 0, 1, 1], [], []>} : vector<9x32xf32>, vector<32x64xf32>, vector<9x64xf32> -> vector<9x64xf32>
    %16 = arith.addf %9, %15 : vector<9x64xf32>
    %c1 = arith.constant 1 : index
    %c0_16 = arith.constant 0 : index
    %c0_17 = arith.constant 0 : index
    %17 = vector.load %arg4[%c1, %c0_16, %c0_17] : memref<16x9x64xf32, #tpu.memory_space<vmem>>, vector<1x9x64xf32>
    %18 = vector.shape_cast %17 : vector<1x9x64xf32> to vector<9x64xf32>
    %cst_18 = arith.constant dense<0.000000e+00> : vector<9x32xf32>
    %19 = tpu.matmul %18, %8, %cst_18 {dimension_numbers = #tpu.dot_dimension_numbers<[1], [0], [0], [1], [0, 0, 1, 1], [], []>} : vector<9x64xf32>, vector<64x32xf32>, vector<9x32xf32> -> vector<9x32xf32>
    %c1_19 = arith.constant 1 : index
    %c0_20 = arith.constant 0 : index
    %c0_21 = arith.constant 0 : index
    %20 = vector.load %arg5[%c1_19, %c0_20, %c0_21] : memref<16x32x64xf32, #tpu.memory_space<vmem>>, vector<1x32x64xf32>
    %21 = vector.shape_cast %20 : vector<1x32x64xf32> to vector<32x64xf32>
    %cst_22 = arith.constant dense<0.000000e+00> : vector<9x64xf32>
    %22 = tpu.matmul %19, %21, %cst_22 {dimension_numbers = #tpu.dot_dimension_numbers<[1], [0], [0], [1], [0, 0, 1, 1], [], []>} : vector<9x32xf32>, vector<32x64xf32>, vector<9x64xf32> -> vector<9x64xf32>
    %23 = arith.addf %16, %22 : vector<9x64xf32>
    %c2 = arith.constant 2 : index
    %c0_23 = arith.constant 0 : index
    %c0_24 = arith.constant 0 : index
    %24 = vector.load %arg4[%c2, %c0_23, %c0_24] : memref<16x9x64xf32, #tpu.memory_space<vmem>>, vector<1x9x64xf32>
    %25 = vector.shape_cast %24 : vector<1x9x64xf32> to vector<9x64xf32>
    %cst_25 = arith.constant dense<0.000000e+00> : vector<9x32xf32>
    %26 = tpu.matmul %25, %8, %cst_25 {dimension_numbers = #tpu.dot_dimension_numbers<[1], [0], [0], [1], [0, 0, 1, 1], [], []>} : vector<9x64xf32>, vector<64x32xf32>, vector<9x32xf32> -> vector<9x32xf32>
    %c2_26 = arith.constant 2 : index
    %c0_27 = arith.constant 0 : index
    %c0_28 = arith.constant 0 : index
    %27 = vector.load %arg5[%c2_26, %c0_27, %c0_28] : memref<16x32x64xf32, #tpu.memory_space<vmem>>, vector<1x32x64xf32>
    %28 = vector.shape_cast %27 : vector<1x32x64xf32> to vector<32x64xf32>
    %cst_29 = arith.constant dense<0.000000e+00> : vector<9x64xf32>
    %29 = tpu.matmul %26, %28, %cst_29 {dimension_numbers = #tpu.dot_dimension_numbers<[1], [0], [0], [1], [0, 0, 1, 1], [], []>} : vector<9x32xf32>, vector<32x64xf32>, vector<9x64xf32> -> vector<9x64xf32>
    %30 = arith.addf %23, %29 : vector<9x64xf32>
    %c3 = arith.constant 3 : index
    %c0_30 = arith.constant 0 : index
    %c0_31 = arith.constant 0 : index
    %31 = vector.load %arg4[%c3, %c0_30, %c0_31] : memref<16x9x64xf32, #tpu.memory_space<vmem>>, vector<1x9x64xf32>
    %32 = vector.shape_cast %31 : vector<1x9x64xf32> to vector<9x64xf32>
    %cst_32 = arith.constant dense<0.000000e+00> : vector<9x32xf32>
    %33 = tpu.matmul %32, %8, %cst_32 {dimension_numbers = #tpu.dot_dimension_numbers<[1], [0], [0], [1], [0, 0, 1, 1], [], []>} : vector<9x64xf32>, vector<64x32xf32>, vector<9x32xf32> -> vector<9x32xf32>
    %c3_33 = arith.constant 3 : index
    %c0_34 = arith.constant 0 : index
    %c0_35 = arith.constant 0 : index
    %34 = vector.load %arg5[%c3_33, %c0_34, %c0_35] : memref<16x32x64xf32, #tpu.memory_space<vmem>>, vector<1x32x64xf32>
    %35 = vector.shape_cast %34 : vector<1x32x64xf32> to vector<32x64xf32>
    %cst_36 = arith.constant dense<0.000000e+00> : vector<9x64xf32>
    %36 = tpu.matmul %33, %35, %cst_36 {dimension_numbers = #tpu.dot_dimension_numbers<[1], [0], [0], [1], [0, 0, 1, 1], [], []>} : vector<9x32xf32>, vector<32x64xf32>, vector<9x64xf32> -> vector<9x64xf32>
    %37 = arith.addf %30, %36 : vector<9x64xf32>
    %c4 = arith.constant 4 : index
    %c0_37 = arith.constant 0 : index
    %c0_38 = arith.constant 0 : index
    %38 = vector.load %arg4[%c4, %c0_37, %c0_38] : memref<16x9x64xf32, #tpu.memory_space<vmem>>, vector<1x9x64xf32>
    %39 = vector.shape_cast %38 : vector<1x9x64xf32> to vector<9x64xf32>
    %cst_39 = arith.constant dense<0.000000e+00> : vector<9x32xf32>
    %40 = tpu.matmul %39, %8, %cst_39 {dimension_numbers = #tpu.dot_dimension_numbers<[1], [0], [0], [1], [0, 0, 1, 1], [], []>} : vector<9x64xf32>, vector<64x32xf32>, vector<9x32xf32> -> vector<9x32xf32>
    %c4_40 = arith.constant 4 : index
    %c0_41 = arith.constant 0 : index
    %c0_42 = arith.constant 0 : index
    %41 = vector.load %arg5[%c4_40, %c0_41, %c0_42] : memref<16x32x64xf32, #tpu.memory_space<vmem>>, vector<1x32x64xf32>
    %42 = vector.shape_cast %41 : vector<1x32x64xf32> to vector<32x64xf32>
    %cst_43 = arith.constant dense<0.000000e+00> : vector<9x64xf32>
    %43 = tpu.matmul %40, %42, %cst_43 {dimension_numbers = #tpu.dot_dimension_numbers<[1], [0], [0], [1], [0, 0, 1, 1], [], []>} : vector<9x32xf32>, vector<32x64xf32>, vector<9x64xf32> -> vector<9x64xf32>
    %44 = arith.addf %37, %43 : vector<9x64xf32>
    %c5 = arith.constant 5 : index
    %c0_44 = arith.constant 0 : index
    %c0_45 = arith.constant 0 : index
    %45 = vector.load %arg4[%c5, %c0_44, %c0_45] : memref<16x9x64xf32, #tpu.memory_space<vmem>>, vector<1x9x64xf32>
    %46 = vector.shape_cast %45 : vector<1x9x64xf32> to vector<9x64xf32>
    %cst_46 = arith.constant dense<0.000000e+00> : vector<9x32xf32>
    %47 = tpu.matmul %46, %8, %cst_46 {dimension_numbers = #tpu.dot_dimension_numbers<[1], [0], [0], [1], [0, 0, 1, 1], [], []>} : vector<9x64xf32>, vector<64x32xf32>, vector<9x32xf32> -> vector<9x32xf32>
    %c5_47 = arith.constant 5 : index
    %c0_48 = arith.constant 0 : index
    %c0_49 = arith.constant 0 : index
    %48 = vector.load %arg5[%c5_47, %c0_48, %c0_49] : memref<16x32x64xf32, #tpu.memory_space<vmem>>, vector<1x32x64xf32>
    %49 = vector.shape_cast %48 : vector<1x32x64xf32> to vector<32x64xf32>
    %cst_50 = arith.constant dense<0.000000e+00> : vector<9x64xf32>
    %50 = tpu.matmul %47, %49, %cst_50 {dimension_numbers = #tpu.dot_dimension_numbers<[1], [0], [0], [1], [0, 0, 1, 1], [], []>} : vector<9x32xf32>, vector<32x64xf32>, vector<9x64xf32> -> vector<9x64xf32>
    %51 = arith.addf %44, %50 : vector<9x64xf32>
    %c6 = arith.constant 6 : index
    %c0_51 = arith.constant 0 : index
    %c0_52 = arith.constant 0 : index
    %52 = vector.load %arg4[%c6, %c0_51, %c0_52] : memref<16x9x64xf32, #tpu.memory_space<vmem>>, vector<1x9x64xf32>
    %53 = vector.shape_cast %52 : vector<1x9x64xf32> to vector<9x64xf32>
    %cst_53 = arith.constant dense<0.000000e+00> : vector<9x32xf32>
    %54 = tpu.matmul %53, %8, %cst_53 {dimension_numbers = #tpu.dot_dimension_numbers<[1], [0], [0], [1], [0, 0, 1, 1], [], []>} : vector<9x64xf32>, vector<64x32xf32>, vector<9x32xf32> -> vector<9x32xf32>
    %c6_54 = arith.constant 6 : index
    %c0_55 = arith.constant 0 : index
    %c0_56 = arith.constant 0 : index
    %55 = vector.load %arg5[%c6_54, %c0_55, %c0_56] : memref<16x32x64xf32, #tpu.memory_space<vmem>>, vector<1x32x64xf32>
    %56 = vector.shape_cast %55 : vector<1x32x64xf32> to vector<32x64xf32>
    %cst_57 = arith.constant dense<0.000000e+00> : vector<9x64xf32>
    %57 = tpu.matmul %54, %56, %cst_57 {dimension_numbers = #tpu.dot_dimension_numbers<[1], [0], [0], [1], [0, 0, 1, 1], [], []>} : vector<9x32xf32>, vector<32x64xf32>, vector<9x64xf32> -> vector<9x64xf32>
    %58 = arith.addf %51, %57 : vector<9x64xf32>
    %c7 = arith.constant 7 : index
    %c0_58 = arith.constant 0 : index
    %c0_59 = arith.constant 0 : index
    %59 = vector.load %arg4[%c7, %c0_58, %c0_59] : memref<16x9x64xf32, #tpu.memory_space<vmem>>, vector<1x9x64xf32>
    %60 = vector.shape_cast %59 : vector<1x9x64xf32> to vector<9x64xf32>
    %cst_60 = arith.constant dense<0.000000e+00> : vector<9x32xf32>
    %61 = tpu.matmul %60, %8, %cst_60 {dimension_numbers = #tpu.dot_dimension_numbers<[1], [0], [0], [1], [0, 0, 1, 1], [], []>} : vector<9x64xf32>, vector<64x32xf32>, vector<9x32xf32> -> vector<9x32xf32>
    %c7_61 = arith.constant 7 : index
    %c0_62 = arith.constant 0 : index
    %c0_63 = arith.constant 0 : index
    %62 = vector.load %arg5[%c7_61, %c0_62, %c0_63] : memref<16x32x64xf32, #tpu.memory_space<vmem>>, vector<1x32x64xf32>
    %63 = vector.shape_cast %62 : vector<1x32x64xf32> to vector<32x64xf32>
    %cst_64 = arith.constant dense<0.000000e+00> : vector<9x64xf32>
    %64 = tpu.matmul %61, %63, %cst_64 {dimension_numbers = #tpu.dot_dimension_numbers<[1], [0], [0], [1], [0, 0, 1, 1], [], []>} : vector<9x32xf32>, vector<32x64xf32>, vector<9x64xf32> -> vector<9x64xf32>
    %65 = arith.addf %58, %64 : vector<9x64xf32>
    %c8 = arith.constant 8 : index
    %c0_65 = arith.constant 0 : index
    %c0_66 = arith.constant 0 : index
    %66 = vector.load %arg4[%c8, %c0_65, %c0_66] : memref<16x9x64xf32, #tpu.memory_space<vmem>>, vector<1x9x64xf32>
    %67 = vector.shape_cast %66 : vector<1x9x64xf32> to vector<9x64xf32>
    %cst_67 = arith.constant dense<0.000000e+00> : vector<9x32xf32>
    %68 = tpu.matmul %67, %8, %cst_67 {dimension_numbers = #tpu.dot_dimension_numbers<[1], [0], [0], [1], [0, 0, 1, 1], [], []>} : vector<9x64xf32>, vector<64x32xf32>, vector<9x32xf32> -> vector<9x32xf32>
    %c8_68 = arith.constant 8 : index
    %c0_69 = arith.constant 0 : index
    %c0_70 = arith.constant 0 : index
    %69 = vector.load %arg5[%c8_68, %c0_69, %c0_70] : memref<16x32x64xf32, #tpu.memory_space<vmem>>, vector<1x32x64xf32>
    %70 = vector.shape_cast %69 : vector<1x32x64xf32> to vector<32x64xf32>
    %cst_71 = arith.constant dense<0.000000e+00> : vector<9x64xf32>
    %71 = tpu.matmul %68, %70, %cst_71 {dimension_numbers = #tpu.dot_dimension_numbers<[1], [0], [0], [1], [0, 0, 1, 1], [], []>} : vector<9x32xf32>, vector<32x64xf32>, vector<9x64xf32> -> vector<9x64xf32>
    %72 = arith.addf %65, %71 : vector<9x64xf32>
    %c9 = arith.constant 9 : index
    %c0_72 = arith.constant 0 : index
    %c0_73 = arith.constant 0 : index
    %73 = vector.load %arg4[%c9, %c0_72, %c0_73] : memref<16x9x64xf32, #tpu.memory_space<vmem>>, vector<1x9x64xf32>
    %74 = vector.shape_cast %73 : vector<1x9x64xf32> to vector<9x64xf32>
    %cst_74 = arith.constant dense<0.000000e+00> : vector<9x32xf32>
    %75 = tpu.matmul %74, %8, %cst_74 {dimension_numbers = #tpu.dot_dimension_numbers<[1], [0], [0], [1], [0, 0, 1, 1], [], []>} : vector<9x64xf32>, vector<64x32xf32>, vector<9x32xf32> -> vector<9x32xf32>
    %c9_75 = arith.constant 9 : index
    %c0_76 = arith.constant 0 : index
    %c0_77 = arith.constant 0 : index
    %76 = vector.load %arg5[%c9_75, %c0_76, %c0_77] : memref<16x32x64xf32, #tpu.memory_space<vmem>>, vector<1x32x64xf32>
    %77 = vector.shape_cast %76 : vector<1x32x64xf32> to vector<32x64xf32>
    %cst_78 = arith.constant dense<0.000000e+00> : vector<9x64xf32>
    %78 = tpu.matmul %75, %77, %cst_78 {dimension_numbers = #tpu.dot_dimension_numbers<[1], [0], [0], [1], [0, 0, 1, 1], [], []>} : vector<9x32xf32>, vector<32x64xf32>, vector<9x64xf32> -> vector<9x64xf32>
    %79 = arith.addf %72, %78 : vector<9x64xf32>
    %c10 = arith.constant 10 : index
    %c0_79 = arith.constant 0 : index
    %c0_80 = arith.constant 0 : index
    %80 = vector.load %arg4[%c10, %c0_79, %c0_80] : memref<16x9x64xf32, #tpu.memory_space<vmem>>, vector<1x9x64xf32>
    %81 = vector.shape_cast %80 : vector<1x9x64xf32> to vector<9x64xf32>
    %cst_81 = arith.constant dense<0.000000e+00> : vector<9x32xf32>
    %82 = tpu.matmul %81, %8, %cst_81 {dimension_numbers = #tpu.dot_dimension_numbers<[1], [0], [0], [1], [0, 0, 1, 1], [], []>} : vector<9x64xf32>, vector<64x32xf32>, vector<9x32xf32> -> vector<9x32xf32>
    %c10_82 = arith.constant 10 : index
    %c0_83 = arith.constant 0 : index
    %c0_84 = arith.constant 0 : index
    %83 = vector.load %arg5[%c10_82, %c0_83, %c0_84] : memref<16x32x64xf32, #tpu.memory_space<vmem>>, vector<1x32x64xf32>
    %84 = vector.shape_cast %83 : vector<1x32x64xf32> to vector<32x64xf32>
    %cst_85 = arith.constant dense<0.000000e+00> : vector<9x64xf32>
    %85 = tpu.matmul %82, %84, %cst_85 {dimension_numbers = #tpu.dot_dimension_numbers<[1], [0], [0], [1], [0, 0, 1, 1], [], []>} : vector<9x32xf32>, vector<32x64xf32>, vector<9x64xf32> -> vector<9x64xf32>
    %86 = arith.addf %79, %85 : vector<9x64xf32>
    %c11 = arith.constant 11 : index
    %c0_86 = arith.constant 0 : index
    %c0_87 = arith.constant 0 : index
    %87 = vector.load %arg4[%c11, %c0_86, %c0_87] : memref<16x9x64xf32, #tpu.memory_space<vmem>>, vector<1x9x64xf32>
    %88 = vector.shape_cast %87 : vector<1x9x64xf32> to vector<9x64xf32>
    %cst_88 = arith.constant dense<0.000000e+00> : vector<9x32xf32>
    %89 = tpu.matmul %88, %8, %cst_88 {dimension_numbers = #tpu.dot_dimension_numbers<[1], [0], [0], [1], [0, 0, 1, 1], [], []>} : vector<9x64xf32>, vector<64x32xf32>, vector<9x32xf32> -> vector<9x32xf32>
    %c11_89 = arith.constant 11 : index
    %c0_90 = arith.constant 0 : index
    %c0_91 = arith.constant 0 : index
    %90 = vector.load %arg5[%c11_89, %c0_90, %c0_91] : memref<16x32x64xf32, #tpu.memory_space<vmem>>, vector<1x32x64xf32>
    %91 = vector.shape_cast %90 : vector<1x32x64xf32> to vector<32x64xf32>
    %cst_92 = arith.constant dense<0.000000e+00> : vector<9x64xf32>
    %92 = tpu.matmul %89, %91, %cst_92 {dimension_numbers = #tpu.dot_dimension_numbers<[1], [0], [0], [1], [0, 0, 1, 1], [], []>} : vector<9x32xf32>, vector<32x64xf32>, vector<9x64xf32> -> vector<9x64xf32>
    %93 = arith.addf %86, %92 : vector<9x64xf32>
    %c12 = arith.constant 12 : index
    %c0_93 = arith.constant 0 : index
    %c0_94 = arith.constant 0 : index
    %94 = vector.load %arg4[%c12, %c0_93, %c0_94] : memref<16x9x64xf32, #tpu.memory_space<vmem>>, vector<1x9x64xf32>
    %95 = vector.shape_cast %94 : vector<1x9x64xf32> to vector<9x64xf32>
    %cst_95 = arith.constant dense<0.000000e+00> : vector<9x32xf32>
    %96 = tpu.matmul %95, %8, %cst_95 {dimension_numbers = #tpu.dot_dimension_numbers<[1], [0], [0], [1], [0, 0, 1, 1], [], []>} : vector<9x64xf32>, vector<64x32xf32>, vector<9x32xf32> -> vector<9x32xf32>
    %c12_96 = arith.constant 12 : index
    %c0_97 = arith.constant 0 : index
    %c0_98 = arith.constant 0 : index
    %97 = vector.load %arg5[%c12_96, %c0_97, %c0_98] : memref<16x32x64xf32, #tpu.memory_space<vmem>>, vector<1x32x64xf32>
    %98 = vector.shape_cast %97 : vector<1x32x64xf32> to vector<32x64xf32>
    %cst_99 = arith.constant dense<0.000000e+00> : vector<9x64xf32>
    %99 = tpu.matmul %96, %98, %cst_99 {dimension_numbers = #tpu.dot_dimension_numbers<[1], [0], [0], [1], [0, 0, 1, 1], [], []>} : vector<9x32xf32>, vector<32x64xf32>, vector<9x64xf32> -> vector<9x64xf32>
    %100 = arith.addf %93, %99 : vector<9x64xf32>
    %c13 = arith.constant 13 : index
    %c0_100 = arith.constant 0 : index
    %c0_101 = arith.constant 0 : index
    %101 = vector.load %arg4[%c13, %c0_100, %c0_101] : memref<16x9x64xf32, #tpu.memory_space<vmem>>, vector<1x9x64xf32>
    %102 = vector.shape_cast %101 : vector<1x9x64xf32> to vector<9x64xf32>
    %cst_102 = arith.constant dense<0.000000e+00> : vector<9x32xf32>
    %103 = tpu.matmul %102, %8, %cst_102 {dimension_numbers = #tpu.dot_dimension_numbers<[1], [0], [0], [1], [0, 0, 1, 1], [], []>} : vector<9x64xf32>, vector<64x32xf32>, vector<9x32xf32> -> vector<9x32xf32>
    %c13_103 = arith.constant 13 : index
    %c0_104 = arith.constant 0 : index
    %c0_105 = arith.constant 0 : index
    %104 = vector.load %arg5[%c13_103, %c0_104, %c0_105] : memref<16x32x64xf32, #tpu.memory_space<vmem>>, vector<1x32x64xf32>
    %105 = vector.shape_cast %104 : vector<1x32x64xf32> to vector<32x64xf32>
    %cst_106 = arith.constant dense<0.000000e+00> : vector<9x64xf32>
    %106 = tpu.matmul %103, %105, %cst_106 {dimension_numbers = #tpu.dot_dimension_numbers<[1], [0], [0], [1], [0, 0, 1, 1], [], []>} : vector<9x32xf32>, vector<32x64xf32>, vector<9x64xf32> -> vector<9x64xf32>
    %107 = arith.addf %100, %106 : vector<9x64xf32>
    %c14 = arith.constant 14 : index
    %c0_107 = arith.constant 0 : index
    %c0_108 = arith.constant 0 : index
    %108 = vector.load %arg4[%c14, %c0_107, %c0_108] : memref<16x9x64xf32, #tpu.memory_space<vmem>>, vector<1x9x64xf32>
    %109 = vector.shape_cast %108 : vector<1x9x64xf32> to vector<9x64xf32>
    %cst_109 = arith.constant dense<0.000000e+00> : vector<9x32xf32>
    %110 = tpu.matmul %109, %8, %cst_109 {dimension_numbers = #tpu.dot_dimension_numbers<[1], [0], [0], [1], [0, 0, 1, 1], [], []>} : vector<9x64xf32>, vector<64x32xf32>, vector<9x32xf32> -> vector<9x32xf32>
    %c14_110 = arith.constant 14 : index
    %c0_111 = arith.constant 0 : index
    %c0_112 = arith.constant 0 : index
    %111 = vector.load %arg5[%c14_110, %c0_111, %c0_112] : memref<16x32x64xf32, #tpu.memory_space<vmem>>, vector<1x32x64xf32>
    %112 = vector.shape_cast %111 : vector<1x32x64xf32> to vector<32x64xf32>
    %cst_113 = arith.constant dense<0.000000e+00> : vector<9x64xf32>
    %113 = tpu.matmul %110, %112, %cst_113 {dimension_numbers = #tpu.dot_dimension_numbers<[1], [0], [0], [1], [0, 0, 1, 1], [], []>} : vector<9x32xf32>, vector<32x64xf32>, vector<9x64xf32> -> vector<9x64xf32>
    %114 = arith.addf %107, %113 : vector<9x64xf32>
    %c15 = arith.constant 15 : index
    %c0_114 = arith.constant 0 : index
    %c0_115 = arith.constant 0 : index
    %115 = vector.load %arg4[%c15, %c0_114, %c0_115] : memref<16x9x64xf32, #tpu.memory_space<vmem>>, vector<1x9x64xf32>
    %116 = vector.shape_cast %115 : vector<1x9x64xf32> to vector<9x64xf32>
    %cst_116 = arith.constant dense<0.000000e+00> : vector<9x32xf32>
    %117 = tpu.matmul %116, %8, %cst_116 {dimension_numbers = #tpu.dot_dimension_numbers<[1], [0], [0], [1], [0, 0, 1, 1], [], []>} : vector<9x64xf32>, vector<64x32xf32>, vector<9x32xf32> -> vector<9x32xf32>
    %c15_117 = arith.constant 15 : index
    %c0_118 = arith.constant 0 : index
    %c0_119 = arith.constant 0 : index
    %118 = vector.load %arg5[%c15_117, %c0_118, %c0_119] : memref<16x32x64xf32, #tpu.memory_space<vmem>>, vector<1x32x64xf32>
    %119 = vector.shape_cast %118 : vector<1x32x64xf32> to vector<32x64xf32>
    %cst_120 = arith.constant dense<0.000000e+00> : vector<9x64xf32>
    %120 = tpu.matmul %117, %119, %cst_120 {dimension_numbers = #tpu.dot_dimension_numbers<[1], [0], [0], [1], [0, 0, 1, 1], [], []>} : vector<9x32xf32>, vector<32x64xf32>, vector<9x64xf32> -> vector<9x64xf32>
    %121 = arith.addf %114, %120 : vector<9x64xf32>
    %c0_121 = arith.constant 0 : index
    %c0_122 = arith.constant 0 : index
    %122 = vector.load %arg6[%c0_121, %c0_122] : memref<1x64xf32, #tpu.memory_space<vmem>>, vector<1x64xf32>
    %123 = vector.broadcast %122 : vector<1x64xf32> to vector<9x64xf32>
    %124 = arith.addf %121, %123 : vector<9x64xf32>
    %cst_123 = arith.constant 0.000000e+00 : f32
    %125 = vector.broadcast %cst_123 : f32 to vector<9x64xf32>
    %126 = arith.maximumf %124, %125 : vector<9x64xf32>
    %cst_124 = arith.constant 0.000000e+00 : f32
    %127 = vector.broadcast %cst_124 : f32 to vector<1x64xf32>
    %128 = vector.extract_strided_slice %126 {offsets = [0, 0], sizes = [1, 64], strides = [1, 1]} : vector<9x64xf32> to vector<1x64xf32>
    %c0_125 = arith.constant 0 : index
    %c0_126 = arith.constant 0 : index
    %c0_127 = arith.constant 0 : index
    %129 = vector.load %arg7[%c0_125, %c0_126, %c0_127] : memref<9x64x64xf32, #tpu.memory_space<vmem>>, vector<1x64x64xf32>
    %130 = vector.shape_cast %129 : vector<1x64x64xf32> to vector<64x64xf32>
    %cst_128 = arith.constant dense<0.000000e+00> : vector<1x64xf32>
    %131 = tpu.matmul %128, %130, %cst_128 {dimension_numbers = #tpu.dot_dimension_numbers<[1], [0], [0], [1], [0, 0, 1, 1], [], []>} : vector<1x64xf32>, vector<64x64xf32>, vector<1x64xf32> -> vector<1x64xf32>
    %132 = arith.addf %127, %131 : vector<1x64xf32>
    %133 = vector.extract_strided_slice %126 {offsets = [1, 0], sizes = [1, 64], strides = [1, 1]} : vector<9x64xf32> to vector<1x64xf32>
    %c1_129 = arith.constant 1 : index
    %c0_130 = arith.constant 0 : index
    %c0_131 = arith.constant 0 : index
    %134 = vector.load %arg7[%c1_129, %c0_130, %c0_131] : memref<9x64x64xf32, #tpu.memory_space<vmem>>, vector<1x64x64xf32>
    %135 = vector.shape_cast %134 : vector<1x64x64xf32> to vector<64x64xf32>
    %cst_132 = arith.constant dense<0.000000e+00> : vector<1x64xf32>
    %136 = tpu.matmul %133, %135, %cst_132 {dimension_numbers = #tpu.dot_dimension_numbers<[1], [0], [0], [1], [0, 0, 1, 1], [], []>} : vector<1x64xf32>, vector<64x64xf32>, vector<1x64xf32> -> vector<1x64xf32>
    %137 = arith.addf %132, %136 : vector<1x64xf32>
    %138 = vector.extract_strided_slice %126 {offsets = [2, 0], sizes = [1, 64], strides = [1, 1]} : vector<9x64xf32> to vector<1x64xf32>
    %c2_133 = arith.constant 2 : index
    %c0_134 = arith.constant 0 : index
    %c0_135 = arith.constant 0 : index
    %139 = vector.load %arg7[%c2_133, %c0_134, %c0_135] : memref<9x64x64xf32, #tpu.memory_space<vmem>>, vector<1x64x64xf32>
    %140 = vector.shape_cast %139 : vector<1x64x64xf32> to vector<64x64xf32>
    %cst_136 = arith.constant dense<0.000000e+00> : vector<1x64xf32>
    %141 = tpu.matmul %138, %140, %cst_136 {dimension_numbers = #tpu.dot_dimension_numbers<[1], [0], [0], [1], [0, 0, 1, 1], [], []>} : vector<1x64xf32>, vector<64x64xf32>, vector<1x64xf32> -> vector<1x64xf32>
    %142 = arith.addf %137, %141 : vector<1x64xf32>
    %143 = vector.extract_strided_slice %126 {offsets = [3, 0], sizes = [1, 64], strides = [1, 1]} : vector<9x64xf32> to vector<1x64xf32>
    %c3_137 = arith.constant 3 : index
    %c0_138 = arith.constant 0 : index
    %c0_139 = arith.constant 0 : index
    %144 = vector.load %arg7[%c3_137, %c0_138, %c0_139] : memref<9x64x64xf32, #tpu.memory_space<vmem>>, vector<1x64x64xf32>
    %145 = vector.shape_cast %144 : vector<1x64x64xf32> to vector<64x64xf32>
    %cst_140 = arith.constant dense<0.000000e+00> : vector<1x64xf32>
    %146 = tpu.matmul %143, %145, %cst_140 {dimension_numbers = #tpu.dot_dimension_numbers<[1], [0], [0], [1], [0, 0, 1, 1], [], []>} : vector<1x64xf32>, vector<64x64xf32>, vector<1x64xf32> -> vector<1x64xf32>
    %147 = arith.addf %142, %146 : vector<1x64xf32>
    %148 = vector.extract_strided_slice %126 {offsets = [4, 0], sizes = [1, 64], strides = [1, 1]} : vector<9x64xf32> to vector<1x64xf32>
    %c4_141 = arith.constant 4 : index
    %c0_142 = arith.constant 0 : index
    %c0_143 = arith.constant 0 : index
    %149 = vector.load %arg7[%c4_141, %c0_142, %c0_143] : memref<9x64x64xf32, #tpu.memory_space<vmem>>, vector<1x64x64xf32>
    %150 = vector.shape_cast %149 : vector<1x64x64xf32> to vector<64x64xf32>
    %cst_144 = arith.constant dense<0.000000e+00> : vector<1x64xf32>
    %151 = tpu.matmul %148, %150, %cst_144 {dimension_numbers = #tpu.dot_dimension_numbers<[1], [0], [0], [1], [0, 0, 1, 1], [], []>} : vector<1x64xf32>, vector<64x64xf32>, vector<1x64xf32> -> vector<1x64xf32>
    %152 = arith.addf %147, %151 : vector<1x64xf32>
    %153 = vector.extract_strided_slice %126 {offsets = [5, 0], sizes = [1, 64], strides = [1, 1]} : vector<9x64xf32> to vector<1x64xf32>
    %c5_145 = arith.constant 5 : index
    %c0_146 = arith.constant 0 : index
    %c0_147 = arith.constant 0 : index
    %154 = vector.load %arg7[%c5_145, %c0_146, %c0_147] : memref<9x64x64xf32, #tpu.memory_space<vmem>>, vector<1x64x64xf32>
    %155 = vector.shape_cast %154 : vector<1x64x64xf32> to vector<64x64xf32>
    %cst_148 = arith.constant dense<0.000000e+00> : vector<1x64xf32>
    %156 = tpu.matmul %153, %155, %cst_148 {dimension_numbers = #tpu.dot_dimension_numbers<[1], [0], [0], [1], [0, 0, 1, 1], [], []>} : vector<1x64xf32>, vector<64x64xf32>, vector<1x64xf32> -> vector<1x64xf32>
    %157 = arith.addf %152, %156 : vector<1x64xf32>
    %158 = vector.extract_strided_slice %126 {offsets = [6, 0], sizes = [1, 64], strides = [1, 1]} : vector<9x64xf32> to vector<1x64xf32>
    %c6_149 = arith.constant 6 : index
    %c0_150 = arith.constant 0 : index
    %c0_151 = arith.constant 0 : index
    %159 = vector.load %arg7[%c6_149, %c0_150, %c0_151] : memref<9x64x64xf32, #tpu.memory_space<vmem>>, vector<1x64x64xf32>
    %160 = vector.shape_cast %159 : vector<1x64x64xf32> to vector<64x64xf32>
    %cst_152 = arith.constant dense<0.000000e+00> : vector<1x64xf32>
    %161 = tpu.matmul %158, %160, %cst_152 {dimension_numbers = #tpu.dot_dimension_numbers<[1], [0], [0], [1], [0, 0, 1, 1], [], []>} : vector<1x64xf32>, vector<64x64xf32>, vector<1x64xf32> -> vector<1x64xf32>
    %162 = arith.addf %157, %161 : vector<1x64xf32>
    %163 = vector.extract_strided_slice %126 {offsets = [7, 0], sizes = [1, 64], strides = [1, 1]} : vector<9x64xf32> to vector<1x64xf32>
    %c7_153 = arith.constant 7 : index
    %c0_154 = arith.constant 0 : index
    %c0_155 = arith.constant 0 : index
    %164 = vector.load %arg7[%c7_153, %c0_154, %c0_155] : memref<9x64x64xf32, #tpu.memory_space<vmem>>, vector<1x64x64xf32>
    %165 = vector.shape_cast %164 : vector<1x64x64xf32> to vector<64x64xf32>
    %cst_156 = arith.constant dense<0.000000e+00> : vector<1x64xf32>
    %166 = tpu.matmul %163, %165, %cst_156 {dimension_numbers = #tpu.dot_dimension_numbers<[1], [0], [0], [1], [0, 0, 1, 1], [], []>} : vector<1x64xf32>, vector<64x64xf32>, vector<1x64xf32> -> vector<1x64xf32>
    %167 = arith.addf %162, %166 : vector<1x64xf32>
    %168 = vector.extract_strided_slice %126 {offsets = [8, 0], sizes = [1, 64], strides = [1, 1]} : vector<9x64xf32> to vector<1x64xf32>
    %c8_157 = arith.constant 8 : index
    %c0_158 = arith.constant 0 : index
    %c0_159 = arith.constant 0 : index
    %169 = vector.load %arg7[%c8_157, %c0_158, %c0_159] : memref<9x64x64xf32, #tpu.memory_space<vmem>>, vector<1x64x64xf32>
    %170 = vector.shape_cast %169 : vector<1x64x64xf32> to vector<64x64xf32>
    %cst_160 = arith.constant dense<0.000000e+00> : vector<1x64xf32>
    %171 = tpu.matmul %168, %170, %cst_160 {dimension_numbers = #tpu.dot_dimension_numbers<[1], [0], [0], [1], [0, 0, 1, 1], [], []>} : vector<1x64xf32>, vector<64x64xf32>, vector<1x64xf32> -> vector<1x64xf32>
    %172 = arith.addf %167, %171 : vector<1x64xf32>
    %c0_161 = arith.constant 0 : index
    %c0_162 = arith.constant 0 : index
    %173 = vector.load %arg8[%c0_161, %c0_162] : memref<1x64xf32, #tpu.memory_space<vmem>>, vector<1x64xf32>
    %174 = arith.addf %172, %173 : vector<1x64xf32>
    %cst_163 = arith.constant 0.000000e+00 : f32
    %175 = vector.broadcast %cst_163 : f32 to vector<1x64xf32>
    %176 = arith.maximumf %174, %175 : vector<1x64xf32>
    %c0_164 = arith.constant 0 : index
    %c0_165 = arith.constant 0 : index
    %c0_166 = arith.constant 0 : index
    %177 = vector.load %arg9[%c0_164, %c0_165, %c0_166] : memref<1x1x64xf32, #tpu.memory_space<vmem>>, vector<1x1x64xf32>
    %178 = vector.shape_cast %177 : vector<1x1x64xf32> to vector<1x64xf32>
    %179 = vector.shape_cast %176 : vector<1x64xf32> to vector<1x1x64xf32>
    tpu.vector_store %arg9[%c0_164, %c0_165, %c0_166], %179 {strides = array<i32>} : memref<1x1x64xf32, #tpu.memory_space<vmem>>, vector<1x1x64xf32>,
    return
  }
  func.func @transform_0(%arg0: i32) -> (i32, i32, i32) {
    %c0_i32 = arith.constant 0 : i32
    %c0_i32_0 = arith.constant 0 : i32
    %c0_i32_1 = arith.constant 0 : i32
    return %arg0, %c0_i32, %c0_i32_0 : i32, i32, i32
  }
  func.func @transform_1(%arg0: i32) -> (i32, i32) {
    %c0_i32 = arith.constant 0 : i32
    %c0_i32_0 = arith.constant 0 : i32
    %c0_i32_1 = arith.constant 0 : i32
    return %c0_i32, %c0_i32_0 : i32, i32
  }
  func.func @transform_2(%arg0: i32) -> (i32, i32) {
    %c0_i32 = arith.constant 0 : i32
    %c0_i32_0 = arith.constant 0 : i32
    %c0_i32_1 = arith.constant 0 : i32
    return %c0_i32, %c0_i32_0 : i32, i32
  }
  func.func @transform_3(%arg0: i32) -> (i32, i32, i32) {
    %c0_i32 = arith.constant 0 : i32
    %c0_i32_0 = arith.constant 0 : i32
    %c0_i32_1 = arith.constant 0 : i32
    %c0_i32_2 = arith.constant 0 : i32
    return %c0_i32, %c0_i32_0, %c0_i32_1 : i32, i32, i32
  }
  func.func @transform_4(%arg0: i32) -> (i32, i32, i32) {
    %c0_i32 = arith.constant 0 : i32
    %c0_i32_0 = arith.constant 0 : i32
    %c0_i32_1 = arith.constant 0 : i32
    %c0_i32_2 = arith.constant 0 : i32
    return %c0_i32, %c0_i32_0, %c0_i32_1 : i32, i32, i32
  }
  func.func @transform_5(%arg0: i32) -> (i32, i32) {
    %c0_i32 = arith.constant 0 : i32
    %c0_i32_0 = arith.constant 0 : i32
    %c0_i32_1 = arith.constant 0 : i32
    return %c0_i32, %c0_i32_0 : i32, i32
  }
  func.func @transform_6(%arg0: i32) -> (i32, i32, i32) {
    %c0_i32 = arith.constant 0 : i32
    %c0_i32_0 = arith.constant 0 : i32
    %c0_i32_1 = arith.constant 0 : i32
    %c0_i32_2 = arith.constant 0 : i32
    return %c0_i32, %c0_i32_0, %c0_i32_1 : i32, i32, i32
  }
  func.func @transform_7(%arg0: i32) -> (i32, i32) {
    %c0_i32 = arith.constant 0 : i32
    %c0_i32_0 = arith.constant 0 : i32
    %c0_i32_1 = arith.constant 0 : i32
    return %c0_i32, %c0_i32_0 : i32, i32
  }
  func.func @transform_8(%arg0: i32) -> (i32, i32, i32) {
    %c0_i32 = arith.constant 0 : i32
    %c0_i32_0 = arith.constant 0 : i32
    %c0_i32_1 = arith.constant 0 : i32
    return %arg0, %c0_i32, %c0_i32_0 : i32, i32, i32
  }
}

</mosaic_0001>

<llo_original>
// kernel: dqn_base_forward.2
$region0: #{dqn_base_forward.2}
  #allocation0 [shape = 'u32[]', space=smem, size = 0x4, offset = 0x4, fixed_abs, tag = 'smem constant byte address 0x4 - core index']
  #allocation1 [shape = 'u32[144,128]{1,0:T(1,128)}', space=vmem, size = 0x12000, scoped, tag = 'internal scratch']
  %s0 = inlined_call_operand.vmem [shape: bf16[2,1296,256], index: 0, kind: input, shape index: {}]
  %s1 = inlined_call_operand.vmem [shape: bf16[256,32], index: 1, kind: input, shape index: {}]
  %s2 = inlined_call_operand.vmem [shape: f32[1,32], index: 2, kind: input, shape index: {}]
  %s3 = inlined_call_operand.vmem [shape: bf16[2,1296,32], index: 3, kind: output, shape index: {}]
  %s4 = sld [smem:[#allocation0]]
  $region45: #{dqn_base_forward.2} parent=0
    _
  %s6 = ssub.s32 1, %s4
  %s7 = scalar_select 0, %s6, %s4
  loop: start=0, step=1, limit=4
  $region2: #{dqn_base_forward.2} parent=0 // loop_pre_header
    _
  $region3: #{dqn_base_forward.2} parent=0 // loop_header
    %s9 = sphi 0, %s13
    %p10 = scmp.ge.s32.totalorder %s9, 4
    %s19 = sphi 0, %s21
    %s22 = sphi 0, %s19
    %s23 = sphi 0, %s22
    %s39 = sphi 0, %s23
    %s43 = sphi 0, %s43
    %s45 = sphi 0, %s43
    %s46 = sphi 0, %s45
    %s60 = sphi 0, %s46
    %s64 = sphi 0, %s64
    %s66 = sphi 0, %s64
    %s67 = sphi 0, %s66
    %s81 = sphi 0, %s67
    %s87 = sphi 0, %s89
    %s90 = sphi 0, %s87
    %s91 = sphi 0, %s90
    %s107 = sphi 0, %s91
  $region4: #{dqn_base_forward.2} parent=0 // loop_header_branch
    %12 = sbr.rel (%p10) target = $region8
  $region5: #{dqn_base_forward.2} parent=0 // loop_body
    %s14 = ssub.s32 %s9, 1
    %s15 = ssub.s32 %s9, 2
    %s16 = sadd.s32 %s9, 1
    %s17 = ssub.s32 %s9, %s16
    %p18 = scmp.eq.s32.totalorder %s17, 0
    %s20 = sadd.s32 %s19, 1
    %s21 = scalar_select %p18, %s19, %s20
    %p24 = pneg %p18
    %p25 = scmp.eq.s32.totalorder %s9, 1
    %p26 = por %p24, %p25
    %p27 = scmp.ne.s32.totalorder %s19, %s22
    %p28 = scmp.eq.s32.totalorder %s9, 0
    %p29 = por %p27, %p28
    %p30 = scmp.ne.s32.totalorder %s19, %s22
    %p31 = scmp.eq.s32.totalorder %s14, 1
    %p32 = por %p30, %p31
    %p33 = scmp.ne.s32.totalorder %s22, %s23
    %p34 = scmp.eq.s32.totalorder %s14, 0
    %p35 = por %p33, %p34
    %p36 = scmp.ne.s32.totalorder %s22, %s23
    %p37 = scmp.eq.s32.totalorder %s15, 1
    %p38 = por %p36, %p37
    %p40 = scmp.ne.s32.totalorder %s23, %s39
    %p41 = scmp.eq.s32.totalorder %s15, 0
    %p42 = por %p40, %p41
    %s44 = sadd.s32 %s43, 1
    %p47 = scmp.eq.s32.totalorder %s9, 1
    %p48 = scmp.ne.s32.totalorder %s43, %s45
    %p49 = scmp.eq.s32.totalorder %s9, 0
    %p50 = por %p48, %p49
    %p51 = scmp.ne.s32.totalorder %s43, %s45
    %p52 = scmp.eq.s32.totalorder %s14, 1
    %p53 = por %p51, %p52
    %p54 = scmp.ne.s32.totalorder %s45, %s46
    %p55 = scmp.eq.s32.totalorder %s14, 0
    %p56 = por %p54, %p55
    %p57 = scmp.ne.s32.totalorder %s45, %s46
    %p58 = scmp.eq.s32.totalorder %s15, 1
    %p59 = por %p57, %p58
    %p61 = scmp.ne.s32.totalorder %s46, %s60
    %p62 = scmp.eq.s32.totalorder %s15, 0
    %p63 = por %p61, %p62
    %s65 = sadd.s32 %s64, 1
    %p68 = scmp.eq.s32.totalorder %s9, 1
    %p69 = scmp.ne.s32.totalorder %s64, %s66
    %p70 = scmp.eq.s32.totalorder %s9, 0
    %p71 = por %p69, %p70
    %p72 = scmp.ne.s32.totalorder %s64, %s66
    %p73 = scmp.eq.s32.totalorder %s14, 1
    %p74 = por %p72, %p73
    %p75 = scmp.ne.s32.totalorder %s66, %s67
    %p76 = scmp.eq.s32.totalorder %s14, 0
    %p77 = por %p75, %p76
    %p78 = scmp.ne.s32.totalorder %s66, %s67
    %p79 = scmp.eq.s32.totalorder %s15, 1
    %p80 = por %p78, %p79
    %p82 = scmp.ne.s32.totalorder %s67, %s81
    %p83 = scmp.eq.s32.totalorder %s15, 0
    %p84 = por %p82, %p83
    %s85 = ssub.s32 %s9, %s16
    %p86 = scmp.eq.s32.totalorder %s85, 0
    %s88 = sadd.s32 %s87, 1
    %s89 = scalar_select %p86, %s87, %s88
    %p92 = pneg %p86
    %p93 = scmp.eq.s32.totalorder %s9, 1
    %p94 = por %p92, %p93
    %p95 = scmp.ne.s32.totalorder %s87, %s90
    %p96 = scmp.eq.s32.totalorder %s9, 0
    %p97 = por %p95, %p96
    %p98 = scmp.ne.s32.totalorder %s87, %s90
    %p99 = scmp.eq.s32.totalorder %s14, 1
    %p100 = por %p98, %p99
    %p101 = scmp.ne.s32.totalorder %s90, %s91
    %p102 = scmp.eq.s32.totalorder %s14, 0
    %p103 = por %p101, %p102
    %p104 = scmp.ne.s32.totalorder %s90, %s91
    %p105 = scmp.eq.s32.totalorder %s15, 1
    %p106 = por %p104, %p105
    %p108 = scmp.ne.s32.totalorder %s91, %s107
    %p109 = scmp.eq.s32.totalorder %s15, 0
    %p110 = por %p108, %p109
    %p111 = scmp.le.s32.totalorder 1, %s9
    %p112 = scmp.lt.s32.totalorder %s9, 3
    %p113 = pnand %p111, %p112
    %p114 = pneg %p113
    // Predicated region
    $region9: #{dqn_base_forward.2} parent=5 // pred_check
      _
    $region10: #{dqn_base_forward.2} parent=5 // pred_check_branch
      %116 = sbr.rel (%p113) target = $region12
    $region11: #{dqn_base_forward.2} parent=5 // pred_region
      %s117 = ssub.s32 %s9, 1
      // Predicated region
      $region13: #{dqn_base_forward.2} parent=11 // pred_check
        %p118 = pneg %p56
      $region14: #{dqn_base_forward.2} parent=11 // pred_check_branch
        %120 = sbr.rel (%p118) target = $region16
      $region15: #{dqn_base_forward.2} parent=11 // pred_region
        _
      $region16: #{dqn_base_forward.2} parent=11 // pred_fallthru
        _
      // Predicated region
      $region17: #{dqn_base_forward.2} parent=11 // pred_check
        %p121 = pneg %p77
      $region18: #{dqn_base_forward.2} parent=11 // pred_check_branch
        %123 = sbr.rel (%p121) target = $region20
      $region19: #{dqn_base_forward.2} parent=11 // pred_region
        _
      $region20: #{dqn_base_forward.2} parent=11 // pred_fallthru
        _
    $region12: #{dqn_base_forward.2} parent=5 // pred_fallthru
      _
    %p124 = scmp.lt.s32.totalorder %s9, 2
    // Predicated region
    $region21: #{dqn_base_forward.2} parent=5 // pred_check
      %p125 = pneg %p124
    $region22: #{dqn_base_forward.2} parent=5 // pred_check_branch
      %127 = sbr.rel (%p125) target = $region24
    $region23: #{dqn_base_forward.2} parent=5 // pred_region
      // Predicated region
      $region25: #{dqn_base_forward.2} parent=23 // pred_check
        %p128 = pneg %p29
      $region26: #{dqn_base_forward.2} parent=23 // pred_check_branch
        %130 = sbr.rel (%p128) target = $region28
      $region27: #{dqn_base_forward.2} parent=23 // pred_region
        %p131 = scmp.lt.s32.totalorder %s9, 1
        %s132 = scalar_select %p131, %s9, 1
        %s133 = smul.addr %s132, 324
        %s134 = smul.addr %s133, 4
        %s135 = scalar_lea.vmem %s0, %s134
      $region28: #{dqn_base_forward.2} parent=23 // pred_fallthru
        _
    $region24: #{dqn_base_forward.2} parent=5 // pred_fallthru
      _
    %p136 = scmp.le.s32.totalorder 1, %s9
    %p137 = scmp.lt.s32.totalorder %s9, 3
    %p138 = pnand %p136, %p137
    %p139 = pneg %p138
    // Predicated region
    $region29: #{dqn_base_forward.2} parent=5 // pred_check
      _
    $region30: #{dqn_base_forward.2} parent=5 // pred_check_branch
      %141 = sbr.rel (%p138) target = $region32
    $region31: #{dqn_base_forward.2} parent=5 // pred_region
      %s142 = ssub.s32 %s9, 1
      %p143 = scmp.lt.s32.totalorder %s14, 1
      %s144 = scalar_select %p143, %s14, 1
      %s145 = smul.addr %s144, 324
      %s146 = smul.addr %s145, 4
      %s147 = scalar_lea.vmem %s0, %s146
      %p148 = pneg %p35
      %p149 = pneg %p32
      %p150 = pneg %p56
      %p151 = pneg %p53
      %p152 = pneg %p77
      %p153 = pneg %p74
      %p154 = pneg %p103
      %p155 = pneg %p100
      %p156 = scmp.lt.s32.totalorder %s14, 1
      %s157 = scalar_select %p156, %s14, 1
      %s158 = smul.addr %s157, 162
      %s159 = smul.addr %s158, 4
      %s160 = scalar_lea.vmem %s3, %s159
      %p161 = scmp.lt.s32.totalorder %s14, 1
      %s162 = scalar_select %p161, %s14, 1
      %s163 = smul.addr %s162, 324
      %s164 = smul.addr %s163, 4
      %s165 = scalar_lea.vmem %s0, %s164
      %p166 = scmp.lt.s32.totalorder %s14, 1
      %s167 = scalar_select %p166, %s14, 1
      %s168 = smul.addr %s167, 162
      %s169 = smul.addr %s168, 4
      %s170 = scalar_lea.vmem %s3, %s169
      %v172 = vld [vmem:[%s165] sm:$0xff]
      %v173 = vld [vmem:[%s165 + $0x8] sm:$0xff]
      %v174 = vld [vmem:[%s165 + $0x10] sm:$0xff]
      %v175 = vld [vmem:[%s165 + $0x18] sm:$0xff]
      %v176 = vld [vmem:[%s165 + $0x20] sm:$0xff]
      %v177 = vld [vmem:[%s165 + $0x28] sm:$0xff]
      %v178 = vld [vmem:[%s165 + $0x30] sm:$0xff]
      %v179 = vld [vmem:[%s165 + $0x38] sm:$0xff]
      %v180 = vld [vmem:[%s165 + $0x40] sm:$0xff]
      %v181 = vld [vmem:[%s165 + $0x48] sm:$0xff]
      %v182 = vld [vmem:[%s165 + $0x50] sm:$0xff]
      %v183 = vld [vmem:[%s165 + $0x58] sm:$0xff]
      %v184 = vld [vmem:[%s165 + $0x60] sm:$0xff]
      %v185 = vld [vmem:[%s165 + $0x68] sm:$0xff]
      %v186 = vld [vmem:[%s165 + $0x70] sm:$0xff]
      %v187 = vld [vmem:[%s165 + $0x78] sm:$0xff]
      %v188 = vld [vmem:[%s165 + $0x80] sm:$0xff]
      %v189 = vld [vmem:[%s165 + $0x88] sm:$0xff]
      %v190 = vld [vmem:[%s165 + $0x90] sm:$0xff]
      %v191 = vld [vmem:[%s165 + $0x98] sm:$0xff]
      %v192 = vld [vmem:[%s165 + $0xa0] sm:$0xff]
      %v193 = vld [vmem:[%s165 + $0xa8] sm:$0xff]
      %v194 = vld [vmem:[%s165 + $0xb0] sm:$0xff]
      %v195 = vld [vmem:[%s165 + $0xb8] sm:$0xff]
      %v196 = vld [vmem:[%s165 + $0xc0] sm:$0xff]
      %v197 = vld [vmem:[%s165 + $0xc8] sm:$0xff]
      %v198 = vld [vmem:[%s165 + $0xd0] sm:$0xff]
      %v199 = vld [vmem:[%s165 + $0xd8] sm:$0xff]
      %v200 = vld [vmem:[%s165 + $0xe0] sm:$0xff]
      %v201 = vld [vmem:[%s165 + $0xe8] sm:$0xff]
      %v202 = vld [vmem:[%s165 + $0xf0] sm:$0xff]
      %v203 = vld [vmem:[%s165 + $0xf8] sm:$0xff]
      %v204 = vld [vmem:[%s165 + $0x100] sm:$0xff]
      %v205 = vld [vmem:[%s165 + $0x108] sm:$0xff]
      %v206 = vld [vmem:[%s165 + $0x110] sm:$0xff]
      %v207 = vld [vmem:[%s165 + $0x118] sm:$0xff]
      %v208 = vld [vmem:[%s165 + $0x120] sm:$0xff]
      %v209 = vld [vmem:[%s165 + $0x128] sm:$0xff]
      %v210 = vld [vmem:[%s165 + $0x130] sm:$0xff]
      %v211 = vld [vmem:[%s165 + $0x138] sm:$0xff]
      %v212 = vld [vmem:[%s165 + $0x140] sm:$0xff]
      %v213 = vld [vmem:[%s165 + $0x148] sm:$0xff]
      %v214 = vld [vmem:[%s165 + $0x150] sm:$0xff]
      %v215 = vld [vmem:[%s165 + $0x158] sm:$0xff]
      %v216 = vld [vmem:[%s165 + $0x160] sm:$0xff]
      %v217 = vld [vmem:[%s165 + $0x168] sm:$0xff]
      %v218 = vld [vmem:[%s165 + $0x170] sm:$0xff]
      %v219 = vld [vmem:[%s165 + $0x178] sm:$0xff]
      %v220 = vld [vmem:[%s165 + $0x180] sm:$0xff]
      %v221 = vld [vmem:[%s165 + $0x188] sm:$0xff]
      %v222 = vld [vmem:[%s165 + $0x190] sm:$0xff]
      %v223 = vld [vmem:[%s165 + $0x198] sm:$0xff]
      %v224 = vld [vmem:[%s165 + $0x1a0] sm:$0xff]
      %v225 = vld [vmem:[%s165 + $0x1a8] sm:$0xff]
      %v226 = vld [vmem:[%s165 + $0x1b0] sm:$0xff]
      %v227 = vld [vmem:[%s165 + $0x1b8] sm:$0xff]
      %v228 = vld [vmem:[%s165 + $0x1c0] sm:$0xff]
      %v229 = vld [vmem:[%s165 + $0x1c8] sm:$0xff]
      %v230 = vld [vmem:[%s165 + $0x1d0] sm:$0xff]
      %v231 = vld [vmem:[%s165 + $0x1d8] sm:$0xff]
      %v232 = vld [vmem:[%s165 + $0x1e0] sm:$0xff]
      %v233 = vld [vmem:[%s165 + $0x1e8] sm:$0xff]
      %v234 = vld [vmem:[%s165 + $0x1f0] sm:$0xff]
      %v235 = vld [vmem:[%s165 + $0x1f8] sm:$0xff]
      %v236 = vld [vmem:[%s165 + $0x200] sm:$0xff]
      %v237 = vld [vmem:[%s165 + $0x208] sm:$0xff]
      %v238 = vld [vmem:[%s165 + $0x210] sm:$0xff]
      %v239 = vld [vmem:[%s165 + $0x218] sm:$0xff]
      %v240 = vld [vmem:[%s165 + $0x220] sm:$0xff]
      %v241 = vld [vmem:[%s165 + $0x228] sm:$0xff]
      %v242 = vld [vmem:[%s165 + $0x230] sm:$0xff]
      %v243 = vld [vmem:[%s165 + $0x238] sm:$0xff]
      %v244 = vld [vmem:[%s165 + $0x240] sm:$0xff]
      %v245 = vld [vmem:[%s165 + $0x248] sm:$0xff]
      %v246 = vld [vmem:[%s165 + $0x250] sm:$0xff]
      %v247 = vld [vmem:[%s165 + $0x258] sm:$0xff]
      %v248 = vld [vmem:[%s165 + $0x260] sm:$0xff]
      %v249 = vld [vmem:[%s165 + $0x268] sm:$0xff]
      %v250 = vld [vmem:[%s165 + $0x270] sm:$0xff]
      %v251 = vld [vmem:[%s165 + $0x278] sm:$0xff]
      %v252 = vld [vmem:[%s165 + $0x280] sm:$0xff]
      %v253 = vld [vmem:[%s165 + $0x288] sm:$0xff]
      %v254 = vld [vmem:[%s165 + $0x290] sm:$0xff]
      %v255 = vld [vmem:[%s165 + $0x298] sm:$0xff]
      %v256 = vld [vmem:[%s165 + $0x2a0] sm:$0xff]
      %v257 = vld [vmem:[%s165 + $0x2a8] sm:$0xff]
      %v258 = vld [vmem:[%s165 + $0x2b0] sm:$0xff]
      %v259 = vld [vmem:[%s165 + $0x2b8] sm:$0xff]
      %v260 = vld [vmem:[%s165 + $0x2c0] sm:$0xff]
      %v261 = vld [vmem:[%s165 + $0x2c8] sm:$0xff]
      %v262 = vld [vmem:[%s165 + $0x2d0] sm:$0xff]
      %v263 = vld [vmem:[%s165 + $0x2d8] sm:$0xff]
      %v264 = vld [vmem:[%s165 + $0x2e0] sm:$0xff]
      %v265 = vld [vmem:[%s165 + $0x2e8] sm:$0xff]
      %v266 = vld [vmem:[%s165 + $0x2f0] sm:$0xff]
      %v267 = vld [vmem:[%s165 + $0x2f8] sm:$0xff]
      %v268 = vld [vmem:[%s165 + $0x300] sm:$0xff]
      %v269 = vld [vmem:[%s165 + $0x308] sm:$0xff]
      %v270 = vld [vmem:[%s165 + $0x310] sm:$0xff]
      %v271 = vld [vmem:[%s165 + $0x318] sm:$0xff]
      %v272 = vld [vmem:[%s165 + $0x320] sm:$0xff]
      %v273 = vld [vmem:[%s165 + $0x328] sm:$0xff]
      %v274 = vld [vmem:[%s165 + $0x330] sm:$0xff]
      %v275 = vld [vmem:[%s165 + $0x338] sm:$0xff]
      %v276 = vld [vmem:[%s165 + $0x340] sm:$0xff]
      %v277 = vld [vmem:[%s165 + $0x348] sm:$0xff]
      %v278 = vld [vmem:[%s165 + $0x350] sm:$0xff]
      %v279 = vld [vmem:[%s165 + $0x358] sm:$0xff]
      %v280 = vld [vmem:[%s165 + $0x360] sm:$0xff]
      %v281 = vld [vmem:[%s165 + $0x368] sm:$0xff]
      %v282 = vld [vmem:[%s165 + $0x370] sm:$0xff]
      %v283 = vld [vmem:[%s165 + $0x378] sm:$0xff]
      %v284 = vld [vmem:[%s165 + $0x380] sm:$0xff]
      %v285 = vld [vmem:[%s165 + $0x388] sm:$0xff]
      %v286 = vld [vmem:[%s165 + $0x390] sm:$0xff]
      %v287 = vld [vmem:[%s165 + $0x398] sm:$0xff]
      %v288 = vld [vmem:[%s165 + $0x3a0] sm:$0xff]
      %v289 = vld [vmem:[%s165 + $0x3a8] sm:$0xff]
      %v290 = vld [vmem:[%s165 + $0x3b0] sm:$0xff]
      %v291 = vld [vmem:[%s165 + $0x3b8] sm:$0xff]
      %v292 = vld [vmem:[%s165 + $0x3c0] sm:$0xff]
      %v293 = vld [vmem:[%s165 + $0x3c8] sm:$0xff]
      %v294 = vld [vmem:[%s165 + $0x3d0] sm:$0xff]
      %v295 = vld [vmem:[%s165 + $0x3d8] sm:$0xff]
      %v296 = vld [vmem:[%s165 + $0x3e0] sm:$0xff]
      %v297 = vld [vmem:[%s165 + $0x3e8] sm:$0xff]
      %v298 = vld [vmem:[%s165 + $0x3f0] sm:$0xff]
      %v299 = vld [vmem:[%s165 + $0x3f8] sm:$0xff]
      %v300 = vld [vmem:[%s165 + $0x400] sm:$0xff]
      %v301 = vld [vmem:[%s165 + $0x408] sm:$0xff]
      %v302 = vld [vmem:[%s165 + $0x410] sm:$0xff]
      %v303 = vld [vmem:[%s165 + $0x418] sm:$0xff]
      %v304 = vld [vmem:[%s165 + $0x420] sm:$0xff]
      %v305 = vld [vmem:[%s165 + $0x428] sm:$0xff]
      %v306 = vld [vmem:[%s165 + $0x430] sm:$0xff]
      %v307 = vld [vmem:[%s165 + $0x438] sm:$0xff]
      %v308 = vld [vmem:[%s165 + $0x440] sm:$0xff]
      %v309 = vld [vmem:[%s165 + $0x448] sm:$0xff]
      %v310 = vld [vmem:[%s165 + $0x450] sm:$0xff]
      %v311 = vld [vmem:[%s165 + $0x458] sm:$0xff]
      %v312 = vld [vmem:[%s165 + $0x460] sm:$0xff]
      %v313 = vld [vmem:[%s165 + $0x468] sm:$0xff]
      %v314 = vld [vmem:[%s165 + $0x470] sm:$0xff]
      %v315 = vld [vmem:[%s165 + $0x478] sm:$0xff]
      %v316 = vld [vmem:[%s165 + $0x480] sm:$0xff]
      %v317 = vld [vmem:[%s165 + $0x488] sm:$0xff]
      %v318 = vld [vmem:[%s165 + $0x490] sm:$0xff]
      %v319 = vld [vmem:[%s165 + $0x498] sm:$0xff]
      %v320 = vld [vmem:[%s165 + $0x4a0] sm:$0xff]
      %v321 = vld [vmem:[%s165 + $0x4a8] sm:$0xff]
      %v322 = vld [vmem:[%s165 + $0x4b0] sm:$0xff]
      %v323 = vld [vmem:[%s165 + $0x4b8] sm:$0xff]
      %v324 = vld [vmem:[%s165 + $0x4c0] sm:$0xff]
      %v325 = vld [vmem:[%s165 + $0x4c8] sm:$0xff]
      %v326 = vld [vmem:[%s165 + $0x4d0] sm:$0xff]
      %v327 = vld [vmem:[%s165 + $0x4d8] sm:$0xff]
      %v328 = vld [vmem:[%s165 + $0x4e0] sm:$0xff]
      %v329 = vld [vmem:[%s165 + $0x4e8] sm:$0xff]
      %v330 = vld [vmem:[%s165 + $0x4f0] sm:$0xff]
      %v331 = vld [vmem:[%s165 + $0x4f8] sm:$0xff]
      %v332 = vld [vmem:[%s165 + $0x500] sm:$0xff]
      %v333 = vld [vmem:[%s165 + $0x508] sm:$0xff]
      %v334 = vld [vmem:[%s1] sm:$0xf]
      %v335 = vld [vmem:[%s1 + $0x4] sm:$0xf]
      %v336 = vld [vmem:[%s1 + $0x8] sm:$0xf]
      %v337 = vld [vmem:[%s1 + $0xc] sm:$0xf]
      %v338 = vld [vmem:[%s1 + $0x10] sm:$0xf]
      %v339 = vld [vmem:[%s1 + $0x14] sm:$0xf]
      %v340 = vld [vmem:[%s1 + $0x18] sm:$0xf]
      %v341 = vld [vmem:[%s1 + $0x1c] sm:$0xf]
      %v342 = vld [vmem:[%s1 + $0x20] sm:$0xf]
      %v343 = vld [vmem:[%s1 + $0x24] sm:$0xf]
      %v344 = vld [vmem:[%s1 + $0x28] sm:$0xf]
      %v345 = vld [vmem:[%s1 + $0x2c] sm:$0xf]
      %v346 = vld [vmem:[%s1 + $0x30] sm:$0xf]
      %v347 = vld [vmem:[%s1 + $0x34] sm:$0xf]
      %v348 = vld [vmem:[%s1 + $0x38] sm:$0xf]
      %v349 = vld [vmem:[%s1 + $0x3c] sm:$0xf]
      %v350 = vld [vmem:[%s1 + $0x40] sm:$0xf]
      %v351 = vld [vmem:[%s1 + $0x44] sm:$0xf]
      %v352 = vld [vmem:[%s1 + $0x48] sm:$0xf]
      %v353 = vld [vmem:[%s1 + $0x4c] sm:$0xf]
      %v354 = vld [vmem:[%s1 + $0x50] sm:$0xf]
      %v355 = vld [vmem:[%s1 + $0x54] sm:$0xf]
      %v356 = vld [vmem:[%s1 + $0x58] sm:$0xf]
      %v357 = vld [vmem:[%s1 + $0x5c] sm:$0xf]
      %v358 = vld [vmem:[%s1 + $0x60] sm:$0xf]
      %v359 = vld [vmem:[%s1 + $0x64] sm:$0xf]
      %v360 = vld [vmem:[%s1 + $0x68] sm:$0xf]
      %v361 = vld [vmem:[%s1 + $0x6c] sm:$0xf]
      %v362 = vld [vmem:[%s1 + $0x70] sm:$0xf]
      %v363 = vld [vmem:[%s1 + $0x74] sm:$0xf]
      %v364 = vld [vmem:[%s1 + $0x78] sm:$0xf]
      %v365 = vld [vmem:[%s1 + $0x7c] sm:$0xf]
      %v366 = vld [vmem:[%s2] sm:$0x1]
      %v368 = vlaneseq
      %v369 = vshrl.u32 %v368, 7
      %v370 = vsub.s32 0, %v369
      %v371 = vrot.slane %v366, %v370
      %v535 = vunpack.c.l.b16 %v172
      %v536 = vunpack.c.h.b16 %v172
      %v537 = vunpack.c.l.b16 %v173
      %v538 = vunpack.c.h.b16 %v173
      %v539 = vunpack.c.l.b16 %v174
      %v540 = vunpack.c.h.b16 %v174
      %v541 = vunpack.c.l.b16 %v175
      %v542 = vunpack.c.h.b16 %v175
      %v543 = vunpack.c.l.b16 %v176
      %v544 = vunpack.c.h.b16 %v176
      %v545 = vunpack.c.l.b16 %v177
      %v546 = vunpack.c.h.b16 %v177
      %v547 = vunpack.c.l.b16 %v178
      %v548 = vunpack.c.h.b16 %v178
      %v549 = vunpack.c.l.b16 %v179
      %v550 = vunpack.c.h.b16 %v179
      %v551 = vunpack.c.l.b16 %v180
      %v552 = vunpack.c.h.b16 %v180
      %v553 = vunpack.c.l.b16 %v181
      %v554 = vunpack.c.h.b16 %v181
      %v555 = vunpack.c.l.b16 %v182
      %v556 = vunpack.c.h.b16 %v182
      %v557 = vunpack.c.l.b16 %v183
      %v558 = vunpack.c.h.b16 %v183
      %v559 = vunpack.c.l.b16 %v184
      %v560 = vunpack.c.h.b16 %v184
      %v561 = vunpack.c.l.b16 %v185
      %v562 = vunpack.c.h.b16 %v185
      %v563 = vunpack.c.l.b16 %v186
      %v564 = vunpack.c.h.b16 %v186
      %v565 = vunpack.c.l.b16 %v187
      %v566 = vunpack.c.h.b16 %v187
      %v567 = vunpack.c.l.b16 %v188
      %v568 = vunpack.c.h.b16 %v188
      %v569 = vunpack.c.l.b16 %v189
      %v570 = vunpack.c.h.b16 %v189
      %v571 = vunpack.c.l.b16 %v190
      %v572 = vunpack.c.h.b16 %v190
      %v573 = vunpack.c.l.b16 %v191
      %v574 = vunpack.c.h.b16 %v191
      %v575 = vunpack.c.l.b16 %v192
      %v576 = vunpack.c.h.b16 %v192
      %v577 = vunpack.c.l.b16 %v193
      %v578 = vunpack.c.h.b16 %v193
      %v579 = vunpack.c.l.b16 %v194
      %v580 = vunpack.c.h.b16 %v194
      %v581 = vunpack.c.l.b16 %v195
      %v582 = vunpack.c.h.b16 %v195
      %v583 = vunpack.c.l.b16 %v196
      %v584 = vunpack.c.h.b16 %v196
      %v585 = vunpack.c.l.b16 %v197
      %v586 = vunpack.c.h.b16 %v197
      %v587 = vunpack.c.l.b16 %v198
      %v588 = vunpack.c.h.b16 %v198
      %v589 = vunpack.c.l.b16 %v199
      %v590 = vunpack.c.h.b16 %v199
      %v591 = vunpack.c.l.b16 %v200
      %v592 = vunpack.c.h.b16 %v200
      %v593 = vunpack.c.l.b16 %v201
      %v594 = vunpack.c.h.b16 %v201
      %v595 = vunpack.c.l.b16 %v202
      %v596 = vunpack.c.h.b16 %v202
      %v597 = vunpack.c.l.b16 %v203
      %v598 = vunpack.c.h.b16 %v203
      %v599 = vunpack.c.l.b16 %v204
      %v600 = vunpack.c.h.b16 %v204
      %v601 = vunpack.c.l.b16 %v205
      %v602 = vunpack.c.h.b16 %v205
      %v603 = vunpack.c.l.b16 %v206
      %v604 = vunpack.c.h.b16 %v206
      %v605 = vunpack.c.l.b16 %v207
      %v606 = vunpack.c.h.b16 %v207
      %v607 = vunpack.c.l.b16 %v208
      %v608 = vunpack.c.h.b16 %v208
      %v609 = vunpack.c.l.b16 %v209
      %v610 = vunpack.c.h.b16 %v209
      %v611 = vunpack.c.l.b16 %v210
      %v612 = vunpack.c.h.b16 %v210
      %v613 = vunpack.c.l.b16 %v211
      %v614 = vunpack.c.h.b16 %v211
      %v615 = vunpack.c.l.b16 %v212
      %v616 = vunpack.c.h.b16 %v212
      %v617 = vunpack.c.l.b16 %v213
      %v618 = vunpack.c.h.b16 %v213
      %v619 = vunpack.c.l.b16 %v214
      %v620 = vunpack.c.h.b16 %v214
      %v621 = vunpack.c.l.b16 %v215
      %v622 = vunpack.c.h.b16 %v215
      %v623 = vunpack.c.l.b16 %v216
      %v624 = vunpack.c.h.b16 %v216
      %v625 = vunpack.c.l.b16 %v217
      %v626 = vunpack.c.h.b16 %v217
      %v627 = vunpack.c.l.b16 %v218
      %v628 = vunpack.c.h.b16 %v218
      %v629 = vunpack.c.l.b16 %v219
      %v630 = vunpack.c.h.b16 %v219
      %v631 = vunpack.c.l.b16 %v220
      %v632 = vunpack.c.h.b16 %v220
      %v633 = vunpack.c.l.b16 %v221
      %v634 = vunpack.c.h.b16 %v221
      %v635 = vunpack.c.l.b16 %v222
      %v636 = vunpack.c.h.b16 %v222
      %v637 = vunpack.c.l.b16 %v223
      %v638 = vunpack.c.h.b16 %v223
      %v639 = vunpack.c.l.b16 %v224
      %v640 = vunpack.c.h.b16 %v224
      %v641 = vunpack.c.l.b16 %v225
      %v642 = vunpack.c.h.b16 %v225
      %v643 = vunpack.c.l.b16 %v226
      %v644 = vunpack.c.h.b16 %v226
      %v645 = vunpack.c.l.b16 %v227
      %v646 = vunpack.c.h.b16 %v227
      %v647 = vunpack.c.l.b16 %v228
      %v648 = vunpack.c.h.b16 %v228
      %v649 = vunpack.c.l.b16 %v229
      %v650 = vunpack.c.h.b16 %v229
      %v651 = vunpack.c.l.b16 %v230
      %v652 = vunpack.c.h.b16 %v230
      %v653 = vunpack.c.l.b16 %v231
      %v654 = vunpack.c.h.b16 %v231
      %v655 = vunpack.c.l.b16 %v232
      %v656 = vunpack.c.h.b16 %v232
      %v657 = vunpack.c.l.b16 %v233
      %v658 = vunpack.c.h.b16 %v233
      %v659 = vunpack.c.l.b16 %v234
      %v660 = vunpack.c.h.b16 %v234
      %v661 = vunpack.c.l.b16 %v235
      %v662 = vunpack.c.h.b16 %v235
      %v663 = vunpack.c.l.b16 %v236
      %v664 = vunpack.c.h.b16 %v236
      %v665 = vunpack.c.l.b16 %v237
      %v666 = vunpack.c.h.b16 %v237
      %v667 = vunpack.c.l.b16 %v238
      %v668 = vunpack.c.h.b16 %v238
      %v669 = vunpack.c.l.b16 %v239
      %v670 = vunpack.c.h.b16 %v239
      %v671 = vunpack.c.l.b16 %v240
      %v672 = vunpack.c.h.b16 %v240
      %v673 = vunpack.c.l.b16 %v241
      %v674 = vunpack.c.h.b16 %v241
      %v675 = vunpack.c.l.b16 %v242
      %v676 = vunpack.c.h.b16 %v242
      %v677 = vunpack.c.l.b16 %v243
      %v678 = vunpack.c.h.b16 %v243
      %v679 = vunpack.c.l.b16 %v244
      %v680 = vunpack.c.h.b16 %v244
      %v681 = vunpack.c.l.b16 %v245
      %v682 = vunpack.c.h.b16 %v245
      %v683 = vunpack.c.l.b16 %v246
      %v684 = vunpack.c.h.b16 %v246
      %v685 = vunpack.c.l.b16 %v247
      %v686 = vunpack.c.h.b16 %v247
      %v687 = vunpack.c.l.b16 %v248
      %v688 = vunpack.c.h.b16 %v248
      %v689 = vunpack.c.l.b16 %v249
      %v690 = vunpack.c.h.b16 %v249
      %v691 = vunpack.c.l.b16 %v250
      %v692 = vunpack.c.h.b16 %v250
      %v693 = vunpack.c.l.b16 %v251
      %v694 = vunpack.c.h.b16 %v251
      %v695 = vunpack.c.l.b16 %v252
      %v696 = vunpack.c.h.b16 %v252
      %v697 = vunpack.c.l.b16 %v253
      %v698 = vunpack.c.h.b16 %v253
      %v699 = vunpack.c.l.b16 %v254
      %v700 = vunpack.c.h.b16 %v254
      %v701 = vunpack.c.l.b16 %v255
      %v702 = vunpack.c.h.b16 %v255
      %v703 = vunpack.c.l.b16 %v256
      %v704 = vunpack.c.h.b16 %v256
      %v705 = vunpack.c.l.b16 %v257
      %v706 = vunpack.c.h.b16 %v257
      %v707 = vunpack.c.l.b16 %v258
      %v708 = vunpack.c.h.b16 %v258
      %v709 = vunpack.c.l.b16 %v259
      %v710 = vunpack.c.h.b16 %v259
      %v711 = vunpack.c.l.b16 %v260
      %v712 = vunpack.c.h.b16 %v260
      %v713 = vunpack.c.l.b16 %v261
      %v714 = vunpack.c.h.b16 %v261
      %v715 = vunpack.c.l.b16 %v262
      %v716 = vunpack.c.h.b16 %v262
      %v717 = vunpack.c.l.b16 %v263
      %v718 = vunpack.c.h.b16 %v263
      %v719 = vunpack.c.l.b16 %v264
      %v720 = vunpack.c.h.b16 %v264
      %v721 = vunpack.c.l.b16 %v265
      %v722 = vunpack.c.h.b16 %v265
      %v723 = vunpack.c.l.b16 %v266
      %v724 = vunpack.c.h.b16 %v266
      %v725 = vunpack.c.l.b16 %v267
      %v726 = vunpack.c.h.b16 %v267
      %v727 = vunpack.c.l.b16 %v268
      %v728 = vunpack.c.h.b16 %v268
      %v729 = vunpack.c.l.b16 %v269
      %v730 = vunpack.c.h.b16 %v269
      %v731 = vunpack.c.l.b16 %v270
      %v732 = vunpack.c.h.b16 %v270
      %v733 = vunpack.c.l.b16 %v271
      %v734 = vunpack.c.h.b16 %v271
      %v735 = vunpack.c.l.b16 %v272
      %v736 = vunpack.c.h.b16 %v272
      %v737 = vunpack.c.l.b16 %v273
      %v738 = vunpack.c.h.b16 %v273
      %v739 = vunpack.c.l.b16 %v274
      %v740 = vunpack.c.h.b16 %v274
      %v741 = vunpack.c.l.b16 %v275
      %v742 = vunpack.c.h.b16 %v275
      %v743 = vunpack.c.l.b16 %v276
      %v744 = vunpack.c.h.b16 %v276
      %v745 = vunpack.c.l.b16 %v277
      %v746 = vunpack.c.h.b16 %v277
      %v747 = vunpack.c.l.b16 %v278
      %v748 = vunpack.c.h.b16 %v278
      %v749 = vunpack.c.l.b16 %v279
      %v750 = vunpack.c.h.b16 %v279
      %v751 = vunpack.c.l.b16 %v280
      %v752 = vunpack.c.h.b16 %v280
      %v753 = vunpack.c.l.b16 %v281
      %v754 = vunpack.c.h.b16 %v281
      %v755 = vunpack.c.l.b16 %v282
      %v756 = vunpack.c.h.b16 %v282
      %v757 = vunpack.c.l.b16 %v283
      %v758 = vunpack.c.h.b16 %v283
      %v759 = vunpack.c.l.b16 %v284
      %v760 = vunpack.c.h.b16 %v284
      %v761 = vunpack.c.l.b16 %v285
      %v762 = vunpack.c.h.b16 %v285
      %v763 = vunpack.c.l.b16 %v286
      %v764 = vunpack.c.h.b16 %v286
      %v765 = vunpack.c.l.b16 %v287
      %v766 = vunpack.c.h.b16 %v287
      %v767 = vunpack.c.l.b16 %v288
      %v768 = vunpack.c.h.b16 %v288
      %v769 = vunpack.c.l.b16 %v289
      %v770 = vunpack.c.h.b16 %v289
      %v771 = vunpack.c.l.b16 %v290
      %v772 = vunpack.c.h.b16 %v290
      %v773 = vunpack.c.l.b16 %v291
      %v774 = vunpack.c.h.b16 %v291
      %v775 = vunpack.c.l.b16 %v292
      %v776 = vunpack.c.h.b16 %v292
      %v777 = vunpack.c.l.b16 %v293
      %v778 = vunpack.c.h.b16 %v293
      %v779 = vunpack.c.l.b16 %v294
      %v780 = vunpack.c.h.b16 %v294
      %v781 = vunpack.c.l.b16 %v295
      %v782 = vunpack.c.h.b16 %v295
      %v783 = vunpack.c.l.b16 %v296
      %v784 = vunpack.c.h.b16 %v296
      %v785 = vunpack.c.l.b16 %v297
      %v786 = vunpack.c.h.b16 %v297
      %v787 = vunpack.c.l.b16 %v298
      %v788 = vunpack.c.h.b16 %v298
      %v789 = vunpack.c.l.b16 %v299
      %v790 = vunpack.c.h.b16 %v299
      %v791 = vunpack.c.l.b16 %v300
      %v792 = vunpack.c.h.b16 %v300
      %v793 = vunpack.c.l.b16 %v301
      %v794 = vunpack.c.h.b16 %v301
      %v795 = vunpack.c.l.b16 %v302
      %v796 = vunpack.c.h.b16 %v302
      %v797 = vunpack.c.l.b16 %v303
      %v798 = vunpack.c.h.b16 %v303
      %v799 = vunpack.c.l.b16 %v304
      %v800 = vunpack.c.h.b16 %v304
      %v801 = vunpack.c.l.b16 %v305
      %v802 = vunpack.c.h.b16 %v305
      %v803 = vunpack.c.l.b16 %v306
      %v804 = vunpack.c.h.b16 %v306
      %v805 = vunpack.c.l.b16 %v307
      %v806 = vunpack.c.h.b16 %v307
      %v807 = vunpack.c.l.b16 %v308
      %v808 = vunpack.c.h.b16 %v308
      %v809 = vunpack.c.l.b16 %v309
      %v810 = vunpack.c.h.b16 %v309
      %v811 = vunpack.c.l.b16 %v310
      %v812 = vunpack.c.h.b16 %v310
      %v813 = vunpack.c.l.b16 %v311
      %v814 = vunpack.c.h.b16 %v311
      %v815 = vunpack.c.l.b16 %v312
      %v816 = vunpack.c.h.b16 %v312
      %v817 = vunpack.c.l.b16 %v313
      %v818 = vunpack.c.h.b16 %v313
      %v819 = vunpack.c.l.b16 %v314
      %v820 = vunpack.c.h.b16 %v314
      %v821 = vunpack.c.l.b16 %v315
      %v822 = vunpack.c.h.b16 %v315
      %v823 = vunpack.c.l.b16 %v316
      %v824 = vunpack.c.h.b16 %v316
      %v825 = vunpack.c.l.b16 %v317
      %v826 = vunpack.c.h.b16 %v317
      %v827 = vunpack.c.l.b16 %v318
      %v828 = vunpack.c.h.b16 %v318
      %v829 = vunpack.c.l.b16 %v319
      %v830 = vunpack.c.h.b16 %v319
      %v831 = vunpack.c.l.b16 %v320
      %v832 = vunpack.c.h.b16 %v320
      %v833 = vunpack.c.l.b16 %v321
      %v834 = vunpack.c.h.b16 %v321
      %v835 = vunpack.c.l.b16 %v322
      %v836 = vunpack.c.h.b16 %v322
      %v837 = vunpack.c.l.b16 %v323
      %v838 = vunpack.c.h.b16 %v323
      %v839 = vunpack.c.l.b16 %v324
      %v840 = vunpack.c.h.b16 %v324
      %v841 = vunpack.c.l.b16 %v325
      %v842 = vunpack.c.h.b16 %v325
      %v843 = vunpack.c.l.b16 %v326
      %v844 = vunpack.c.h.b16 %v326
      %v845 = vunpack.c.l.b16 %v327
      %v846 = vunpack.c.h.b16 %v327
      %v847 = vunpack.c.l.b16 %v328
      %v848 = vunpack.c.h.b16 %v328
      %v849 = vunpack.c.l.b16 %v329
      %v850 = vunpack.c.h.b16 %v329
      %v851 = vunpack.c.l.b16 %v330
      %v852 = vunpack.c.h.b16 %v330
      %v853 = vunpack.c.l.b16 %v331
      %v854 = vunpack.c.h.b16 %v331
      %v855 = vunpack.c.l.b16 %v332
      %v856 = vunpack.c.h.b16 %v332
      %v857 = vunpack.c.l.b16 %v333
      %v858 = vunpack.c.h.b16 %v333
      %v859 = vpack.c.b16 %v537, %v535
      %v860 = vpack.c.b16 %v538, %v536
      %v861 = vpack.c.b16 %v541, %v539
      %v862 = vpack.c.b16 %v542, %v540
      %v863 = vpack.c.b16 %v545, %v543
      %v864 = vpack.c.b16 %v546, %v544
      %v865 = vpack.c.b16 %v549, %v547
      %v866 = vpack.c.b16 %v550, %v548
      %v867 = vpack.c.b16 %v553, %v551
      %v868 = vpack.c.b16 %v554, %v552
      %v869 = vpack.c.b16 %v557, %v555
      %v870 = vpack.c.b16 %v558, %v556
      %v871 = vpack.c.b16 %v561, %v559
      %v872 = vpack.c.b16 %v562, %v560
      %v873 = vpack.c.b16 %v565, %v563
      %v874 = vpack.c.b16 %v566, %v564
      %v875 = vpack.c.b16 %v569, %v567
      %v876 = vpack.c.b16 %v570, %v568
      %v877 = vpack.c.b16 %v573, %v571
      %v878 = vpack.c.b16 %v574, %v572
      %v879 = vpack.c.b16 %v577, %v575
      %v880 = vpack.c.b16 %v578, %v576
      %v881 = vpack.c.b16 %v581, %v579
      %v882 = vpack.c.b16 %v582, %v580
      %v883 = vpack.c.b16 %v585, %v583
      %v884 = vpack.c.b16 %v586, %v584
      %v885 = vpack.c.b16 %v589, %v587
      %v886 = vpack.c.b16 %v590, %v588
      %v887 = vpack.c.b16 %v593, %v591
      %v888 = vpack.c.b16 %v594, %v592
      %v889 = vpack.c.b16 %v597, %v595
      %v890 = vpack.c.b16 %v598, %v596
      %v891 = vpack.c.b16 %v601, %v599
      %v892 = vpack.c.b16 %v602, %v600
      %v893 = vpack.c.b16 %v605, %v603
      %v894 = vpack.c.b16 %v606, %v604
      %v895 = vpack.c.b16 %v609, %v607
      %v896 = vpack.c.b16 %v610, %v608
      %v897 = vpack.c.b16 %v613, %v611
      %v898 = vpack.c.b16 %v614, %v612
      %v899 = vpack.c.b16 %v617, %v615
      %v900 = vpack.c.b16 %v618, %v616
      %v901 = vpack.c.b16 %v621, %v619
      %v902 = vpack.c.b16 %v622, %v620
      %v903 = vpack.c.b16 %v625, %v623
      %v904 = vpack.c.b16 %v626, %v624
      %v905 = vpack.c.b16 %v629, %v627
      %v906 = vpack.c.b16 %v630, %v628
      %v907 = vpack.c.b16 %v633, %v631
      %v908 = vpack.c.b16 %v634, %v632
      %v909 = vpack.c.b16 %v637, %v635
      %v910 = vpack.c.b16 %v638, %v636
      %v911 = vpack.c.b16 %v641, %v639
      %v912 = vpack.c.b16 %v642, %v640
      %v913 = vpack.c.b16 %v645, %v643
      %v914 = vpack.c.b16 %v646, %v644
      %v915 = vpack.c.b16 %v649, %v647
      %v916 = vpack.c.b16 %v650, %v648
      %v917 = vpack.c.b16 %v653, %v651
      %v918 = vpack.c.b16 %v654, %v652
      %v919 = vpack.c.b16 %v657, %v655
      %v920 = vpack.c.b16 %v658, %v656
      %v921 = vpack.c.b16 %v661, %v659
      %v922 = vpack.c.b16 %v662, %v660
      %v923 = vpack.c.b16 %v665, %v663
      %v924 = vpack.c.b16 %v666, %v664
      %v925 = vpack.c.b16 %v669, %v667
      %v926 = vpack.c.b16 %v670, %v668
      %v927 = vpack.c.b16 %v673, %v671
      %v928 = vpack.c.b16 %v674, %v672
      %v929 = vpack.c.b16 %v677, %v675
      %v930 = vpack.c.b16 %v678, %v676
      %v931 = vpack.c.b16 %v681, %v679
      %v932 = vpack.c.b16 %v682, %v680
      %v933 = vpack.c.b16 %v685, %v683
      %v934 = vpack.c.b16 %v686, %v684
      %v935 = vpack.c.b16 %v689, %v687
      %v936 = vpack.c.b16 %v690, %v688
      %v937 = vpack.c.b16 %v693, %v691
      %v938 = vpack.c.b16 %v694, %v692
      %v939 = vpack.c.b16 %v697, %v695
      %v940 = vpack.c.b16 %v698, %v696
      %v941 = vpack.c.b16 %v701, %v699
      %v942 = vpack.c.b16 %v702, %v700
      %v943 = vpack.c.b16 %v705, %v703
      %v944 = vpack.c.b16 %v706, %v704
      %v945 = vpack.c.b16 %v709, %v707
      %v946 = vpack.c.b16 %v710, %v708
      %v947 = vpack.c.b16 %v713, %v711
      %v948 = vpack.c.b16 %v714, %v712
      %v949 = vpack.c.b16 %v717, %v715
      %v950 = vpack.c.b16 %v718, %v716
      %v951 = vpack.c.b16 %v721, %v719
      %v952 = vpack.c.b16 %v722, %v720
      %v953 = vpack.c.b16 %v725, %v723
      %v954 = vpack.c.b16 %v726, %v724
      %v955 = vpack.c.b16 %v729, %v727
      %v956 = vpack.c.b16 %v730, %v728
      %v957 = vpack.c.b16 %v733, %v731
      %v958 = vpack.c.b16 %v734, %v732
      %v959 = vpack.c.b16 %v737, %v735
      %v960 = vpack.c.b16 %v738, %v736
      %v961 = vpack.c.b16 %v741, %v739
      %v962 = vpack.c.b16 %v742, %v740
      %v963 = vpack.c.b16 %v745, %v743
      %v964 = vpack.c.b16 %v746, %v744
      %v965 = vpack.c.b16 %v749, %v747
      %v966 = vpack.c.b16 %v750, %v748
      %v967 = vpack.c.b16 %v753, %v751
      %v968 = vpack.c.b16 %v754, %v752
      %v969 = vpack.c.b16 %v757, %v755
      %v970 = vpack.c.b16 %v758, %v756
      %v971 = vpack.c.b16 %v761, %v759
      %v972 = vpack.c.b16 %v762, %v760
      %v973 = vpack.c.b16 %v765, %v763
      %v974 = vpack.c.b16 %v766, %v764
      %v975 = vpack.c.b16 %v769, %v767
      %v976 = vpack.c.b16 %v770, %v768
      %v977 = vpack.c.b16 %v773, %v771
      %v978 = vpack.c.b16 %v774, %v772
      %v979 = vpack.c.b16 %v777, %v775
      %v980 = vpack.c.b16 %v778, %v776
      %v981 = vpack.c.b16 %v781, %v779
      %v982 = vpack.c.b16 %v782, %v780
      %v983 = vpack.c.b16 %v785, %v783
      %v984 = vpack.c.b16 %v786, %v784
      %v985 = vpack.c.b16 %v789, %v787
      %v986 = vpack.c.b16 %v790, %v788
      %v987 = vpack.c.b16 %v793, %v791
      %v988 = vpack.c.b16 %v794, %v792
      %v989 = vpack.c.b16 %v797, %v795
      %v990 = vpack.c.b16 %v798, %v796
      %v991 = vpack.c.b16 %v801, %v799
      %v992 = vpack.c.b16 %v802, %v800
      %v993 = vpack.c.b16 %v805, %v803
      %v994 = vpack.c.b16 %v806, %v804
      %v995 = vpack.c.b16 %v809, %v807
      %v996 = vpack.c.b16 %v810, %v808
      %v997 = vpack.c.b16 %v813, %v811
      %v998 = vpack.c.b16 %v814, %v812
      %v999 = vpack.c.b16 %v817, %v815
      %v1000 = vpack.c.b16 %v818, %v816
      %v1001 = vpack.c.b16 %v821, %v819
      %v1002 = vpack.c.b16 %v822, %v820
      %v1003 = vpack.c.b16 %v825, %v823
      %v1004 = vpack.c.b16 %v826, %v824
      %v1005 = vpack.c.b16 %v829, %v827
      %v1006 = vpack.c.b16 %v830, %v828
      %v1007 = vpack.c.b16 %v833, %v831
      %v1008 = vpack.c.b16 %v834, %v832
      %v1009 = vpack.c.b16 %v837, %v835
      %v1010 = vpack.c.b16 %v838, %v836
      %v1011 = vpack.c.b16 %v841, %v839
      %v1012 = vpack.c.b16 %v842, %v840
      %v1013 = vpack.c.b16 %v845, %v843
      %v1014 = vpack.c.b16 %v846, %v844
      %v1015 = vpack.c.b16 %v849, %v847
      %v1016 = vpack.c.b16 %v850, %v848
      %v1017 = vpack.c.b16 %v853, %v851
      %v1018 = vpack.c.b16 %v854, %v852
      %v1019 = vpack.c.b16 %v857, %v855
      %v1020 = vpack.c.b16 %v858, %v856
      %v1215 = vunpack.c.l.b16 %v334
      %v1216 = vunpack.c.l.b16 %v335
      %v1217 = vunpack.c.l.b16 %v336
      %v1218 = vunpack.c.l.b16 %v337
      %v1219 = vunpack.c.l.b16 %v338
      %v1220 = vunpack.c.l.b16 %v339
      %v1221 = vunpack.c.l.b16 %v340
      %v1222 = vunpack.c.l.b16 %v341
      %v1223 = vunpack.c.l.b16 %v342
      %v1224 = vunpack.c.l.b16 %v343
      %v1225 = vunpack.c.l.b16 %v344
      %v1226 = vunpack.c.l.b16 %v345
      %v1227 = vunpack.c.l.b16 %v346
      %v1228 = vunpack.c.l.b16 %v347
      %v1229 = vunpack.c.l.b16 %v348
      %v1230 = vunpack.c.l.b16 %v349
      %v1231 = vunpack.c.l.b16 %v350
      %v1232 = vunpack.c.l.b16 %v351
      %v1233 = vunpack.c.l.b16 %v352
      %v1234 = vunpack.c.l.b16 %v353
      %v1235 = vunpack.c.l.b16 %v354
      %v1236 = vunpack.c.l.b16 %v355
      %v1237 = vunpack.c.l.b16 %v356
      %v1238 = vunpack.c.l.b16 %v357
      %v1239 = vunpack.c.l.b16 %v358
      %v1240 = vunpack.c.l.b16 %v359
      %v1241 = vunpack.c.l.b16 %v360
      %v1242 = vunpack.c.l.b16 %v361
      %v1243 = vunpack.c.l.b16 %v362
      %v1244 = vunpack.c.l.b16 %v363
      %v1245 = vunpack.c.l.b16 %v364
      %v1246 = vunpack.c.l.b16 %v365
      %v1247 = vpack.c.b16 %v1216, %v1215
      %v1248 = vpack.c.b16 %v1218, %v1217
      %v1249 = vpack.c.b16 %v1220, %v1219
      %v1250 = vpack.c.b16 %v1222, %v1221
      %v1251 = vpack.c.b16 %v1224, %v1223
      %v1252 = vpack.c.b16 %v1226, %v1225
      %v1253 = vpack.c.b16 %v1228, %v1227
      %v1254 = vpack.c.b16 %v1230, %v1229
      %v1255 = vpack.c.b16 %v1232, %v1231
      %v1256 = vpack.c.b16 %v1234, %v1233
      %v1257 = vpack.c.b16 %v1236, %v1235
      %v1258 = vpack.c.b16 %v1238, %v1237
      %v1259 = vpack.c.b16 %v1240, %v1239
      %v1260 = vpack.c.b16 %v1242, %v1241
      %v1261 = vpack.c.b16 %v1244, %v1243
      %v1262 = vpack.c.b16 %v1246, %v1245
      %1279 = vmatprep.subr.bf16.mxu0 0
      %1280 = vmatpush1.bf16.msra.mxu0 %v1247
      %1281 = vmatprep.subr.bf16.mxu0 0
      %1282 = vmatpush1.bf16.msra.mxu0 %v1248
      %1283 = vmatprep.subr.bf16.mxu0 0
      %1284 = vmatpush1.bf16.msra.mxu0 %v1249
      %1285 = vmatprep.subr.bf16.mxu0 0
      %1286 = vmatpush1.bf16.msra.mxu0 %v1250
      %1287 = vmatprep.subr.bf16.mxu0 0
      %1288 = vmatpush1.bf16.msra.mxu0 %v1251
      %1289 = vmatprep.subr.bf16.mxu0 0
      %1290 = vmatpush1.bf16.msra.mxu0 %v1252
      %1291 = vmatprep.subr.bf16.mxu0 0
      %1292 = vmatpush1.bf16.msra.mxu0 %v1253
      %1293 = vmatprep.subr.bf16.mxu0 0
      %1294 = vmatpush1.bf16.msra.mxu0 %v1254
      %1295 = vmatprep.subr.bf16.mxu0 0
      %1296 = vmatpush1.bf16.msra.mxu0 %v1255
      %1297 = vmatprep.subr.bf16.mxu0 0
      %1298 = vmatpush1.bf16.msra.mxu0 %v1256
      %1299 = vmatprep.subr.bf16.mxu0 0
      %1300 = vmatpush1.bf16.msra.mxu0 %v1257
      %1301 = vmatprep.subr.bf16.mxu0 0
      %1302 = vmatpush1.bf16.msra.mxu0 %v1258
      %1303 = vmatprep.subr.bf16.mxu0 0
      %1304 = vmatpush1.bf16.msra.mxu0 %v1259
      %1305 = vmatprep.subr.bf16.mxu0 0
      %1306 = vmatpush1.bf16.msra.mxu0 %v1260
      %1307 = vmatprep.subr.bf16.mxu0 0
      %1308 = vmatpush1.bf16.msra.mxu0 %v1261
      %1309 = vmatprep.subr.bf16.mxu0 0
      %1310 = vmatpush1.bf16.msra.mxu0 %v1262
      %1311 = vmatprep.mubr.bf16.mxu0 %v860
      %1312 = vmatmul.mubr.bf16.gmra.mrb[0].mxu0 %v859
      %v1313 = vpop.f32.mrb[0].mxu0
      %v1314 = vadd.f32 %v371, %v1313
      %v1315 = vpop.f32.mrb[0].mxu0
      %v1316 = vpop.f32.mrb[0].mxu0
      %v1317 = vadd.f32 %v371, %v1316
      %v1318 = vpop.f32.mrb[0].mxu0
      %1319 = vmatprep.mubr.bf16.mxu0 %v862
      %1320 = vmatmul.mubr.bf16.gmra.mrb[0].mxu0 %v861
      %v1321 = vpop.f32.mrb[0].mxu0
      %v1322 = vadd.f32 %v371, %v1321
      %v1323 = vpop.f32.mrb[0].mxu0
      %v1324 = vpop.f32.mrb[0].mxu0
      %v1325 = vadd.f32 %v371, %v1324
      %v1326 = vpop.f32.mrb[0].mxu0
      %1327 = vmatprep.mubr.bf16.mxu0 %v864
      %1328 = vmatmul.mubr.bf16.gmra.mrb[0].mxu0 %v863
      %v1329 = vpop.f32.mrb[0].mxu0
      %v1330 = vadd.f32 %v371, %v1329
      %v1331 = vpop.f32.mrb[0].mxu0
      %v1332 = vpop.f32.mrb[0].mxu0
      %v1333 = vadd.f32 %v371, %v1332
      %v1334 = vpop.f32.mrb[0].mxu0
      %1335 = vmatprep.mubr.bf16.mxu0 %v866
      %1336 = vmatmul.mubr.bf16.gmra.mrb[0].mxu0 %v865
      %v1337 = vpop.f32.mrb[0].mxu0
      %v1338 = vadd.f32 %v371, %v1337
      %v1339 = vpop.f32.mrb[0].mxu0
      %v1340 = vpop.f32.mrb[0].mxu0
      %v1341 = vadd.f32 %v371, %v1340
      %v1342 = vpop.f32.mrb[0].mxu0
      %1343 = vmatprep.mubr.bf16.mxu0 %v868
      %1344 = vmatmul.mubr.bf16.gmra.mrb[0].mxu0 %v867
      %v1345 = vpop.f32.mrb[0].mxu0
      %v1346 = vadd.f32 %v371, %v1345
      %v1347 = vpop.f32.mrb[0].mxu0
      %v1348 = vpop.f32.mrb[0].mxu0
      %v1349 = vadd.f32 %v371, %v1348
      %v1350 = vpop.f32.mrb[0].mxu0
      %1351 = vmatprep.mubr.bf16.mxu0 %v870
      %1352 = vmatmul.mubr.bf16.gmra.mrb[0].mxu0 %v869
      %v1353 = vpop.f32.mrb[0].mxu0
      %v1354 = vadd.f32 %v371, %v1353
      %v1355 = vpop.f32.mrb[0].mxu0
      %v1356 = vpop.f32.mrb[0].mxu0
      %v1357 = vadd.f32 %v371, %v1356
      %v1358 = vpop.f32.mrb[0].mxu0
      %1359 = vmatprep.mubr.bf16.mxu0 %v872
      %1360 = vmatmul.mubr.bf16.gmra.mrb[0].mxu0 %v871
      %v1361 = vpop.f32.mrb[0].mxu0
      %v1362 = vadd.f32 %v371, %v1361
      %v1363 = vpop.f32.mrb[0].mxu0
      %v1364 = vpop.f32.mrb[0].mxu0
      %v1365 = vadd.f32 %v371, %v1364
      %v1366 = vpop.f32.mrb[0].mxu0
      %1367 = vmatprep.mubr.bf16.mxu0 %v874
      %1368 = vmatmul.mubr.bf16.gmra.mrb[0].mxu0 %v873
      %v1369 = vpop.f32.mrb[0].mxu0
      %v1370 = vadd.f32 %v371, %v1369
      %v1371 = vpop.f32.mrb[0].mxu0
      %v1372 = vpop.f32.mrb[0].mxu0
      %v1373 = vadd.f32 %v371, %v1372
      %v1374 = vpop.f32.mrb[0].mxu0
      %1375 = vmatprep.mubr.bf16.mxu0 %v876
      %1376 = vmatmul.mubr.bf16.gmra.mrb[0].mxu0 %v875
      %v1377 = vpop.f32.mrb[0].mxu0
      %v1378 = vadd.f32 %v371, %v1377
      %v1379 = vpop.f32.mrb[0].mxu0
      %v1380 = vpop.f32.mrb[0].mxu0
      %v1381 = vadd.f32 %v371, %v1380
      %v1382 = vpop.f32.mrb[0].mxu0
      %1383 = vmatprep.mubr.bf16.mxu0 %v878
      %1384 = vmatmul.mubr.bf16.gmra.mrb[0].mxu0 %v877
      %v1385 = vpop.f32.mrb[0].mxu0
      %v1386 = vadd.f32 %v371, %v1385
      %v1387 = vpop.f32.mrb[0].mxu0
      %v1388 = vpop.f32.mrb[0].mxu0
      %v1389 = vadd.f32 %v371, %v1388
      %v1390 = vpop.f32.mrb[0].mxu0
      %1391 = vmatprep.mubr.bf16.mxu0 %v880
      %1392 = vmatmul.mubr.bf16.gmra.mrb[0].mxu0 %v879
      %v1393 = vpop.f32.mrb[0].mxu0
      %v1394 = vadd.f32 %v371, %v1393
      %v1395 = vpop.f32.mrb[0].mxu0
      %v1396 = vpop.f32.mrb[0].mxu0
      %v1397 = vadd.f32 %v371, %v1396
      %v1398 = vpop.f32.mrb[0].mxu0
      %1399 = vmatprep.mubr.bf16.mxu0 %v882
      %1400 = vmatmul.mubr.bf16.gmra.mrb[0].mxu0 %v881
      %v1401 = vpop.f32.mrb[0].mxu0
      %v1402 = vadd.f32 %v371, %v1401
      %v1403 = vpop.f32.mrb[0].mxu0
      %v1404 = vpop.f32.mrb[0].mxu0
      %v1405 = vadd.f32 %v371, %v1404
      %v1406 = vpop.f32.mrb[0].mxu0
      %1407 = vmatprep.mubr.bf16.mxu0 %v884
      %1408 = vmatmul.mubr.bf16.gmra.mrb[0].mxu0 %v883
      %v1409 = vpop.f32.mrb[0].mxu0
      %v1410 = vadd.f32 %v371, %v1409
      %v1411 = vpop.f32.mrb[0].mxu0
      %v1412 = vpop.f32.mrb[0].mxu0
      %v1413 = vadd.f32 %v371, %v1412
      %v1414 = vpop.f32.mrb[0].mxu0
      %1415 = vmatprep.mubr.bf16.mxu0 %v886
      %1416 = vmatmul.mubr.bf16.gmra.mrb[0].mxu0 %v885
      %v1417 = vpop.f32.mrb[0].mxu0
      %v1418 = vadd.f32 %v371, %v1417
      %v1419 = vpop.f32.mrb[0].mxu0
      %v1420 = vpop.f32.mrb[0].mxu0
      %v1421 = vadd.f32 %v371, %v1420
      %v1422 = vpop.f32.mrb[0].mxu0
      %1423 = vmatprep.mubr.bf16.mxu0 %v888
      %1424 = vmatmul.mubr.bf16.gmra.mrb[0].mxu0 %v887
      %v1425 = vpop.f32.mrb[0].mxu0
      %v1426 = vadd.f32 %v371, %v1425
      %v1427 = vpop.f32.mrb[0].mxu0
      %v1428 = vpop.f32.mrb[0].mxu0
      %v1429 = vadd.f32 %v371, %v1428
      %v1430 = vpop.f32.mrb[0].mxu0
      %1431 = vmatprep.mubr.bf16.mxu0 %v890
      %1432 = vmatmul.mubr.bf16.gmra.mrb[0].mxu0 %v889
      %v1433 = vpop.f32.mrb[0].mxu0
      %v1434 = vadd.f32 %v371, %v1433
      %v1435 = vpop.f32.mrb[0].mxu0
      %v1436 = vpop.f32.mrb[0].mxu0
      %v1437 = vadd.f32 %v371, %v1436
      %v1438 = vpop.f32.mrb[0].mxu0
      %1439 = vmatprep.mubr.bf16.mxu0 %v892
      %1440 = vmatmul.mubr.bf16.gmra.mrb[0].mxu0 %v891
      %v1441 = vpop.f32.mrb[0].mxu0
      %v1442 = vadd.f32 %v371, %v1441
      %v1443 = vpop.f32.mrb[0].mxu0
      %v1444 = vpop.f32.mrb[0].mxu0
      %v1445 = vadd.f32 %v371, %v1444
      %v1446 = vpop.f32.mrb[0].mxu0
      %1447 = vmatprep.mubr.bf16.mxu0 %v894
      %1448 = vmatmul.mubr.bf16.gmra.mrb[0].mxu0 %v893
      %v1449 = vpop.f32.mrb[0].mxu0
      %v1450 = vadd.f32 %v371, %v1449
      %v1451 = vpop.f32.mrb[0].mxu0
      %v1452 = vpop.f32.mrb[0].mxu0
      %v1453 = vadd.f32 %v371, %v1452
      %v1454 = vpop.f32.mrb[0].mxu0
      %1455 = vmatprep.mubr.bf16.mxu0 %v896
      %1456 = vmatmul.mubr.bf16.gmra.mrb[0].mxu0 %v895
      %v1457 = vpop.f32.mrb[0].mxu0
      %v1458 = vadd.f32 %v371, %v1457
      %v1459 = vpop.f32.mrb[0].mxu0
      %v1460 = vpop.f32.mrb[0].mxu0
      %v1461 = vadd.f32 %v371, %v1460
      %v1462 = vpop.f32.mrb[0].mxu0
      %1463 = vmatprep.mubr.bf16.mxu0 %v898
      %1464 = vmatmul.mubr.bf16.gmra.mrb[0].mxu0 %v897
      %v1465 = vpop.f32.mrb[0].mxu0
      %v1466 = vadd.f32 %v371, %v1465
      %v1467 = vpop.f32.mrb[0].mxu0
      %v1468 = vpop.f32.mrb[0].mxu0
      %v1469 = vadd.f32 %v371, %v1468
      %v1470 = vpop.f32.mrb[0].mxu0
      %1471 = vmatprep.mubr.bf16.mxu0 %v900
      %1472 = vmatmul.mubr.bf16.gmra.mrb[0].mxu0 %v899
      %v1473 = vpop.f32.mrb[0].mxu0
      %v1474 = vadd.f32 %v371, %v1473
      %v1475 = vpop.f32.mrb[0].mxu0
      %v1476 = vpop.f32.mrb[0].mxu0
      %v1477 = vadd.f32 %v371, %v1476
      %v1478 = vpop.f32.mrb[0].mxu0
      %1479 = vmatprep.mubr.bf16.mxu0 %v902
      %1480 = vmatmul.mubr.bf16.gmra.mrb[0].mxu0 %v901
      %v1481 = vpop.f32.mrb[0].mxu0
      %v1482 = vadd.f32 %v371, %v1481
      %v1483 = vpop.f32.mrb[0].mxu0
      %v1484 = vpop.f32.mrb[0].mxu0
      %v1485 = vadd.f32 %v371, %v1484
      %v1486 = vpop.f32.mrb[0].mxu0
      %1487 = vmatprep.mubr.bf16.mxu0 %v904
      %1488 = vmatmul.mubr.bf16.gmra.mrb[0].mxu0 %v903
      %v1489 = vpop.f32.mrb[0].mxu0
      %v1490 = vadd.f32 %v371, %v1489
      %v1491 = vpop.f32.mrb[0].mxu0
      %v1492 = vpop.f32.mrb[0].mxu0
      %v1493 = vadd.f32 %v371, %v1492
      %v1494 = vpop.f32.mrb[0].mxu0
      %1495 = vmatprep.mubr.bf16.mxu0 %v906
      %1496 = vmatmul.mubr.bf16.gmra.mrb[0].mxu0 %v905
      %v1497 = vpop.f32.mrb[0].mxu0
      %v1498 = vadd.f32 %v371, %v1497
      %v1499 = vpop.f32.mrb[0].mxu0
      %v1500 = vpop.f32.mrb[0].mxu0
      %v1501 = vadd.f32 %v371, %v1500
      %v1502 = vpop.f32.mrb[0].mxu0
      %1503 = vmatprep.mubr.bf16.mxu0 %v908
      %1504 = vmatmul.mubr.bf16.gmra.mrb[0].mxu0 %v907
      %v1505 = vpop.f32.mrb[0].mxu0
      %v1506 = vadd.f32 %v371, %v1505
      %v1507 = vpop.f32.mrb[0].mxu0
      %v1508 = vpop.f32.mrb[0].mxu0
      %v1509 = vadd.f32 %v371, %v1508
      %v1510 = vpop.f32.mrb[0].mxu0
      %1511 = vmatprep.mubr.bf16.mxu0 %v910
      %1512 = vmatmul.mubr.bf16.gmra.mrb[0].mxu0 %v909
      %v1513 = vpop.f32.mrb[0].mxu0
      %v1514 = vadd.f32 %v371, %v1513
      %v1515 = vpop.f32.mrb[0].mxu0
      %v1516 = vpop.f32.mrb[0].mxu0
      %v1517 = vadd.f32 %v371, %v1516
      %v1518 = vpop.f32.mrb[0].mxu0
      %1519 = vmatprep.mubr.bf16.mxu0 %v912
      %1520 = vmatmul.mubr.bf16.gmra.mrb[0].mxu0 %v911
      %v1521 = vpop.f32.mrb[0].mxu0
      %v1522 = vadd.f32 %v371, %v1521
      %v1523 = vpop.f32.mrb[0].mxu0
      %v1524 = vpop.f32.mrb[0].mxu0
      %v1525 = vadd.f32 %v371, %v1524
      %v1526 = vpop.f32.mrb[0].mxu0
      %1527 = vmatprep.mubr.bf16.mxu0 %v914
      %1528 = vmatmul.mubr.bf16.gmra.mrb[0].mxu0 %v913
      %v1529 = vpop.f32.mrb[0].mxu0
      %v1530 = vadd.f32 %v371, %v1529
      %v1531 = vpop.f32.mrb[0].mxu0
      %v1532 = vpop.f32.mrb[0].mxu0
      %v1533 = vadd.f32 %v371, %v1532
      %v1534 = vpop.f32.mrb[0].mxu0
      %1535 = vmatprep.mubr.bf16.mxu0 %v916
      %1536 = vmatmul.mubr.bf16.gmra.mrb[0].mxu0 %v915
      %v1537 = vpop.f32.mrb[0].mxu0
      %v1538 = vadd.f32 %v371, %v1537
      %v1539 = vpop.f32.mrb[0].mxu0
      %v1540 = vpop.f32.mrb[0].mxu0
      %v1541 = vadd.f32 %v371, %v1540
      %v1542 = vpop.f32.mrb[0].mxu0
      %1543 = vmatprep.mubr.bf16.mxu0 %v918
      %1544 = vmatmul.mubr.bf16.gmra.mrb[0].mxu0 %v917
      %v1545 = vpop.f32.mrb[0].mxu0
      %v1546 = vadd.f32 %v371, %v1545
      %v1547 = vpop.f32.mrb[0].mxu0
      %v1548 = vpop.f32.mrb[0].mxu0
      %v1549 = vadd.f32 %v371, %v1548
      %v1550 = vpop.f32.mrb[0].mxu0
      %1551 = vmatprep.mubr.bf16.mxu0 %v920
      %1552 = vmatmul.mubr.bf16.gmra.mrb[0].mxu0 %v919
      %v1553 = vpop.f32.mrb[0].mxu0
      %v1554 = vadd.f32 %v371, %v1553
      %v1555 = vpop.f32.mrb[0].mxu0
      %v1556 = vpop.f32.mrb[0].mxu0
      %v1557 = vadd.f32 %v371, %v1556
      %v1558 = vpop.f32.mrb[0].mxu0
      %1559 = vmatprep.mubr.bf16.mxu0 %v922
      %1560 = vmatmul.mubr.bf16.gmra.mrb[0].mxu0 %v921
      %v1561 = vpop.f32.mrb[0].mxu0
      %v1562 = vadd.f32 %v371, %v1561
      %v1563 = vpop.f32.mrb[0].mxu0
      %v1564 = vpop.f32.mrb[0].mxu0
      %v1565 = vadd.f32 %v371, %v1564
      %v1566 = vpop.f32.mrb[0].mxu0
      %1567 = vmatprep.mubr.bf16.mxu0 %v924
      %1568 = vmatmul.mubr.bf16.gmra.mrb[0].mxu0 %v923
      %v1569 = vpop.f32.mrb[0].mxu0
      %v1570 = vadd.f32 %v371, %v1569
      %v1571 = vpop.f32.mrb[0].mxu0
      %v1572 = vpop.f32.mrb[0].mxu0
      %v1573 = vadd.f32 %v371, %v1572
      %v1574 = vpop.f32.mrb[0].mxu0
      %1575 = vmatprep.mubr.bf16.mxu0 %v926
      %1576 = vmatmul.mubr.bf16.gmra.mrb[0].mxu0 %v925
      %v1577 = vpop.f32.mrb[0].mxu0
      %v1578 = vadd.f32 %v371, %v1577
      %v1579 = vpop.f32.mrb[0].mxu0
      %v1580 = vpop.f32.mrb[0].mxu0
      %v1581 = vadd.f32 %v371, %v1580
      %v1582 = vpop.f32.mrb[0].mxu0
      %1583 = vmatprep.mubr.bf16.mxu0 %v928
      %1584 = vmatmul.mubr.bf16.gmra.mrb[0].mxu0 %v927
      %v1585 = vpop.f32.mrb[0].mxu0
      %v1586 = vadd.f32 %v371, %v1585
      %v1587 = vpop.f32.mrb[0].mxu0
      %v1588 = vpop.f32.mrb[0].mxu0
      %v1589 = vadd.f32 %v371, %v1588
      %v1590 = vpop.f32.mrb[0].mxu0
      %1591 = vmatprep.mubr.bf16.mxu0 %v930
      %1592 = vmatmul.mubr.bf16.gmra.mrb[0].mxu0 %v929
      %v1593 = vpop.f32.mrb[0].mxu0
      %v1594 = vadd.f32 %v371, %v1593
      %v1595 = vpop.f32.mrb[0].mxu0
      %v1596 = vpop.f32.mrb[0].mxu0
      %v1597 = vadd.f32 %v371, %v1596
      %v1598 = vpop.f32.mrb[0].mxu0
      %1599 = vmatprep.mubr.bf16.mxu0 %v932
      %1600 = vmatmul.mubr.bf16.gmra.mrb[0].mxu0 %v931
      %v1601 = vpop.f32.mrb[0].mxu0
      %v1602 = vadd.f32 %v371, %v1601
      %v1603 = vpop.f32.mrb[0].mxu0
      %v1604 = vpop.f32.mrb[0].mxu0
      %v1605 = vadd.f32 %v371, %v1604
      %v1606 = vpop.f32.mrb[0].mxu0
      %1607 = vmatprep.mubr.bf16.mxu0 %v934
      %1608 = vmatmul.mubr.bf16.gmra.mrb[0].mxu0 %v933
      %v1609 = vpop.f32.mrb[0].mxu0
      %v1610 = vadd.f32 %v371, %v1609
      %v1611 = vpop.f32.mrb[0].mxu0
      %v1612 = vpop.f32.mrb[0].mxu0
      %v1613 = vadd.f32 %v371, %v1612
      %v1614 = vpop.f32.mrb[0].mxu0
      %1615 = vmatprep.mubr.bf16.mxu0 %v936
      %1616 = vmatmul.mubr.bf16.gmra.mrb[0].mxu0 %v935
      %v1617 = vpop.f32.mrb[0].mxu0
      %v1618 = vadd.f32 %v371, %v1617
      %v1619 = vpop.f32.mrb[0].mxu0
      %v1620 = vpop.f32.mrb[0].mxu0
      %v1621 = vadd.f32 %v371, %v1620
      %v1622 = vpop.f32.mrb[0].mxu0
      %1623 = vmatprep.mubr.bf16.mxu0 %v938
      %1624 = vmatmul.mubr.bf16.gmra.mrb[0].mxu0 %v937
      %v1625 = vpop.f32.mrb[0].mxu0
      %v1626 = vadd.f32 %v371, %v1625
      %v1627 = vpop.f32.mrb[0].mxu0
      %v1628 = vpop.f32.mrb[0].mxu0
      %v1629 = vadd.f32 %v371, %v1628
      %v1630 = vpop.f32.mrb[0].mxu0
      %1631 = vmatprep.mubr.bf16.mxu0 %v940
      %1632 = vmatmul.mubr.bf16.gmra.mrb[0].mxu0 %v939
      %v1633 = vpop.f32.mrb[0].mxu0
      %v1634 = vadd.f32 %v371, %v1633
      %v1635 = vpop.f32.mrb[0].mxu0
      %v1636 = vpop.f32.mrb[0].mxu0
      %v1637 = vadd.f32 %v371, %v1636
      %v1638 = vpop.f32.mrb[0].mxu0
      %1639 = vmatprep.mubr.bf16.mxu0 %v942
      %1640 = vmatmul.mubr.bf16.gmra.mrb[0].mxu0 %v941
      %v1641 = vpop.f32.mrb[0].mxu0
      %v1642 = vadd.f32 %v371, %v1641
      %v1643 = vpop.f32.mrb[0].mxu0
      %v1644 = vpop.f32.mrb[0].mxu0
      %v1645 = vadd.f32 %v371, %v1644
      %v1646 = vpop.f32.mrb[0].mxu0
      %1647 = vmatprep.mubr.bf16.mxu0 %v944
      %1648 = vmatmul.mubr.bf16.gmra.mrb[0].mxu0 %v943
      %v1649 = vpop.f32.mrb[0].mxu0
      %v1650 = vadd.f32 %v371, %v1649
      %v1651 = vpop.f32.mrb[0].mxu0
      %v1652 = vpop.f32.mrb[0].mxu0
      %v1653 = vadd.f32 %v371, %v1652
      %v1654 = vpop.f32.mrb[0].mxu0
      %1655 = vmatprep.mubr.bf16.mxu0 %v946
      %1656 = vmatmul.mubr.bf16.gmra.mrb[0].mxu0 %v945
      %v1657 = vpop.f32.mrb[0].mxu0
      %v1658 = vadd.f32 %v371, %v1657
      %v1659 = vpop.f32.mrb[0].mxu0
      %v1660 = vpop.f32.mrb[0].mxu0
      %v1661 = vadd.f32 %v371, %v1660
      %v1662 = vpop.f32.mrb[0].mxu0
      %1663 = vmatprep.mubr.bf16.mxu0 %v948
      %1664 = vmatmul.mubr.bf16.gmra.mrb[0].mxu0 %v947
      %v1665 = vpop.f32.mrb[0].mxu0
      %v1666 = vadd.f32 %v371, %v1665
      %v1667 = vpop.f32.mrb[0].mxu0
      %v1668 = vpop.f32.mrb[0].mxu0
      %v1669 = vadd.f32 %v371, %v1668
      %v1670 = vpop.f32.mrb[0].mxu0
      %1671 = vmatprep.mubr.bf16.mxu0 %v950
      %1672 = vmatmul.mubr.bf16.gmra.mrb[0].mxu0 %v949
      %v1673 = vpop.f32.mrb[0].mxu0
      %v1674 = vadd.f32 %v371, %v1673
      %v1675 = vpop.f32.mrb[0].mxu0
      %v1676 = vpop.f32.mrb[0].mxu0
      %v1677 = vadd.f32 %v371, %v1676
      %v1678 = vpop.f32.mrb[0].mxu0
      %1679 = vmatprep.mubr.bf16.mxu0 %v952
      %1680 = vmatmul.mubr.bf16.gmra.mrb[0].mxu0 %v951
      %v1681 = vpop.f32.mrb[0].mxu0
      %v1682 = vadd.f32 %v371, %v1681
      %v1683 = vpop.f32.mrb[0].mxu0
      %v1684 = vpop.f32.mrb[0].mxu0
      %v1685 = vadd.f32 %v371, %v1684
      %v1686 = vpop.f32.mrb[0].mxu0
      %1687 = vmatprep.mubr.bf16.mxu0 %v954
      %1688 = vmatmul.mubr.bf16.gmra.mrb[0].mxu0 %v953
      %v1689 = vpop.f32.mrb[0].mxu0
      %v1690 = vadd.f32 %v371, %v1689
      %v1691 = vpop.f32.mrb[0].mxu0
      %v1692 = vpop.f32.mrb[0].mxu0
      %v1693 = vadd.f32 %v371, %v1692
      %v1694 = vpop.f32.mrb[0].mxu0
      %1695 = vmatprep.mubr.bf16.mxu0 %v956
      %1696 = vmatmul.mubr.bf16.gmra.mrb[0].mxu0 %v955
      %v1697 = vpop.f32.mrb[0].mxu0
      %v1698 = vadd.f32 %v371, %v1697
      %v1699 = vpop.f32.mrb[0].mxu0
      %v1700 = vpop.f32.mrb[0].mxu0
      %v1701 = vadd.f32 %v371, %v1700
      %v1702 = vpop.f32.mrb[0].mxu0
      %1703 = vmatprep.mubr.bf16.mxu0 %v958
      %1704 = vmatmul.mubr.bf16.gmra.mrb[0].mxu0 %v957
      %v1705 = vpop.f32.mrb[0].mxu0
      %v1706 = vadd.f32 %v371, %v1705
      %v1707 = vpop.f32.mrb[0].mxu0
      %v1708 = vpop.f32.mrb[0].mxu0
      %v1709 = vadd.f32 %v371, %v1708
      %v1710 = vpop.f32.mrb[0].mxu0
      %1711 = vmatprep.mubr.bf16.mxu0 %v960
      %1712 = vmatmul.mubr.bf16.gmra.mrb[0].mxu0 %v959
      %v1713 = vpop.f32.mrb[0].mxu0
      %v1714 = vadd.f32 %v371, %v1713
      %v1715 = vpop.f32.mrb[0].mxu0
      %v1716 = vpop.f32.mrb[0].mxu0
      %v1717 = vadd.f32 %v371, %v1716
      %v1718 = vpop.f32.mrb[0].mxu0
      %1719 = vmatprep.mubr.bf16.mxu0 %v962
      %1720 = vmatmul.mubr.bf16.gmra.mrb[0].mxu0 %v961
      %v1721 = vpop.f32.mrb[0].mxu0
      %v1722 = vadd.f32 %v371, %v1721
      %v1723 = vpop.f32.mrb[0].mxu0
      %v1724 = vpop.f32.mrb[0].mxu0
      %v1725 = vadd.f32 %v371, %v1724
      %v1726 = vpop.f32.mrb[0].mxu0
      %1727 = vmatprep.mubr.bf16.mxu0 %v964
      %1728 = vmatmul.mubr.bf16.gmra.mrb[0].mxu0 %v963
      %v1729 = vpop.f32.mrb[0].mxu0
      %v1730 = vadd.f32 %v371, %v1729
      %v1731 = vpop.f32.mrb[0].mxu0
      %v1732 = vpop.f32.mrb[0].mxu0
      %v1733 = vadd.f32 %v371, %v1732
      %v1734 = vpop.f32.mrb[0].mxu0
      %1735 = vmatprep.mubr.bf16.mxu0 %v966
      %1736 = vmatmul.mubr.bf16.gmra.mrb[0].mxu0 %v965
      %v1737 = vpop.f32.mrb[0].mxu0
      %v1738 = vadd.f32 %v371, %v1737
      %v1739 = vpop.f32.mrb[0].mxu0
      %v1740 = vpop.f32.mrb[0].mxu0
      %v1741 = vadd.f32 %v371, %v1740
      %v1742 = vpop.f32.mrb[0].mxu0
      %1743 = vmatprep.mubr.bf16.mxu0 %v968
      %1744 = vmatmul.mubr.bf16.gmra.mrb[0].mxu0 %v967
      %v1745 = vpop.f32.mrb[0].mxu0
      %v1746 = vadd.f32 %v371, %v1745
      %v1747 = vpop.f32.mrb[0].mxu0
      %v1748 = vpop.f32.mrb[0].mxu0
      %v1749 = vadd.f32 %v371, %v1748
      %v1750 = vpop.f32.mrb[0].mxu0
      %1751 = vmatprep.mubr.bf16.mxu0 %v970
      %1752 = vmatmul.mubr.bf16.gmra.mrb[0].mxu0 %v969
      %v1753 = vpop.f32.mrb[0].mxu0
      %v1754 = vadd.f32 %v371, %v1753
      %v1755 = vpop.f32.mrb[0].mxu0
      %v1756 = vpop.f32.mrb[0].mxu0
      %v1757 = vadd.f32 %v371, %v1756
      %v1758 = vpop.f32.mrb[0].mxu0
      %1759 = vmatprep.mubr.bf16.mxu0 %v972
      %1760 = vmatmul.mubr.bf16.gmra.mrb[0].mxu0 %v971
      %v1761 = vpop.f32.mrb[0].mxu0
      %v1762 = vadd.f32 %v371, %v1761
      %v1763 = vpop.f32.mrb[0].mxu0
      %v1764 = vpop.f32.mrb[0].mxu0
      %v1765 = vadd.f32 %v371, %v1764
      %v1766 = vpop.f32.mrb[0].mxu0
      %1767 = vmatprep.mubr.bf16.mxu0 %v974
      %1768 = vmatmul.mubr.bf16.gmra.mrb[0].mxu0 %v973
      %v1769 = vpop.f32.mrb[0].mxu0
      %v1770 = vadd.f32 %v371, %v1769
      %v1771 = vpop.f32.mrb[0].mxu0
      %v1772 = vpop.f32.mrb[0].mxu0
      %v1773 = vadd.f32 %v371, %v1772
      %v1774 = vpop.f32.mrb[0].mxu0
      %1775 = vmatprep.mubr.bf16.mxu0 %v976
      %1776 = vmatmul.mubr.bf16.gmra.mrb[0].mxu0 %v975
      %v1777 = vpop.f32.mrb[0].mxu0
      %v1778 = vadd.f32 %v371, %v1777
      %v1779 = vpop.f32.mrb[0].mxu0
      %v1780 = vpop.f32.mrb[0].mxu0
      %v1781 = vadd.f32 %v371, %v1780
      %v1782 = vpop.f32.mrb[0].mxu0
      %1783 = vmatprep.mubr.bf16.mxu0 %v978
      %1784 = vmatmul.mubr.bf16.gmra.mrb[0].mxu0 %v977
      %v1785 = vpop.f32.mrb[0].mxu0
      %v1786 = vadd.f32 %v371, %v1785
      %v1787 = vpop.f32.mrb[0].mxu0
      %v1788 = vpop.f32.mrb[0].mxu0
      %v1789 = vadd.f32 %v371, %v1788
      %v1790 = vpop.f32.mrb[0].mxu0
      %1791 = vmatprep.mubr.bf16.mxu0 %v980
      %1792 = vmatmul.mubr.bf16.gmra.mrb[0].mxu0 %v979
      %v1793 = vpop.f32.mrb[0].mxu0
      %v1794 = vadd.f32 %v371, %v1793
      %v1795 = vpop.f32.mrb[0].mxu0
      %v1796 = vpop.f32.mrb[0].mxu0
      %v1797 = vadd.f32 %v371, %v1796
      %v1798 = vpop.f32.mrb[0].mxu0
      %1799 = vmatprep.mubr.bf16.mxu0 %v982
      %1800 = vmatmul.mubr.bf16.gmra.mrb[0].mxu0 %v981
      %v1801 = vpop.f32.mrb[0].mxu0
      %v1802 = vadd.f32 %v371, %v1801
      %v1803 = vpop.f32.mrb[0].mxu0
      %v1804 = vpop.f32.mrb[0].mxu0
      %v1805 = vadd.f32 %v371, %v1804
      %v1806 = vpop.f32.mrb[0].mxu0
      %1807 = vmatprep.mubr.bf16.mxu0 %v984
      %1808 = vmatmul.mubr.bf16.gmra.mrb[0].mxu0 %v983
      %v1809 = vpop.f32.mrb[0].mxu0
      %v1810 = vadd.f32 %v371, %v1809
      %v1811 = vpop.f32.mrb[0].mxu0
      %v1812 = vpop.f32.mrb[0].mxu0
      %v1813 = vadd.f32 %v371, %v1812
      %v1814 = vpop.f32.mrb[0].mxu0
      %1815 = vmatprep.mubr.bf16.mxu0 %v986
      %1816 = vmatmul.mubr.bf16.gmra.mrb[0].mxu0 %v985
      %v1817 = vpop.f32.mrb[0].mxu0
      %v1818 = vadd.f32 %v371, %v1817
      %v1819 = vpop.f32.mrb[0].mxu0
      %v1820 = vpop.f32.mrb[0].mxu0
      %v1821 = vadd.f32 %v371, %v1820
      %v1822 = vpop.f32.mrb[0].mxu0
      %1823 = vmatprep.mubr.bf16.mxu0 %v988
      %1824 = vmatmul.mubr.bf16.gmra.mrb[0].mxu0 %v987
      %v1825 = vpop.f32.mrb[0].mxu0
      %v1826 = vadd.f32 %v371, %v1825
      %v1827 = vpop.f32.mrb[0].mxu0
      %v1828 = vpop.f32.mrb[0].mxu0
      %v1829 = vadd.f32 %v371, %v1828
      %v1830 = vpop.f32.mrb[0].mxu0
      %1831 = vmatprep.mubr.bf16.mxu0 %v990
      %1832 = vmatmul.mubr.bf16.gmra.mrb[0].mxu0 %v989
      %v1833 = vpop.f32.mrb[0].mxu0
      %v1834 = vadd.f32 %v371, %v1833
      %v1835 = vpop.f32.mrb[0].mxu0
      %v1836 = vpop.f32.mrb[0].mxu0
      %v1837 = vadd.f32 %v371, %v1836
      %v1838 = vpop.f32.mrb[0].mxu0
      %1839 = vmatprep.mubr.bf16.mxu0 %v992
      %1840 = vmatmul.mubr.bf16.gmra.mrb[0].mxu0 %v991
      %v1841 = vpop.f32.mrb[0].mxu0
      %v1842 = vadd.f32 %v371, %v1841
      %v1843 = vpop.f32.mrb[0].mxu0
      %v1844 = vpop.f32.mrb[0].mxu0
      %v1845 = vadd.f32 %v371, %v1844
      %v1846 = vpop.f32.mrb[0].mxu0
      %1847 = vmatprep.mubr.bf16.mxu0 %v994
      %1848 = vmatmul.mubr.bf16.gmra.mrb[0].mxu0 %v993
      %v1849 = vpop.f32.mrb[0].mxu0
      %v1850 = vadd.f32 %v371, %v1849
      %v1851 = vpop.f32.mrb[0].mxu0
      %v1852 = vpop.f32.mrb[0].mxu0
      %v1853 = vadd.f32 %v371, %v1852
      %v1854 = vpop.f32.mrb[0].mxu0
      %1855 = vmatprep.mubr.bf16.mxu0 %v996
      %1856 = vmatmul.mubr.bf16.gmra.mrb[0].mxu0 %v995
      %v1857 = vpop.f32.mrb[0].mxu0
      %v1858 = vadd.f32 %v371, %v1857
      %v1859 = vpop.f32.mrb[0].mxu0
      %v1860 = vpop.f32.mrb[0].mxu0
      %v1861 = vadd.f32 %v371, %v1860
      %v1862 = vpop.f32.mrb[0].mxu0
      %1863 = vmatprep.mubr.bf16.mxu0 %v998
      %1864 = vmatmul.mubr.bf16.gmra.mrb[0].mxu0 %v997
      %v1865 = vpop.f32.mrb[0].mxu0
      %v1866 = vadd.f32 %v371, %v1865
      %v1867 = vpop.f32.mrb[0].mxu0
      %v1868 = vpop.f32.mrb[0].mxu0
      %v1869 = vadd.f32 %v371, %v1868
      %v1870 = vpop.f32.mrb[0].mxu0
      %1871 = vmatprep.mubr.bf16.mxu0 %v1000
      %1872 = vmatmul.mubr.bf16.gmra.mrb[0].mxu0 %v999
      %v1873 = vpop.f32.mrb[0].mxu0
      %v1874 = vadd.f32 %v371, %v1873
      %v1875 = vpop.f32.mrb[0].mxu0
      %v1876 = vpop.f32.mrb[0].mxu0
      %v1877 = vadd.f32 %v371, %v1876
      %v1878 = vpop.f32.mrb[0].mxu0
      %1879 = vmatprep.mubr.bf16.mxu0 %v1002
      %1880 = vmatmul.mubr.bf16.gmra.mrb[0].mxu0 %v1001
      %v1881 = vpop.f32.mrb[0].mxu0
      %v1882 = vadd.f32 %v371, %v1881
      %v1883 = vpop.f32.mrb[0].mxu0
      %v1884 = vpop.f32.mrb[0].mxu0
      %v1885 = vadd.f32 %v371, %v1884
      %v1886 = vpop.f32.mrb[0].mxu0
      %1887 = vmatprep.mubr.bf16.mxu0 %v1004
      %1888 = vmatmul.mubr.bf16.gmra.mrb[0].mxu0 %v1003
      %v1889 = vpop.f32.mrb[0].mxu0
      %v1890 = vadd.f32 %v371, %v1889
      %v1891 = vpop.f32.mrb[0].mxu0
      %v1892 = vpop.f32.mrb[0].mxu0
      %v1893 = vadd.f32 %v371, %v1892
      %v1894 = vpop.f32.mrb[0].mxu0
      %1895 = vmatprep.mubr.bf16.mxu0 %v1006
      %1896 = vmatmul.mubr.bf16.gmra.mrb[0].mxu0 %v1005
      %v1897 = vpop.f32.mrb[0].mxu0
      %v1898 = vadd.f32 %v371, %v1897
      %v1899 = vpop.f32.mrb[0].mxu0
      %v1900 = vpop.f32.mrb[0].mxu0
      %v1901 = vadd.f32 %v371, %v1900
      %v1902 = vpop.f32.mrb[0].mxu0
      %1903 = vmatprep.mubr.bf16.mxu0 %v1008
      %1904 = vmatmul.mubr.bf16.gmra.mrb[0].mxu0 %v1007
      %v1905 = vpop.f32.mrb[0].mxu0
      %v1906 = vadd.f32 %v371, %v1905
      %v1907 = vpop.f32.mrb[0].mxu0
      %v1908 = vpop.f32.mrb[0].mxu0
      %v1909 = vadd.f32 %v371, %v1908
      %v1910 = vpop.f32.mrb[0].mxu0
      %1911 = vmatprep.mubr.bf16.mxu0 %v1010
      %1912 = vmatmul.mubr.bf16.gmra.mrb[0].mxu0 %v1009
      %v1913 = vpop.f32.mrb[0].mxu0
      %v1914 = vadd.f32 %v371, %v1913
      %v1915 = vpop.f32.mrb[0].mxu0
      %v1916 = vpop.f32.mrb[0].mxu0
      %v1917 = vadd.f32 %v371, %v1916
      %v1918 = vpop.f32.mrb[0].mxu0
      %1919 = vmatprep.mubr.bf16.mxu0 %v1012
      %1920 = vmatmul.mubr.bf16.gmra.mrb[0].mxu0 %v1011
      %v1921 = vpop.f32.mrb[0].mxu0
      %v1922 = vadd.f32 %v371, %v1921
      %v1923 = vpop.f32.mrb[0].mxu0
      %v1924 = vpop.f32.mrb[0].mxu0
      %v1925 = vadd.f32 %v371, %v1924
      %v1926 = vpop.f32.mrb[0].mxu0
      %1927 = vmatprep.mubr.bf16.mxu0 %v1014
      %1928 = vmatmul.mubr.bf16.gmra.mrb[0].mxu0 %v1013
      %v1929 = vpop.f32.mrb[0].mxu0
      %v1930 = vadd.f32 %v371, %v1929
      %v1931 = vpop.f32.mrb[0].mxu0
      %v1932 = vpop.f32.mrb[0].mxu0
      %v1933 = vadd.f32 %v371, %v1932
      %v1934 = vpop.f32.mrb[0].mxu0
      %1935 = vmatprep.mubr.bf16.mxu0 %v1016
      %1936 = vmatmul.mubr.bf16.gmra.mrb[0].mxu0 %v1015
      %v1937 = vpop.f32.mrb[0].mxu0
      %v1938 = vadd.f32 %v371, %v1937
      %v1939 = vpop.f32.mrb[0].mxu0
      %v1940 = vpop.f32.mrb[0].mxu0
      %v1941 = vadd.f32 %v371, %v1940
      %v1942 = vpop.f32.mrb[0].mxu0
      %1943 = vmatprep.mubr.bf16.mxu0 %v1018
      %1944 = vmatmul.mubr.bf16.gmra.mrb[0].mxu0 %v1017
      %v1945 = vpop.f32.mrb[0].mxu0
      %v1946 = vadd.f32 %v371, %v1945
      %v1947 = vpop.f32.mrb[0].mxu0
      %v1948 = vpop.f32.mrb[0].mxu0
      %v1949 = vadd.f32 %v371, %v1948
      %v1950 = vpop.f32.mrb[0].mxu0
      %1951 = vmatprep.mubr.bf16.mxu0 %v1020
      %1952 = vmatmul.mubr.bf16.gmra.mrb[0].mxu0 %v1019
      %v1953 = vpop.f32.mrb[0].mxu0
      %v1954 = vadd.f32 %v371, %v1953
      %v1955 = vpop.f32.mrb[0].mxu0
      %v1956 = vpop.f32.mrb[0].mxu0
      %v1957 = vadd.f32 %v371, %v1956
      %v1958 = vpop.f32.mrb[0].mxu0
      %1959 = vdwg.mxu0
      %v1960 = vmax.f32 %v1314, 0.0
      %v1961 = vmax.f32 %v1317, 0.0
      %v1962 = vmax.f32 %v1322, 0.0
      %v1963 = vmax.f32 %v1325, 0.0
      %v1964 = vmax.f32 %v1330, 0.0
      %v1965 = vmax.f32 %v1333, 0.0
      %v1966 = vmax.f32 %v1338, 0.0
      %v1967 = vmax.f32 %v1341, 0.0
      %v1968 = vmax.f32 %v1346, 0.0
      %v1969 = vmax.f32 %v1349, 0.0
      %v1970 = vmax.f32 %v1354, 0.0
      %v1971 = vmax.f32 %v1357, 0.0
      %v1972 = vmax.f32 %v1362, 0.0
      %v1973 = vmax.f32 %v1365, 0.0
      %v1974 = vmax.f32 %v1370, 0.0
      %v1975 = vmax.f32 %v1373, 0.0
      %v1976 = vmax.f32 %v1378, 0.0
      %v1977 = vmax.f32 %v1381, 0.0
      %v1978 = vmax.f32 %v1386, 0.0
      %v1979 = vmax.f32 %v1389, 0.0
      %v1980 = vmax.f32 %v1394, 0.0
      %v1981 = vmax.f32 %v1397, 0.0
      %v1982 = vmax.f32 %v1402, 0.0
      %v1983 = vmax.f32 %v1405, 0.0
      %v1984 = vmax.f32 %v1410, 0.0
      %v1985 = vmax.f32 %v1413, 0.0
      %v1986 = vmax.f32 %v1418, 0.0
      %v1987 = vmax.f32 %v1421, 0.0
      %v1988 = vmax.f32 %v1426, 0.0
      %v1989 = vmax.f32 %v1429, 0.0
      %v1990 = vmax.f32 %v1434, 0.0
      %v1991 = vmax.f32 %v1437, 0.0
      %v1992 = vmax.f32 %v1442, 0.0
      %v1993 = vmax.f32 %v1445, 0.0
      %v1994 = vmax.f32 %v1450, 0.0
      %v1995 = vmax.f32 %v1453, 0.0
      %v1996 = vmax.f32 %v1458, 0.0
      %v1997 = vmax.f32 %v1461, 0.0
      %v1998 = vmax.f32 %v1466, 0.0
      %v1999 = vmax.f32 %v1469, 0.0
      %v2000 = vmax.f32 %v1474, 0.0
      %v2001 = vmax.f32 %v1477, 0.0
      %v2002 = vmax.f32 %v1482, 0.0
      %v2003 = vmax.f32 %v1485, 0.0
      %v2004 = vmax.f32 %v1490, 0.0
      %v2005 = vmax.f32 %v1493, 0.0
      %v2006 = vmax.f32 %v1498, 0.0
      %v2007 = vmax.f32 %v1501, 0.0
      %v2008 = vmax.f32 %v1506, 0.0
      %v2009 = vmax.f32 %v1509, 0.0
      %v2010 = vmax.f32 %v1514, 0.0
      %v2011 = vmax.f32 %v1517, 0.0
      %v2012 = vmax.f32 %v1522, 0.0
      %v2013 = vmax.f32 %v1525, 0.0
      %v2014 = vmax.f32 %v1530, 0.0
      %v2015 = vmax.f32 %v1533, 0.0
      %v2016 = vmax.f32 %v1538, 0.0
      %v2017 = vmax.f32 %v1541, 0.0
      %v2018 = vmax.f32 %v1546, 0.0
      %v2019 = vmax.f32 %v1549, 0.0
      %v2020 = vmax.f32 %v1554, 0.0
      %v2021 = vmax.f32 %v1557, 0.0
      %v2022 = vmax.f32 %v1562, 0.0
      %v2023 = vmax.f32 %v1565, 0.0
      %v2024 = vmax.f32 %v1570, 0.0
      %v2025 = vmax.f32 %v1573, 0.0
      %v2026 = vmax.f32 %v1578, 0.0
      %v2027 = vmax.f32 %v1581, 0.0
      %v2028 = vmax.f32 %v1586, 0.0
      %v2029 = vmax.f32 %v1589, 0.0
      %v2030 = vmax.f32 %v1594, 0.0
      %v2031 = vmax.f32 %v1597, 0.0
      %v2032 = vmax.f32 %v1602, 0.0
      %v2033 = vmax.f32 %v1605, 0.0
      %v2034 = vmax.f32 %v1610, 0.0
      %v2035 = vmax.f32 %v1613, 0.0
      %v2036 = vmax.f32 %v1618, 0.0
      %v2037 = vmax.f32 %v1621, 0.0
      %v2038 = vmax.f32 %v1626, 0.0
      %v2039 = vmax.f32 %v1629, 0.0
      %v2040 = vmax.f32 %v1634, 0.0
      %v2041 = vmax.f32 %v1637, 0.0
      %v2042 = vmax.f32 %v1642, 0.0
      %v2043 = vmax.f32 %v1645, 0.0
      %v2044 = vmax.f32 %v1650, 0.0
      %v2045 = vmax.f32 %v1653, 0.0
      %v2046 = vmax.f32 %v1658, 0.0
      %v2047 = vmax.f32 %v1661, 0.0
      %v2048 = vmax.f32 %v1666, 0.0
      %v2049 = vmax.f32 %v1669, 0.0
      %v2050 = vmax.f32 %v1674, 0.0
      %v2051 = vmax.f32 %v1677, 0.0
      %v2052 = vmax.f32 %v1682, 0.0
      %v2053 = vmax.f32 %v1685, 0.0
      %v2054 = vmax.f32 %v1690, 0.0
      %v2055 = vmax.f32 %v1693, 0.0
      %v2056 = vmax.f32 %v1698, 0.0
      %v2057 = vmax.f32 %v1701, 0.0
      %v2058 = vmax.f32 %v1706, 0.0
      %v2059 = vmax.f32 %v1709, 0.0
      %v2060 = vmax.f32 %v1714, 0.0
      %v2061 = vmax.f32 %v1717, 0.0
      %v2062 = vmax.f32 %v1722, 0.0
      %v2063 = vmax.f32 %v1725, 0.0
      %v2064 = vmax.f32 %v1730, 0.0
      %v2065 = vmax.f32 %v1733, 0.0
      %v2066 = vmax.f32 %v1738, 0.0
      %v2067 = vmax.f32 %v1741, 0.0
      %v2068 = vmax.f32 %v1746, 0.0
      %v2069 = vmax.f32 %v1749, 0.0
      %v2070 = vmax.f32 %v1754, 0.0
      %v2071 = vmax.f32 %v1757, 0.0
      %v2072 = vmax.f32 %v1762, 0.0
      %v2073 = vmax.f32 %v1765, 0.0
      %v2074 = vmax.f32 %v1770, 0.0
      %v2075 = vmax.f32 %v1773, 0.0
      %v2076 = vmax.f32 %v1778, 0.0
      %v2077 = vmax.f32 %v1781, 0.0
      %v2078 = vmax.f32 %v1786, 0.0
      %v2079 = vmax.f32 %v1789, 0.0
      %v2080 = vmax.f32 %v1794, 0.0
      %v2081 = vmax.f32 %v1797, 0.0
      %v2082 = vmax.f32 %v1802, 0.0
      %v2083 = vmax.f32 %v1805, 0.0
      %v2084 = vmax.f32 %v1810, 0.0
      %v2085 = vmax.f32 %v1813, 0.0
      %v2086 = vmax.f32 %v1818, 0.0
      %v2087 = vmax.f32 %v1821, 0.0
      %v2088 = vmax.f32 %v1826, 0.0
      %v2089 = vmax.f32 %v1829, 0.0
      %v2090 = vmax.f32 %v1834, 0.0
      %v2091 = vmax.f32 %v1837, 0.0
      %v2092 = vmax.f32 %v1842, 0.0
      %v2093 = vmax.f32 %v1845, 0.0
      %v2094 = vmax.f32 %v1850, 0.0
      %v2095 = vmax.f32 %v1853, 0.0
      %v2096 = vmax.f32 %v1858, 0.0
      %v2097 = vmax.f32 %v1861, 0.0
      %v2098 = vmax.f32 %v1866, 0.0
      %v2099 = vmax.f32 %v1869, 0.0
      %v2100 = vmax.f32 %v1874, 0.0
      %v2101 = vmax.f32 %v1877, 0.0
      %v2102 = vmax.f32 %v1882, 0.0
      %v2103 = vmax.f32 %v1885, 0.0
      %v2104 = vmax.f32 %v1890, 0.0
      %v2105 = vmax.f32 %v1893, 0.0
      %v2106 = vmax.f32 %v1898, 0.0
      %v2107 = vmax.f32 %v1901, 0.0
      %v2108 = vmax.f32 %v1906, 0.0
      %v2109 = vmax.f32 %v1909, 0.0
      %v2110 = vmax.f32 %v1914, 0.0
      %v2111 = vmax.f32 %v1917, 0.0
      %v2112 = vmax.f32 %v1922, 0.0
      %v2113 = vmax.f32 %v1925, 0.0
      %v2114 = vmax.f32 %v1930, 0.0
      %v2115 = vmax.f32 %v1933, 0.0
      %v2116 = vmax.f32 %v1938, 0.0
      %v2117 = vmax.f32 %v1941, 0.0
      %v2118 = vmax.f32 %v1946, 0.0
      %v2119 = vmax.f32 %v1949, 0.0
      %v2120 = vmax.f32 %v1954, 0.0
      %v2121 = vmax.f32 %v1957, 0.0
      %v2122 = vpack.c.bf16 %v1961, %v1960
      %v2123 = vpack.c.bf16 %v1963, %v1962
      %v2124 = vpack.c.bf16 %v1965, %v1964
      %v2125 = vpack.c.bf16 %v1967, %v1966
      %v2126 = vpack.c.bf16 %v1969, %v1968
      %v2127 = vpack.c.bf16 %v1971, %v1970
      %v2128 = vpack.c.bf16 %v1973, %v1972
      %v2129 = vpack.c.bf16 %v1975, %v1974
      %v2130 = vpack.c.bf16 %v1977, %v1976
      %v2131 = vpack.c.bf16 %v1979, %v1978
      %v2132 = vpack.c.bf16 %v1981, %v1980
      %v2133 = vpack.c.bf16 %v1983, %v1982
      %v2134 = vpack.c.bf16 %v1985, %v1984
      %v2135 = vpack.c.bf16 %v1987, %v1986
      %v2136 = vpack.c.bf16 %v1989, %v1988
      %v2137 = vpack.c.bf16 %v1991, %v1990
      %v2138 = vpack.c.bf16 %v1993, %v1992
      %v2139 = vpack.c.bf16 %v1995, %v1994
      %v2140 = vpack.c.bf16 %v1997, %v1996
      %v2141 = vpack.c.bf16 %v1999, %v1998
      %v2142 = vpack.c.bf16 %v2001, %v2000
      %v2143 = vpack.c.bf16 %v2003, %v2002
      %v2144 = vpack.c.bf16 %v2005, %v2004
      %v2145 = vpack.c.bf16 %v2007, %v2006
      %v2146 = vpack.c.bf16 %v2009, %v2008
      %v2147 = vpack.c.bf16 %v2011, %v2010
      %v2148 = vpack.c.bf16 %v2013, %v2012
      %v2149 = vpack.c.bf16 %v2015, %v2014
      %v2150 = vpack.c.bf16 %v2017, %v2016
      %v2151 = vpack.c.bf16 %v2019, %v2018
      %v2152 = vpack.c.bf16 %v2021, %v2020
      %v2153 = vpack.c.bf16 %v2023, %v2022
      %v2154 = vpack.c.bf16 %v2025, %v2024
      %v2155 = vpack.c.bf16 %v2027, %v2026
      %v2156 = vpack.c.bf16 %v2029, %v2028
      %v2157 = vpack.c.bf16 %v2031, %v2030
      %v2158 = vpack.c.bf16 %v2033, %v2032
      %v2159 = vpack.c.bf16 %v2035, %v2034
      %v2160 = vpack.c.bf16 %v2037, %v2036
      %v2161 = vpack.c.bf16 %v2039, %v2038
      %v2162 = vpack.c.bf16 %v2041, %v2040
      %v2163 = vpack.c.bf16 %v2043, %v2042
      %v2164 = vpack.c.bf16 %v2045, %v2044
      %v2165 = vpack.c.bf16 %v2047, %v2046
      %v2166 = vpack.c.bf16 %v2049, %v2048
      %v2167 = vpack.c.bf16 %v2051, %v2050
      %v2168 = vpack.c.bf16 %v2053, %v2052
      %v2169 = vpack.c.bf16 %v2055, %v2054
      %v2170 = vpack.c.bf16 %v2057, %v2056
      %v2171 = vpack.c.bf16 %v2059, %v2058
      %v2172 = vpack.c.bf16 %v2061, %v2060
      %v2173 = vpack.c.bf16 %v2063, %v2062
      %v2174 = vpack.c.bf16 %v2065, %v2064
      %v2175 = vpack.c.bf16 %v2067, %v2066
      %v2176 = vpack.c.bf16 %v2069, %v2068
      %v2177 = vpack.c.bf16 %v2071, %v2070
      %v2178 = vpack.c.bf16 %v2073, %v2072
      %v2179 = vpack.c.bf16 %v2075, %v2074
      %v2180 = vpack.c.bf16 %v2077, %v2076
      %v2181 = vpack.c.bf16 %v2079, %v2078
      %v2182 = vpack.c.bf16 %v2081, %v2080
      %v2183 = vpack.c.bf16 %v2083, %v2082
      %v2184 = vpack.c.bf16 %v2085, %v2084
      %v2185 = vpack.c.bf16 %v2087, %v2086
      %v2186 = vpack.c.bf16 %v2089, %v2088
      %v2187 = vpack.c.bf16 %v2091, %v2090
      %v2188 = vpack.c.bf16 %v2093, %v2092
      %v2189 = vpack.c.bf16 %v2095, %v2094
      %v2190 = vpack.c.bf16 %v2097, %v2096
      %v2191 = vpack.c.bf16 %v2099, %v2098
      %v2192 = vpack.c.bf16 %v2101, %v2100
      %v2193 = vpack.c.bf16 %v2103, %v2102
      %v2194 = vpack.c.bf16 %v2105, %v2104
      %v2195 = vpack.c.bf16 %v2107, %v2106
      %v2196 = vpack.c.bf16 %v2109, %v2108
      %v2197 = vpack.c.bf16 %v2111, %v2110
      %v2198 = vpack.c.bf16 %v2113, %v2112
      %v2199 = vpack.c.bf16 %v2115, %v2114
      %v2200 = vpack.c.bf16 %v2117, %v2116
      %v2201 = vpack.c.bf16 %v2119, %v2118
      %v2202 = vpack.c.bf16 %v2121, %v2120
      %v2284 = vunpack.c.l.b16 %v2122
      %v2285 = vunpack.c.h.b16 %v2122
      %v2286 = vunpack.c.l.b16 %v2123
      %v2287 = vunpack.c.h.b16 %v2123
      %v2288 = vunpack.c.l.b16 %v2124
      %v2289 = vunpack.c.h.b16 %v2124
      %v2290 = vunpack.c.l.b16 %v2125
      %v2291 = vunpack.c.h.b16 %v2125
      %v2292 = vunpack.c.l.b16 %v2126
      %v2293 = vunpack.c.h.b16 %v2126
      %v2294 = vunpack.c.l.b16 %v2127
      %v2295 = vunpack.c.h.b16 %v2127
      %v2296 = vunpack.c.l.b16 %v2128
      %v2297 = vunpack.c.h.b16 %v2128
      %v2298 = vunpack.c.l.b16 %v2129
      %v2299 = vunpack.c.h.b16 %v2129
      %v2300 = vunpack.c.l.b16 %v2130
      %v2301 = vunpack.c.h.b16 %v2130
      %v2302 = vunpack.c.l.b16 %v2131
      %v2303 = vunpack.c.h.b16 %v2131
      %v2304 = vunpack.c.l.b16 %v2132
      %v2305 = vunpack.c.h.b16 %v2132
      %v2306 = vunpack.c.l.b16 %v2133
      %v2307 = vunpack.c.h.b16 %v2133
      %v2308 = vunpack.c.l.b16 %v2134
      %v2309 = vunpack.c.h.b16 %v2134
      %v2310 = vunpack.c.l.b16 %v2135
      %v2311 = vunpack.c.h.b16 %v2135
      %v2312 = vunpack.c.l.b16 %v2136
      %v2313 = vunpack.c.h.b16 %v2136
      %v2314 = vunpack.c.l.b16 %v2137
      %v2315 = vunpack.c.h.b16 %v2137
      %v2316 = vunpack.c.l.b16 %v2138
      %v2317 = vunpack.c.h.b16 %v2138
      %v2318 = vunpack.c.l.b16 %v2139
      %v2319 = vunpack.c.h.b16 %v2139
      %v2320 = vunpack.c.l.b16 %v2140
      %v2321 = vunpack.c.h.b16 %v2140
      %v2322 = vunpack.c.l.b16 %v2141
      %v2323 = vunpack.c.h.b16 %v2141
      %v2324 = vunpack.c.l.b16 %v2142
      %v2325 = vunpack.c.h.b16 %v2142
      %v2326 = vunpack.c.l.b16 %v2143
      %v2327 = vunpack.c.h.b16 %v2143
      %v2328 = vunpack.c.l.b16 %v2144
      %v2329 = vunpack.c.h.b16 %v2144
      %v2330 = vunpack.c.l.b16 %v2145
      %v2331 = vunpack.c.h.b16 %v2145
      %v2332 = vunpack.c.l.b16 %v2146
      %v2333 = vunpack.c.h.b16 %v2146
      %v2334 = vunpack.c.l.b16 %v2147
      %v2335 = vunpack.c.h.b16 %v2147
      %v2336 = vunpack.c.l.b16 %v2148
      %v2337 = vunpack.c.h.b16 %v2148
      %v2338 = vunpack.c.l.b16 %v2149
      %v2339 = vunpack.c.h.b16 %v2149
      %v2340 = vunpack.c.l.b16 %v2150
      %v2341 = vunpack.c.h.b16 %v2150
      %v2342 = vunpack.c.l.b16 %v2151
      %v2343 = vunpack.c.h.b16 %v2151
      %v2344 = vunpack.c.l.b16 %v2152
      %v2345 = vunpack.c.h.b16 %v2152
      %v2346 = vunpack.c.l.b16 %v2153
      %v2347 = vunpack.c.h.b16 %v2153
      %v2348 = vunpack.c.l.b16 %v2154
      %v2349 = vunpack.c.h.b16 %v2154
      %v2350 = vunpack.c.l.b16 %v2155
      %v2351 = vunpack.c.h.b16 %v2155
      %v2352 = vunpack.c.l.b16 %v2156
      %v2353 = vunpack.c.h.b16 %v2156
      %v2354 = vunpack.c.l.b16 %v2157
      %v2355 = vunpack.c.h.b16 %v2157
      %v2356 = vunpack.c.l.b16 %v2158
      %v2357 = vunpack.c.h.b16 %v2158
      %v2358 = vunpack.c.l.b16 %v2159
      %v2359 = vunpack.c.h.b16 %v2159
      %v2360 = vunpack.c.l.b16 %v2160
      %v2361 = vunpack.c.h.b16 %v2160
      %v2362 = vunpack.c.l.b16 %v2161
      %v2363 = vunpack.c.h.b16 %v2161
      %v2364 = vunpack.c.l.b16 %v2162
      %v2365 = vunpack.c.h.b16 %v2162
      %v2366 = vunpack.c.l.b16 %v2163
      %v2367 = vunpack.c.h.b16 %v2163
      %v2368 = vunpack.c.l.b16 %v2164
      %v2369 = vunpack.c.h.b16 %v2164
      %v2370 = vunpack.c.l.b16 %v2165
      %v2371 = vunpack.c.h.b16 %v2165
      %v2372 = vunpack.c.l.b16 %v2166
      %v2373 = vunpack.c.h.b16 %v2166
      %v2374 = vunpack.c.l.b16 %v2167
      %v2375 = vunpack.c.h.b16 %v2167
      %v2376 = vunpack.c.l.b16 %v2168
      %v2377 = vunpack.c.h.b16 %v2168
      %v2378 = vunpack.c.l.b16 %v2169
      %v2379 = vunpack.c.h.b16 %v2169
      %v2380 = vunpack.c.l.b16 %v2170
      %v2381 = vunpack.c.h.b16 %v2170
      %v2382 = vunpack.c.l.b16 %v2171
      %v2383 = vunpack.c.h.b16 %v2171
      %v2384 = vunpack.c.l.b16 %v2172
      %v2385 = vunpack.c.h.b16 %v2172
      %v2386 = vunpack.c.l.b16 %v2173
      %v2387 = vunpack.c.h.b16 %v2173
      %v2388 = vunpack.c.l.b16 %v2174
      %v2389 = vunpack.c.h.b16 %v2174
      %v2390 = vunpack.c.l.b16 %v2175
      %v2391 = vunpack.c.h.b16 %v2175
      %v2392 = vunpack.c.l.b16 %v2176
      %v2393 = vunpack.c.h.b16 %v2176
      %v2394 = vunpack.c.l.b16 %v2177
      %v2395 = vunpack.c.h.b16 %v2177
      %v2396 = vunpack.c.l.b16 %v2178
      %v2397 = vunpack.c.h.b16 %v2178
      %v2398 = vunpack.c.l.b16 %v2179
      %v2399 = vunpack.c.h.b16 %v2179
      %v2400 = vunpack.c.l.b16 %v2180
      %v2401 = vunpack.c.h.b16 %v2180
      %v2402 = vunpack.c.l.b16 %v2181
      %v2403 = vunpack.c.h.b16 %v2181
      %v2404 = vunpack.c.l.b16 %v2182
      %v2405 = vunpack.c.h.b16 %v2182
      %v2406 = vunpack.c.l.b16 %v2183
      %v2407 = vunpack.c.h.b16 %v2183
      %v2408 = vunpack.c.l.b16 %v2184
      %v2409 = vunpack.c.h.b16 %v2184
      %v2410 = vunpack.c.l.b16 %v2185
      %v2411 = vunpack.c.h.b16 %v2185
      %v2412 = vunpack.c.l.b16 %v2186
      %v2413 = vunpack.c.h.b16 %v2186
      %v2414 = vunpack.c.l.b16 %v2187
      %v2415 = vunpack.c.h.b16 %v2187
      %v2416 = vunpack.c.l.b16 %v2188
      %v2417 = vunpack.c.h.b16 %v2188
      %v2418 = vunpack.c.l.b16 %v2189
      %v2419 = vunpack.c.h.b16 %v2189
      %v2420 = vunpack.c.l.b16 %v2190
      %v2421 = vunpack.c.h.b16 %v2190
      %v2422 = vunpack.c.l.b16 %v2191
      %v2423 = vunpack.c.h.b16 %v2191
      %v2424 = vunpack.c.l.b16 %v2192
      %v2425 = vunpack.c.h.b16 %v2192
      %v2426 = vunpack.c.l.b16 %v2193
      %v2427 = vunpack.c.h.b16 %v2193
      %v2428 = vunpack.c.l.b16 %v2194
      %v2429 = vunpack.c.h.b16 %v2194
      %v2430 = vunpack.c.l.b16 %v2195
      %v2431 = vunpack.c.h.b16 %v2195
      %v2432 = vunpack.c.l.b16 %v2196
      %v2433 = vunpack.c.h.b16 %v2196
      %v2434 = vunpack.c.l.b16 %v2197
      %v2435 = vunpack.c.h.b16 %v2197
      %v2436 = vunpack.c.l.b16 %v2198
      %v2437 = vunpack.c.h.b16 %v2198
      %v2438 = vunpack.c.l.b16 %v2199
      %v2439 = vunpack.c.h.b16 %v2199
      %v2440 = vunpack.c.l.b16 %v2200
      %v2441 = vunpack.c.h.b16 %v2200
      %v2442 = vunpack.c.l.b16 %v2201
      %v2443 = vunpack.c.h.b16 %v2201
      %v2444 = vunpack.c.l.b16 %v2202
      %v2445 = vunpack.c.h.b16 %v2202
      %v2446 = vpack.c.b16 %v2284, %v2284
      %v2447 = vpack.c.b16 %v2285, %v2285
      %v2448 = vpack.c.b16 %v2286, %v2286
      %v2449 = vpack.c.b16 %v2287, %v2287
      %v2450 = vpack.c.b16 %v2288, %v2288
      %v2451 = vpack.c.b16 %v2289, %v2289
      %v2452 = vpack.c.b16 %v2290, %v2290
      %v2453 = vpack.c.b16 %v2291, %v2291
      %v2454 = vpack.c.b16 %v2292, %v2292
      %v2455 = vpack.c.b16 %v2293, %v2293
      %v2456 = vpack.c.b16 %v2294, %v2294
      %v2457 = vpack.c.b16 %v2295, %v2295
      %v2458 = vpack.c.b16 %v2296, %v2296
      %v2459 = vpack.c.b16 %v2297, %v2297
      %v2460 = vpack.c.b16 %v2298, %v2298
      %v2461 = vpack.c.b16 %v2299, %v2299
      %v2462 = vpack.c.b16 %v2300, %v2300
      %v2463 = vpack.c.b16 %v2301, %v2301
      %v2464 = vpack.c.b16 %v2302, %v2302
      %v2465 = vpack.c.b16 %v2303, %v2303
      %v2466 = vpack.c.b16 %v2304, %v2304
      %v2467 = vpack.c.b16 %v2305, %v2305
      %v2468 = vpack.c.b16 %v2306, %v2306
      %v2469 = vpack.c.b16 %v2307, %v2307
      %v2470 = vpack.c.b16 %v2308, %v2308
      %v2471 = vpack.c.b16 %v2309, %v2309
      %v2472 = vpack.c.b16 %v2310, %v2310
      %v2473 = vpack.c.b16 %v2311, %v2311
      %v2474 = vpack.c.b16 %v2312, %v2312
      %v2475 = vpack.c.b16 %v2313, %v2313
      %v2476 = vpack.c.b16 %v2314, %v2314
      %v2477 = vpack.c.b16 %v2315, %v2315
      %v2478 = vpack.c.b16 %v2316, %v2316
      %v2479 = vpack.c.b16 %v2317, %v2317
      %v2480 = vpack.c.b16 %v2318, %v2318
      %v2481 = vpack.c.b16 %v2319, %v2319
      %v2482 = vpack.c.b16 %v2320, %v2320
      %v2483 = vpack.c.b16 %v2321, %v2321
      %v2484 = vpack.c.b16 %v2322, %v2322
      %v2485 = vpack.c.b16 %v2323, %v2323
      %v2486 = vpack.c.b16 %v2324, %v2324
      %v2487 = vpack.c.b16 %v2325, %v2325
      %v2488 = vpack.c.b16 %v2326, %v2326
      %v2489 = vpack.c.b16 %v2327, %v2327
      %v2490 = vpack.c.b16 %v2328, %v2328
      %v2491 = vpack.c.b16 %v2329, %v2329
      %v2492 = vpack.c.b16 %v2330, %v2330
      %v2493 = vpack.c.b16 %v2331, %v2331
      %v2494 = vpack.c.b16 %v2332, %v2332
      %v2495 = vpack.c.b16 %v2333, %v2333
      %v2496 = vpack.c.b16 %v2334, %v2334
      %v2497 = vpack.c.b16 %v2335, %v2335
      %v2498 = vpack.c.b16 %v2336, %v2336
      %v2499 = vpack.c.b16 %v2337, %v2337
      %v2500 = vpack.c.b16 %v2338, %v2338
      %v2501 = vpack.c.b16 %v2339, %v2339
      %v2502 = vpack.c.b16 %v2340, %v2340
      %v2503 = vpack.c.b16 %v2341, %v2341
      %v2504 = vpack.c.b16 %v2342, %v2342
      %v2505 = vpack.c.b16 %v2343, %v2343
      %v2506 = vpack.c.b16 %v2344, %v2344
      %v2507 = vpack.c.b16 %v2345, %v2345
      %v2508 = vpack.c.b16 %v2346, %v2346
      %v2509 = vpack.c.b16 %v2347, %v2347
      %v2510 = vpack.c.b16 %v2348, %v2348
      %v2511 = vpack.c.b16 %v2349, %v2349
      %v2512 = vpack.c.b16 %v2350, %v2350
      %v2513 = vpack.c.b16 %v2351, %v2351
      %v2514 = vpack.c.b16 %v2352, %v2352
      %v2515 = vpack.c.b16 %v2353, %v2353
      %v2516 = vpack.c.b16 %v2354, %v2354
      %v2517 = vpack.c.b16 %v2355, %v2355
      %v2518 = vpack.c.b16 %v2356, %v2356
      %v2519 = vpack.c.b16 %v2357, %v2357
      %v2520 = vpack.c.b16 %v2358, %v2358
      %v2521 = vpack.c.b16 %v2359, %v2359
      %v2522 = vpack.c.b16 %v2360, %v2360
      %v2523 = vpack.c.b16 %v2361, %v2361
      %v2524 = vpack.c.b16 %v2362, %v2362
      %v2525 = vpack.c.b16 %v2363, %v2363
      %v2526 = vpack.c.b16 %v2364, %v2364
      %v2527 = vpack.c.b16 %v2365, %v2365
      %v2528 = vpack.c.b16 %v2366, %v2366
      %v2529 = vpack.c.b16 %v2367, %v2367
      %v2530 = vpack.c.b16 %v2368, %v2368
      %v2531 = vpack.c.b16 %v2369, %v2369
      %v2532 = vpack.c.b16 %v2370, %v2370
      %v2533 = vpack.c.b16 %v2371, %v2371
      %v2534 = vpack.c.b16 %v2372, %v2372
      %v2535 = vpack.c.b16 %v2373, %v2373
      %v2536 = vpack.c.b16 %v2374, %v2374
      %v2537 = vpack.c.b16 %v2375, %v2375
      %v2538 = vpack.c.b16 %v2376, %v2376
      %v2539 = vpack.c.b16 %v2377, %v2377
      %v2540 = vpack.c.b16 %v2378, %v2378
      %v2541 = vpack.c.b16 %v2379, %v2379
      %v2542 = vpack.c.b16 %v2380, %v2380
      %v2543 = vpack.c.b16 %v2381, %v2381
      %v2544 = vpack.c.b16 %v2382, %v2382
      %v2545 = vpack.c.b16 %v2383, %v2383
      %v2546 = vpack.c.b16 %v2384, %v2384
      %v2547 = vpack.c.b16 %v2385, %v2385
      %v2548 = vpack.c.b16 %v2386, %v2386
      %v2549 = vpack.c.b16 %v2387, %v2387
      %v2550 = vpack.c.b16 %v2388, %v2388
      %v2551 = vpack.c.b16 %v2389, %v2389
      %v2552 = vpack.c.b16 %v2390, %v2390
      %v2553 = vpack.c.b16 %v2391, %v2391
      %v2554 = vpack.c.b16 %v2392, %v2392
      %v2555 = vpack.c.b16 %v2393, %v2393
      %v2556 = vpack.c.b16 %v2394, %v2394
      %v2557 = vpack.c.b16 %v2395, %v2395
      %v2558 = vpack.c.b16 %v2396, %v2396
      %v2559 = vpack.c.b16 %v2397, %v2397
      %v2560 = vpack.c.b16 %v2398, %v2398
      %v2561 = vpack.c.b16 %v2399, %v2399
      %v2562 = vpack.c.b16 %v2400, %v2400
      %v2563 = vpack.c.b16 %v2401, %v2401
      %v2564 = vpack.c.b16 %v2402, %v2402
      %v2565 = vpack.c.b16 %v2403, %v2403
      %v2566 = vpack.c.b16 %v2404, %v2404
      %v2567 = vpack.c.b16 %v2405, %v2405
      %v2568 = vpack.c.b16 %v2406, %v2406
      %v2569 = vpack.c.b16 %v2407, %v2407
      %v2570 = vpack.c.b16 %v2408, %v2408
      %v2571 = vpack.c.b16 %v2409, %v2409
      %v2572 = vpack.c.b16 %v2410, %v2410
      %v2573 = vpack.c.b16 %v2411, %v2411
      %v2574 = vpack.c.b16 %v2412, %v2412
      %v2575 = vpack.c.b16 %v2413, %v2413
      %v2576 = vpack.c.b16 %v2414, %v2414
      %v2577 = vpack.c.b16 %v2415, %v2415
      %v2578 = vpack.c.b16 %v2416, %v2416
      %v2579 = vpack.c.b16 %v2417, %v2417
      %v2580 = vpack.c.b16 %v2418, %v2418
      %v2581 = vpack.c.b16 %v2419, %v2419
      %v2582 = vpack.c.b16 %v2420, %v2420
      %v2583 = vpack.c.b16 %v2421, %v2421
      %v2584 = vpack.c.b16 %v2422, %v2422
      %v2585 = vpack.c.b16 %v2423, %v2423
      %v2586 = vpack.c.b16 %v2424, %v2424
      %v2587 = vpack.c.b16 %v2425, %v2425
      %v2588 = vpack.c.b16 %v2426, %v2426
      %v2589 = vpack.c.b16 %v2427, %v2427
      %v2590 = vpack.c.b16 %v2428, %v2428
      %v2591 = vpack.c.b16 %v2429, %v2429
      %v2592 = vpack.c.b16 %v2430, %v2430
      %v2593 = vpack.c.b16 %v2431, %v2431
      %v2594 = vpack.c.b16 %v2432, %v2432
      %v2595 = vpack.c.b16 %v2433, %v2433
      %v2596 = vpack.c.b16 %v2434, %v2434
      %v2597 = vpack.c.b16 %v2435, %v2435
      %v2598 = vpack.c.b16 %v2436, %v2436
      %v2599 = vpack.c.b16 %v2437, %v2437
      %v2600 = vpack.c.b16 %v2438, %v2438
      %v2601 = vpack.c.b16 %v2439, %v2439
      %v2602 = vpack.c.b16 %v2440, %v2440
      %v2603 = vpack.c.b16 %v2441, %v2441
      %v2604 = vpack.c.b16 %v2442, %v2442
      %v2605 = vpack.c.b16 %v2443, %v2443
      %v2606 = vpack.c.b16 %v2444, %v2444
      %v2607 = vpack.c.b16 %v2445, %v2445
      %vm2770 = vcmask 257024
      %2771 = vst.msk [vmem:[%s170] sm:$0xf] %vm2770, %v2446
      %2772 = vst.msk [vmem:[%s170 + $0x4] sm:$0xf] %vm2770, %v2447
      %2773 = vst.msk [vmem:[%s170 + $0x8] sm:$0xf] %vm2770, %v2448
      %2774 = vst.msk [vmem:[%s170 + $0xc] sm:$0xf] %vm2770, %v2449
      %2775 = vst.msk [vmem:[%s170 + $0x10] sm:$0xf] %vm2770, %v2450
      %2776 = vst.msk [vmem:[%s170 + $0x14] sm:$0xf] %vm2770, %v2451
      %2777 = vst.msk [vmem:[%s170 + $0x18] sm:$0xf] %vm2770, %v2452
      %2778 = vst.msk [vmem:[%s170 + $0x1c] sm:$0xf] %vm2770, %v2453
      %2779 = vst.msk [vmem:[%s170 + $0x20] sm:$0xf] %vm2770, %v2454
      %2780 = vst.msk [vmem:[%s170 + $0x24] sm:$0xf] %vm2770, %v2455
      %2781 = vst.msk [vmem:[%s170 + $0x28] sm:$0xf] %vm2770, %v2456
      %2782 = vst.msk [vmem:[%s170 + $0x2c] sm:$0xf] %vm2770, %v2457
      %2783 = vst.msk [vmem:[%s170 + $0x30] sm:$0xf] %vm2770, %v2458
      %2784 = vst.msk [vmem:[%s170 + $0x34] sm:$0xf] %vm2770, %v2459
      %2785 = vst.msk [vmem:[%s170 + $0x38] sm:$0xf] %vm2770, %v2460
      %2786 = vst.msk [vmem:[%s170 + $0x3c] sm:$0xf] %vm2770, %v2461
      %2787 = vst.msk [vmem:[%s170 + $0x40] sm:$0xf] %vm2770, %v2462
      %2788 = vst.msk [vmem:[%s170 + $0x44] sm:$0xf] %vm2770, %v2463
      %2789 = vst.msk [vmem:[%s170 + $0x48] sm:$0xf] %vm2770, %v2464
      %2790 = vst.msk [vmem:[%s170 + $0x4c] sm:$0xf] %vm2770, %v2465
      %2791 = vst.msk [vmem:[%s170 + $0x50] sm:$0xf] %vm2770, %v2466
      %2792 = vst.msk [vmem:[%s170 + $0x54] sm:$0xf] %vm2770, %v2467
      %2793 = vst.msk [vmem:[%s170 + $0x58] sm:$0xf] %vm2770, %v2468
      %2794 = vst.msk [vmem:[%s170 + $0x5c] sm:$0xf] %vm2770, %v2469
      %2795 = vst.msk [vmem:[%s170 + $0x60] sm:$0xf] %vm2770, %v2470
      %2796 = vst.msk [vmem:[%s170 + $0x64] sm:$0xf] %vm2770, %v2471
      %2797 = vst.msk [vmem:[%s170 + $0x68] sm:$0xf] %vm2770, %v2472
      %2798 = vst.msk [vmem:[%s170 + $0x6c] sm:$0xf] %vm2770, %v2473
      %2799 = vst.msk [vmem:[%s170 + $0x70] sm:$0xf] %vm2770, %v2474
      %2800 = vst.msk [vmem:[%s170 + $0x74] sm:$0xf] %vm2770, %v2475
      %2801 = vst.msk [vmem:[%s170 + $0x78] sm:$0xf] %vm2770, %v2476
      %2802 = vst.msk [vmem:[%s170 + $0x7c] sm:$0xf] %vm2770, %v2477
      %2803 = vst.msk [vmem:[%s170 + $0x80] sm:$0xf] %vm2770, %v2478
      %2804 = vst.msk [vmem:[%s170 + $0x84] sm:$0xf] %vm2770, %v2479
      %2805 = vst.msk [vmem:[%s170 + $0x88] sm:$0xf] %vm2770, %v2480
      %2806 = vst.msk [vmem:[%s170 + $0x8c] sm:$0xf] %vm2770, %v2481
      %2807 = vst.msk [vmem:[%s170 + $0x90] sm:$0xf] %vm2770, %v2482
      %2808 = vst.msk [vmem:[%s170 + $0x94] sm:$0xf] %vm2770, %v2483
      %2809 = vst.msk [vmem:[%s170 + $0x98] sm:$0xf] %vm2770, %v2484
      %2810 = vst.msk [vmem:[%s170 + $0x9c] sm:$0xf] %vm2770, %v2485
      %2811 = vst.msk [vmem:[%s170 + $0xa0] sm:$0xf] %vm2770, %v2486
      %2812 = vst.msk [vmem:[%s170 + $0xa4] sm:$0xf] %vm2770, %v2487
      %2813 = vst.msk [vmem:[%s170 + $0xa8] sm:$0xf] %vm2770, %v2488
      %2814 = vst.msk [vmem:[%s170 + $0xac] sm:$0xf] %vm2770, %v2489
      %2815 = vst.msk [vmem:[%s170 + $0xb0] sm:$0xf] %vm2770, %v2490
      %2816 = vst.msk [vmem:[%s170 + $0xb4] sm:$0xf] %vm2770, %v2491
      %2817 = vst.msk [vmem:[%s170 + $0xb8] sm:$0xf] %vm2770, %v2492
      %2818 = vst.msk [vmem:[%s170 + $0xbc] sm:$0xf] %vm2770, %v2493
      %2819 = vst.msk [vmem:[%s170 + $0xc0] sm:$0xf] %vm2770, %v2494
      %2820 = vst.msk [vmem:[%s170 + $0xc4] sm:$0xf] %vm2770, %v2495
      %2821 = vst.msk [vmem:[%s170 + $0xc8] sm:$0xf] %vm2770, %v2496
      %2822 = vst.msk [vmem:[%s170 + $0xcc] sm:$0xf] %vm2770, %v2497
      %2823 = vst.msk [vmem:[%s170 + $0xd0] sm:$0xf] %vm2770, %v2498
      %2824 = vst.msk [vmem:[%s170 + $0xd4] sm:$0xf] %vm2770, %v2499
      %2825 = vst.msk [vmem:[%s170 + $0xd8] sm:$0xf] %vm2770, %v2500
      %2826 = vst.msk [vmem:[%s170 + $0xdc] sm:$0xf] %vm2770, %v2501
      %2827 = vst.msk [vmem:[%s170 + $0xe0] sm:$0xf] %vm2770, %v2502
      %2828 = vst.msk [vmem:[%s170 + $0xe4] sm:$0xf] %vm2770, %v2503
      %2829 = vst.msk [vmem:[%s170 + $0xe8] sm:$0xf] %vm2770, %v2504
      %2830 = vst.msk [vmem:[%s170 + $0xec] sm:$0xf] %vm2770, %v2505
      %2831 = vst.msk [vmem:[%s170 + $0xf0] sm:$0xf] %vm2770, %v2506
      %2832 = vst.msk [vmem:[%s170 + $0xf4] sm:$0xf] %vm2770, %v2507
      %2833 = vst.msk [vmem:[%s170 + $0xf8] sm:$0xf] %vm2770, %v2508
      %2834 = vst.msk [vmem:[%s170 + $0xfc] sm:$0xf] %vm2770, %v2509
      %2835 = vst.msk [vmem:[%s170 + $0x100] sm:$0xf] %vm2770, %v2510
      %2836 = vst.msk [vmem:[%s170 + $0x104] sm:$0xf] %vm2770, %v2511
      %2837 = vst.msk [vmem:[%s170 + $0x108] sm:$0xf] %vm2770, %v2512
      %2838 = vst.msk [vmem:[%s170 + $0x10c] sm:$0xf] %vm2770, %v2513
      %2839 = vst.msk [vmem:[%s170 + $0x110] sm:$0xf] %vm2770, %v2514
      %2840 = vst.msk [vmem:[%s170 + $0x114] sm:$0xf] %vm2770, %v2515
      %2841 = vst.msk [vmem:[%s170 + $0x118] sm:$0xf] %vm2770, %v2516
      %2842 = vst.msk [vmem:[%s170 + $0x11c] sm:$0xf] %vm2770, %v2517
      %2843 = vst.msk [vmem:[%s170 + $0x120] sm:$0xf] %vm2770, %v2518
      %2844 = vst.msk [vmem:[%s170 + $0x124] sm:$0xf] %vm2770, %v2519
      %2845 = vst.msk [vmem:[%s170 + $0x128] sm:$0xf] %vm2770, %v2520
      %2846 = vst.msk [vmem:[%s170 + $0x12c] sm:$0xf] %vm2770, %v2521
      %2847 = vst.msk [vmem:[%s170 + $0x130] sm:$0xf] %vm2770, %v2522
      %2848 = vst.msk [vmem:[%s170 + $0x134] sm:$0xf] %vm2770, %v2523
      %2849 = vst.msk [vmem:[%s170 + $0x138] sm:$0xf] %vm2770, %v2524
      %2850 = vst.msk [vmem:[%s170 + $0x13c] sm:$0xf] %vm2770, %v2525
      %2851 = vst.msk [vmem:[%s170 + $0x140] sm:$0xf] %vm2770, %v2526
      %2852 = vst.msk [vmem:[%s170 + $0x144] sm:$0xf] %vm2770, %v2527
      %2853 = vst.msk [vmem:[%s170 + $0x148] sm:$0xf] %vm2770, %v2528
      %2854 = vst.msk [vmem:[%s170 + $0x14c] sm:$0xf] %vm2770, %v2529
      %2855 = vst.msk [vmem:[%s170 + $0x150] sm:$0xf] %vm2770, %v2530
      %2856 = vst.msk [vmem:[%s170 + $0x154] sm:$0xf] %vm2770, %v2531
      %2857 = vst.msk [vmem:[%s170 + $0x158] sm:$0xf] %vm2770, %v2532
      %2858 = vst.msk [vmem:[%s170 + $0x15c] sm:$0xf] %vm2770, %v2533
      %2859 = vst.msk [vmem:[%s170 + $0x160] sm:$0xf] %vm2770, %v2534
      %2860 = vst.msk [vmem:[%s170 + $0x164] sm:$0xf] %vm2770, %v2535
      %2861 = vst.msk [vmem:[%s170 + $0x168] sm:$0xf] %vm2770, %v2536
      %2862 = vst.msk [vmem:[%s170 + $0x16c] sm:$0xf] %vm2770, %v2537
      %2863 = vst.msk [vmem:[%s170 + $0x170] sm:$0xf] %vm2770, %v2538
      %2864 = vst.msk [vmem:[%s170 + $0x174] sm:$0xf] %vm2770, %v2539
      %2865 = vst.msk [vmem:[%s170 + $0x178] sm:$0xf] %vm2770, %v2540
      %2866 = vst.msk [vmem:[%s170 + $0x17c] sm:$0xf] %vm2770, %v2541
      %2867 = vst.msk [vmem:[%s170 + $0x180] sm:$0xf] %vm2770, %v2542
      %2868 = vst.msk [vmem:[%s170 + $0x184] sm:$0xf] %vm2770, %v2543
      %2869 = vst.msk [vmem:[%s170 + $0x188] sm:$0xf] %vm2770, %v2544
      %2870 = vst.msk [vmem:[%s170 + $0x18c] sm:$0xf] %vm2770, %v2545
      %2871 = vst.msk [vmem:[%s170 + $0x190] sm:$0xf] %vm2770, %v2546
      %2872 = vst.msk [vmem:[%s170 + $0x194] sm:$0xf] %vm2770, %v2547
      %2873 = vst.msk [vmem:[%s170 + $0x198] sm:$0xf] %vm2770, %v2548
      %2874 = vst.msk [vmem:[%s170 + $0x19c] sm:$0xf] %vm2770, %v2549
      %2875 = vst.msk [vmem:[%s170 + $0x1a0] sm:$0xf] %vm2770, %v2550
      %2876 = vst.msk [vmem:[%s170 + $0x1a4] sm:$0xf] %vm2770, %v2551
      %2877 = vst.msk [vmem:[%s170 + $0x1a8] sm:$0xf] %vm2770, %v2552
      %2878 = vst.msk [vmem:[%s170 + $0x1ac] sm:$0xf] %vm2770, %v2553
      %2879 = vst.msk [vmem:[%s170 + $0x1b0] sm:$0xf] %vm2770, %v2554
      %2880 = vst.msk [vmem:[%s170 + $0x1b4] sm:$0xf] %vm2770, %v2555
      %2881 = vst.msk [vmem:[%s170 + $0x1b8] sm:$0xf] %vm2770, %v2556
      %2882 = vst.msk [vmem:[%s170 + $0x1bc] sm:$0xf] %vm2770, %v2557
      %2883 = vst.msk [vmem:[%s170 + $0x1c0] sm:$0xf] %vm2770, %v2558
      %2884 = vst.msk [vmem:[%s170 + $0x1c4] sm:$0xf] %vm2770, %v2559
      %2885 = vst.msk [vmem:[%s170 + $0x1c8] sm:$0xf] %vm2770, %v2560
      %2886 = vst.msk [vmem:[%s170 + $0x1cc] sm:$0xf] %vm2770, %v2561
      %2887 = vst.msk [vmem:[%s170 + $0x1d0] sm:$0xf] %vm2770, %v2562
      %2888 = vst.msk [vmem:[%s170 + $0x1d4] sm:$0xf] %vm2770, %v2563
      %2889 = vst.msk [vmem:[%s170 + $0x1d8] sm:$0xf] %vm2770, %v2564
      %2890 = vst.msk [vmem:[%s170 + $0x1dc] sm:$0xf] %vm2770, %v2565
      %2891 = vst.msk [vmem:[%s170 + $0x1e0] sm:$0xf] %vm2770, %v2566
      %2892 = vst.msk [vmem:[%s170 + $0x1e4] sm:$0xf] %vm2770, %v2567
      %2893 = vst.msk [vmem:[%s170 + $0x1e8] sm:$0xf] %vm2770, %v2568
      %2894 = vst.msk [vmem:[%s170 + $0x1ec] sm:$0xf] %vm2770, %v2569
      %2895 = vst.msk [vmem:[%s170 + $0x1f0] sm:$0xf] %vm2770, %v2570
      %2896 = vst.msk [vmem:[%s170 + $0x1f4] sm:$0xf] %vm2770, %v2571
      %2897 = vst.msk [vmem:[%s170 + $0x1f8] sm:$0xf] %vm2770, %v2572
      %2898 = vst.msk [vmem:[%s170 + $0x1fc] sm:$0xf] %vm2770, %v2573
      %2899 = vst.msk [vmem:[%s170 + $0x200] sm:$0xf] %vm2770, %v2574
      %2900 = vst.msk [vmem:[%s170 + $0x204] sm:$0xf] %vm2770, %v2575
      %2901 = vst.msk [vmem:[%s170 + $0x208] sm:$0xf] %vm2770, %v2576
      %2902 = vst.msk [vmem:[%s170 + $0x20c] sm:$0xf] %vm2770, %v2577
      %2903 = vst.msk [vmem:[%s170 + $0x210] sm:$0xf] %vm2770, %v2578
      %2904 = vst.msk [vmem:[%s170 + $0x214] sm:$0xf] %vm2770, %v2579
      %2905 = vst.msk [vmem:[%s170 + $0x218] sm:$0xf] %vm2770, %v2580
      %2906 = vst.msk [vmem:[%s170 + $0x21c] sm:$0xf] %vm2770, %v2581
      %2907 = vst.msk [vmem:[%s170 + $0x220] sm:$0xf] %vm2770, %v2582
      %2908 = vst.msk [vmem:[%s170 + $0x224] sm:$0xf] %vm2770, %v2583
      %2909 = vst.msk [vmem:[%s170 + $0x228] sm:$0xf] %vm2770, %v2584
      %2910 = vst.msk [vmem:[%s170 + $0x22c] sm:$0xf] %vm2770, %v2585
      %2911 = vst.msk [vmem:[%s170 + $0x230] sm:$0xf] %vm2770, %v2586
      %2912 = vst.msk [vmem:[%s170 + $0x234] sm:$0xf] %vm2770, %v2587
      %2913 = vst.msk [vmem:[%s170 + $0x238] sm:$0xf] %vm2770, %v2588
      %2914 = vst.msk [vmem:[%s170 + $0x23c] sm:$0xf] %vm2770, %v2589
      %2915 = vst.msk [vmem:[%s170 + $0x240] sm:$0xf] %vm2770, %v2590
      %2916 = vst.msk [vmem:[%s170 + $0x244] sm:$0xf] %vm2770, %v2591
      %2917 = vst.msk [vmem:[%s170 + $0x248] sm:$0xf] %vm2770, %v2592
      %2918 = vst.msk [vmem:[%s170 + $0x24c] sm:$0xf] %vm2770, %v2593
      %2919 = vst.msk [vmem:[%s170 + $0x250] sm:$0xf] %vm2770, %v2594
      %2920 = vst.msk [vmem:[%s170 + $0x254] sm:$0xf] %vm2770, %v2595
      %2921 = vst.msk [vmem:[%s170 + $0x258] sm:$0xf] %vm2770, %v2596
      %2922 = vst.msk [vmem:[%s170 + $0x25c] sm:$0xf] %vm2770, %v2597
      %2923 = vst.msk [vmem:[%s170 + $0x260] sm:$0xf] %vm2770, %v2598
      %2924 = vst.msk [vmem:[%s170 + $0x264] sm:$0xf] %vm2770, %v2599
      %2925 = vst.msk [vmem:[%s170 + $0x268] sm:$0xf] %vm2770, %v2600
      %2926 = vst.msk [vmem:[%s170 + $0x26c] sm:$0xf] %vm2770, %v2601
      %2927 = vst.msk [vmem:[%s170 + $0x270] sm:$0xf] %vm2770, %v2602
      %2928 = vst.msk [vmem:[%s170 + $0x274] sm:$0xf] %vm2770, %v2603
      %2929 = vst.msk [vmem:[%s170 + $0x278] sm:$0xf] %vm2770, %v2604
      %2930 = vst.msk [vmem:[%s170 + $0x27c] sm:$0xf] %vm2770, %v2605
      %2931 = vst.msk [vmem:[%s170 + $0x280] sm:$0xf] %vm2770, %v2606
      %2932 = vst.msk [vmem:[%s170 + $0x284] sm:$0xf] %vm2770, %v2607
      %p2933 = scmp.lt.s32.totalorder %s14, 1
      %s2934 = scalar_select %p2933, %s14, 1
      %s2935 = smul.addr %s2934, 162
      %s2936 = smul.addr %s2935, 4
      %s2937 = scalar_lea.vmem %s3, %s2936
      // Predicated region
      $region33: #{dqn_base_forward.2} parent=31 // pred_check
        %p2938 = pneg %p100
      $region34: #{dqn_base_forward.2} parent=31 // pred_check_branch
        %2940 = sbr.rel (%p2938) target = $region36
      $region35: #{dqn_base_forward.2} parent=31 // pred_region
        _
      $region36: #{dqn_base_forward.2} parent=31 // pred_fallthru
        _
    $region32: #{dqn_base_forward.2} parent=5 // pred_fallthru
      _
    %p2941 = scmp.le.s32.totalorder 2, %s9
    // Predicated region
    $region37: #{dqn_base_forward.2} parent=5 // pred_check
      %p2942 = pneg %p2941
    $region38: #{dqn_base_forward.2} parent=5 // pred_check_branch
      %2944 = sbr.rel (%p2942) target = $region40
    $region39: #{dqn_base_forward.2} parent=5 // pred_region
      %s2945 = ssub.s32 %s9, 2
      // Predicated region
      $region41: #{dqn_base_forward.2} parent=39 // pred_check
        %p2946 = pneg %p106
      $region42: #{dqn_base_forward.2} parent=39 // pred_check_branch
        %2948 = sbr.rel (%p2946) target = $region44
      $region43: #{dqn_base_forward.2} parent=39 // pred_region
        %p2949 = scmp.lt.s32.totalorder %s15, 1
        %s2950 = scalar_select %p2949, %s15, 1
        %s2951 = smul.addr %s2950, 162
        %s2952 = smul.addr %s2951, 4
        %s2953 = scalar_lea.vmem %s3, %s2952
      $region44: #{dqn_base_forward.2} parent=39 // pred_fallthru
        _
    $region40: #{dqn_base_forward.2} parent=5 // pred_fallthru
      _
  $region6: #{dqn_base_forward.2} parent=0 // loop_footer
    %s13 = sadd.s32 1, %s9
  $region7: #{dqn_base_forward.2} parent=0 // loop_footer_branch
    %8 = sbr.rel target = $region3
  $region8: #{dqn_base_forward.2} parent=0 // loop_exit
    _

// kernel: dqn_base_forward.3
$region0: #{dqn_base_forward.3}
  #allocation0 [shape = 'u32[]', space=smem, size = 0x4, offset = 0x4, fixed_abs, tag = 'smem constant byte address 0x4 - core index']
  #allocation1 [shape = 'u32[144,128]{1,0:T(1,128)}', space=vmem, size = 0x12000, scoped, tag = 'internal scratch']
  %s0 = inlined_call_operand.vmem [shape: bf16[2,64,2048], index: 0, kind: input, shape index: {}]
  %s1 = inlined_call_operand.vmem [shape: bf16[2048,32], index: 1, kind: input, shape index: {}]
  %s2 = inlined_call_operand.vmem [shape: f32[1,32], index: 2, kind: input, shape index: {}]
  %s3 = inlined_call_operand.vmem [shape: f32[16,9,64], index: 3, kind: input, shape index: {}]
  %s4 = inlined_call_operand.vmem [shape: f32[16,32,64], index: 4, kind: input, shape index: {}]
  %s5 = inlined_call_operand.vmem [shape: f32[1,64], index: 5, kind: input, shape index: {}]
  %s6 = inlined_call_operand.vmem [shape: f32[9,64,64], index: 6, kind: input, shape index: {}]
  %s7 = inlined_call_operand.vmem [shape: f32[1,64], index: 7, kind: input, shape index: {}]
  %s8 = inlined_call_operand.hbm [shape: f32[2,1,64], index: 8, kind: output, shape index: {}]
  %s9 = sld [smem:[#allocation0]]
  $region65: #{dqn_base_forward.3} parent=0
    _
  %s11 = ssub.s32 1, %s9
  %s12 = scalar_select 0, %s11, %s9
  $region1: #{dqn_base_forward.3} parent=0
    #allocation2 [shape = 'u8[1024]{0}', space=vmem, size = 0x400, scoped, tag = 'output window, operand 0']
    #allocation3 [shape = 's32[2]{0}', space=sflag, size = 0x8, scoped, tag = 'scoped memory for dqn_base_forward.3']
    %13 = vsyncpa [#allocation3], 0
    %s14 = scalar_lea.sflag [#allocation3], 1
    %15 = vsyncpa %s14, 0
    loop: start=0, step=1, limit=4
    $region2: #{dqn_base_forward.3} parent=1 // loop_pre_header
      _
    $region3: #{dqn_base_forward.3} parent=1 // loop_header
      %s17 = sphi 0, %s21
      %p18 = scmp.ge.s32.totalorder %s17, 4
      %s27 = sphi 0, %s29
      %s30 = sphi 0, %s27
      %s31 = sphi 0, %s30
      %s47 = sphi 0, %s31
      %s51 = sphi 0, %s51
      %s53 = sphi 0, %s51
      %s54 = sphi 0, %s53
      %s68 = sphi 0, %s54
      %s72 = sphi 0, %s72
      %s74 = sphi 0, %s72
      %s75 = sphi 0, %s74
      %s89 = sphi 0, %s75
      %s93 = sphi 0, %s93
      %s95 = sphi 0, %s93
      %s96 = sphi 0, %s95
      %s110 = sphi 0, %s96
      %s114 = sphi 0, %s114
      %s116 = sphi 0, %s114
      %s117 = sphi 0, %s116
      %s131 = sphi 0, %s117
      %s135 = sphi 0, %s135
      %s137 = sphi 0, %s135
      %s138 = sphi 0, %s137
      %s152 = sphi 0, %s138
      %s156 = sphi 0, %s156
      %s158 = sphi 0, %s156
      %s159 = sphi 0, %s158
      %s173 = sphi 0, %s159
      %s177 = sphi 0, %s177
      %s179 = sphi 0, %s177
      %s180 = sphi 0, %s179
      %s194 = sphi 0, %s180
      %s200 = sphi 0, %s202
      %s203 = sphi 0, %s200
      %s204 = sphi 0, %s203
      %s220 = sphi 0, %s204
    $region4: #{dqn_base_forward.3} parent=1 // loop_header_branch
      %20 = sbr.rel (%p18) target = $region8
    $region5: #{dqn_base_forward.3} parent=1 // loop_body
      %s22 = ssub.s32 %s17, 1
      %s23 = ssub.s32 %s17, 2
      %s24 = sadd.s32 %s17, 1
      %s25 = ssub.s32 %s17, %s24
      %p26 = scmp.eq.s32.totalorder %s25, 0
      %s28 = sadd.s32 %s27, 1
      %s29 = scalar_select %p26, %s27, %s28
      %p32 = pneg %p26
      %p33 = scmp.eq.s32.totalorder %s17, 1
      %p34 = por %p32, %p33
      %p35 = scmp.ne.s32.totalorder %s27, %s30
      %p36 = scmp.eq.s32.totalorder %s17, 0
      %p37 = por %p35, %p36
      %p38 = scmp.ne.s32.totalorder %s27, %s30
      %p39 = scmp.eq.s32.totalorder %s22, 1
      %p40 = por %p38, %p39
      %p41 = scmp.ne.s32.totalorder %s30, %s31
      %p42 = scmp.eq.s32.totalorder %s22, 0
      %p43 = por %p41, %p42
      %p44 = scmp.ne.s32.totalorder %s30, %s31
      %p45 = scmp.eq.s32.totalorder %s23, 1
      %p46 = por %p44, %p45
      %p48 = scmp.ne.s32.totalorder %s31, %s47
      %p49 = scmp.eq.s32.totalorder %s23, 0
      %p50 = por %p48, %p49
      %s52 = sadd.s32 %s51, 1
      %p55 = scmp.eq.s32.totalorder %s17, 1
      %p56 = scmp.ne.s32.totalorder %s51, %s53
      %p57 = scmp.eq.s32.totalorder %s17, 0
      %p58 = por %p56, %p57
      %p59 = scmp.ne.s32.totalorder %s51, %s53
      %p60 = scmp.eq.s32.totalorder %s22, 1
      %p61 = por %p59, %p60
      %p62 = scmp.ne.s32.totalorder %s53, %s54
      %p63 = scmp.eq.s32.totalorder %s22, 0
      %p64 = por %p62, %p63
      %p65 = scmp.ne.s32.totalorder %s53, %s54
      %p66 = scmp.eq.s32.totalorder %s23, 1
      %p67 = por %p65, %p66
      %p69 = scmp.ne.s32.totalorder %s54, %s68
      %p70 = scmp.eq.s32.totalorder %s23, 0
      %p71 = por %p69, %p70
      %s73 = sadd.s32 %s72, 1
      %p76 = scmp.eq.s32.totalorder %s17, 1
      %p77 = scmp.ne.s32.totalorder %s72, %s74
      %p78 = scmp.eq.s32.totalorder %s17, 0
      %p79 = por %p77, %p78
      %p80 = scmp.ne.s32.totalorder %s72, %s74
      %p81 = scmp.eq.s32.totalorder %s22, 1
      %p82 = por %p80, %p81
      %p83 = scmp.ne.s32.totalorder %s74, %s75
      %p84 = scmp.eq.s32.totalorder %s22, 0
      %p85 = por %p83, %p84
      %p86 = scmp.ne.s32.totalorder %s74, %s75
      %p87 = scmp.eq.s32.totalorder %s23, 1
      %p88 = por %p86, %p87
      %p90 = scmp.ne.s32.totalorder %s75, %s89
      %p91 = scmp.eq.s32.totalorder %s23, 0
      %p92 = por %p90, %p91
      %s94 = sadd.s32 %s93, 1
      %p97 = scmp.eq.s32.totalorder %s17, 1
      %p98 = scmp.ne.s32.totalorder %s93, %s95
      %p99 = scmp.eq.s32.totalorder %s17, 0
      %p100 = por %p98, %p99
      %p101 = scmp.ne.s32.totalorder %s93, %s95
      %p102 = scmp.eq.s32.totalorder %s22, 1
      %p103 = por %p101, %p102
      %p104 = scmp.ne.s32.totalorder %s95, %s96
      %p105 = scmp.eq.s32.totalorder %s22, 0
      %p106 = por %p104, %p105
      %p107 = scmp.ne.s32.totalorder %s95, %s96
      %p108 = scmp.eq.s32.totalorder %s23, 1
      %p109 = por %p107, %p108
      %p111 = scmp.ne.s32.totalorder %s96, %s110
      %p112 = scmp.eq.s32.totalorder %s23, 0
      %p113 = por %p111, %p112
      %s115 = sadd.s32 %s114, 1
      %p118 = scmp.eq.s32.totalorder %s17, 1
      %p119 = scmp.ne.s32.totalorder %s114, %s116
      %p120 = scmp.eq.s32.totalorder %s17, 0
      %p121 = por %p119, %p120
      %p122 = scmp.ne.s32.totalorder %s114, %s116
      %p123 = scmp.eq.s32.totalorder %s22, 1
      %p124 = por %p122, %p123
      %p125 = scmp.ne.s32.totalorder %s116, %s117
      %p126 = scmp.eq.s32.totalorder %s22, 0
      %p127 = por %p125, %p126
      %p128 = scmp.ne.s32.totalorder %s116, %s117
      %p129 = scmp.eq.s32.totalorder %s23, 1
      %p130 = por %p128, %p129
      %p132 = scmp.ne.s32.totalorder %s117, %s131
      %p133 = scmp.eq.s32.totalorder %s23, 0
      %p134 = por %p132, %p133
      %s136 = sadd.s32 %s135, 1
      %p139 = scmp.eq.s32.totalorder %s17, 1
      %p140 = scmp.ne.s32.totalorder %s135, %s137
      %p141 = scmp.eq.s32.totalorder %s17, 0
      %p142 = por %p140, %p141
      %p143 = scmp.ne.s32.totalorder %s135, %s137
      %p144 = scmp.eq.s32.totalorder %s22, 1
      %p145 = por %p143, %p144
      %p146 = scmp.ne.s32.totalorder %s137, %s138
      %p147 = scmp.eq.s32.totalorder %s22, 0
      %p148 = por %p146, %p147
      %p149 = scmp.ne.s32.totalorder %s137, %s138
      %p150 = scmp.eq.s32.totalorder %s23, 1
      %p151 = por %p149, %p150
      %p153 = scmp.ne.s32.totalorder %s138, %s152
      %p154 = scmp.eq.s32.totalorder %s23, 0
      %p155 = por %p153, %p154
      %s157 = sadd.s32 %s156, 1
      %p160 = scmp.eq.s32.totalorder %s17, 1
      %p161 = scmp.ne.s32.totalorder %s156, %s158
      %p162 = scmp.eq.s32.totalorder %s17, 0
      %p163 = por %p161, %p162
      %p164 = scmp.ne.s32.totalorder %s156, %s158
      %p165 = scmp.eq.s32.totalorder %s22, 1
      %p166 = por %p164, %p165
      %p167 = scmp.ne.s32.totalorder %s158, %s159
      %p168 = scmp.eq.s32.totalorder %s22, 0
      %p169 = por %p167, %p168
      %p170 = scmp.ne.s32.totalorder %s158, %s159
      %p171 = scmp.eq.s32.totalorder %s23, 1
      %p172 = por %p170, %p171
      %p174 = scmp.ne.s32.totalorder %s159, %s173
      %p175 = scmp.eq.s32.totalorder %s23, 0
      %p176 = por %p174, %p175
      %s178 = sadd.s32 %s177, 1
      %p181 = scmp.eq.s32.totalorder %s17, 1
      %p182 = scmp.ne.s32.totalorder %s177, %s179
      %p183 = scmp.eq.s32.totalorder %s17, 0
      %p184 = por %p182, %p183
      %p185 = scmp.ne.s32.totalorder %s177, %s179
      %p186 = scmp.eq.s32.totalorder %s22, 1
      %p187 = por %p185, %p186
      %p188 = scmp.ne.s32.totalorder %s179, %s180
      %p189 = scmp.eq.s32.totalorder %s22, 0
      %p190 = por %p188, %p189
      %p191 = scmp.ne.s32.totalorder %s179, %s180
      %p192 = scmp.eq.s32.totalorder %s23, 1
      %p193 = por %p191, %p192
      %p195 = scmp.ne.s32.totalorder %s180, %s194
      %p196 = scmp.eq.s32.totalorder %s23, 0
      %p197 = por %p195, %p196
      %s198 = ssub.s32 %s17, %s24
      %p199 = scmp.eq.s32.totalorder %s198, 0
      %s201 = sadd.s32 %s200, 1
      %s202 = scalar_select %p199, %s200, %s201
      %p205 = pneg %p199
      %p206 = scmp.eq.s32.totalorder %s17, 1
      %p207 = por %p205, %p206
      %p208 = scmp.ne.s32.totalorder %s200, %s203
      %p209 = scmp.eq.s32.totalorder %s17, 0
      %p210 = por %p208, %p209
      %p211 = scmp.ne.s32.totalorder %s200, %s203
      %p212 = scmp.eq.s32.totalorder %s22, 1
      %p213 = por %p211, %p212
      %p214 = scmp.ne.s32.totalorder %s203, %s204
      %p215 = scmp.eq.s32.totalorder %s22, 0
      %p216 = por %p214, %p215
      %p217 = scmp.ne.s32.totalorder %s203, %s204
      %p218 = scmp.eq.s32.totalorder %s23, 1
      %p219 = por %p217, %p218
      %p221 = scmp.ne.s32.totalorder %s204, %s220
      %p222 = scmp.eq.s32.totalorder %s23, 0
      %p223 = por %p221, %p222
      %p224 = scmp.le.s32.totalorder 1, %s17
      %p225 = scmp.lt.s32.totalorder %s17, 3
      %p226 = pnand %p224, %p225
      %p227 = pneg %p226
      // Predicated region
      $region9: #{dqn_base_forward.3} parent=5 // pred_check
        _
      $region10: #{dqn_base_forward.3} parent=5 // pred_check_branch
        %229 = sbr.rel (%p226) target = $region12
      $region11: #{dqn_base_forward.3} parent=5 // pred_region
        %s230 = ssub.s32 %s17, 1
        // Predicated region
        $region13: #{dqn_base_forward.3} parent=11 // pred_check
          %p231 = pneg %p64
        $region14: #{dqn_base_forward.3} parent=11 // pred_check_branch
          %233 = sbr.rel (%p231) target = $region16
        $region15: #{dqn_base_forward.3} parent=11 // pred_region
          _
        $region16: #{dqn_base_forward.3} parent=11 // pred_fallthru
          _
        // Predicated region
        $region17: #{dqn_base_forward.3} parent=11 // pred_check
          %p234 = pneg %p85
        $region18: #{dqn_base_forward.3} parent=11 // pred_check_branch
          %236 = sbr.rel (%p234) target = $region20
        $region19: #{dqn_base_forward.3} parent=11 // pred_region
          _
        $region20: #{dqn_base_forward.3} parent=11 // pred_fallthru
          _
        // Predicated region
        $region21: #{dqn_base_forward.3} parent=11 // pred_check
          %p237 = pneg %p106
        $region22: #{dqn_base_forward.3} parent=11 // pred_check_branch
          %239 = sbr.rel (%p237) target = $region24
        $region23: #{dqn_base_forward.3} parent=11 // pred_region
          _
        $region24: #{dqn_base_forward.3} parent=11 // pred_fallthru
          _
        // Predicated region
        $region25: #{dqn_base_forward.3} parent=11 // pred_check
          %p240 = pneg %p127
        $region26: #{dqn_base_forward.3} parent=11 // pred_check_branch
          %242 = sbr.rel (%p240) target = $region28
        $region27: #{dqn_base_forward.3} parent=11 // pred_region
          _
        $region28: #{dqn_base_forward.3} parent=11 // pred_fallthru
          _
        // Predicated region
        $region29: #{dqn_base_forward.3} parent=11 // pred_check
          %p243 = pneg %p148
        $region30: #{dqn_base_forward.3} parent=11 // pred_check_branch
          %245 = sbr.rel (%p243) target = $region32
        $region31: #{dqn_base_forward.3} parent=11 // pred_region
          _
        $region32: #{dqn_base_forward.3} parent=11 // pred_fallthru
          _
        // Predicated region
        $region33: #{dqn_base_forward.3} parent=11 // pred_check
          %p246 = pneg %p169
        $region34: #{dqn_base_forward.3} parent=11 // pred_check_branch
          %248 = sbr.rel (%p246) target = $region36
        $region35: #{dqn_base_forward.3} parent=11 // pred_region
          _
        $region36: #{dqn_base_forward.3} parent=11 // pred_fallthru
          _
        // Predicated region
        $region37: #{dqn_base_forward.3} parent=11 // pred_check
          %p249 = pneg %p190
        $region38: #{dqn_base_forward.3} parent=11 // pred_check_branch
          %251 = sbr.rel (%p249) target = $region40
        $region39: #{dqn_base_forward.3} parent=11 // pred_region
          _
        $region40: #{dqn_base_forward.3} parent=11 // pred_fallthru
          _
      $region12: #{dqn_base_forward.3} parent=5 // pred_fallthru
        _
      %p252 = scmp.lt.s32.totalorder %s17, 2
      // Predicated region
      $region41: #{dqn_base_forward.3} parent=5 // pred_check
        %p253 = pneg %p252
      $region42: #{dqn_base_forward.3} parent=5 // pred_check_branch
        %255 = sbr.rel (%p253) target = $region44
      $region43: #{dqn_base_forward.3} parent=5 // pred_region
        // Predicated region
        $region45: #{dqn_base_forward.3} parent=43 // pred_check
          %p256 = pneg %p37
        $region46: #{dqn_base_forward.3} parent=43 // pred_check_branch
          %258 = sbr.rel (%p256) target = $region48
        $region47: #{dqn_base_forward.3} parent=43 // pred_region
          %p259 = scmp.lt.s32.totalorder %s17, 1
          %s260 = scalar_select %p259, %s17, 1
          %s261 = smul.addr %s260, 128
          %s262 = smul.addr %s261, 4
          %s263 = scalar_lea.vmem %s0, %s262
        $region48: #{dqn_base_forward.3} parent=43 // pred_fallthru
          _
      $region44: #{dqn_base_forward.3} parent=5 // pred_fallthru
        _
      %p264 = scmp.le.s32.totalorder 1, %s17
      %p265 = scmp.lt.s32.totalorder %s17, 3
      %p266 = pnand %p264, %p265
      %p267 = pneg %p266
      // Predicated region
      $region49: #{dqn_base_forward.3} parent=5 // pred_check
        _
      $region50: #{dqn_base_forward.3} parent=5 // pred_check_branch
        %269 = sbr.rel (%p266) target = $region52
      $region51: #{dqn_base_forward.3} parent=5 // pred_region
        %s270 = ssub.s32 %s17, 1
        %p271 = scmp.lt.s32.totalorder %s22, 1
        %s272 = scalar_select %p271, %s22, 1
        %s273 = smul.addr %s272, 128
        %s274 = smul.addr %s273, 4
        %s275 = scalar_lea.vmem %s0, %s274
        %p276 = pneg %p43
        %p277 = pneg %p40
        %p278 = pneg %p64
        %p279 = pneg %p61
        %p280 = pneg %p85
        %p281 = pneg %p82
        %p282 = pneg %p106
        %p283 = pneg %p103
        %p284 = pneg %p127
        %p285 = pneg %p124
        %p286 = pneg %p148
        %p287 = pneg %p145
        %p288 = pneg %p169
        %p289 = pneg %p166
        %p290 = pneg %p190
        %p291 = pneg %p187
        %p292 = pneg %p216
        %p293 = pneg %p213
        %s294 = sand.u32 %s203, 1
        %s295 = scalar_lea.sflag [#allocation3], %s294
        %s296 = sand.u32 %s203, 1
        %s297 = scalar_lea.vmem [#allocation2], %s296
        %p298 = scmp.lt.s32.totalorder %s22, 1
        %s299 = scalar_select %p298, %s22, 1
        %s300 = smul.addr %s299, 128
        %s301 = smul.addr %s300, 4
        %s302 = scalar_lea.vmem %s0, %s301
        %v304 = vld [vmem:[%s302] sm:$0xff]
        %v305 = vld [vmem:[%s302 + $0x8] sm:$0xff]
        %v306 = vld [vmem:[%s302 + $0x10] sm:$0xff]
        %v307 = vld [vmem:[%s302 + $0x18] sm:$0xff]
        %v308 = vld [vmem:[%s302 + $0x20] sm:$0xff]
        %v309 = vld [vmem:[%s302 + $0x28] sm:$0xff]
        %v310 = vld [vmem:[%s302 + $0x30] sm:$0xff]
        %v311 = vld [vmem:[%s302 + $0x38] sm:$0xff]
        %v312 = vld [vmem:[%s302 + $0x40] sm:$0xff]
        %v313 = vld [vmem:[%s302 + $0x48] sm:$0xff]
        %v314 = vld [vmem:[%s302 + $0x50] sm:$0xff]
        %v315 = vld [vmem:[%s302 + $0x58] sm:$0xff]
        %v316 = vld [vmem:[%s302 + $0x60] sm:$0xff]
        %v317 = vld [vmem:[%s302 + $0x68] sm:$0xff]
        %v318 = vld [vmem:[%s302 + $0x70] sm:$0xff]
        %v319 = vld [vmem:[%s302 + $0x78] sm:$0xff]
        %v320 = vld [vmem:[%s302 + $0x80] sm:$0xff]
        %v321 = vld [vmem:[%s302 + $0x88] sm:$0xff]
        %v322 = vld [vmem:[%s302 + $0x90] sm:$0xff]
        %v323 = vld [vmem:[%s302 + $0x98] sm:$0xff]
        %v324 = vld [vmem:[%s302 + $0xa0] sm:$0xff]
        %v325 = vld [vmem:[%s302 + $0xa8] sm:$0xff]
        %v326 = vld [vmem:[%s302 + $0xb0] sm:$0xff]
        %v327 = vld [vmem:[%s302 + $0xb8] sm:$0xff]
        %v328 = vld [vmem:[%s302 + $0xc0] sm:$0xff]
        %v329 = vld [vmem:[%s302 + $0xc8] sm:$0xff]
        %v330 = vld [vmem:[%s302 + $0xd0] sm:$0xff]
        %v331 = vld [vmem:[%s302 + $0xd8] sm:$0xff]
        %v332 = vld [vmem:[%s302 + $0xe0] sm:$0xff]
        %v333 = vld [vmem:[%s302 + $0xe8] sm:$0xff]
        %v334 = vld [vmem:[%s302 + $0xf0] sm:$0xff]
        %v335 = vld [vmem:[%s302 + $0xf8] sm:$0xff]
        %v336 = vld [vmem:[%s302 + $0x100] sm:$0xff]
        %v337 = vld [vmem:[%s302 + $0x108] sm:$0xff]
        %v338 = vld [vmem:[%s302 + $0x110] sm:$0xff]
        %v339 = vld [vmem:[%s302 + $0x118] sm:$0xff]
        %v340 = vld [vmem:[%s302 + $0x120] sm:$0xff]
        %v341 = vld [vmem:[%s302 + $0x128] sm:$0xff]
        %v342 = vld [vmem:[%s302 + $0x130] sm:$0xff]
        %v343 = vld [vmem:[%s302 + $0x138] sm:$0xff]
        %v344 = vld [vmem:[%s302 + $0x140] sm:$0xff]
        %v345 = vld [vmem:[%s302 + $0x148] sm:$0xff]
        %v346 = vld [vmem:[%s302 + $0x150] sm:$0xff]
        %v347 = vld [vmem:[%s302 + $0x158] sm:$0xff]
        %v348 = vld [vmem:[%s302 + $0x160] sm:$0xff]
        %v349 = vld [vmem:[%s302 + $0x168] sm:$0xff]
        %v350 = vld [vmem:[%s302 + $0x170] sm:$0xff]
        %v351 = vld [vmem:[%s302 + $0x178] sm:$0xff]
        %v352 = vld [vmem:[%s302 + $0x180] sm:$0xff]
        %v353 = vld [vmem:[%s302 + $0x188] sm:$0xff]
        %v354 = vld [vmem:[%s302 + $0x190] sm:$0xff]
        %v355 = vld [vmem:[%s302 + $0x198] sm:$0xff]
        %v356 = vld [vmem:[%s302 + $0x1a0] sm:$0xff]
        %v357 = vld [vmem:[%s302 + $0x1a8] sm:$0xff]
        %v358 = vld [vmem:[%s302 + $0x1b0] sm:$0xff]
        %v359 = vld [vmem:[%s302 + $0x1b8] sm:$0xff]
        %v360 = vld [vmem:[%s302 + $0x1c0] sm:$0xff]
        %v361 = vld [vmem:[%s302 + $0x1c8] sm:$0xff]
        %v362 = vld [vmem:[%s302 + $0x1d0] sm:$0xff]
        %v363 = vld [vmem:[%s302 + $0x1d8] sm:$0xff]
        %v364 = vld [vmem:[%s302 + $0x1e0] sm:$0xff]
        %v365 = vld [vmem:[%s302 + $0x1e8] sm:$0xff]
        %v366 = vld [vmem:[%s302 + $0x1f0] sm:$0xff]
        %v367 = vld [vmem:[%s302 + $0x1f8] sm:$0xff]
        %v368 = vld [vmem:[%s1] sm:$0xf]
        %v369 = vld [vmem:[%s1 + $0x4] sm:$0xf]
        %v370 = vld [vmem:[%s1 + $0x8] sm:$0xf]
        %v371 = vld [vmem:[%s1 + $0xc] sm:$0xf]
        %v372 = vld [vmem:[%s1 + $0x10] sm:$0xf]
        %v373 = vld [vmem:[%s1 + $0x14] sm:$0xf]
        %v374 = vld [vmem:[%s1 + $0x18] sm:$0xf]
        %v375 = vld [vmem:[%s1 + $0x1c] sm:$0xf]
        %v376 = vld [vmem:[%s1 + $0x20] sm:$0xf]
        %v377 = vld [vmem:[%s1 + $0x24] sm:$0xf]
        %v378 = vld [vmem:[%s1 + $0x28] sm:$0xf]
        %v379 = vld [vmem:[%s1 + $0x2c] sm:$0xf]
        %v380 = vld [vmem:[%s1 + $0x30] sm:$0xf]
        %v381 = vld [vmem:[%s1 + $0x34] sm:$0xf]
        %v382 = vld [vmem:[%s1 + $0x38] sm:$0xf]
        %v383 = vld [vmem:[%s1 + $0x3c] sm:$0xf]
        %v384 = vld [vmem:[%s1 + $0x40] sm:$0xf]
        %v385 = vld [vmem:[%s1 + $0x44] sm:$0xf]
        %v386 = vld [vmem:[%s1 + $0x48] sm:$0xf]
        %v387 = vld [vmem:[%s1 + $0x4c] sm:$0xf]
        %v388 = vld [vmem:[%s1 + $0x50] sm:$0xf]
        %v389 = vld [vmem:[%s1 + $0x54] sm:$0xf]
        %v390 = vld [vmem:[%s1 + $0x58] sm:$0xf]
        %v391 = vld [vmem:[%s1 + $0x5c] sm:$0xf]
        %v392 = vld [vmem:[%s1 + $0x60] sm:$0xf]
        %v393 = vld [vmem:[%s1 + $0x64] sm:$0xf]
        %v394 = vld [vmem:[%s1 + $0x68] sm:$0xf]
        %v395 = vld [vmem:[%s1 + $0x6c] sm:$0xf]
        %v396 = vld [vmem:[%s1 + $0x70] sm:$0xf]
        %v397 = vld [vmem:[%s1 + $0x74] sm:$0xf]
        %v398 = vld [vmem:[%s1 + $0x78] sm:$0xf]
        %v399 = vld [vmem:[%s1 + $0x7c] sm:$0xf]
        %v400 = vld [vmem:[%s1 + $0x80] sm:$0xf]
        %v401 = vld [vmem:[%s1 + $0x84] sm:$0xf]
        %v402 = vld [vmem:[%s1 + $0x88] sm:$0xf]
        %v403 = vld [vmem:[%s1 + $0x8c] sm:$0xf]
        %v404 = vld [vmem:[%s1 + $0x90] sm:$0xf]
        %v405 = vld [vmem:[%s1 + $0x94] sm:$0xf]
        %v406 = vld [vmem:[%s1 + $0x98] sm:$0xf]
        %v407 = vld [vmem:[%s1 + $0x9c] sm:$0xf]
        %v408 = vld [vmem:[%s1 + $0xa0] sm:$0xf]
        %v409 = vld [vmem:[%s1 + $0xa4] sm:$0xf]
        %v410 = vld [vmem:[%s1 + $0xa8] sm:$0xf]
        %v411 = vld [vmem:[%s1 + $0xac] sm:$0xf]
        %v412 = vld [vmem:[%s1 + $0xb0] sm:$0xf]
        %v413 = vld [vmem:[%s1 + $0xb4] sm:$0xf]
        %v414 = vld [vmem:[%s1 + $0xb8] sm:$0xf]
        %v415 = vld [vmem:[%s1 + $0xbc] sm:$0xf]
        %v416 = vld [vmem:[%s1 + $0xc0] sm:$0xf]
        %v417 = vld [vmem:[%s1 + $0xc4] sm:$0xf]
        %v418 = vld [vmem:[%s1 + $0xc8] sm:$0xf]
        %v419 = vld [vmem:[%s1 + $0xcc] sm:$0xf]
        %v420 = vld [vmem:[%s1 + $0xd0] sm:$0xf]
        %v421 = vld [vmem:[%s1 + $0xd4] sm:$0xf]
        %v422 = vld [vmem:[%s1 + $0xd8] sm:$0xf]
        %v423 = vld [vmem:[%s1 + $0xdc] sm:$0xf]
        %v424 = vld [vmem:[%s1 + $0xe0] sm:$0xf]
        %v425 = vld [vmem:[%s1 + $0xe4] sm:$0xf]
        %v426 = vld [vmem:[%s1 + $0xe8] sm:$0xf]
        %v427 = vld [vmem:[%s1 + $0xec] sm:$0xf]
        %v428 = vld [vmem:[%s1 + $0xf0] sm:$0xf]
        %v429 = vld [vmem:[%s1 + $0xf4] sm:$0xf]
        %v430 = vld [vmem:[%s1 + $0xf8] sm:$0xf]
        %v431 = vld [vmem:[%s1 + $0xfc] sm:$0xf]
        %v432 = vld [vmem:[%s1 + $0x100] sm:$0xf]
        %v433 = vld [vmem:[%s1 + $0x104] sm:$0xf]
        %v434 = vld [vmem:[%s1 + $0x108] sm:$0xf]
        %v435 = vld [vmem:[%s1 + $0x10c] sm:$0xf]
        %v436 = vld [vmem:[%s1 + $0x110] sm:$0xf]
        %v437 = vld [vmem:[%s1 + $0x114] sm:$0xf]
        %v438 = vld [vmem:[%s1 + $0x118] sm:$0xf]
        %v439 = vld [vmem:[%s1 + $0x11c] sm:$0xf]
        %v440 = vld [vmem:[%s1 + $0x120] sm:$0xf]
        %v441 = vld [vmem:[%s1 + $0x124] sm:$0xf]
        %v442 = vld [vmem:[%s1 + $0x128] sm:$0xf]
        %v443 = vld [vmem:[%s1 + $0x12c] sm:$0xf]
        %v444 = vld [vmem:[%s1 + $0x130] sm:$0xf]
        %v445 = vld [vmem:[%s1 + $0x134] sm:$0xf]
        %v446 = vld [vmem:[%s1 + $0x138] sm:$0xf]
        %v447 = vld [vmem:[%s1 + $0x13c] sm:$0xf]
        %v448 = vld [vmem:[%s1 + $0x140] sm:$0xf]
        %v449 = vld [vmem:[%s1 + $0x144] sm:$0xf]
        %v450 = vld [vmem:[%s1 + $0x148] sm:$0xf]
        %v451 = vld [vmem:[%s1 + $0x14c] sm:$0xf]
        %v452 = vld [vmem:[%s1 + $0x150] sm:$0xf]
        %v453 = vld [vmem:[%s1 + $0x154] sm:$0xf]
        %v454 = vld [vmem:[%s1 + $0x158] sm:$0xf]
        %v455 = vld [vmem:[%s1 + $0x15c] sm:$0xf]
        %v456 = vld [vmem:[%s1 + $0x160] sm:$0xf]
        %v457 = vld [vmem:[%s1 + $0x164] sm:$0xf]
        %v458 = vld [vmem:[%s1 + $0x168] sm:$0xf]
        %v459 = vld [vmem:[%s1 + $0x16c] sm:$0xf]
        %v460 = vld [vmem:[%s1 + $0x170] sm:$0xf]
        %v461 = vld [vmem:[%s1 + $0x174] sm:$0xf]
        %v462 = vld [vmem:[%s1 + $0x178] sm:$0xf]
        %v463 = vld [vmem:[%s1 + $0x17c] sm:$0xf]
        %v464 = vld [vmem:[%s1 + $0x180] sm:$0xf]
        %v465 = vld [vmem:[%s1 + $0x184] sm:$0xf]
        %v466 = vld [vmem:[%s1 + $0x188] sm:$0xf]
        %v467 = vld [vmem:[%s1 + $0x18c] sm:$0xf]
        %v468 = vld [vmem:[%s1 + $0x190] sm:$0xf]
        %v469 = vld [vmem:[%s1 + $0x194] sm:$0xf]
        %v470 = vld [vmem:[%s1 + $0x198] sm:$0xf]
        %v471 = vld [vmem:[%s1 + $0x19c] sm:$0xf]
        %v472 = vld [vmem:[%s1 + $0x1a0] sm:$0xf]
        %v473 = vld [vmem:[%s1 + $0x1a4] sm:$0xf]
        %v474 = vld [vmem:[%s1 + $0x1a8] sm:$0xf]
        %v475 = vld [vmem:[%s1 + $0x1ac] sm:$0xf]
        %v476 = vld [vmem:[%s1 + $0x1b0] sm:$0xf]
        %v477 = vld [vmem:[%s1 + $0x1b4] sm:$0xf]
        %v478 = vld [vmem:[%s1 + $0x1b8] sm:$0xf]
        %v479 = vld [vmem:[%s1 + $0x1bc] sm:$0xf]
        %v480 = vld [vmem:[%s1 + $0x1c0] sm:$0xf]
        %v481 = vld [vmem:[%s1 + $0x1c4] sm:$0xf]
        %v482 = vld [vmem:[%s1 + $0x1c8] sm:$0xf]
        %v483 = vld [vmem:[%s1 + $0x1cc] sm:$0xf]
        %v484 = vld [vmem:[%s1 + $0x1d0] sm:$0xf]
        %v485 = vld [vmem:[%s1 + $0x1d4] sm:$0xf]
        %v486 = vld [vmem:[%s1 + $0x1d8] sm:$0xf]
        %v487 = vld [vmem:[%s1 + $0x1dc] sm:$0xf]
        %v488 = vld [vmem:[%s1 + $0x1e0] sm:$0xf]
        %v489 = vld [vmem:[%s1 + $0x1e4] sm:$0xf]
        %v490 = vld [vmem:[%s1 + $0x1e8] sm:$0xf]
        %v491 = vld [vmem:[%s1 + $0x1ec] sm:$0xf]
        %v492 = vld [vmem:[%s1 + $0x1f0] sm:$0xf]
        %v493 = vld [vmem:[%s1 + $0x1f4] sm:$0xf]
        %v494 = vld [vmem:[%s1 + $0x1f8] sm:$0xf]
        %v495 = vld [vmem:[%s1 + $0x1fc] sm:$0xf]
        %v496 = vld [vmem:[%s1 + $0x200] sm:$0xf]
        %v497 = vld [vmem:[%s1 + $0x204] sm:$0xf]
        %v498 = vld [vmem:[%s1 + $0x208] sm:$0xf]
        %v499 = vld [vmem:[%s1 + $0x20c] sm:$0xf]
        %v500 = vld [vmem:[%s1 + $0x210] sm:$0xf]
        %v501 = vld [vmem:[%s1 + $0x214] sm:$0xf]
        %v502 = vld [vmem:[%s1 + $0x218] sm:$0xf]
        %v503 = vld [vmem:[%s1 + $0x21c] sm:$0xf]
        %v504 = vld [vmem:[%s1 + $0x220] sm:$0xf]
        %v505 = vld [vmem:[%s1 + $0x224] sm:$0xf]
        %v506 = vld [vmem:[%s1 + $0x228] sm:$0xf]
        %v507 = vld [vmem:[%s1 + $0x22c] sm:$0xf]
        %v508 = vld [vmem:[%s1 + $0x230] sm:$0xf]
        %v509 = vld [vmem:[%s1 + $0x234] sm:$0xf]
        %v510 = vld [vmem:[%s1 + $0x238] sm:$0xf]
        %v511 = vld [vmem:[%s1 + $0x23c] sm:$0xf]
        %v512 = vld [vmem:[%s1 + $0x240] sm:$0xf]
        %v513 = vld [vmem:[%s1 + $0x244] sm:$0xf]
        %v514 = vld [vmem:[%s1 + $0x248] sm:$0xf]
        %v515 = vld [vmem:[%s1 + $0x24c] sm:$0xf]
        %v516 = vld [vmem:[%s1 + $0x250] sm:$0xf]
        %v517 = vld [vmem:[%s1 + $0x254] sm:$0xf]
        %v518 = vld [vmem:[%s1 + $0x258] sm:$0xf]
        %v519 = vld [vmem:[%s1 + $0x25c] sm:$0xf]
        %v520 = vld [vmem:[%s1 + $0x260] sm:$0xf]
        %v521 = vld [vmem:[%s1 + $0x264] sm:$0xf]
        %v522 = vld [vmem:[%s1 + $0x268] sm:$0xf]
        %v523 = vld [vmem:[%s1 + $0x26c] sm:$0xf]
        %v524 = vld [vmem:[%s1 + $0x270] sm:$0xf]
        %v525 = vld [vmem:[%s1 + $0x274] sm:$0xf]
        %v526 = vld [vmem:[%s1 + $0x278] sm:$0xf]
        %v527 = vld [vmem:[%s1 + $0x27c] sm:$0xf]
        %v528 = vld [vmem:[%s1 + $0x280] sm:$0xf]
        %v529 = vld [vmem:[%s1 + $0x284] sm:$0xf]
        %v530 = vld [vmem:[%s1 + $0x288] sm:$0xf]
        %v531 = vld [vmem:[%s1 + $0x28c] sm:$0xf]
        %v532 = vld [vmem:[%s1 + $0x290] sm:$0xf]
        %v533 = vld [vmem:[%s1 + $0x294] sm:$0xf]
        %v534 = vld [vmem:[%s1 + $0x298] sm:$0xf]
        %v535 = vld [vmem:[%s1 + $0x29c] sm:$0xf]
        %v536 = vld [vmem:[%s1 + $0x2a0] sm:$0xf]
        %v537 = vld [vmem:[%s1 + $0x2a4] sm:$0xf]
        %v538 = vld [vmem:[%s1 + $0x2a8] sm:$0xf]
        %v539 = vld [vmem:[%s1 + $0x2ac] sm:$0xf]
        %v540 = vld [vmem:[%s1 + $0x2b0] sm:$0xf]
        %v541 = vld [vmem:[%s1 + $0x2b4] sm:$0xf]
        %v542 = vld [vmem:[%s1 + $0x2b8] sm:$0xf]
        %v543 = vld [vmem:[%s1 + $0x2bc] sm:$0xf]
        %v544 = vld [vmem:[%s1 + $0x2c0] sm:$0xf]
        %v545 = vld [vmem:[%s1 + $0x2c4] sm:$0xf]
        %v546 = vld [vmem:[%s1 + $0x2c8] sm:$0xf]
        %v547 = vld [vmem:[%s1 + $0x2cc] sm:$0xf]
        %v548 = vld [vmem:[%s1 + $0x2d0] sm:$0xf]
        %v549 = vld [vmem:[%s1 + $0x2d4] sm:$0xf]
        %v550 = vld [vmem:[%s1 + $0x2d8] sm:$0xf]
        %v551 = vld [vmem:[%s1 + $0x2dc] sm:$0xf]
        %v552 = vld [vmem:[%s1 + $0x2e0] sm:$0xf]
        %v553 = vld [vmem:[%s1 + $0x2e4] sm:$0xf]
        %v554 = vld [vmem:[%s1 + $0x2e8] sm:$0xf]
        %v555 = vld [vmem:[%s1 + $0x2ec] sm:$0xf]
        %v556 = vld [vmem:[%s1 + $0x2f0] sm:$0xf]
        %v557 = vld [vmem:[%s1 + $0x2f4] sm:$0xf]
        %v558 = vld [vmem:[%s1 + $0x2f8] sm:$0xf]
        %v559 = vld [vmem:[%s1 + $0x2fc] sm:$0xf]
        %v560 = vld [vmem:[%s1 + $0x300] sm:$0xf]
        %v561 = vld [vmem:[%s1 + $0x304] sm:$0xf]
        %v562 = vld [vmem:[%s1 + $0x308] sm:$0xf]
        %v563 = vld [vmem:[%s1 + $0x30c] sm:$0xf]
        %v564 = vld [vmem:[%s1 + $0x310] sm:$0xf]
        %v565 = vld [vmem:[%s1 + $0x314] sm:$0xf]
        %v566 = vld [vmem:[%s1 + $0x318] sm:$0xf]
        %v567 = vld [vmem:[%s1 + $0x31c] sm:$0xf]
        %v568 = vld [vmem:[%s1 + $0x320] sm:$0xf]
        %v569 = vld [vmem:[%s1 + $0x324] sm:$0xf]
        %v570 = vld [vmem:[%s1 + $0x328] sm:$0xf]
        %v571 = vld [vmem:[%s1 + $0x32c] sm:$0xf]
        %v572 = vld [vmem:[%s1 + $0x330] sm:$0xf]
        %v573 = vld [vmem:[%s1 + $0x334] sm:$0xf]
        %v574 = vld [vmem:[%s1 + $0x338] sm:$0xf]
        %v575 = vld [vmem:[%s1 + $0x33c] sm:$0xf]
        %v576 = vld [vmem:[%s1 + $0x340] sm:$0xf]
        %v577 = vld [vmem:[%s1 + $0x344] sm:$0xf]
        %v578 = vld [vmem:[%s1 + $0x348] sm:$0xf]
        %v579 = vld [vmem:[%s1 + $0x34c] sm:$0xf]
        %v580 = vld [vmem:[%s1 + $0x350] sm:$0xf]
        %v581 = vld [vmem:[%s1 + $0x354] sm:$0xf]
        %v582 = vld [vmem:[%s1 + $0x358] sm:$0xf]
        %v583 = vld [vmem:[%s1 + $0x35c] sm:$0xf]
        %v584 = vld [vmem:[%s1 + $0x360] sm:$0xf]
        %v585 = vld [vmem:[%s1 + $0x364] sm:$0xf]
        %v586 = vld [vmem:[%s1 + $0x368] sm:$0xf]
        %v587 = vld [vmem:[%s1 + $0x36c] sm:$0xf]
        %v588 = vld [vmem:[%s1 + $0x370] sm:$0xf]
        %v589 = vld [vmem:[%s1 + $0x374] sm:$0xf]
        %v590 = vld [vmem:[%s1 + $0x378] sm:$0xf]
        %v591 = vld [vmem:[%s1 + $0x37c] sm:$0xf]
        %v592 = vld [vmem:[%s1 + $0x380] sm:$0xf]
        %v593 = vld [vmem:[%s1 + $0x384] sm:$0xf]
        %v594 = vld [vmem:[%s1 + $0x388] sm:$0xf]
        %v595 = vld [vmem:[%s1 + $0x38c] sm:$0xf]
        %v596 = vld [vmem:[%s1 + $0x390] sm:$0xf]
        %v597 = vld [vmem:[%s1 + $0x394] sm:$0xf]
        %v598 = vld [vmem:[%s1 + $0x398] sm:$0xf]
        %v599 = vld [vmem:[%s1 + $0x39c] sm:$0xf]
        %v600 = vld [vmem:[%s1 + $0x3a0] sm:$0xf]
        %v601 = vld [vmem:[%s1 + $0x3a4] sm:$0xf]
        %v602 = vld [vmem:[%s1 + $0x3a8] sm:$0xf]
        %v603 = vld [vmem:[%s1 + $0x3ac] sm:$0xf]
        %v604 = vld [vmem:[%s1 + $0x3b0] sm:$0xf]
        %v605 = vld [vmem:[%s1 + $0x3b4] sm:$0xf]
        %v606 = vld [vmem:[%s1 + $0x3b8] sm:$0xf]
        %v607 = vld [vmem:[%s1 + $0x3bc] sm:$0xf]
        %v608 = vld [vmem:[%s1 + $0x3c0] sm:$0xf]
        %v609 = vld [vmem:[%s1 + $0x3c4] sm:$0xf]
        %v610 = vld [vmem:[%s1 + $0x3c8] sm:$0xf]
        %v611 = vld [vmem:[%s1 + $0x3cc] sm:$0xf]
        %v612 = vld [vmem:[%s1 + $0x3d0] sm:$0xf]
        %v613 = vld [vmem:[%s1 + $0x3d4] sm:$0xf]
        %v614 = vld [vmem:[%s1 + $0x3d8] sm:$0xf]
        %v615 = vld [vmem:[%s1 + $0x3dc] sm:$0xf]
        %v616 = vld [vmem:[%s1 + $0x3e0] sm:$0xf]
        %v617 = vld [vmem:[%s1 + $0x3e4] sm:$0xf]
        %v618 = vld [vmem:[%s1 + $0x3e8] sm:$0xf]
        %v619 = vld [vmem:[%s1 + $0x3ec] sm:$0xf]
        %v620 = vld [vmem:[%s1 + $0x3f0] sm:$0xf]
        %v621 = vld [vmem:[%s1 + $0x3f4] sm:$0xf]
        %v622 = vld [vmem:[%s1 + $0x3f8] sm:$0xf]
        %v623 = vld [vmem:[%s1 + $0x3fc] sm:$0xf]
        %v624 = vld [vmem:[%s2] sm:$0x1]
        %v626 = vlaneseq
        %v627 = vshrl.u32 %v626, 7
        %v628 = vsub.s32 0, %v627
        %v629 = vrot.slane %v624, %v628
        %v695 = vunpack.c.l.b16 %v304
        %v696 = vunpack.c.h.b16 %v304
        %v697 = vunpack.c.l.b16 %v305
        %v698 = vunpack.c.h.b16 %v305
        %v699 = vunpack.c.l.b16 %v306
        %v700 = vunpack.c.h.b16 %v306
        %v701 = vunpack.c.l.b16 %v307
        %v702 = vunpack.c.h.b16 %v307
        %v703 = vunpack.c.l.b16 %v308
        %v704 = vunpack.c.h.b16 %v308
        %v705 = vunpack.c.l.b16 %v309
        %v706 = vunpack.c.h.b16 %v309
        %v707 = vunpack.c.l.b16 %v310
        %v708 = vunpack.c.h.b16 %v310
        %v709 = vunpack.c.l.b16 %v311
        %v710 = vunpack.c.h.b16 %v311
        %v711 = vunpack.c.l.b16 %v312
        %v712 = vunpack.c.h.b16 %v312
        %v713 = vunpack.c.l.b16 %v313
        %v714 = vunpack.c.h.b16 %v313
        %v715 = vunpack.c.l.b16 %v314
        %v716 = vunpack.c.h.b16 %v314
        %v717 = vunpack.c.l.b16 %v315
        %v718 = vunpack.c.h.b16 %v315
        %v719 = vunpack.c.l.b16 %v316
        %v720 = vunpack.c.h.b16 %v316
        %v721 = vunpack.c.l.b16 %v317
        %v722 = vunpack.c.h.b16 %v317
        %v723 = vunpack.c.l.b16 %v318
        %v724 = vunpack.c.h.b16 %v318
        %v725 = vunpack.c.l.b16 %v319
        %v726 = vunpack.c.h.b16 %v319
        %v727 = vunpack.c.l.b16 %v320
        %v728 = vunpack.c.h.b16 %v320
        %v729 = vunpack.c.l.b16 %v321
        %v730 = vunpack.c.h.b16 %v321
        %v731 = vunpack.c.l.b16 %v322
        %v732 = vunpack.c.h.b16 %v322
        %v733 = vunpack.c.l.b16 %v323
        %v734 = vunpack.c.h.b16 %v323
        %v735 = vunpack.c.l.b16 %v324
        %v736 = vunpack.c.h.b16 %v324
        %v737 = vunpack.c.l.b16 %v325
        %v738 = vunpack.c.h.b16 %v325
        %v739 = vunpack.c.l.b16 %v326
        %v740 = vunpack.c.h.b16 %v326
        %v741 = vunpack.c.l.b16 %v327
        %v742 = vunpack.c.h.b16 %v327
        %v743 = vunpack.c.l.b16 %v328
        %v744 = vunpack.c.h.b16 %v328
        %v745 = vunpack.c.l.b16 %v329
        %v746 = vunpack.c.h.b16 %v329
        %v747 = vunpack.c.l.b16 %v330
        %v748 = vunpack.c.h.b16 %v330
        %v749 = vunpack.c.l.b16 %v331
        %v750 = vunpack.c.h.b16 %v331
        %v751 = vunpack.c.l.b16 %v332
        %v752 = vunpack.c.h.b16 %v332
        %v753 = vunpack.c.l.b16 %v333
        %v754 = vunpack.c.h.b16 %v333
        %v755 = vunpack.c.l.b16 %v334
        %v756 = vunpack.c.h.b16 %v334
        %v757 = vunpack.c.l.b16 %v335
        %v758 = vunpack.c.h.b16 %v335
        %v759 = vunpack.c.l.b16 %v336
        %v760 = vunpack.c.h.b16 %v336
        %v761 = vunpack.c.l.b16 %v337
        %v762 = vunpack.c.h.b16 %v337
        %v763 = vunpack.c.l.b16 %v338
        %v764 = vunpack.c.h.b16 %v338
        %v765 = vunpack.c.l.b16 %v339
        %v766 = vunpack.c.h.b16 %v339
        %v767 = vunpack.c.l.b16 %v340
        %v768 = vunpack.c.h.b16 %v340
        %v769 = vunpack.c.l.b16 %v341
        %v770 = vunpack.c.h.b16 %v341
        %v771 = vunpack.c.l.b16 %v342
        %v772 = vunpack.c.h.b16 %v342
        %v773 = vunpack.c.l.b16 %v343
        %v774 = vunpack.c.h.b16 %v343
        %v775 = vunpack.c.l.b16 %v344
        %v776 = vunpack.c.h.b16 %v344
        %v777 = vunpack.c.l.b16 %v345
        %v778 = vunpack.c.h.b16 %v345
        %v779 = vunpack.c.l.b16 %v346
        %v780 = vunpack.c.h.b16 %v346
        %v781 = vunpack.c.l.b16 %v347
        %v782 = vunpack.c.h.b16 %v347
        %v783 = vunpack.c.l.b16 %v348
        %v784 = vunpack.c.h.b16 %v348
        %v785 = vunpack.c.l.b16 %v349
        %v786 = vunpack.c.h.b16 %v349
        %v787 = vunpack.c.l.b16 %v350
        %v788 = vunpack.c.h.b16 %v350
        %v789 = vunpack.c.l.b16 %v351
        %v790 = vunpack.c.h.b16 %v351
        %v791 = vunpack.c.l.b16 %v352
        %v792 = vunpack.c.h.b16 %v352
        %v793 = vunpack.c.l.b16 %v353
        %v794 = vunpack.c.h.b16 %v353
        %v795 = vunpack.c.l.b16 %v354
        %v796 = vunpack.c.h.b16 %v354
        %v797 = vunpack.c.l.b16 %v355
        %v798 = vunpack.c.h.b16 %v355
        %v799 = vunpack.c.l.b16 %v356
        %v800 = vunpack.c.h.b16 %v356
        %v801 = vunpack.c.l.b16 %v357
        %v802 = vunpack.c.h.b16 %v357
        %v803 = vunpack.c.l.b16 %v358
        %v804 = vunpack.c.h.b16 %v358
        %v805 = vunpack.c.l.b16 %v359
        %v806 = vunpack.c.h.b16 %v359
        %v807 = vunpack.c.l.b16 %v360
        %v808 = vunpack.c.h.b16 %v360
        %v809 = vunpack.c.l.b16 %v361
        %v810 = vunpack.c.h.b16 %v361
        %v811 = vunpack.c.l.b16 %v362
        %v812 = vunpack.c.h.b16 %v362
        %v813 = vunpack.c.l.b16 %v363
        %v814 = vunpack.c.h.b16 %v363
        %v815 = vunpack.c.l.b16 %v364
        %v816 = vunpack.c.h.b16 %v364
        %v817 = vunpack.c.l.b16 %v365
        %v818 = vunpack.c.h.b16 %v365
        %v819 = vunpack.c.l.b16 %v366
        %v820 = vunpack.c.h.b16 %v366
        %v821 = vunpack.c.l.b16 %v367
        %v822 = vunpack.c.h.b16 %v367
        %v823 = vpack.c.b16 %v711, %v695
        %v824 = vpack.c.b16 %v712, %v696
        %v825 = vpack.c.b16 %v713, %v697
        %v826 = vpack.c.b16 %v714, %v698
        %v827 = vpack.c.b16 %v715, %v699
        %v828 = vpack.c.b16 %v716, %v700
        %v829 = vpack.c.b16 %v717, %v701
        %v830 = vpack.c.b16 %v718, %v702
        %v831 = vpack.c.b16 %v719, %v703
        %v832 = vpack.c.b16 %v720, %v704
        %v833 = vpack.c.b16 %v721, %v705
        %v834 = vpack.c.b16 %v722, %v706
        %v835 = vpack.c.b16 %v723, %v707
        %v836 = vpack.c.b16 %v724, %v708
        %v837 = vpack.c.b16 %v725, %v709
        %v838 = vpack.c.b16 %v726, %v710
        %v839 = vpack.c.b16 %v743, %v727
        %v840 = vpack.c.b16 %v744, %v728
        %v841 = vpack.c.b16 %v745, %v729
        %v842 = vpack.c.b16 %v746, %v730
        %v843 = vpack.c.b16 %v747, %v731
        %v844 = vpack.c.b16 %v748, %v732
        %v845 = vpack.c.b16 %v749, %v733
        %v846 = vpack.c.b16 %v750, %v734
        %v847 = vpack.c.b16 %v751, %v735
        %v848 = vpack.c.b16 %v752, %v736
        %v849 = vpack.c.b16 %v753, %v737
        %v850 = vpack.c.b16 %v754, %v738
        %v851 = vpack.c.b16 %v755, %v739
        %v852 = vpack.c.b16 %v756, %v740
        %v853 = vpack.c.b16 %v757, %v741
        %v854 = vpack.c.b16 %v758, %v742
        %v855 = vpack.c.b16 %v775, %v759
        %v856 = vpack.c.b16 %v776, %v760
        %v857 = vpack.c.b16 %v777, %v761
        %v858 = vpack.c.b16 %v778, %v762
        %v859 = vpack.c.b16 %v779, %v763
        %v860 = vpack.c.b16 %v780, %v764
        %v861 = vpack.c.b16 %v781, %v765
        %v862 = vpack.c.b16 %v782, %v766
        %v863 = vpack.c.b16 %v783, %v767
        %v864 = vpack.c.b16 %v784, %v768
        %v865 = vpack.c.b16 %v785, %v769
        %v866 = vpack.c.b16 %v786, %v770
        %v867 = vpack.c.b16 %v787, %v771
        %v868 = vpack.c.b16 %v788, %v772
        %v869 = vpack.c.b16 %v789, %v773
        %v870 = vpack.c.b16 %v790, %v774
        %v871 = vpack.c.b16 %v807, %v791
        %v872 = vpack.c.b16 %v808, %v792
        %v873 = vpack.c.b16 %v809, %v793
        %v874 = vpack.c.b16 %v810, %v794
        %v875 = vpack.c.b16 %v811, %v795
        %v876 = vpack.c.b16 %v812, %v796
        %v877 = vpack.c.b16 %v813, %v797
        %v878 = vpack.c.b16 %v814, %v798
        %v879 = vpack.c.b16 %v815, %v799
        %v880 = vpack.c.b16 %v816, %v800
        %v881 = vpack.c.b16 %v817, %v801
        %v882 = vpack.c.b16 %v818, %v802
        %v883 = vpack.c.b16 %v819, %v803
        %v884 = vpack.c.b16 %v820, %v804
        %v885 = vpack.c.b16 %v821, %v805
        %v886 = vpack.c.b16 %v822, %v806
        %v1207 = vunpack.c.l.b16 %v368
        %v1208 = vunpack.c.l.b16 %v369
        %v1209 = vunpack.c.l.b16 %v370
        %v1210 = vunpack.c.l.b16 %v371
        %v1211 = vunpack.c.l.b16 %v372
        %v1212 = vunpack.c.l.b16 %v373
        %v1213 = vunpack.c.l.b16 %v374
        %v1214 = vunpack.c.l.b16 %v375
        %v1215 = vunpack.c.l.b16 %v376
        %v1216 = vunpack.c.l.b16 %v377
        %v1217 = vunpack.c.l.b16 %v378
        %v1218 = vunpack.c.l.b16 %v379
        %v1219 = vunpack.c.l.b16 %v380
        %v1220 = vunpack.c.l.b16 %v381
        %v1221 = vunpack.c.l.b16 %v382
        %v1222 = vunpack.c.l.b16 %v383
        %v1223 = vunpack.c.l.b16 %v384
        %v1224 = vunpack.c.l.b16 %v385
        %v1225 = vunpack.c.l.b16 %v386
        %v1226 = vunpack.c.l.b16 %v387
        %v1227 = vunpack.c.l.b16 %v388
        %v1228 = vunpack.c.l.b16 %v389
        %v1229 = vunpack.c.l.b16 %v390
        %v1230 = vunpack.c.l.b16 %v391
        %v1231 = vunpack.c.l.b16 %v392
        %v1232 = vunpack.c.l.b16 %v393
        %v1233 = vunpack.c.l.b16 %v394
        %v1234 = vunpack.c.l.b16 %v395
        %v1235 = vunpack.c.l.b16 %v396
        %v1236 = vunpack.c.l.b16 %v397
        %v1237 = vunpack.c.l.b16 %v398
        %v1238 = vunpack.c.l.b16 %v399
        %v1239 = vunpack.c.l.b16 %v400
        %v1240 = vunpack.c.l.b16 %v401
        %v1241 = vunpack.c.l.b16 %v402
        %v1242 = vunpack.c.l.b16 %v403
        %v1243 = vunpack.c.l.b16 %v404
        %v1244 = vunpack.c.l.b16 %v405
        %v1245 = vunpack.c.l.b16 %v406
        %v1246 = vunpack.c.l.b16 %v407
        %v1247 = vunpack.c.l.b16 %v408
        %v1248 = vunpack.c.l.b16 %v409
        %v1249 = vunpack.c.l.b16 %v410
        %v1250 = vunpack.c.l.b16 %v411
        %v1251 = vunpack.c.l.b16 %v412
        %v1252 = vunpack.c.l.b16 %v413
        %v1253 = vunpack.c.l.b16 %v414
        %v1254 = vunpack.c.l.b16 %v415
        %v1255 = vunpack.c.l.b16 %v416
        %v1256 = vunpack.c.l.b16 %v417
        %v1257 = vunpack.c.l.b16 %v418
        %v1258 = vunpack.c.l.b16 %v419
        %v1259 = vunpack.c.l.b16 %v420
        %v1260 = vunpack.c.l.b16 %v421
        %v1261 = vunpack.c.l.b16 %v422
        %v1262 = vunpack.c.l.b16 %v423
        %v1263 = vunpack.c.l.b16 %v424
        %v1264 = vunpack.c.l.b16 %v425
        %v1265 = vunpack.c.l.b16 %v426
        %v1266 = vunpack.c.l.b16 %v427
        %v1267 = vunpack.c.l.b16 %v428
        %v1268 = vunpack.c.l.b16 %v429
        %v1269 = vunpack.c.l.b16 %v430
        %v1270 = vunpack.c.l.b16 %v431
        %v1271 = vunpack.c.l.b16 %v432
        %v1272 = vunpack.c.l.b16 %v433
        %v1273 = vunpack.c.l.b16 %v434
        %v1274 = vunpack.c.l.b16 %v435
        %v1275 = vunpack.c.l.b16 %v436
        %v1276 = vunpack.c.l.b16 %v437
        %v1277 = vunpack.c.l.b16 %v438
        %v1278 = vunpack.c.l.b16 %v439
        %v1279 = vunpack.c.l.b16 %v440
        %v1280 = vunpack.c.l.b16 %v441
        %v1281 = vunpack.c.l.b16 %v442
        %v1282 = vunpack.c.l.b16 %v443
        %v1283 = vunpack.c.l.b16 %v444
        %v1284 = vunpack.c.l.b16 %v445
        %v1285 = vunpack.c.l.b16 %v446
        %v1286 = vunpack.c.l.b16 %v447
        %v1287 = vunpack.c.l.b16 %v448
        %v1288 = vunpack.c.l.b16 %v449
        %v1289 = vunpack.c.l.b16 %v450
        %v1290 = vunpack.c.l.b16 %v451
        %v1291 = vunpack.c.l.b16 %v452
        %v1292 = vunpack.c.l.b16 %v453
        %v1293 = vunpack.c.l.b16 %v454
        %v1294 = vunpack.c.l.b16 %v455
        %v1295 = vunpack.c.l.b16 %v456
        %v1296 = vunpack.c.l.b16 %v457
        %v1297 = vunpack.c.l.b16 %v458
        %v1298 = vunpack.c.l.b16 %v459
        %v1299 = vunpack.c.l.b16 %v460
        %v1300 = vunpack.c.l.b16 %v461
        %v1301 = vunpack.c.l.b16 %v462
        %v1302 = vunpack.c.l.b16 %v463
        %v1303 = vunpack.c.l.b16 %v464
        %v1304 = vunpack.c.l.b16 %v465
        %v1305 = vunpack.c.l.b16 %v466
        %v1306 = vunpack.c.l.b16 %v467
        %v1307 = vunpack.c.l.b16 %v468
        %v1308 = vunpack.c.l.b16 %v469
        %v1309 = vunpack.c.l.b16 %v470
        %v1310 = vunpack.c.l.b16 %v471
        %v1311 = vunpack.c.l.b16 %v472
        %v1312 = vunpack.c.l.b16 %v473
        %v1313 = vunpack.c.l.b16 %v474
        %v1314 = vunpack.c.l.b16 %v475
        %v1315 = vunpack.c.l.b16 %v476
        %v1316 = vunpack.c.l.b16 %v477
        %v1317 = vunpack.c.l.b16 %v478
        %v1318 = vunpack.c.l.b16 %v479
        %v1319 = vunpack.c.l.b16 %v480
        %v1320 = vunpack.c.l.b16 %v481
        %v1321 = vunpack.c.l.b16 %v482
        %v1322 = vunpack.c.l.b16 %v483
        %v1323 = vunpack.c.l.b16 %v484
        %v1324 = vunpack.c.l.b16 %v485
        %v1325 = vunpack.c.l.b16 %v486
        %v1326 = vunpack.c.l.b16 %v487
        %v1327 = vunpack.c.l.b16 %v488
        %v1328 = vunpack.c.l.b16 %v489
        %v1329 = vunpack.c.l.b16 %v490
        %v1330 = vunpack.c.l.b16 %v491
        %v1331 = vunpack.c.l.b16 %v492
        %v1332 = vunpack.c.l.b16 %v493
        %v1333 = vunpack.c.l.b16 %v494
        %v1334 = vunpack.c.l.b16 %v495
        %v1335 = vunpack.c.l.b16 %v496
        %v1336 = vunpack.c.l.b16 %v497
        %v1337 = vunpack.c.l.b16 %v498
        %v1338 = vunpack.c.l.b16 %v499
        %v1339 = vunpack.c.l.b16 %v500
        %v1340 = vunpack.c.l.b16 %v501
        %v1341 = vunpack.c.l.b16 %v502
        %v1342 = vunpack.c.l.b16 %v503
        %v1343 = vunpack.c.l.b16 %v504
        %v1344 = vunpack.c.l.b16 %v505
        %v1345 = vunpack.c.l.b16 %v506
        %v1346 = vunpack.c.l.b16 %v507
        %v1347 = vunpack.c.l.b16 %v508
        %v1348 = vunpack.c.l.b16 %v509
        %v1349 = vunpack.c.l.b16 %v510
        %v1350 = vunpack.c.l.b16 %v511
        %v1351 = vunpack.c.l.b16 %v512
        %v1352 = vunpack.c.l.b16 %v513
        %v1353 = vunpack.c.l.b16 %v514
        %v1354 = vunpack.c.l.b16 %v515
        %v1355 = vunpack.c.l.b16 %v516
        %v1356 = vunpack.c.l.b16 %v517
        %v1357 = vunpack.c.l.b16 %v518
        %v1358 = vunpack.c.l.b16 %v519
        %v1359 = vunpack.c.l.b16 %v520
        %v1360 = vunpack.c.l.b16 %v521
        %v1361 = vunpack.c.l.b16 %v522
        %v1362 = vunpack.c.l.b16 %v523
        %v1363 = vunpack.c.l.b16 %v524
        %v1364 = vunpack.c.l.b16 %v525
        %v1365 = vunpack.c.l.b16 %v526
        %v1366 = vunpack.c.l.b16 %v527
        %v1367 = vunpack.c.l.b16 %v528
        %v1368 = vunpack.c.l.b16 %v529
        %v1369 = vunpack.c.l.b16 %v530
        %v1370 = vunpack.c.l.b16 %v531
        %v1371 = vunpack.c.l.b16 %v532
        %v1372 = vunpack.c.l.b16 %v533
        %v1373 = vunpack.c.l.b16 %v534
        %v1374 = vunpack.c.l.b16 %v535
        %v1375 = vunpack.c.l.b16 %v536
        %v1376 = vunpack.c.l.b16 %v537
        %v1377 = vunpack.c.l.b16 %v538
        %v1378 = vunpack.c.l.b16 %v539
        %v1379 = vunpack.c.l.b16 %v540
        %v1380 = vunpack.c.l.b16 %v541
        %v1381 = vunpack.c.l.b16 %v542
        %v1382 = vunpack.c.l.b16 %v543
        %v1383 = vunpack.c.l.b16 %v544
        %v1384 = vunpack.c.l.b16 %v545
        %v1385 = vunpack.c.l.b16 %v546
        %v1386 = vunpack.c.l.b16 %v547
        %v1387 = vunpack.c.l.b16 %v548
        %v1388 = vunpack.c.l.b16 %v549
        %v1389 = vunpack.c.l.b16 %v550
        %v1390 = vunpack.c.l.b16 %v551
        %v1391 = vunpack.c.l.b16 %v552
        %v1392 = vunpack.c.l.b16 %v553
        %v1393 = vunpack.c.l.b16 %v554
        %v1394 = vunpack.c.l.b16 %v555
        %v1395 = vunpack.c.l.b16 %v556
        %v1396 = vunpack.c.l.b16 %v557
        %v1397 = vunpack.c.l.b16 %v558
        %v1398 = vunpack.c.l.b16 %v559
        %v1399 = vunpack.c.l.b16 %v560
        %v1400 = vunpack.c.l.b16 %v561
        %v1401 = vunpack.c.l.b16 %v562
        %v1402 = vunpack.c.l.b16 %v563
        %v1403 = vunpack.c.l.b16 %v564
        %v1404 = vunpack.c.l.b16 %v565
        %v1405 = vunpack.c.l.b16 %v566
        %v1406 = vunpack.c.l.b16 %v567
        %v1407 = vunpack.c.l.b16 %v568
        %v1408 = vunpack.c.l.b16 %v569
        %v1409 = vunpack.c.l.b16 %v570
        %v1410 = vunpack.c.l.b16 %v571
        %v1411 = vunpack.c.l.b16 %v572
        %v1412 = vunpack.c.l.b16 %v573
        %v1413 = vunpack.c.l.b16 %v574
        %v1414 = vunpack.c.l.b16 %v575
        %v1415 = vunpack.c.l.b16 %v576
        %v1416 = vunpack.c.l.b16 %v577
        %v1417 = vunpack.c.l.b16 %v578
        %v1418 = vunpack.c.l.b16 %v579
        %v1419 = vunpack.c.l.b16 %v580
        %v1420 = vunpack.c.l.b16 %v581
        %v1421 = vunpack.c.l.b16 %v582
        %v1422 = vunpack.c.l.b16 %v583
        %v1423 = vunpack.c.l.b16 %v584
        %v1424 = vunpack.c.l.b16 %v585
        %v1425 = vunpack.c.l.b16 %v586
        %v1426 = vunpack.c.l.b16 %v587
        %v1427 = vunpack.c.l.b16 %v588
        %v1428 = vunpack.c.l.b16 %v589
        %v1429 = vunpack.c.l.b16 %v590
        %v1430 = vunpack.c.l.b16 %v591
        %v1431 = vunpack.c.l.b16 %v592
        %v1432 = vunpack.c.l.b16 %v593
        %v1433 = vunpack.c.l.b16 %v594
        %v1434 = vunpack.c.l.b16 %v595
        %v1435 = vunpack.c.l.b16 %v596
        %v1436 = vunpack.c.l.b16 %v597
        %v1437 = vunpack.c.l.b16 %v598
        %v1438 = vunpack.c.l.b16 %v599
        %v1439 = vunpack.c.l.b16 %v600
        %v1440 = vunpack.c.l.b16 %v601
        %v1441 = vunpack.c.l.b16 %v602
        %v1442 = vunpack.c.l.b16 %v603
        %v1443 = vunpack.c.l.b16 %v604
        %v1444 = vunpack.c.l.b16 %v605
        %v1445 = vunpack.c.l.b16 %v606
        %v1446 = vunpack.c.l.b16 %v607
        %v1447 = vunpack.c.l.b16 %v608
        %v1448 = vunpack.c.l.b16 %v609
        %v1449 = vunpack.c.l.b16 %v610
        %v1450 = vunpack.c.l.b16 %v611
        %v1451 = vunpack.c.l.b16 %v612
        %v1452 = vunpack.c.l.b16 %v613
        %v1453 = vunpack.c.l.b16 %v614
        %v1454 = vunpack.c.l.b16 %v615
        %v1455 = vunpack.c.l.b16 %v616
        %v1456 = vunpack.c.l.b16 %v617
        %v1457 = vunpack.c.l.b16 %v618
        %v1458 = vunpack.c.l.b16 %v619
        %v1459 = vunpack.c.l.b16 %v620
        %v1460 = vunpack.c.l.b16 %v621
        %v1461 = vunpack.c.l.b16 %v622
        %v1462 = vunpack.c.l.b16 %v623
        %v1463 = vpack.c.b16 %v1208, %v1207
        %v1464 = vpack.c.b16 %v1210, %v1209
        %v1465 = vpack.c.b16 %v1212, %v1211
        %v1466 = vpack.c.b16 %v1214, %v1213
        %v1467 = vpack.c.b16 %v1216, %v1215
        %v1468 = vpack.c.b16 %v1218, %v1217
        %v1469 = vpack.c.b16 %v1220, %v1219
        %v1470 = vpack.c.b16 %v1222, %v1221
        %v1471 = vpack.c.b16 %v1224, %v1223
        %v1472 = vpack.c.b16 %v1226, %v1225
        %v1473 = vpack.c.b16 %v1228, %v1227
        %v1474 = vpack.c.b16 %v1230, %v1229
        %v1475 = vpack.c.b16 %v1232, %v1231
        %v1476 = vpack.c.b16 %v1234, %v1233
        %v1477 = vpack.c.b16 %v1236, %v1235
        %v1478 = vpack.c.b16 %v1238, %v1237
        %v1479 = vpack.c.b16 %v1240, %v1239
        %v1480 = vpack.c.b16 %v1242, %v1241
        %v1481 = vpack.c.b16 %v1244, %v1243
        %v1482 = vpack.c.b16 %v1246, %v1245
        %v1483 = vpack.c.b16 %v1248, %v1247
        %v1484 = vpack.c.b16 %v1250, %v1249
        %v1485 = vpack.c.b16 %v1252, %v1251
        %v1486 = vpack.c.b16 %v1254, %v1253
        %v1487 = vpack.c.b16 %v1256, %v1255
        %v1488 = vpack.c.b16 %v1258, %v1257
        %v1489 = vpack.c.b16 %v1260, %v1259
        %v1490 = vpack.c.b16 %v1262, %v1261
        %v1491 = vpack.c.b16 %v1264, %v1263
        %v1492 = vpack.c.b16 %v1266, %v1265
        %v1493 = vpack.c.b16 %v1268, %v1267
        %v1494 = vpack.c.b16 %v1270, %v1269
        %v1495 = vpack.c.b16 %v1272, %v1271
        %v1496 = vpack.c.b16 %v1274, %v1273
        %v1497 = vpack.c.b16 %v1276, %v1275
        %v1498 = vpack.c.b16 %v1278, %v1277
        %v1499 = vpack.c.b16 %v1280, %v1279
        %v1500 = vpack.c.b16 %v1282, %v1281
        %v1501 = vpack.c.b16 %v1284, %v1283
        %v1502 = vpack.c.b16 %v1286, %v1285
        %v1503 = vpack.c.b16 %v1288, %v1287
        %v1504 = vpack.c.b16 %v1290, %v1289
        %v1505 = vpack.c.b16 %v1292, %v1291
        %v1506 = vpack.c.b16 %v1294, %v1293
        %v1507 = vpack.c.b16 %v1296, %v1295
        %v1508 = vpack.c.b16 %v1298, %v1297
        %v1509 = vpack.c.b16 %v1300, %v1299
        %v1510 = vpack.c.b16 %v1302, %v1301
        %v1511 = vpack.c.b16 %v1304, %v1303
        %v1512 = vpack.c.b16 %v1306, %v1305
        %v1513 = vpack.c.b16 %v1308, %v1307
        %v1514 = vpack.c.b16 %v1310, %v1309
        %v1515 = vpack.c.b16 %v1312, %v1311
        %v1516 = vpack.c.b16 %v1314, %v1313
        %v1517 = vpack.c.b16 %v1316, %v1315
        %v1518 = vpack.c.b16 %v1318, %v1317
        %v1519 = vpack.c.b16 %v1320, %v1319
        %v1520 = vpack.c.b16 %v1322, %v1321
        %v1521 = vpack.c.b16 %v1324, %v1323
        %v1522 = vpack.c.b16 %v1326, %v1325
        %v1523 = vpack.c.b16 %v1328, %v1327
        %v1524 = vpack.c.b16 %v1330, %v1329
        %v1525 = vpack.c.b16 %v1332, %v1331
        %v1526 = vpack.c.b16 %v1334, %v1333
        %v1527 = vpack.c.b16 %v1336, %v1335
        %v1528 = vpack.c.b16 %v1338, %v1337
        %v1529 = vpack.c.b16 %v1340, %v1339
        %v1530 = vpack.c.b16 %v1342, %v1341
        %v1531 = vpack.c.b16 %v1344, %v1343
        %v1532 = vpack.c.b16 %v1346, %v1345
        %v1533 = vpack.c.b16 %v1348, %v1347
        %v1534 = vpack.c.b16 %v1350, %v1349
        %v1535 = vpack.c.b16 %v1352, %v1351
        %v1536 = vpack.c.b16 %v1354, %v1353
        %v1537 = vpack.c.b16 %v1356, %v1355
        %v1538 = vpack.c.b16 %v1358, %v1357
        %v1539 = vpack.c.b16 %v1360, %v1359
        %v1540 = vpack.c.b16 %v1362, %v1361
        %v1541 = vpack.c.b16 %v1364, %v1363
        %v1542 = vpack.c.b16 %v1366, %v1365
        %v1543 = vpack.c.b16 %v1368, %v1367
        %v1544 = vpack.c.b16 %v1370, %v1369
        %v1545 = vpack.c.b16 %v1372, %v1371
        %v1546 = vpack.c.b16 %v1374, %v1373
        %v1547 = vpack.c.b16 %v1376, %v1375
        %v1548 = vpack.c.b16 %v1378, %v1377
        %v1549 = vpack.c.b16 %v1380, %v1379
        %v1550 = vpack.c.b16 %v1382, %v1381
        %v1551 = vpack.c.b16 %v1384, %v1383
        %v1552 = vpack.c.b16 %v1386, %v1385
        %v1553 = vpack.c.b16 %v1388, %v1387
        %v1554 = vpack.c.b16 %v1390, %v1389
        %v1555 = vpack.c.b16 %v1392, %v1391
        %v1556 = vpack.c.b16 %v1394, %v1393
        %v1557 = vpack.c.b16 %v1396, %v1395
        %v1558 = vpack.c.b16 %v1398, %v1397
        %v1559 = vpack.c.b16 %v1400, %v1399
        %v1560 = vpack.c.b16 %v1402, %v1401
        %v1561 = vpack.c.b16 %v1404, %v1403
        %v1562 = vpack.c.b16 %v1406, %v1405
        %v1563 = vpack.c.b16 %v1408, %v1407
        %v1564 = vpack.c.b16 %v1410, %v1409
        %v1565 = vpack.c.b16 %v1412, %v1411
        %v1566 = vpack.c.b16 %v1414, %v1413
        %v1567 = vpack.c.b16 %v1416, %v1415
        %v1568 = vpack.c.b16 %v1418, %v1417
        %v1569 = vpack.c.b16 %v1420, %v1419
        %v1570 = vpack.c.b16 %v1422, %v1421
        %v1571 = vpack.c.b16 %v1424, %v1423
        %v1572 = vpack.c.b16 %v1426, %v1425
        %v1573 = vpack.c.b16 %v1428, %v1427
        %v1574 = vpack.c.b16 %v1430, %v1429
        %v1575 = vpack.c.b16 %v1432, %v1431
        %v1576 = vpack.c.b16 %v1434, %v1433
        %v1577 = vpack.c.b16 %v1436, %v1435
        %v1578 = vpack.c.b16 %v1438, %v1437
        %v1579 = vpack.c.b16 %v1440, %v1439
        %v1580 = vpack.c.b16 %v1442, %v1441
        %v1581 = vpack.c.b16 %v1444, %v1443
        %v1582 = vpack.c.b16 %v1446, %v1445
        %v1583 = vpack.c.b16 %v1448, %v1447
        %v1584 = vpack.c.b16 %v1450, %v1449
        %v1585 = vpack.c.b16 %v1452, %v1451
        %v1586 = vpack.c.b16 %v1454, %v1453
        %v1587 = vpack.c.b16 %v1456, %v1455
        %v1588 = vpack.c.b16 %v1458, %v1457
        %v1589 = vpack.c.b16 %v1460, %v1459
        %v1590 = vpack.c.b16 %v1462, %v1461
        %1719 = vmatprep.subr.bf16.mxu0 0
        %1720 = vmatpush1.bf16.msra.mxu0 %v1463
        %1721 = vmatprep.subr.bf16.mxu0 0
        %1722 = vmatpush1.bf16.msra.mxu0 %v1464
        %1723 = vmatprep.subr.bf16.mxu0 0
        %1724 = vmatpush1.bf16.msra.mxu0 %v1465
        %1725 = vmatprep.subr.bf16.mxu0 0
        %1726 = vmatpush1.bf16.msra.mxu0 %v1466
        %1727 = vmatprep.subr.bf16.mxu0 0
        %1728 = vmatpush1.bf16.msra.mxu0 %v1467
        %1729 = vmatprep.subr.bf16.mxu0 0
        %1730 = vmatpush1.bf16.msra.mxu0 %v1468
        %1731 = vmatprep.subr.bf16.mxu0 0
        %1732 = vmatpush1.bf16.msra.mxu0 %v1469
        %1733 = vmatprep.subr.bf16.mxu0 0
        %1734 = vmatpush1.bf16.msra.mxu0 %v1470
        %1735 = vmatprep.subr.bf16.mxu0 0
        %1736 = vmatpush1.bf16.msra.mxu0 %v1471
        %1737 = vmatprep.subr.bf16.mxu0 0
        %1738 = vmatpush1.bf16.msra.mxu0 %v1472
        %1739 = vmatprep.subr.bf16.mxu0 0
        %1740 = vmatpush1.bf16.msra.mxu0 %v1473
        %1741 = vmatprep.subr.bf16.mxu0 0
        %1742 = vmatpush1.bf16.msra.mxu0 %v1474
        %1743 = vmatprep.subr.bf16.mxu0 0
        %1744 = vmatpush1.bf16.msra.mxu0 %v1475
        %1745 = vmatprep.subr.bf16.mxu0 0
        %1746 = vmatpush1.bf16.msra.mxu0 %v1476
        %1747 = vmatprep.subr.bf16.mxu0 0
        %1748 = vmatpush1.bf16.msra.mxu0 %v1477
        %1749 = vmatprep.subr.bf16.mxu0 0
        %1750 = vmatpush1.bf16.msra.mxu0 %v1478
        %1751 = vmatprep.mubr.bf16.mxu0 %v824
        %1752 = vmatmul.mubr.bf16.gmra.mrb[0].mxu0 %v823
        %v1753 = vpop.f32.mrb[0].mxu0
        %v1754 = vadd.f32 %v629, %v1753
        %v1755 = vpop.f32.mrb[0].mxu0
        %v1756 = vpop.f32.mrb[0].mxu0
        %v1757 = vadd.f32 %v629, %v1756
        %v1758 = vpop.f32.mrb[0].mxu0
        %1759 = vmatprep.mubr.bf16.mxu0 %v840
        %1760 = vmatmul.mubr.bf16.gmra.mrb[0].mxu0 %v839
        %v1761 = vpop.f32.mrb[0].mxu0
        %v1762 = vadd.f32 %v629, %v1761
        %v1763 = vpop.f32.mrb[0].mxu0
        %v1764 = vpop.f32.mrb[0].mxu0
        %v1765 = vadd.f32 %v629, %v1764
        %v1766 = vpop.f32.mrb[0].mxu0
        %1767 = vmatprep.mubr.bf16.mxu0 %v856
        %1768 = vmatmul.mubr.bf16.gmra.mrb[0].mxu0 %v855
        %v1769 = vpop.f32.mrb[0].mxu0
        %v1770 = vadd.f32 %v629, %v1769
        %v1771 = vpop.f32.mrb[0].mxu0
        %v1772 = vpop.f32.mrb[0].mxu0
        %v1773 = vadd.f32 %v629, %v1772
        %v1774 = vpop.f32.mrb[0].mxu0
        %1775 = vmatprep.mubr.bf16.mxu0 %v872
        %1776 = vmatmul.mubr.bf16.gmra.mrb[0].mxu0 %v871
        %v1777 = vpop.f32.mrb[0].mxu0
        %v1778 = vadd.f32 %v629, %v1777
        %v1779 = vpop.f32.mrb[0].mxu0
        %v1780 = vpop.f32.mrb[0].mxu0
        %v1781 = vadd.f32 %v629, %v1780
        %v1782 = vpop.f32.mrb[0].mxu0
        %1783 = vdwg.mxu0
        %1784 = vmatprep.subr.bf16.mxu0 0
        %1785 = vmatpush1.bf16.msra.mxu0 %v1479
        %1786 = vmatprep.subr.bf16.mxu0 0
        %1787 = vmatpush1.bf16.msra.mxu0 %v1480
        %1788 = vmatprep.subr.bf16.mxu0 0
        %1789 = vmatpush1.bf16.msra.mxu0 %v1481
        %1790 = vmatprep.subr.bf16.mxu0 0
        %1791 = vmatpush1.bf16.msra.mxu0 %v1482
        %1792 = vmatprep.subr.bf16.mxu0 0
        %1793 = vmatpush1.bf16.msra.mxu0 %v1483
        %1794 = vmatprep.subr.bf16.mxu0 0
        %1795 = vmatpush1.bf16.msra.mxu0 %v1484
        %1796 = vmatprep.subr.bf16.mxu0 0
        %1797 = vmatpush1.bf16.msra.mxu0 %v1485
        %1798 = vmatprep.subr.bf16.mxu0 0
        %1799 = vmatpush1.bf16.msra.mxu0 %v1486
        %1800 = vmatprep.subr.bf16.mxu0 0
        %1801 = vmatpush1.bf16.msra.mxu0 %v1487
        %1802 = vmatprep.subr.bf16.mxu0 0
        %1803 = vmatpush1.bf16.msra.mxu0 %v1488
        %1804 = vmatprep.subr.bf16.mxu0 0
        %1805 = vmatpush1.bf16.msra.mxu0 %v1489
        %1806 = vmatprep.subr.bf16.mxu0 0
        %1807 = vmatpush1.bf16.msra.mxu0 %v1490
        %1808 = vmatprep.subr.bf16.mxu0 0
        %1809 = vmatpush1.bf16.msra.mxu0 %v1491
        %1810 = vmatprep.subr.bf16.mxu0 0
        %1811 = vmatpush1.bf16.msra.mxu0 %v1492
        %1812 = vmatprep.subr.bf16.mxu0 0
        %1813 = vmatpush1.bf16.msra.mxu0 %v1493
        %1814 = vmatprep.subr.bf16.mxu0 0
        %1815 = vmatpush1.bf16.msra.mxu0 %v1494
        %1816 = vmatprep.mubr.bf16.mxu0 %v826
        %1817 = vmatmul.mubr.bf16.gmra.mrb[0].mxu0 %v825
        %v1818 = vpop.f32.mrb[0].mxu0
        %v1819 = vadd.f32 %v1754, %v1818
        %v1820 = vpop.f32.mrb[0].mxu0
        %v1821 = vpop.f32.mrb[0].mxu0
        %v1822 = vadd.f32 %v1757, %v1821
        %v1823 = vpop.f32.mrb[0].mxu0
        %1824 = vmatprep.mubr.bf16.mxu0 %v842
        %1825 = vmatmul.mubr.bf16.gmra.mrb[0].mxu0 %v841
        %v1826 = vpop.f32.mrb[0].mxu0
        %v1827 = vadd.f32 %v1762, %v1826
        %v1828 = vpop.f32.mrb[0].mxu0
        %v1829 = vpop.f32.mrb[0].mxu0
        %v1830 = vadd.f32 %v1765, %v1829
        %v1831 = vpop.f32.mrb[0].mxu0
        %1832 = vmatprep.mubr.bf16.mxu0 %v858
        %1833 = vmatmul.mubr.bf16.gmra.mrb[0].mxu0 %v857
        %v1834 = vpop.f32.mrb[0].mxu0
        %v1835 = vadd.f32 %v1770, %v1834
        %v1836 = vpop.f32.mrb[0].mxu0
        %v1837 = vpop.f32.mrb[0].mxu0
        %v1838 = vadd.f32 %v1773, %v1837
        %v1839 = vpop.f32.mrb[0].mxu0
        %1840 = vmatprep.mubr.bf16.mxu0 %v874
        %1841 = vmatmul.mubr.bf16.gmra.mrb[0].mxu0 %v873
        %v1842 = vpop.f32.mrb[0].mxu0
        %v1843 = vadd.f32 %v1778, %v1842
        %v1844 = vpop.f32.mrb[0].mxu0
        %v1845 = vpop.f32.mrb[0].mxu0
        %v1846 = vadd.f32 %v1781, %v1845
        %v1847 = vpop.f32.mrb[0].mxu0
        %1848 = vdwg.mxu0
        %1849 = vmatprep.subr.bf16.mxu0 0
        %1850 = vmatpush1.bf16.msra.mxu0 %v1495
        %1851 = vmatprep.subr.bf16.mxu0 0
        %1852 = vmatpush1.bf16.msra.mxu0 %v1496
        %1853 = vmatprep.subr.bf16.mxu0 0
        %1854 = vmatpush1.bf16.msra.mxu0 %v1497
        %1855 = vmatprep.subr.bf16.mxu0 0
        %1856 = vmatpush1.bf16.msra.mxu0 %v1498
        %1857 = vmatprep.subr.bf16.mxu0 0
        %1858 = vmatpush1.bf16.msra.mxu0 %v1499
        %1859 = vmatprep.subr.bf16.mxu0 0
        %1860 = vmatpush1.bf16.msra.mxu0 %v1500
        %1861 = vmatprep.subr.bf16.mxu0 0
        %1862 = vmatpush1.bf16.msra.mxu0 %v1501
        %1863 = vmatprep.subr.bf16.mxu0 0
        %1864 = vmatpush1.bf16.msra.mxu0 %v1502
        %1865 = vmatprep.subr.bf16.mxu0 0
        %1866 = vmatpush1.bf16.msra.mxu0 %v1503
        %1867 = vmatprep.subr.bf16.mxu0 0
        %1868 = vmatpush1.bf16.msra.mxu0 %v1504
        %1869 = vmatprep.subr.bf16.mxu0 0
        %1870 = vmatpush1.bf16.msra.mxu0 %v1505
        %1871 = vmatprep.subr.bf16.mxu0 0
        %1872 = vmatpush1.bf16.msra.mxu0 %v1506
        %1873 = vmatprep.subr.bf16.mxu0 0
        %1874 = vmatpush1.bf16.msra.mxu0 %v1507
        %1875 = vmatprep.subr.bf16.mxu0 0
        %1876 = vmatpush1.bf16.msra.mxu0 %v1508
        %1877 = vmatprep.subr.bf16.mxu0 0
        %1878 = vmatpush1.bf16.msra.mxu0 %v1509
        %1879 = vmatprep.subr.bf16.mxu0 0
        %1880 = vmatpush1.bf16.msra.mxu0 %v1510
        %1881 = vmatprep.mubr.bf16.mxu0 %v828
        %1882 = vmatmul.mubr.bf16.gmra.mrb[0].mxu0 %v827
        %v1883 = vpop.f32.mrb[0].mxu0
        %v1884 = vadd.f32 %v1819, %v1883
        %v1885 = vpop.f32.mrb[0].mxu0
        %v1886 = vpop.f32.mrb[0].mxu0
        %v1887 = vadd.f32 %v1822, %v1886
        %v1888 = vpop.f32.mrb[0].mxu0
        %1889 = vmatprep.mubr.bf16.mxu0 %v844
        %1890 = vmatmul.mubr.bf16.gmra.mrb[0].mxu0 %v843
        %v1891 = vpop.f32.mrb[0].mxu0
        %v1892 = vadd.f32 %v1827, %v1891
        %v1893 = vpop.f32.mrb[0].mxu0
        %v1894 = vpop.f32.mrb[0].mxu0
        %v1895 = vadd.f32 %v1830, %v1894
        %v1896 = vpop.f32.mrb[0].mxu0
        %1897 = vmatprep.mubr.bf16.mxu0 %v860
        %1898 = vmatmul.mubr.bf16.gmra.mrb[0].mxu0 %v859
        %v1899 = vpop.f32.mrb[0].mxu0
        %v1900 = vadd.f32 %v1835, %v1899
        %v1901 = vpop.f32.mrb[0].mxu0
        %v1902 = vpop.f32.mrb[0].mxu0
        %v1903 = vadd.f32 %v1838, %v1902
        %v1904 = vpop.f32.mrb[0].mxu0
        %1905 = vmatprep.mubr.bf16.mxu0 %v876
        %1906 = vmatmul.mubr.bf16.gmra.mrb[0].mxu0 %v875
        %v1907 = vpop.f32.mrb[0].mxu0
        %v1908 = vadd.f32 %v1843, %v1907
        %v1909 = vpop.f32.mrb[0].mxu0
        %v1910 = vpop.f32.mrb[0].mxu0
        %v1911 = vadd.f32 %v1846, %v1910
        %v1912 = vpop.f32.mrb[0].mxu0
        %1913 = vdwg.mxu0
        %1914 = vmatprep.subr.bf16.mxu0 0
        %1915 = vmatpush1.bf16.msra.mxu0 %v1511
        %1916 = vmatprep.subr.bf16.mxu0 0
        %1917 = vmatpush1.bf16.msra.mxu0 %v1512
        %1918 = vmatprep.subr.bf16.mxu0 0
        %1919 = vmatpush1.bf16.msra.mxu0 %v1513
        %1920 = vmatprep.subr.bf16.mxu0 0
        %1921 = vmatpush1.bf16.msra.mxu0 %v1514
        %1922 = vmatprep.subr.bf16.mxu0 0
        %1923 = vmatpush1.bf16.msra.mxu0 %v1515
        %1924 = vmatprep.subr.bf16.mxu0 0
        %1925 = vmatpush1.bf16.msra.mxu0 %v1516
        %1926 = vmatprep.subr.bf16.mxu0 0
        %1927 = vmatpush1.bf16.msra.mxu0 %v1517
        %1928 = vmatprep.subr.bf16.mxu0 0
        %1929 = vmatpush1.bf16.msra.mxu0 %v1518
        %1930 = vmatprep.subr.bf16.mxu0 0
        %1931 = vmatpush1.bf16.msra.mxu0 %v1519
        %1932 = vmatprep.subr.bf16.mxu0 0
        %1933 = vmatpush1.bf16.msra.mxu0 %v1520
        %1934 = vmatprep.subr.bf16.mxu0 0
        %1935 = vmatpush1.bf16.msra.mxu0 %v1521
        %1936 = vmatprep.subr.bf16.mxu0 0
        %1937 = vmatpush1.bf16.msra.mxu0 %v1522
        %1938 = vmatprep.subr.bf16.mxu0 0
        %1939 = vmatpush1.bf16.msra.mxu0 %v1523
        %1940 = vmatprep.subr.bf16.mxu0 0
        %1941 = vmatpush1.bf16.msra.mxu0 %v1524
        %1942 = vmatprep.subr.bf16.mxu0 0
        %1943 = vmatpush1.bf16.msra.mxu0 %v1525
        %1944 = vmatprep.subr.bf16.mxu0 0
        %1945 = vmatpush1.bf16.msra.mxu0 %v1526
        %1946 = vmatprep.mubr.bf16.mxu0 %v830
        %1947 = vmatmul.mubr.bf16.gmra.mrb[0].mxu0 %v829
        %v1948 = vpop.f32.mrb[0].mxu0
        %v1949 = vadd.f32 %v1884, %v1948
        %v1950 = vpop.f32.mrb[0].mxu0
        %v1951 = vpop.f32.mrb[0].mxu0
        %v1952 = vadd.f32 %v1887, %v1951
        %v1953 = vpop.f32.mrb[0].mxu0
        %1954 = vmatprep.mubr.bf16.mxu0 %v846
        %1955 = vmatmul.mubr.bf16.gmra.mrb[0].mxu0 %v845
        %v1956 = vpop.f32.mrb[0].mxu0
        %v1957 = vadd.f32 %v1892, %v1956
        %v1958 = vpop.f32.mrb[0].mxu0
        %v1959 = vpop.f32.mrb[0].mxu0
        %v1960 = vadd.f32 %v1895, %v1959
        %v1961 = vpop.f32.mrb[0].mxu0
        %1962 = vmatprep.mubr.bf16.mxu0 %v862
        %1963 = vmatmul.mubr.bf16.gmra.mrb[0].mxu0 %v861
        %v1964 = vpop.f32.mrb[0].mxu0
        %v1965 = vadd.f32 %v1900, %v1964
        %v1966 = vpop.f32.mrb[0].mxu0
        %v1967 = vpop.f32.mrb[0].mxu0
        %v1968 = vadd.f32 %v1903, %v1967
        %v1969 = vpop.f32.mrb[0].mxu0
        %1970 = vmatprep.mubr.bf16.mxu0 %v878
        %1971 = vmatmul.mubr.bf16.gmra.mrb[0].mxu0 %v877
        %v1972 = vpop.f32.mrb[0].mxu0
        %v1973 = vadd.f32 %v1908, %v1972
        %v1974 = vpop.f32.mrb[0].mxu0
        %v1975 = vpop.f32.mrb[0].mxu0
        %v1976 = vadd.f32 %v1911, %v1975
        %v1977 = vpop.f32.mrb[0].mxu0
        %1978 = vdwg.mxu0
        %1979 = vmatprep.subr.bf16.mxu0 0
        %1980 = vmatpush1.bf16.msra.mxu0 %v1527
        %1981 = vmatprep.subr.bf16.mxu0 0
        %1982 = vmatpush1.bf16.msra.mxu0 %v1528
        %1983 = vmatprep.subr.bf16.mxu0 0
        %1984 = vmatpush1.bf16.msra.mxu0 %v1529
        %1985 = vmatprep.subr.bf16.mxu0 0
        %1986 = vmatpush1.bf16.msra.mxu0 %v1530
        %1987 = vmatprep.subr.bf16.mxu0 0
        %1988 = vmatpush1.bf16.msra.mxu0 %v1531
        %1989 = vmatprep.subr.bf16.mxu0 0
        %1990 = vmatpush1.bf16.msra.mxu0 %v1532
        %1991 = vmatprep.subr.bf16.mxu0 0
        %1992 = vmatpush1.bf16.msra.mxu0 %v1533
        %1993 = vmatprep.subr.bf16.mxu0 0
        %1994 = vmatpush1.bf16.msra.mxu0 %v1534
        %1995 = vmatprep.subr.bf16.mxu0 0
        %1996 = vmatpush1.bf16.msra.mxu0 %v1535
        %1997 = vmatprep.subr.bf16.mxu0 0
        %1998 = vmatpush1.bf16.msra.mxu0 %v1536
        %1999 = vmatprep.subr.bf16.mxu0 0
        %2000 = vmatpush1.bf16.msra.mxu0 %v1537
        %2001 = vmatprep.subr.bf16.mxu0 0
        %2002 = vmatpush1.bf16.msra.mxu0 %v1538
        %2003 = vmatprep.subr.bf16.mxu0 0
        %2004 = vmatpush1.bf16.msra.mxu0 %v1539
        %2005 = vmatprep.subr.bf16.mxu0 0
        %2006 = vmatpush1.bf16.msra.mxu0 %v1540
        %2007 = vmatprep.subr.bf16.mxu0 0
        %2008 = vmatpush1.bf16.msra.mxu0 %v1541
        %2009 = vmatprep.subr.bf16.mxu0 0
        %2010 = vmatpush1.bf16.msra.mxu0 %v1542
        %2011 = vmatprep.mubr.bf16.mxu0 %v832
        %2012 = vmatmul.mubr.bf16.gmra.mrb[0].mxu0 %v831
        %v2013 = vpop.f32.mrb[0].mxu0
        %v2014 = vadd.f32 %v1949, %v2013
        %v2015 = vpop.f32.mrb[0].mxu0
        %v2016 = vpop.f32.mrb[0].mxu0
        %v2017 = vadd.f32 %v1952, %v2016
        %v2018 = vpop.f32.mrb[0].mxu0
        %2019 = vmatprep.mubr.bf16.mxu0 %v848
        %2020 = vmatmul.mubr.bf16.gmra.mrb[0].mxu0 %v847
        %v2021 = vpop.f32.mrb[0].mxu0
        %v2022 = vadd.f32 %v1957, %v2021
        %v2023 = vpop.f32.mrb[0].mxu0
        %v2024 = vpop.f32.mrb[0].mxu0
        %v2025 = vadd.f32 %v1960, %v2024
        %v2026 = vpop.f32.mrb[0].mxu0
        %2027 = vmatprep.mubr.bf16.mxu0 %v864
        %2028 = vmatmul.mubr.bf16.gmra.mrb[0].mxu0 %v863
        %v2029 = vpop.f32.mrb[0].mxu0
        %v2030 = vadd.f32 %v1965, %v2029
        %v2031 = vpop.f32.mrb[0].mxu0
        %v2032 = vpop.f32.mrb[0].mxu0
        %v2033 = vadd.f32 %v1968, %v2032
        %v2034 = vpop.f32.mrb[0].mxu0
        %2035 = vmatprep.mubr.bf16.mxu0 %v880
        %2036 = vmatmul.mubr.bf16.gmra.mrb[0].mxu0 %v879
        %v2037 = vpop.f32.mrb[0].mxu0
        %v2038 = vadd.f32 %v1973, %v2037
        %v2039 = vpop.f32.mrb[0].mxu0
        %v2040 = vpop.f32.mrb[0].mxu0
        %v2041 = vadd.f32 %v1976, %v2040
        %v2042 = vpop.f32.mrb[0].mxu0
        %2043 = vdwg.mxu0
        %2044 = vmatprep.subr.bf16.mxu0 0
        %2045 = vmatpush1.bf16.msra.mxu0 %v1543
        %2046 = vmatprep.subr.bf16.mxu0 0
        %2047 = vmatpush1.bf16.msra.mxu0 %v1544
        %2048 = vmatprep.subr.bf16.mxu0 0
        %2049 = vmatpush1.bf16.msra.mxu0 %v1545
        %2050 = vmatprep.subr.bf16.mxu0 0
        %2051 = vmatpush1.bf16.msra.mxu0 %v1546
        %2052 = vmatprep.subr.bf16.mxu0 0
        %2053 = vmatpush1.bf16.msra.mxu0 %v1547
        %2054 = vmatprep.subr.bf16.mxu0 0
        %2055 = vmatpush1.bf16.msra.mxu0 %v1548
        %2056 = vmatprep.subr.bf16.mxu0 0
        %2057 = vmatpush1.bf16.msra.mxu0 %v1549
        %2058 = vmatprep.subr.bf16.mxu0 0
        %2059 = vmatpush1.bf16.msra.mxu0 %v1550
        %2060 = vmatprep.subr.bf16.mxu0 0
        %2061 = vmatpush1.bf16.msra.mxu0 %v1551
        %2062 = vmatprep.subr.bf16.mxu0 0
        %2063 = vmatpush1.bf16.msra.mxu0 %v1552
        %2064 = vmatprep.subr.bf16.mxu0 0
        %2065 = vmatpush1.bf16.msra.mxu0 %v1553
        %2066 = vmatprep.subr.bf16.mxu0 0
        %2067 = vmatpush1.bf16.msra.mxu0 %v1554
        %2068 = vmatprep.subr.bf16.mxu0 0
        %2069 = vmatpush1.bf16.msra.mxu0 %v1555
        %2070 = vmatprep.subr.bf16.mxu0 0
        %2071 = vmatpush1.bf16.msra.mxu0 %v1556
        %2072 = vmatprep.subr.bf16.mxu0 0
        %2073 = vmatpush1.bf16.msra.mxu0 %v1557
        %2074 = vmatprep.subr.bf16.mxu0 0
        %2075 = vmatpush1.bf16.msra.mxu0 %v1558
        %2076 = vmatprep.mubr.bf16.mxu0 %v834
        %2077 = vmatmul.mubr.bf16.gmra.mrb[0].mxu0 %v833
        %v2078 = vpop.f32.mrb[0].mxu0
        %v2079 = vadd.f32 %v2014, %v2078
        %v2080 = vpop.f32.mrb[0].mxu0
        %v2081 = vpop.f32.mrb[0].mxu0
        %v2082 = vadd.f32 %v2017, %v2081
        %v2083 = vpop.f32.mrb[0].mxu0
        %2084 = vmatprep.mubr.bf16.mxu0 %v850
        %2085 = vmatmul.mubr.bf16.gmra.mrb[0].mxu0 %v849
        %v2086 = vpop.f32.mrb[0].mxu0
        %v2087 = vadd.f32 %v2022, %v2086
        %v2088 = vpop.f32.mrb[0].mxu0
        %v2089 = vpop.f32.mrb[0].mxu0
        %v2090 = vadd.f32 %v2025, %v2089
        %v2091 = vpop.f32.mrb[0].mxu0
        %2092 = vmatprep.mubr.bf16.mxu0 %v866
        %2093 = vmatmul.mubr.bf16.gmra.mrb[0].mxu0 %v865
        %v2094 = vpop.f32.mrb[0].mxu0
        %v2095 = vadd.f32 %v2030, %v2094
        %v2096 = vpop.f32.mrb[0].mxu0
        %v2097 = vpop.f32.mrb[0].mxu0
        %v2098 = vadd.f32 %v2033, %v2097
        %v2099 = vpop.f32.mrb[0].mxu0
        %2100 = vmatprep.mubr.bf16.mxu0 %v882
        %2101 = vmatmul.mubr.bf16.gmra.mrb[0].mxu0 %v881
        %v2102 = vpop.f32.mrb[0].mxu0
        %v2103 = vadd.f32 %v2038, %v2102
        %v2104 = vpop.f32.mrb[0].mxu0
        %v2105 = vpop.f32.mrb[0].mxu0
        %v2106 = vadd.f32 %v2041, %v2105
        %v2107 = vpop.f32.mrb[0].mxu0
        %2108 = vdwg.mxu0
        %2109 = vmatprep.subr.bf16.mxu0 0
        %2110 = vmatpush1.bf16.msra.mxu0 %v1559
        %2111 = vmatprep.subr.bf16.mxu0 0
        %2112 = vmatpush1.bf16.msra.mxu0 %v1560
        %2113 = vmatprep.subr.bf16.mxu0 0
        %2114 = vmatpush1.bf16.msra.mxu0 %v1561
        %2115 = vmatprep.subr.bf16.mxu0 0
        %2116 = vmatpush1.bf16.msra.mxu0 %v1562
        %2117 = vmatprep.subr.bf16.mxu0 0
        %2118 = vmatpush1.bf16.msra.mxu0 %v1563
        %2119 = vmatprep.subr.bf16.mxu0 0
        %2120 = vmatpush1.bf16.msra.mxu0 %v1564
        %2121 = vmatprep.subr.bf16.mxu0 0
        %2122 = vmatpush1.bf16.msra.mxu0 %v1565
        %2123 = vmatprep.subr.bf16.mxu0 0
        %2124 = vmatpush1.bf16.msra.mxu0 %v1566
        %2125 = vmatprep.subr.bf16.mxu0 0
        %2126 = vmatpush1.bf16.msra.mxu0 %v1567
        %2127 = vmatprep.subr.bf16.mxu0 0
        %2128 = vmatpush1.bf16.msra.mxu0 %v1568
        %2129 = vmatprep.subr.bf16.mxu0 0
        %2130 = vmatpush1.bf16.msra.mxu0 %v1569
        %2131 = vmatprep.subr.bf16.mxu0 0
        %2132 = vmatpush1.bf16.msra.mxu0 %v1570
        %2133 = vmatprep.subr.bf16.mxu0 0
        %2134 = vmatpush1.bf16.msra.mxu0 %v1571
        %2135 = vmatprep.subr.bf16.mxu0 0
        %2136 = vmatpush1.bf16.msra.mxu0 %v1572
        %2137 = vmatprep.subr.bf16.mxu0 0
        %2138 = vmatpush1.bf16.msra.mxu0 %v1573
        %2139 = vmatprep.subr.bf16.mxu0 0
        %2140 = vmatpush1.bf16.msra.mxu0 %v1574
        %2141 = vmatprep.mubr.bf16.mxu0 %v836
        %2142 = vmatmul.mubr.bf16.gmra.mrb[0].mxu0 %v835
        %v2143 = vpop.f32.mrb[0].mxu0
        %v2144 = vadd.f32 %v2079, %v2143
        %v2145 = vpop.f32.mrb[0].mxu0
        %v2146 = vpop.f32.mrb[0].mxu0
        %v2147 = vadd.f32 %v2082, %v2146
        %v2148 = vpop.f32.mrb[0].mxu0
        %2149 = vmatprep.mubr.bf16.mxu0 %v852
        %2150 = vmatmul.mubr.bf16.gmra.mrb[0].mxu0 %v851
        %v2151 = vpop.f32.mrb[0].mxu0
        %v2152 = vadd.f32 %v2087, %v2151
        %v2153 = vpop.f32.mrb[0].mxu0
        %v2154 = vpop.f32.mrb[0].mxu0
        %v2155 = vadd.f32 %v2090, %v2154
        %v2156 = vpop.f32.mrb[0].mxu0
        %2157 = vmatprep.mubr.bf16.mxu0 %v868
        %2158 = vmatmul.mubr.bf16.gmra.mrb[0].mxu0 %v867
        %v2159 = vpop.f32.mrb[0].mxu0
        %v2160 = vadd.f32 %v2095, %v2159
        %v2161 = vpop.f32.mrb[0].mxu0
        %v2162 = vpop.f32.mrb[0].mxu0
        %v2163 = vadd.f32 %v2098, %v2162
        %v2164 = vpop.f32.mrb[0].mxu0
        %2165 = vmatprep.mubr.bf16.mxu0 %v884
        %2166 = vmatmul.mubr.bf16.gmra.mrb[0].mxu0 %v883
        %v2167 = vpop.f32.mrb[0].mxu0
        %v2168 = vadd.f32 %v2103, %v2167
        %v2169 = vpop.f32.mrb[0].mxu0
        %v2170 = vpop.f32.mrb[0].mxu0
        %v2171 = vadd.f32 %v2106, %v2170
        %v2172 = vpop.f32.mrb[0].mxu0
        %2173 = vdwg.mxu0
        %2174 = vmatprep.subr.bf16.mxu0 0
        %2175 = vmatpush1.bf16.msra.mxu0 %v1575
        %2176 = vmatprep.subr.bf16.mxu0 0
        %2177 = vmatpush1.bf16.msra.mxu0 %v1576
        %2178 = vmatprep.subr.bf16.mxu0 0
        %2179 = vmatpush1.bf16.msra.mxu0 %v1577
        %2180 = vmatprep.subr.bf16.mxu0 0
        %2181 = vmatpush1.bf16.msra.mxu0 %v1578
        %2182 = vmatprep.subr.bf16.mxu0 0
        %2183 = vmatpush1.bf16.msra.mxu0 %v1579
        %2184 = vmatprep.subr.bf16.mxu0 0
        %2185 = vmatpush1.bf16.msra.mxu0 %v1580
        %2186 = vmatprep.subr.bf16.mxu0 0
        %2187 = vmatpush1.bf16.msra.mxu0 %v1581
        %2188 = vmatprep.subr.bf16.mxu0 0
        %2189 = vmatpush1.bf16.msra.mxu0 %v1582
        %2190 = vmatprep.subr.bf16.mxu0 0
        %2191 = vmatpush1.bf16.msra.mxu0 %v1583
        %2192 = vmatprep.subr.bf16.mxu0 0
        %2193 = vmatpush1.bf16.msra.mxu0 %v1584
        %2194 = vmatprep.subr.bf16.mxu0 0
        %2195 = vmatpush1.bf16.msra.mxu0 %v1585
        %2196 = vmatprep.subr.bf16.mxu0 0
        %2197 = vmatpush1.bf16.msra.mxu0 %v1586
        %2198 = vmatprep.subr.bf16.mxu0 0
        %2199 = vmatpush1.bf16.msra.mxu0 %v1587
        %2200 = vmatprep.subr.bf16.mxu0 0
        %2201 = vmatpush1.bf16.msra.mxu0 %v1588
        %2202 = vmatprep.subr.bf16.mxu0 0
        %2203 = vmatpush1.bf16.msra.mxu0 %v1589
        %2204 = vmatprep.subr.bf16.mxu0 0
        %2205 = vmatpush1.bf16.msra.mxu0 %v1590
        %2206 = vmatprep.mubr.bf16.mxu0 %v838
        %2207 = vmatmul.mubr.bf16.gmra.mrb[0].mxu0 %v837
        %v2208 = vpop.f32.mrb[0].mxu0
        %v2209 = vadd.f32 %v2144, %v2208
        %v2210 = vpop.f32.mrb[0].mxu0
        %v2211 = vpop.f32.mrb[0].mxu0
        %v2212 = vadd.f32 %v2147, %v2211
        %v2213 = vpop.f32.mrb[0].mxu0
        %2214 = vmatprep.mubr.bf16.mxu0 %v854
        %2215 = vmatmul.mubr.bf16.gmra.mrb[0].mxu0 %v853
        %v2216 = vpop.f32.mrb[0].mxu0
        %v2217 = vadd.f32 %v2152, %v2216
        %v2218 = vpop.f32.mrb[0].mxu0
        %v2219 = vpop.f32.mrb[0].mxu0
        %v2220 = vadd.f32 %v2155, %v2219
        %v2221 = vpop.f32.mrb[0].mxu0
        %2222 = vmatprep.mubr.bf16.mxu0 %v870
        %2223 = vmatmul.mubr.bf16.gmra.mrb[0].mxu0 %v869
        %v2224 = vpop.f32.mrb[0].mxu0
        %v2225 = vadd.f32 %v2160, %v2224
        %v2226 = vpop.f32.mrb[0].mxu0
        %v2227 = vpop.f32.mrb[0].mxu0
        %v2228 = vadd.f32 %v2163, %v2227
        %v2229 = vpop.f32.mrb[0].mxu0
        %2230 = vmatprep.mubr.bf16.mxu0 %v886
        %2231 = vmatmul.mubr.bf16.gmra.mrb[0].mxu0 %v885
        %v2232 = vpop.f32.mrb[0].mxu0
        %v2233 = vadd.f32 %v2168, %v2232
        %v2234 = vpop.f32.mrb[0].mxu0
        %v2235 = vpop.f32.mrb[0].mxu0
        %v2236 = vadd.f32 %v2171, %v2235
        %v2237 = vpop.f32.mrb[0].mxu0
        %2238 = vdwg.mxu0
        %v2239 = vmax.f32 %v2209, 0.0
        %v2240 = vmax.f32 %v2212, 0.0
        %v2241 = vmax.f32 %v2217, 0.0
        %v2242 = vmax.f32 %v2220, 0.0
        %v2243 = vmax.f32 %v2225, 0.0
        %v2244 = vmax.f32 %v2228, 0.0
        %v2245 = vmax.f32 %v2233, 0.0
        %v2246 = vmax.f32 %v2236, 0.0
        %v2247 = vld [vmem:[%s3] sm:$0xff]
        %v2248 = vld [vmem:[%s3 + $0x8] sm:$0x1]
        %vm2249 = vcmask 523264
        %v2251 = vsel %vm2249, %v2247, 0
        %v2254 = vsel %vm2249, %v2248, 0
        %2256 = vmatprep.subr.mxu0 0.0
        %2257 = vmatpush1.msra.mxu0 %v2239
        %2258 = vmatprep.subr.mxu0 0.0
        %2259 = vmatpush1.msra.mxu0 %v2240
        %2260 = vmatprep.subr.mxu0 0.0
        %2261 = vmatpush1.msra.mxu0 %v2241
        %2262 = vmatprep.subr.mxu0 0.0
        %2263 = vmatpush1.msra.mxu0 %v2242
        %2264 = vmatprep.subr.mxu0 0.0
        %2265 = vmatpush1.msra.mxu0 %v2243
        %2266 = vmatprep.subr.mxu0 0.0
        %2267 = vmatpush1.msra.mxu0 %v2244
        %2268 = vmatprep.subr.mxu0 0.0
        %2269 = vmatpush1.msra.mxu0 %v2245
        %2270 = vmatprep.subr.mxu0 0.0
        %2271 = vmatpush1.msra.mxu0 %v2246
        %2272 = vmatprep.subr.mxu0 0.0
        %2273 = vmatpush1.msra.mxu0 0.0
        %2274 = vmatprep.subr.mxu0 0.0
        %2275 = vmatpush1.msra.mxu0 0.0
        %2276 = vmatprep.subr.mxu0 0.0
        %2277 = vmatpush1.msra.mxu0 0.0
        %2278 = vmatprep.subr.mxu0 0.0
        %2279 = vmatpush1.msra.mxu0 0.0
        %2280 = vmatprep.subr.mxu0 0.0
        %2281 = vmatpush1.msra.mxu0 0.0
        %2282 = vmatprep.subr.mxu0 0.0
        %2283 = vmatpush1.msra.mxu0 0.0
        %2284 = vmatprep.subr.mxu0 0.0
        %2285 = vmatpush1.msra.mxu0 0.0
        %2286 = vmatprep.subr.mxu0 0.0
        %2287 = vmatpush1.msra.mxu0 0.0
        %2288 = vmatprep.subr.mxu0 0.0
        %2289 = vmatpush1.msra.mxu0 0.0
        %2290 = vmatprep.subr.mxu0 0.0
        %2291 = vmatpush1.msra.mxu0 0.0
        %2292 = vmatprep.subr.mxu0 0.0
        %2293 = vmatpush1.msra.mxu0 0.0
        %2294 = vmatprep.subr.mxu0 0.0
        %2295 = vmatpush1.msra.mxu0 0.0
        %2296 = vmatprep.subr.mxu0 0.0
        %2297 = vmatpush1.msra.mxu0 0.0
        %2298 = vmatprep.subr.mxu0 0.0
        %2299 = vmatpush1.msra.mxu0 0.0
        %2300 = vmatprep.subr.mxu0 0.0
        %2301 = vmatpush1.msra.mxu0 0.0
        %2302 = vmatprep.subr.mxu0 0.0
        %2303 = vmatpush1.msra.mxu0 0.0
        %2304 = vmatprep.subr.mxu0 0.0
        %2305 = vmatpush1.msra.mxu0 0.0
        %2306 = vmatprep.subr.mxu0 0.0
        %2307 = vmatpush1.msra.mxu0 0.0
        %2308 = vmatprep.subr.mxu0 0.0
        %2309 = vmatpush1.msra.mxu0 0.0
        %2310 = vmatprep.subr.mxu0 0.0
        %2311 = vmatpush1.msra.mxu0 0.0
        %2312 = vmatprep.subr.mxu0 0.0
        %2313 = vmatpush1.msra.mxu0 0.0
        %2314 = vmatprep.subr.mxu0 0.0
        %2315 = vmatpush1.msra.mxu0 0.0
        %2316 = vmatprep.subr.mxu0 0.0
        %2317 = vmatpush1.msra.mxu0 0.0
        %2318 = vmatprep.subr.mxu0 0.0
        %2319 = vmatpush1.msra.mxu0 0.0
        %2320 = vmatprep.mubr.f32.mxu0 0.0
        %2321 = vmatmul.mubr.f32.gmra.mrb[0].mxu0 %v2251
        %v2322 = vpop.f32.mrb[0].mxu0
        %v2323 = vadd.f32 0.0, %v2322
        %v2324 = vpop.f32.mrb[0].mxu0
        %2325 = vmatprep.mubr.f32.mxu0 0.0
        %2326 = vmatmul.mubr.f32.gmra.mrb[0].mxu0 %v2254
        %v2327 = vpop.f32.mrb[0].mxu0
        %v2328 = vadd.f32 0.0, %v2327
        %v2329 = vpop.f32.mrb[0].mxu0
        %2330 = vdwg.mxu0
        %v2331 = vld [vmem:[%s4] sm:$0xff]
        %v2332 = vld [vmem:[%s4 + $0x8] sm:$0xff]
        %v2333 = vld [vmem:[%s4 + $0x10] sm:$0xff]
        %v2334 = vld [vmem:[%s4 + $0x18] sm:$0xff]
        %s2335 = scalar_lea.vmem %s3, 16
        %v2336 = vld [vmem:[%s2335] sm:$0xff]
        %v2337 = vld [vmem:[%s2335 + $0x8] sm:$0x1]
        %v2339 = vsel %vm2249, %v2336, 0
        %v2342 = vsel %vm2249, %v2337, 0
        %2344 = vmatprep.subr.mxu0 0.0
        %2345 = vmatpush1.msra.mxu0 %v2239
        %2346 = vmatprep.subr.mxu0 0.0
        %2347 = vmatpush1.msra.mxu0 %v2240
        %2348 = vmatprep.subr.mxu0 0.0
        %2349 = vmatpush1.msra.mxu0 %v2241
        %2350 = vmatprep.subr.mxu0 0.0
        %2351 = vmatpush1.msra.mxu0 %v2242
        %2352 = vmatprep.subr.mxu0 0.0
        %2353 = vmatpush1.msra.mxu0 %v2243
        %2354 = vmatprep.subr.mxu0 0.0
        %2355 = vmatpush1.msra.mxu0 %v2244
        %2356 = vmatprep.subr.mxu0 0.0
        %2357 = vmatpush1.msra.mxu0 %v2245
        %2358 = vmatprep.subr.mxu0 0.0
        %2359 = vmatpush1.msra.mxu0 %v2246
        %2360 = vmatprep.subr.mxu0 0.0
        %2361 = vmatpush1.msra.mxu0 0.0
        %2362 = vmatprep.subr.mxu0 0.0
        %2363 = vmatpush1.msra.mxu0 0.0
        %2364 = vmatprep.subr.mxu0 0.0
        %2365 = vmatpush1.msra.mxu0 0.0
        %2366 = vmatprep.subr.mxu0 0.0
        %2367 = vmatpush1.msra.mxu0 0.0
        %2368 = vmatprep.subr.mxu0 0.0
        %2369 = vmatpush1.msra.mxu0 0.0
        %2370 = vmatprep.subr.mxu0 0.0
        %2371 = vmatpush1.msra.mxu0 0.0
        %2372 = vmatprep.subr.mxu0 0.0
        %2373 = vmatpush1.msra.mxu0 0.0
        %2374 = vmatprep.subr.mxu0 0.0
        %2375 = vmatpush1.msra.mxu0 0.0
        %2376 = vmatprep.subr.mxu0 0.0
        %2377 = vmatpush1.msra.mxu0 0.0
        %2378 = vmatprep.subr.mxu0 0.0
        %2379 = vmatpush1.msra.mxu0 0.0
        %2380 = vmatprep.subr.mxu0 0.0
        %2381 = vmatpush1.msra.mxu0 0.0
        %2382 = vmatprep.subr.mxu0 0.0
        %2383 = vmatpush1.msra.mxu0 0.0
        %2384 = vmatprep.subr.mxu0 0.0
        %2385 = vmatpush1.msra.mxu0 0.0
        %2386 = vmatprep.subr.mxu0 0.0
        %2387 = vmatpush1.msra.mxu0 0.0
        %2388 = vmatprep.subr.mxu0 0.0
        %2389 = vmatpush1.msra.mxu0 0.0
        %2390 = vmatprep.subr.mxu0 0.0
        %2391 = vmatpush1.msra.mxu0 0.0
        %2392 = vmatprep.subr.mxu0 0.0
        %2393 = vmatpush1.msra.mxu0 0.0
        %2394 = vmatprep.subr.mxu0 0.0
        %2395 = vmatpush1.msra.mxu0 0.0
        %2396 = vmatprep.subr.mxu0 0.0
        %2397 = vmatpush1.msra.mxu0 0.0
        %2398 = vmatprep.subr.mxu0 0.0
        %2399 = vmatpush1.msra.mxu0 0.0
        %2400 = vmatprep.subr.mxu0 0.0
        %2401 = vmatpush1.msra.mxu0 0.0
        %2402 = vmatprep.subr.mxu0 0.0
        %2403 = vmatpush1.msra.mxu0 0.0
        %2404 = vmatprep.subr.mxu0 0.0
        %2405 = vmatpush1.msra.mxu0 0.0
        %2406 = vmatprep.subr.mxu0 0.0
        %2407 = vmatpush1.msra.mxu0 0.0
        %2408 = vmatprep.mubr.f32.mxu0 0.0
        %2409 = vmatmul.mubr.f32.gmra.mrb[0].mxu0 %v2339
        %v2410 = vpop.f32.mrb[0].mxu0
        %v2411 = vadd.f32 0.0, %v2410
        %v2412 = vpop.f32.mrb[0].mxu0
        %2413 = vmatprep.mubr.f32.mxu0 0.0
        %2414 = vmatmul.mubr.f32.gmra.mrb[0].mxu0 %v2342
        %v2415 = vpop.f32.mrb[0].mxu0
        %v2416 = vadd.f32 0.0, %v2415
        %v2417 = vpop.f32.mrb[0].mxu0
        %2418 = vdwg.mxu0
        %s2419 = scalar_lea.vmem %s4, 32
        %v2420 = vld [vmem:[%s2419] sm:$0xff]
        %v2421 = vld [vmem:[%s2419 + $0x8] sm:$0xff]
        %v2422 = vld [vmem:[%s2419 + $0x10] sm:$0xff]
        %v2423 = vld [vmem:[%s2419 + $0x18] sm:$0xff]
        %vm2424 = vcmask 261120
        %v2426 = vsel %vm2424, %v2411, 0
        %v2429 = vsel %vm2424, %v2416, 0
        %2431 = vmatprep.subr.mxu0 0.0
        %2432 = vmatpush1.msra.mxu0 %v2420
        %2433 = vmatprep.subr.mxu0 0.0
        %2434 = vmatpush1.msra.mxu0 %v2421
        %2435 = vmatprep.subr.mxu0 0.0
        %2436 = vmatpush1.msra.mxu0 %v2422
        %2437 = vmatprep.subr.mxu0 0.0
        %2438 = vmatpush1.msra.mxu0 %v2423
        %2439 = vmatprep.subr.mxu0 0.0
        %2440 = vmatpush1.msra.mxu0 0.0
        %2441 = vmatprep.subr.mxu0 0.0
        %2442 = vmatpush1.msra.mxu0 0.0
        %2443 = vmatprep.subr.mxu0 0.0
        %2444 = vmatpush1.msra.mxu0 0.0
        %2445 = vmatprep.subr.mxu0 0.0
        %2446 = vmatpush1.msra.mxu0 0.0
        %2447 = vmatprep.subr.mxu0 0.0
        %2448 = vmatpush1.msra.mxu0 0.0
        %2449 = vmatprep.subr.mxu0 0.0
        %2450 = vmatpush1.msra.mxu0 0.0
        %2451 = vmatprep.subr.mxu0 0.0
        %2452 = vmatpush1.msra.mxu0 0.0
        %2453 = vmatprep.subr.mxu0 0.0
        %2454 = vmatpush1.msra.mxu0 0.0
        %2455 = vmatprep.subr.mxu0 0.0
        %2456 = vmatpush1.msra.mxu0 0.0
        %2457 = vmatprep.subr.mxu0 0.0
        %2458 = vmatpush1.msra.mxu0 0.0
        %2459 = vmatprep.subr.mxu0 0.0
        %2460 = vmatpush1.msra.mxu0 0.0
        %2461 = vmatprep.subr.mxu0 0.0
        %2462 = vmatpush1.msra.mxu0 0.0
        %2463 = vmatprep.subr.mxu0 0.0
        %2464 = vmatpush1.msra.mxu0 0.0
        %2465 = vmatprep.subr.mxu0 0.0
        %2466 = vmatpush1.msra.mxu0 0.0
        %2467 = vmatprep.subr.mxu0 0.0
        %2468 = vmatpush1.msra.mxu0 0.0
        %2469 = vmatprep.subr.mxu0 0.0
        %2470 = vmatpush1.msra.mxu0 0.0
        %2471 = vmatprep.subr.mxu0 0.0
        %2472 = vmatpush1.msra.mxu0 0.0
        %2473 = vmatprep.subr.mxu0 0.0
        %2474 = vmatpush1.msra.mxu0 0.0
        %2475 = vmatprep.subr.mxu0 0.0
        %2476 = vmatpush1.msra.mxu0 0.0
        %2477 = vmatprep.subr.mxu0 0.0
        %2478 = vmatpush1.msra.mxu0 0.0
        %2479 = vmatprep.subr.mxu0 0.0
        %2480 = vmatpush1.msra.mxu0 0.0
        %2481 = vmatprep.subr.mxu0 0.0
        %2482 = vmatpush1.msra.mxu0 0.0
        %2483 = vmatprep.subr.mxu0 0.0
        %2484 = vmatpush1.msra.mxu0 0.0
        %2485 = vmatprep.subr.mxu0 0.0
        %2486 = vmatpush1.msra.mxu0 0.0
        %2487 = vmatprep.subr.mxu0 0.0
        %2488 = vmatpush1.msra.mxu0 0.0
        %2489 = vmatprep.subr.mxu0 0.0
        %2490 = vmatpush1.msra.mxu0 0.0
        %2491 = vmatprep.subr.mxu0 0.0
        %2492 = vmatpush1.msra.mxu0 0.0
        %2493 = vmatprep.subr.mxu0 0.0
        %2494 = vmatpush1.msra.mxu0 0.0
        %2495 = vmatprep.mubr.f32.mxu0 0.0
        %2496 = vmatmul.mubr.f32.gmra.mrb[0].mxu0 %v2426
        %v2497 = vpop.f32.mrb[0].mxu0
        %v2498 = vadd.f32 0.0, %v2497
        %v2499 = vpop.f32.mrb[0].mxu0
        %2500 = vmatprep.mubr.f32.mxu0 0.0
        %2501 = vmatmul.mubr.f32.gmra.mrb[0].mxu0 %v2429
        %v2502 = vpop.f32.mrb[0].mxu0
        %v2503 = vadd.f32 0.0, %v2502
        %v2504 = vpop.f32.mrb[0].mxu0
        %2505 = vdwg.mxu0
        %v2507 = vsel %vm2424, %v2323, 0
        %v2510 = vsel %vm2424, %v2328, 0
        %2512 = vmatprep.subr.mxu0 0.0
        %2513 = vmatpush1.msra.mxu0 %v2331
        %2514 = vmatprep.subr.mxu0 0.0
        %2515 = vmatpush1.msra.mxu0 %v2332
        %2516 = vmatprep.subr.mxu0 0.0
        %2517 = vmatpush1.msra.mxu0 %v2333
        %2518 = vmatprep.subr.mxu0 0.0
        %2519 = vmatpush1.msra.mxu0 %v2334
        %2520 = vmatprep.subr.mxu0 0.0
        %2521 = vmatpush1.msra.mxu0 0.0
        %2522 = vmatprep.subr.mxu0 0.0
        %2523 = vmatpush1.msra.mxu0 0.0
        %2524 = vmatprep.subr.mxu0 0.0
        %2525 = vmatpush1.msra.mxu0 0.0
        %2526 = vmatprep.subr.mxu0 0.0
        %2527 = vmatpush1.msra.mxu0 0.0
        %2528 = vmatprep.subr.mxu0 0.0
        %2529 = vmatpush1.msra.mxu0 0.0
        %2530 = vmatprep.subr.mxu0 0.0
        %2531 = vmatpush1.msra.mxu0 0.0
        %2532 = vmatprep.subr.mxu0 0.0
        %2533 = vmatpush1.msra.mxu0 0.0
        %2534 = vmatprep.subr.mxu0 0.0
        %2535 = vmatpush1.msra.mxu0 0.0
        %2536 = vmatprep.subr.mxu0 0.0
        %2537 = vmatpush1.msra.mxu0 0.0
        %2538 = vmatprep.subr.mxu0 0.0
        %2539 = vmatpush1.msra.mxu0 0.0
        %2540 = vmatprep.subr.mxu0 0.0
        %2541 = vmatpush1.msra.mxu0 0.0
        %2542 = vmatprep.subr.mxu0 0.0
        %2543 = vmatpush1.msra.mxu0 0.0
        %2544 = vmatprep.subr.mxu0 0.0
        %2545 = vmatpush1.msra.mxu0 0.0
        %2546 = vmatprep.subr.mxu0 0.0
        %2547 = vmatpush1.msra.mxu0 0.0
        %2548 = vmatprep.subr.mxu0 0.0
        %2549 = vmatpush1.msra.mxu0 0.0
        %2550 = vmatprep.subr.mxu0 0.0
        %2551 = vmatpush1.msra.mxu0 0.0
        %2552 = vmatprep.subr.mxu0 0.0
        %2553 = vmatpush1.msra.mxu0 0.0
        %2554 = vmatprep.subr.mxu0 0.0
        %2555 = vmatpush1.msra.mxu0 0.0
        %2556 = vmatprep.subr.mxu0 0.0
        %2557 = vmatpush1.msra.mxu0 0.0
        %2558 = vmatprep.subr.mxu0 0.0
        %2559 = vmatpush1.msra.mxu0 0.0
        %2560 = vmatprep.subr.mxu0 0.0
        %2561 = vmatpush1.msra.mxu0 0.0
        %2562 = vmatprep.subr.mxu0 0.0
        %2563 = vmatpush1.msra.mxu0 0.0
        %2564 = vmatprep.subr.mxu0 0.0
        %2565 = vmatpush1.msra.mxu0 0.0
        %2566 = vmatprep.subr.mxu0 0.0
        %2567 = vmatpush1.msra.mxu0 0.0
        %2568 = vmatprep.subr.mxu0 0.0
        %2569 = vmatpush1.msra.mxu0 0.0
        %2570 = vmatprep.subr.mxu0 0.0
        %2571 = vmatpush1.msra.mxu0 0.0
        %2572 = vmatprep.subr.mxu0 0.0
        %2573 = vmatpush1.msra.mxu0 0.0
        %2574 = vmatprep.subr.mxu0 0.0
        %2575 = vmatpush1.msra.mxu0 0.0
        %2576 = vmatprep.mubr.f32.mxu0 0.0
        %2577 = vmatmul.mubr.f32.gmra.mrb[0].mxu0 %v2507
        %v2578 = vpop.f32.mrb[0].mxu0
        %v2579 = vadd.f32 %v2498, %v2578
        %v2580 = vpop.f32.mrb[0].mxu0
        %2581 = vmatprep.mubr.f32.mxu0 0.0
        %2582 = vmatmul.mubr.f32.gmra.mrb[0].mxu0 %v2510
        %v2583 = vpop.f32.mrb[0].mxu0
        %v2584 = vadd.f32 %v2503, %v2583
        %v2585 = vpop.f32.mrb[0].mxu0
        %2586 = vdwg.mxu0
        %s2587 = scalar_lea.vmem %s3, 32
        %v2588 = vld [vmem:[%s2587] sm:$0xff]
        %v2589 = vld [vmem:[%s2587 + $0x8] sm:$0x1]
        %v2591 = vsel %vm2249, %v2588, 0
        %v2594 = vsel %vm2249, %v2589, 0
        %2596 = vmatprep.subr.mxu0 0.0
        %2597 = vmatpush1.msra.mxu0 %v2239
        %2598 = vmatprep.subr.mxu0 0.0
        %2599 = vmatpush1.msra.mxu0 %v2240
        %2600 = vmatprep.subr.mxu0 0.0
        %2601 = vmatpush1.msra.mxu0 %v2241
        %2602 = vmatprep.subr.mxu0 0.0
        %2603 = vmatpush1.msra.mxu0 %v2242
        %2604 = vmatprep.subr.mxu0 0.0
        %2605 = vmatpush1.msra.mxu0 %v2243
        %2606 = vmatprep.subr.mxu0 0.0
        %2607 = vmatpush1.msra.mxu0 %v2244
        %2608 = vmatprep.subr.mxu0 0.0
        %2609 = vmatpush1.msra.mxu0 %v2245
        %2610 = vmatprep.subr.mxu0 0.0
        %2611 = vmatpush1.msra.mxu0 %v2246
        %2612 = vmatprep.subr.mxu0 0.0
        %2613 = vmatpush1.msra.mxu0 0.0
        %2614 = vmatprep.subr.mxu0 0.0
        %2615 = vmatpush1.msra.mxu0 0.0
        %2616 = vmatprep.subr.mxu0 0.0
        %2617 = vmatpush1.msra.mxu0 0.0
        %2618 = vmatprep.subr.mxu0 0.0
        %2619 = vmatpush1.msra.mxu0 0.0
        %2620 = vmatprep.subr.mxu0 0.0
        %2621 = vmatpush1.msra.mxu0 0.0
        %2622 = vmatprep.subr.mxu0 0.0
        %2623 = vmatpush1.msra.mxu0 0.0
        %2624 = vmatprep.subr.mxu0 0.0
        %2625 = vmatpush1.msra.mxu0 0.0
        %2626 = vmatprep.subr.mxu0 0.0
        %2627 = vmatpush1.msra.mxu0 0.0
        %2628 = vmatprep.subr.mxu0 0.0
        %2629 = vmatpush1.msra.mxu0 0.0
        %2630 = vmatprep.subr.mxu0 0.0
        %2631 = vmatpush1.msra.mxu0 0.0
        %2632 = vmatprep.subr.mxu0 0.0
        %2633 = vmatpush1.msra.mxu0 0.0
        %2634 = vmatprep.subr.mxu0 0.0
        %2635 = vmatpush1.msra.mxu0 0.0
        %2636 = vmatprep.subr.mxu0 0.0
        %2637 = vmatpush1.msra.mxu0 0.0
        %2638 = vmatprep.subr.mxu0 0.0
        %2639 = vmatpush1.msra.mxu0 0.0
        %2640 = vmatprep.subr.mxu0 0.0
        %2641 = vmatpush1.msra.mxu0 0.0
        %2642 = vmatprep.subr.mxu0 0.0
        %2643 = vmatpush1.msra.mxu0 0.0
        %2644 = vmatprep.subr.mxu0 0.0
        %2645 = vmatpush1.msra.mxu0 0.0
        %2646 = vmatprep.subr.mxu0 0.0
        %2647 = vmatpush1.msra.mxu0 0.0
        %2648 = vmatprep.subr.mxu0 0.0
        %2649 = vmatpush1.msra.mxu0 0.0
        %2650 = vmatprep.subr.mxu0 0.0
        %2651 = vmatpush1.msra.mxu0 0.0
        %2652 = vmatprep.subr.mxu0 0.0
        %2653 = vmatpush1.msra.mxu0 0.0
        %2654 = vmatprep.subr.mxu0 0.0
        %2655 = vmatpush1.msra.mxu0 0.0
        %2656 = vmatprep.subr.mxu0 0.0
        %2657 = vmatpush1.msra.mxu0 0.0
        %2658 = vmatprep.subr.mxu0 0.0
        %2659 = vmatpush1.msra.mxu0 0.0
        %2660 = vmatprep.mubr.f32.mxu0 0.0
        %2661 = vmatmul.mubr.f32.gmra.mrb[0].mxu0 %v2591
        %v2662 = vpop.f32.mrb[0].mxu0
        %v2663 = vadd.f32 0.0, %v2662
        %v2664 = vpop.f32.mrb[0].mxu0
        %2665 = vmatprep.mubr.f32.mxu0 0.0
        %2666 = vmatmul.mubr.f32.gmra.mrb[0].mxu0 %v2594
        %v2667 = vpop.f32.mrb[0].mxu0
        %v2668 = vadd.f32 0.0, %v2667
        %v2669 = vpop.f32.mrb[0].mxu0
        %2670 = vdwg.mxu0
        %s2671 = scalar_lea.vmem %s4, 64
        %v2672 = vld [vmem:[%s2671] sm:$0xff]
        %v2673 = vld [vmem:[%s2671 + $0x8] sm:$0xff]
        %v2674 = vld [vmem:[%s2671 + $0x10] sm:$0xff]
        %v2675 = vld [vmem:[%s2671 + $0x18] sm:$0xff]
        %v2677 = vsel %vm2424, %v2663, 0
        %v2680 = vsel %vm2424, %v2668, 0
        %2682 = vmatprep.subr.mxu0 0.0
        %2683 = vmatpush1.msra.mxu0 %v2672
        %2684 = vmatprep.subr.mxu0 0.0
        %2685 = vmatpush1.msra.mxu0 %v2673
        %2686 = vmatprep.subr.mxu0 0.0
        %2687 = vmatpush1.msra.mxu0 %v2674
        %2688 = vmatprep.subr.mxu0 0.0
        %2689 = vmatpush1.msra.mxu0 %v2675
        %2690 = vmatprep.subr.mxu0 0.0
        %2691 = vmatpush1.msra.mxu0 0.0
        %2692 = vmatprep.subr.mxu0 0.0
        %2693 = vmatpush1.msra.mxu0 0.0
        %2694 = vmatprep.subr.mxu0 0.0
        %2695 = vmatpush1.msra.mxu0 0.0
        %2696 = vmatprep.subr.mxu0 0.0
        %2697 = vmatpush1.msra.mxu0 0.0
        %2698 = vmatprep.subr.mxu0 0.0
        %2699 = vmatpush1.msra.mxu0 0.0
        %2700 = vmatprep.subr.mxu0 0.0
        %2701 = vmatpush1.msra.mxu0 0.0
        %2702 = vmatprep.subr.mxu0 0.0
        %2703 = vmatpush1.msra.mxu0 0.0
        %2704 = vmatprep.subr.mxu0 0.0
        %2705 = vmatpush1.msra.mxu0 0.0
        %2706 = vmatprep.subr.mxu0 0.0
        %2707 = vmatpush1.msra.mxu0 0.0
        %2708 = vmatprep.subr.mxu0 0.0
        %2709 = vmatpush1.msra.mxu0 0.0
        %2710 = vmatprep.subr.mxu0 0.0
        %2711 = vmatpush1.msra.mxu0 0.0
        %2712 = vmatprep.subr.mxu0 0.0
        %2713 = vmatpush1.msra.mxu0 0.0
        %2714 = vmatprep.subr.mxu0 0.0
        %2715 = vmatpush1.msra.mxu0 0.0
        %2716 = vmatprep.subr.mxu0 0.0
        %2717 = vmatpush1.msra.mxu0 0.0
        %2718 = vmatprep.subr.mxu0 0.0
        %2719 = vmatpush1.msra.mxu0 0.0
        %2720 = vmatprep.subr.mxu0 0.0
        %2721 = vmatpush1.msra.mxu0 0.0
        %2722 = vmatprep.subr.mxu0 0.0
        %2723 = vmatpush1.msra.mxu0 0.0
        %2724 = vmatprep.subr.mxu0 0.0
        %2725 = vmatpush1.msra.mxu0 0.0
        %2726 = vmatprep.subr.mxu0 0.0
        %2727 = vmatpush1.msra.mxu0 0.0
        %2728 = vmatprep.subr.mxu0 0.0
        %2729 = vmatpush1.msra.mxu0 0.0
        %2730 = vmatprep.subr.mxu0 0.0
        %2731 = vmatpush1.msra.mxu0 0.0
        %2732 = vmatprep.subr.mxu0 0.0
        %2733 = vmatpush1.msra.mxu0 0.0
        %2734 = vmatprep.subr.mxu0 0.0
        %2735 = vmatpush1.msra.mxu0 0.0
        %2736 = vmatprep.subr.mxu0 0.0
        %2737 = vmatpush1.msra.mxu0 0.0
        %2738 = vmatprep.subr.mxu0 0.0
        %2739 = vmatpush1.msra.mxu0 0.0
        %2740 = vmatprep.subr.mxu0 0.0
        %2741 = vmatpush1.msra.mxu0 0.0
        %2742 = vmatprep.subr.mxu0 0.0
        %2743 = vmatpush1.msra.mxu0 0.0
        %2744 = vmatprep.subr.mxu0 0.0
        %2745 = vmatpush1.msra.mxu0 0.0
        %2746 = vmatprep.mubr.f32.mxu0 0.0
        %2747 = vmatmul.mubr.f32.gmra.mrb[0].mxu0 %v2677
        %v2748 = vpop.f32.mrb[0].mxu0
        %v2749 = vadd.f32 0.0, %v2748
        %v2750 = vpop.f32.mrb[0].mxu0
        %2751 = vmatprep.mubr.f32.mxu0 0.0
        %2752 = vmatmul.mubr.f32.gmra.mrb[0].mxu0 %v2680
        %v2753 = vpop.f32.mrb[0].mxu0
        %v2754 = vadd.f32 0.0, %v2753
        %v2755 = vpop.f32.mrb[0].mxu0
        %2756 = vdwg.mxu0
        %v2757 = vadd.f32 %v2579, %v2749
        %v2758 = vadd.f32 %v2584, %v2754
        %s2759 = scalar_lea.vmem %s3, 48
        %v2760 = vld [vmem:[%s2759] sm:$0xff]
        %v2761 = vld [vmem:[%s2759 + $0x8] sm:$0x1]
        %v2763 = vsel %vm2249, %v2760, 0
        %v2766 = vsel %vm2249, %v2761, 0
        %2768 = vmatprep.subr.mxu0 0.0
        %2769 = vmatpush1.msra.mxu0 %v2239
        %2770 = vmatprep.subr.mxu0 0.0
        %2771 = vmatpush1.msra.mxu0 %v2240
        %2772 = vmatprep.subr.mxu0 0.0
        %2773 = vmatpush1.msra.mxu0 %v2241
        %2774 = vmatprep.subr.mxu0 0.0
        %2775 = vmatpush1.msra.mxu0 %v2242
        %2776 = vmatprep.subr.mxu0 0.0
        %2777 = vmatpush1.msra.mxu0 %v2243
        %2778 = vmatprep.subr.mxu0 0.0
        %2779 = vmatpush1.msra.mxu0 %v2244
        %2780 = vmatprep.subr.mxu0 0.0
        %2781 = vmatpush1.msra.mxu0 %v2245
        %2782 = vmatprep.subr.mxu0 0.0
        %2783 = vmatpush1.msra.mxu0 %v2246
        %2784 = vmatprep.subr.mxu0 0.0
        %2785 = vmatpush1.msra.mxu0 0.0
        %2786 = vmatprep.subr.mxu0 0.0
        %2787 = vmatpush1.msra.mxu0 0.0
        %2788 = vmatprep.subr.mxu0 0.0
        %2789 = vmatpush1.msra.mxu0 0.0
        %2790 = vmatprep.subr.mxu0 0.0
        %2791 = vmatpush1.msra.mxu0 0.0
        %2792 = vmatprep.subr.mxu0 0.0
        %2793 = vmatpush1.msra.mxu0 0.0
        %2794 = vmatprep.subr.mxu0 0.0
        %2795 = vmatpush1.msra.mxu0 0.0
        %2796 = vmatprep.subr.mxu0 0.0
        %2797 = vmatpush1.msra.mxu0 0.0
        %2798 = vmatprep.subr.mxu0 0.0
        %2799 = vmatpush1.msra.mxu0 0.0
        %2800 = vmatprep.subr.mxu0 0.0
        %2801 = vmatpush1.msra.mxu0 0.0
        %2802 = vmatprep.subr.mxu0 0.0
        %2803 = vmatpush1.msra.mxu0 0.0
        %2804 = vmatprep.subr.mxu0 0.0
        %2805 = vmatpush1.msra.mxu0 0.0
        %2806 = vmatprep.subr.mxu0 0.0
        %2807 = vmatpush1.msra.mxu0 0.0
        %2808 = vmatprep.subr.mxu0 0.0
        %2809 = vmatpush1.msra.mxu0 0.0
        %2810 = vmatprep.subr.mxu0 0.0
        %2811 = vmatpush1.msra.mxu0 0.0
        %2812 = vmatprep.subr.mxu0 0.0
        %2813 = vmatpush1.msra.mxu0 0.0
        %2814 = vmatprep.subr.mxu0 0.0
        %2815 = vmatpush1.msra.mxu0 0.0
        %2816 = vmatprep.subr.mxu0 0.0
        %2817 = vmatpush1.msra.mxu0 0.0
        %2818 = vmatprep.subr.mxu0 0.0
        %2819 = vmatpush1.msra.mxu0 0.0
        %2820 = vmatprep.subr.mxu0 0.0
        %2821 = vmatpush1.msra.mxu0 0.0
        %2822 = vmatprep.subr.mxu0 0.0
        %2823 = vmatpush1.msra.mxu0 0.0
        %2824 = vmatprep.subr.mxu0 0.0
        %2825 = vmatpush1.msra.mxu0 0.0
        %2826 = vmatprep.subr.mxu0 0.0
        %2827 = vmatpush1.msra.mxu0 0.0
        %2828 = vmatprep.subr.mxu0 0.0
        %2829 = vmatpush1.msra.mxu0 0.0
        %2830 = vmatprep.subr.mxu0 0.0
        %2831 = vmatpush1.msra.mxu0 0.0
        %2832 = vmatprep.mubr.f32.mxu0 0.0
        %2833 = vmatmul.mubr.f32.gmra.mrb[0].mxu0 %v2763
        %v2834 = vpop.f32.mrb[0].mxu0
        %v2835 = vadd.f32 0.0, %v2834
        %v2836 = vpop.f32.mrb[0].mxu0
        %2837 = vmatprep.mubr.f32.mxu0 0.0
        %2838 = vmatmul.mubr.f32.gmra.mrb[0].mxu0 %v2766
        %v2839 = vpop.f32.mrb[0].mxu0
        %v2840 = vadd.f32 0.0, %v2839
        %v2841 = vpop.f32.mrb[0].mxu0
        %2842 = vdwg.mxu0
        %s2843 = scalar_lea.vmem %s4, 96
        %v2844 = vld [vmem:[%s2843] sm:$0xff]
        %v2845 = vld [vmem:[%s2843 + $0x8] sm:$0xff]
        %v2846 = vld [vmem:[%s2843 + $0x10] sm:$0xff]
        %v2847 = vld [vmem:[%s2843 + $0x18] sm:$0xff]
        %v2849 = vsel %vm2424, %v2835, 0
        %v2852 = vsel %vm2424, %v2840, 0
        %2854 = vmatprep.subr.mxu0 0.0
        %2855 = vmatpush1.msra.mxu0 %v2844
        %2856 = vmatprep.subr.mxu0 0.0
        %2857 = vmatpush1.msra.mxu0 %v2845
        %2858 = vmatprep.subr.mxu0 0.0
        %2859 = vmatpush1.msra.mxu0 %v2846
        %2860 = vmatprep.subr.mxu0 0.0
        %2861 = vmatpush1.msra.mxu0 %v2847
        %2862 = vmatprep.subr.mxu0 0.0
        %2863 = vmatpush1.msra.mxu0 0.0
        %2864 = vmatprep.subr.mxu0 0.0
        %2865 = vmatpush1.msra.mxu0 0.0
        %2866 = vmatprep.subr.mxu0 0.0
        %2867 = vmatpush1.msra.mxu0 0.0
        %2868 = vmatprep.subr.mxu0 0.0
        %2869 = vmatpush1.msra.mxu0 0.0
        %2870 = vmatprep.subr.mxu0 0.0
        %2871 = vmatpush1.msra.mxu0 0.0
        %2872 = vmatprep.subr.mxu0 0.0
        %2873 = vmatpush1.msra.mxu0 0.0
        %2874 = vmatprep.subr.mxu0 0.0
        %2875 = vmatpush1.msra.mxu0 0.0
        %2876 = vmatprep.subr.mxu0 0.0
        %2877 = vmatpush1.msra.mxu0 0.0
        %2878 = vmatprep.subr.mxu0 0.0
        %2879 = vmatpush1.msra.mxu0 0.0
        %2880 = vmatprep.subr.mxu0 0.0
        %2881 = vmatpush1.msra.mxu0 0.0
        %2882 = vmatprep.subr.mxu0 0.0
        %2883 = vmatpush1.msra.mxu0 0.0
        %2884 = vmatprep.subr.mxu0 0.0
        %2885 = vmatpush1.msra.mxu0 0.0
        %2886 = vmatprep.subr.mxu0 0.0
        %2887 = vmatpush1.msra.mxu0 0.0
        %2888 = vmatprep.subr.mxu0 0.0
        %2889 = vmatpush1.msra.mxu0 0.0
        %2890 = vmatprep.subr.mxu0 0.0
        %2891 = vmatpush1.msra.mxu0 0.0
        %2892 = vmatprep.subr.mxu0 0.0
        %2893 = vmatpush1.msra.mxu0 0.0
        %2894 = vmatprep.subr.mxu0 0.0
        %2895 = vmatpush1.msra.mxu0 0.0
        %2896 = vmatprep.subr.mxu0 0.0
        %2897 = vmatpush1.msra.mxu0 0.0
        %2898 = vmatprep.subr.mxu0 0.0
        %2899 = vmatpush1.msra.mxu0 0.0
        %2900 = vmatprep.subr.mxu0 0.0
        %2901 = vmatpush1.msra.mxu0 0.0
        %2902 = vmatprep.subr.mxu0 0.0
        %2903 = vmatpush1.msra.mxu0 0.0
        %2904 = vmatprep.subr.mxu0 0.0
        %2905 = vmatpush1.msra.mxu0 0.0
        %2906 = vmatprep.subr.mxu0 0.0
        %2907 = vmatpush1.msra.mxu0 0.0
        %2908 = vmatprep.subr.mxu0 0.0
        %2909 = vmatpush1.msra.mxu0 0.0
        %2910 = vmatprep.subr.mxu0 0.0
        %2911 = vmatpush1.msra.mxu0 0.0
        %2912 = vmatprep.subr.mxu0 0.0
        %2913 = vmatpush1.msra.mxu0 0.0
        %2914 = vmatprep.subr.mxu0 0.0
        %2915 = vmatpush1.msra.mxu0 0.0
        %2916 = vmatprep.subr.mxu0 0.0
        %2917 = vmatpush1.msra.mxu0 0.0
        %2918 = vmatprep.mubr.f32.mxu0 0.0
        %2919 = vmatmul.mubr.f32.gmra.mrb[0].mxu0 %v2849
        %v2920 = vpop.f32.mrb[0].mxu0
        %v2921 = vadd.f32 0.0, %v2920
        %v2922 = vpop.f32.mrb[0].mxu0
        %2923 = vmatprep.mubr.f32.mxu0 0.0
        %2924 = vmatmul.mubr.f32.gmra.mrb[0].mxu0 %v2852
        %v2925 = vpop.f32.mrb[0].mxu0
        %v2926 = vadd.f32 0.0, %v2925
        %v2927 = vpop.f32.mrb[0].mxu0
        %2928 = vdwg.mxu0
        %v2929 = vadd.f32 %v2757, %v2921
        %v2930 = vadd.f32 %v2758, %v2926
        %s2931 = scalar_lea.vmem %s3, 64
        %v2932 = vld [vmem:[%s2931] sm:$0xff]
        %v2933 = vld [vmem:[%s2931 + $0x8] sm:$0x1]
        %v2935 = vsel %vm2249, %v2932, 0
        %v2938 = vsel %vm2249, %v2933, 0
        %2940 = vmatprep.subr.mxu0 0.0
        %2941 = vmatpush1.msra.mxu0 %v2239
        %2942 = vmatprep.subr.mxu0 0.0
        %2943 = vmatpush1.msra.mxu0 %v2240
        %2944 = vmatprep.subr.mxu0 0.0
        %2945 = vmatpush1.msra.mxu0 %v2241
        %2946 = vmatprep.subr.mxu0 0.0
        %2947 = vmatpush1.msra.mxu0 %v2242
        %2948 = vmatprep.subr.mxu0 0.0
        %2949 = vmatpush1.msra.mxu0 %v2243
        %2950 = vmatprep.subr.mxu0 0.0
        %2951 = vmatpush1.msra.mxu0 %v2244
        %2952 = vmatprep.subr.mxu0 0.0
        %2953 = vmatpush1.msra.mxu0 %v2245
        %2954 = vmatprep.subr.mxu0 0.0
        %2955 = vmatpush1.msra.mxu0 %v2246
        %2956 = vmatprep.subr.mxu0 0.0
        %2957 = vmatpush1.msra.mxu0 0.0
        %2958 = vmatprep.subr.mxu0 0.0
        %2959 = vmatpush1.msra.mxu0 0.0
        %2960 = vmatprep.subr.mxu0 0.0
        %2961 = vmatpush1.msra.mxu0 0.0
        %2962 = vmatprep.subr.mxu0 0.0
        %2963 = vmatpush1.msra.mxu0 0.0
        %2964 = vmatprep.subr.mxu0 0.0
        %2965 = vmatpush1.msra.mxu0 0.0
        %2966 = vmatprep.subr.mxu0 0.0
        %2967 = vmatpush1.msra.mxu0 0.0
        %2968 = vmatprep.subr.mxu0 0.0
        %2969 = vmatpush1.msra.mxu0 0.0
        %2970 = vmatprep.subr.mxu0 0.0
        %2971 = vmatpush1.msra.mxu0 0.0
        %2972 = vmatprep.subr.mxu0 0.0
        %2973 = vmatpush1.msra.mxu0 0.0
        %2974 = vmatprep.subr.mxu0 0.0
        %2975 = vmatpush1.msra.mxu0 0.0
        %2976 = vmatprep.subr.mxu0 0.0
        %2977 = vmatpush1.msra.mxu0 0.0
        %2978 = vmatprep.subr.mxu0 0.0
        %2979 = vmatpush1.msra.mxu0 0.0
        %2980 = vmatprep.subr.mxu0 0.0
        %2981 = vmatpush1.msra.mxu0 0.0
        %2982 = vmatprep.subr.mxu0 0.0
        %2983 = vmatpush1.msra.mxu0 0.0
        %2984 = vmatprep.subr.mxu0 0.0
        %2985 = vmatpush1.msra.mxu0 0.0
        %2986 = vmatprep.subr.mxu0 0.0
        %2987 = vmatpush1.msra.mxu0 0.0
        %2988 = vmatprep.subr.mxu0 0.0
        %2989 = vmatpush1.msra.mxu0 0.0
        %2990 = vmatprep.subr.mxu0 0.0
        %2991 = vmatpush1.msra.mxu0 0.0
        %2992 = vmatprep.subr.mxu0 0.0
        %2993 = vmatpush1.msra.mxu0 0.0
        %2994 = vmatprep.subr.mxu0 0.0
        %2995 = vmatpush1.msra.mxu0 0.0
        %2996 = vmatprep.subr.mxu0 0.0
        %2997 = vmatpush1.msra.mxu0 0.0
        %2998 = vmatprep.subr.mxu0 0.0
        %2999 = vmatpush1.msra.mxu0 0.0
        %3000 = vmatprep.subr.mxu0 0.0
        %3001 = vmatpush1.msra.mxu0 0.0
        %3002 = vmatprep.subr.mxu0 0.0
        %3003 = vmatpush1.msra.mxu0 0.0
        %3004 = vmatprep.mubr.f32.mxu0 0.0
        %3005 = vmatmul.mubr.f32.gmra.mrb[0].mxu0 %v2935
        %v3006 = vpop.f32.mrb[0].mxu0
        %v3007 = vadd.f32 0.0, %v3006
        %v3008 = vpop.f32.mrb[0].mxu0
        %3009 = vmatprep.mubr.f32.mxu0 0.0
        %3010 = vmatmul.mubr.f32.gmra.mrb[0].mxu0 %v2938
        %v3011 = vpop.f32.mrb[0].mxu0
        %v3012 = vadd.f32 0.0, %v3011
        %v3013 = vpop.f32.mrb[0].mxu0
        %3014 = vdwg.mxu0
        %s3015 = scalar_lea.vmem %s4, 128
        %v3016 = vld [vmem:[%s3015] sm:$0xff]
        %v3017 = vld [vmem:[%s3015 + $0x8] sm:$0xff]
        %v3018 = vld [vmem:[%s3015 + $0x10] sm:$0xff]
        %v3019 = vld [vmem:[%s3015 + $0x18] sm:$0xff]
        %v3021 = vsel %vm2424, %v3007, 0
        %v3024 = vsel %vm2424, %v3012, 0
        %3026 = vmatprep.subr.mxu0 0.0
        %3027 = vmatpush1.msra.mxu0 %v3016
        %3028 = vmatprep.subr.mxu0 0.0
        %3029 = vmatpush1.msra.mxu0 %v3017
        %3030 = vmatprep.subr.mxu0 0.0
        %3031 = vmatpush1.msra.mxu0 %v3018
        %3032 = vmatprep.subr.mxu0 0.0
        %3033 = vmatpush1.msra.mxu0 %v3019
        %3034 = vmatprep.subr.mxu0 0.0
        %3035 = vmatpush1.msra.mxu0 0.0
        %3036 = vmatprep.subr.mxu0 0.0
        %3037 = vmatpush1.msra.mxu0 0.0
        %3038 = vmatprep.subr.mxu0 0.0
        %3039 = vmatpush1.msra.mxu0 0.0
        %3040 = vmatprep.subr.mxu0 0.0
        %3041 = vmatpush1.msra.mxu0 0.0
        %3042 = vmatprep.subr.mxu0 0.0
        %3043 = vmatpush1.msra.mxu0 0.0
        %3044 = vmatprep.subr.mxu0 0.0
        %3045 = vmatpush1.msra.mxu0 0.0
        %3046 = vmatprep.subr.mxu0 0.0
        %3047 = vmatpush1.msra.mxu0 0.0
        %3048 = vmatprep.subr.mxu0 0.0
        %3049 = vmatpush1.msra.mxu0 0.0
        %3050 = vmatprep.subr.mxu0 0.0
        %3051 = vmatpush1.msra.mxu0 0.0
        %3052 = vmatprep.subr.mxu0 0.0
        %3053 = vmatpush1.msra.mxu0 0.0
        %3054 = vmatprep.subr.mxu0 0.0
        %3055 = vmatpush1.msra.mxu0 0.0
        %3056 = vmatprep.subr.mxu0 0.0
        %3057 = vmatpush1.msra.mxu0 0.0
        %3058 = vmatprep.subr.mxu0 0.0
        %3059 = vmatpush1.msra.mxu0 0.0
        %3060 = vmatprep.subr.mxu0 0.0
        %3061 = vmatpush1.msra.mxu0 0.0
        %3062 = vmatprep.subr.mxu0 0.0
        %3063 = vmatpush1.msra.mxu0 0.0
        %3064 = vmatprep.subr.mxu0 0.0
        %3065 = vmatpush1.msra.mxu0 0.0
        %3066 = vmatprep.subr.mxu0 0.0
        %3067 = vmatpush1.msra.mxu0 0.0
        %3068 = vmatprep.subr.mxu0 0.0
        %3069 = vmatpush1.msra.mxu0 0.0
        %3070 = vmatprep.subr.mxu0 0.0
        %3071 = vmatpush1.msra.mxu0 0.0
        %3072 = vmatprep.subr.mxu0 0.0
        %3073 = vmatpush1.msra.mxu0 0.0
        %3074 = vmatprep.subr.mxu0 0.0
        %3075 = vmatpush1.msra.mxu0 0.0
        %3076 = vmatprep.subr.mxu0 0.0
        %3077 = vmatpush1.msra.mxu0 0.0
        %3078 = vmatprep.subr.mxu0 0.0
        %3079 = vmatpush1.msra.mxu0 0.0
        %3080 = vmatprep.subr.mxu0 0.0
        %3081 = vmatpush1.msra.mxu0 0.0
        %3082 = vmatprep.subr.mxu0 0.0
        %3083 = vmatpush1.msra.mxu0 0.0
        %3084 = vmatprep.subr.mxu0 0.0
        %3085 = vmatpush1.msra.mxu0 0.0
        %3086 = vmatprep.subr.mxu0 0.0
        %3087 = vmatpush1.msra.mxu0 0.0
        %3088 = vmatprep.subr.mxu0 0.0
        %3089 = vmatpush1.msra.mxu0 0.0
        %3090 = vmatprep.mubr.f32.mxu0 0.0
        %3091 = vmatmul.mubr.f32.gmra.mrb[0].mxu0 %v3021
        %v3092 = vpop.f32.mrb[0].mxu0
        %v3093 = vadd.f32 0.0, %v3092
        %v3094 = vpop.f32.mrb[0].mxu0
        %3095 = vmatprep.mubr.f32.mxu0 0.0
        %3096 = vmatmul.mubr.f32.gmra.mrb[0].mxu0 %v3024
        %v3097 = vpop.f32.mrb[0].mxu0
        %v3098 = vadd.f32 0.0, %v3097
        %v3099 = vpop.f32.mrb[0].mxu0
        %3100 = vdwg.mxu0
        %v3101 = vadd.f32 %v2929, %v3093
        %v3102 = vadd.f32 %v2930, %v3098
        %s3103 = scalar_lea.vmem %s3, 80
        %v3104 = vld [vmem:[%s3103] sm:$0xff]
        %v3105 = vld [vmem:[%s3103 + $0x8] sm:$0x1]
        %v3107 = vsel %vm2249, %v3104, 0
        %v3110 = vsel %vm2249, %v3105, 0
        %3112 = vmatprep.subr.mxu0 0.0
        %3113 = vmatpush1.msra.mxu0 %v2239
        %3114 = vmatprep.subr.mxu0 0.0
        %3115 = vmatpush1.msra.mxu0 %v2240
        %3116 = vmatprep.subr.mxu0 0.0
        %3117 = vmatpush1.msra.mxu0 %v2241
        %3118 = vmatprep.subr.mxu0 0.0
        %3119 = vmatpush1.msra.mxu0 %v2242
        %3120 = vmatprep.subr.mxu0 0.0
        %3121 = vmatpush1.msra.mxu0 %v2243
        %3122 = vmatprep.subr.mxu0 0.0
        %3123 = vmatpush1.msra.mxu0 %v2244
        %3124 = vmatprep.subr.mxu0 0.0
        %3125 = vmatpush1.msra.mxu0 %v2245
        %3126 = vmatprep.subr.mxu0 0.0
        %3127 = vmatpush1.msra.mxu0 %v2246
        %3128 = vmatprep.subr.mxu0 0.0
        %3129 = vmatpush1.msra.mxu0 0.0
        %3130 = vmatprep.subr.mxu0 0.0
        %3131 = vmatpush1.msra.mxu0 0.0
        %3132 = vmatprep.subr.mxu0 0.0
        %3133 = vmatpush1.msra.mxu0 0.0
        %3134 = vmatprep.subr.mxu0 0.0
        %3135 = vmatpush1.msra.mxu0 0.0
        %3136 = vmatprep.subr.mxu0 0.0
        %3137 = vmatpush1.msra.mxu0 0.0
        %3138 = vmatprep.subr.mxu0 0.0
        %3139 = vmatpush1.msra.mxu0 0.0
        %3140 = vmatprep.subr.mxu0 0.0
        %3141 = vmatpush1.msra.mxu0 0.0
        %3142 = vmatprep.subr.mxu0 0.0
        %3143 = vmatpush1.msra.mxu0 0.0
        %3144 = vmatprep.subr.mxu0 0.0
        %3145 = vmatpush1.msra.mxu0 0.0
        %3146 = vmatprep.subr.mxu0 0.0
        %3147 = vmatpush1.msra.mxu0 0.0
        %3148 = vmatprep.subr.mxu0 0.0
        %3149 = vmatpush1.msra.mxu0 0.0
        %3150 = vmatprep.subr.mxu0 0.0
        %3151 = vmatpush1.msra.mxu0 0.0
        %3152 = vmatprep.subr.mxu0 0.0
        %3153 = vmatpush1.msra.mxu0 0.0
        %3154 = vmatprep.subr.mxu0 0.0
        %3155 = vmatpush1.msra.mxu0 0.0
        %3156 = vmatprep.subr.mxu0 0.0
        %3157 = vmatpush1.msra.mxu0 0.0
        %3158 = vmatprep.subr.mxu0 0.0
        %3159 = vmatpush1.msra.mxu0 0.0
        %3160 = vmatprep.subr.mxu0 0.0
        %3161 = vmatpush1.msra.mxu0 0.0
        %3162 = vmatprep.subr.mxu0 0.0
        %3163 = vmatpush1.msra.mxu0 0.0
        %3164 = vmatprep.subr.mxu0 0.0
        %3165 = vmatpush1.msra.mxu0 0.0
        %3166 = vmatprep.subr.mxu0 0.0
        %3167 = vmatpush1.msra.mxu0 0.0
        %3168 = vmatprep.subr.mxu0 0.0
        %3169 = vmatpush1.msra.mxu0 0.0
        %3170 = vmatprep.subr.mxu0 0.0
        %3171 = vmatpush1.msra.mxu0 0.0
        %3172 = vmatprep.subr.mxu0 0.0
        %3173 = vmatpush1.msra.mxu0 0.0
        %3174 = vmatprep.subr.mxu0 0.0
        %3175 = vmatpush1.msra.mxu0 0.0
        %3176 = vmatprep.mubr.f32.mxu0 0.0
        %3177 = vmatmul.mubr.f32.gmra.mrb[0].mxu0 %v3107
        %v3178 = vpop.f32.mrb[0].mxu0
        %v3179 = vadd.f32 0.0, %v3178
        %v3180 = vpop.f32.mrb[0].mxu0
        %3181 = vmatprep.mubr.f32.mxu0 0.0
        %3182 = vmatmul.mubr.f32.gmra.mrb[0].mxu0 %v3110
        %v3183 = vpop.f32.mrb[0].mxu0
        %v3184 = vadd.f32 0.0, %v3183
        %v3185 = vpop.f32.mrb[0].mxu0
        %3186 = vdwg.mxu0
        %s3187 = scalar_lea.vmem %s4, 160
        %v3188 = vld [vmem:[%s3187] sm:$0xff]
        %v3189 = vld [vmem:[%s3187 + $0x8] sm:$0xff]
        %v3190 = vld [vmem:[%s3187 + $0x10] sm:$0xff]
        %v3191 = vld [vmem:[%s3187 + $0x18] sm:$0xff]
        %v3193 = vsel %vm2424, %v3179, 0
        %v3196 = vsel %vm2424, %v3184, 0
        %3198 = vmatprep.subr.mxu0 0.0
        %3199 = vmatpush1.msra.mxu0 %v3188
        %3200 = vmatprep.subr.mxu0 0.0
        %3201 = vmatpush1.msra.mxu0 %v3189
        %3202 = vmatprep.subr.mxu0 0.0
        %3203 = vmatpush1.msra.mxu0 %v3190
        %3204 = vmatprep.subr.mxu0 0.0
        %3205 = vmatpush1.msra.mxu0 %v3191
        %3206 = vmatprep.subr.mxu0 0.0
        %3207 = vmatpush1.msra.mxu0 0.0
        %3208 = vmatprep.subr.mxu0 0.0
        %3209 = vmatpush1.msra.mxu0 0.0
        %3210 = vmatprep.subr.mxu0 0.0
        %3211 = vmatpush1.msra.mxu0 0.0
        %3212 = vmatprep.subr.mxu0 0.0
        %3213 = vmatpush1.msra.mxu0 0.0
        %3214 = vmatprep.subr.mxu0 0.0
        %3215 = vmatpush1.msra.mxu0 0.0
        %3216 = vmatprep.subr.mxu0 0.0
        %3217 = vmatpush1.msra.mxu0 0.0
        %3218 = vmatprep.subr.mxu0 0.0
        %3219 = vmatpush1.msra.mxu0 0.0
        %3220 = vmatprep.subr.mxu0 0.0
        %3221 = vmatpush1.msra.mxu0 0.0
        %3222 = vmatprep.subr.mxu0 0.0
        %3223 = vmatpush1.msra.mxu0 0.0
        %3224 = vmatprep.subr.mxu0 0.0
        %3225 = vmatpush1.msra.mxu0 0.0
        %3226 = vmatprep.subr.mxu0 0.0
        %3227 = vmatpush1.msra.mxu0 0.0
        %3228 = vmatprep.subr.mxu0 0.0
        %3229 = vmatpush1.msra.mxu0 0.0
        %3230 = vmatprep.subr.mxu0 0.0
        %3231 = vmatpush1.msra.mxu0 0.0
        %3232 = vmatprep.subr.mxu0 0.0
        %3233 = vmatpush1.msra.mxu0 0.0
        %3234 = vmatprep.subr.mxu0 0.0
        %3235 = vmatpush1.msra.mxu0 0.0
        %3236 = vmatprep.subr.mxu0 0.0
        %3237 = vmatpush1.msra.mxu0 0.0
        %3238 = vmatprep.subr.mxu0 0.0
        %3239 = vmatpush1.msra.mxu0 0.0
        %3240 = vmatprep.subr.mxu0 0.0
        %3241 = vmatpush1.msra.mxu0 0.0
        %3242 = vmatprep.subr.mxu0 0.0
        %3243 = vmatpush1.msra.mxu0 0.0
        %3244 = vmatprep.subr.mxu0 0.0
        %3245 = vmatpush1.msra.mxu0 0.0
        %3246 = vmatprep.subr.mxu0 0.0
        %3247 = vmatpush1.msra.mxu0 0.0
        %3248 = vmatprep.subr.mxu0 0.0
        %3249 = vmatpush1.msra.mxu0 0.0
        %3250 = vmatprep.subr.mxu0 0.0
        %3251 = vmatpush1.msra.mxu0 0.0
        %3252 = vmatprep.subr.mxu0 0.0
        %3253 = vmatpush1.msra.mxu0 0.0
        %3254 = vmatprep.subr.mxu0 0.0
        %3255 = vmatpush1.msra.mxu0 0.0
        %3256 = vmatprep.subr.mxu0 0.0
        %3257 = vmatpush1.msra.mxu0 0.0
        %3258 = vmatprep.subr.mxu0 0.0
        %3259 = vmatpush1.msra.mxu0 0.0
        %3260 = vmatprep.subr.mxu0 0.0
        %3261 = vmatpush1.msra.mxu0 0.0
        %3262 = vmatprep.mubr.f32.mxu0 0.0
        %3263 = vmatmul.mubr.f32.gmra.mrb[0].mxu0 %v3193
        %v3264 = vpop.f32.mrb[0].mxu0
        %v3265 = vadd.f32 0.0, %v3264
        %v3266 = vpop.f32.mrb[0].mxu0
        %3267 = vmatprep.mubr.f32.mxu0 0.0
        %3268 = vmatmul.mubr.f32.gmra.mrb[0].mxu0 %v3196
        %v3269 = vpop.f32.mrb[0].mxu0
        %v3270 = vadd.f32 0.0, %v3269
        %v3271 = vpop.f32.mrb[0].mxu0
        %3272 = vdwg.mxu0
        %v3273 = vadd.f32 %v3101, %v3265
        %v3274 = vadd.f32 %v3102, %v3270
        %s3275 = scalar_lea.vmem %s3, 96
        %v3276 = vld [vmem:[%s3275] sm:$0xff]
        %v3277 = vld [vmem:[%s3275 + $0x8] sm:$0x1]
        %v3279 = vsel %vm2249, %v3276, 0
        %v3282 = vsel %vm2249, %v3277, 0
        %3284 = vmatprep.subr.mxu0 0.0
        %3285 = vmatpush1.msra.mxu0 %v2239
        %3286 = vmatprep.subr.mxu0 0.0
        %3287 = vmatpush1.msra.mxu0 %v2240
        %3288 = vmatprep.subr.mxu0 0.0
        %3289 = vmatpush1.msra.mxu0 %v2241
        %3290 = vmatprep.subr.mxu0 0.0
        %3291 = vmatpush1.msra.mxu0 %v2242
        %3292 = vmatprep.subr.mxu0 0.0
        %3293 = vmatpush1.msra.mxu0 %v2243
        %3294 = vmatprep.subr.mxu0 0.0
        %3295 = vmatpush1.msra.mxu0 %v2244
        %3296 = vmatprep.subr.mxu0 0.0
        %3297 = vmatpush1.msra.mxu0 %v2245
        %3298 = vmatprep.subr.mxu0 0.0
        %3299 = vmatpush1.msra.mxu0 %v2246
        %3300 = vmatprep.subr.mxu0 0.0
        %3301 = vmatpush1.msra.mxu0 0.0
        %3302 = vmatprep.subr.mxu0 0.0
        %3303 = vmatpush1.msra.mxu0 0.0
        %3304 = vmatprep.subr.mxu0 0.0
        %3305 = vmatpush1.msra.mxu0 0.0
        %3306 = vmatprep.subr.mxu0 0.0
        %3307 = vmatpush1.msra.mxu0 0.0
        %3308 = vmatprep.subr.mxu0 0.0
        %3309 = vmatpush1.msra.mxu0 0.0
        %3310 = vmatprep.subr.mxu0 0.0
        %3311 = vmatpush1.msra.mxu0 0.0
        %3312 = vmatprep.subr.mxu0 0.0
        %3313 = vmatpush1.msra.mxu0 0.0
        %3314 = vmatprep.subr.mxu0 0.0
        %3315 = vmatpush1.msra.mxu0 0.0
        %3316 = vmatprep.subr.mxu0 0.0
        %3317 = vmatpush1.msra.mxu0 0.0
        %3318 = vmatprep.subr.mxu0 0.0
        %3319 = vmatpush1.msra.mxu0 0.0
        %3320 = vmatprep.subr.mxu0 0.0
        %3321 = vmatpush1.msra.mxu0 0.0
        %3322 = vmatprep.subr.mxu0 0.0
        %3323 = vmatpush1.msra.mxu0 0.0
        %3324 = vmatprep.subr.mxu0 0.0
        %3325 = vmatpush1.msra.mxu0 0.0
        %3326 = vmatprep.subr.mxu0 0.0
        %3327 = vmatpush1.msra.mxu0 0.0
        %3328 = vmatprep.subr.mxu0 0.0
        %3329 = vmatpush1.msra.mxu0 0.0
        %3330 = vmatprep.subr.mxu0 0.0
        %3331 = vmatpush1.msra.mxu0 0.0
        %3332 = vmatprep.subr.mxu0 0.0
        %3333 = vmatpush1.msra.mxu0 0.0
        %3334 = vmatprep.subr.mxu0 0.0
        %3335 = vmatpush1.msra.mxu0 0.0
        %3336 = vmatprep.subr.mxu0 0.0
        %3337 = vmatpush1.msra.mxu0 0.0
        %3338 = vmatprep.subr.mxu0 0.0
        %3339 = vmatpush1.msra.mxu0 0.0
        %3340 = vmatprep.subr.mxu0 0.0
        %3341 = vmatpush1.msra.mxu0 0.0
        %3342 = vmatprep.subr.mxu0 0.0
        %3343 = vmatpush1.msra.mxu0 0.0
        %3344 = vmatprep.subr.mxu0 0.0
        %3345 = vmatpush1.msra.mxu0 0.0
        %3346 = vmatprep.subr.mxu0 0.0
        %3347 = vmatpush1.msra.mxu0 0.0
        %3348 = vmatprep.mubr.f32.mxu0 0.0
        %3349 = vmatmul.mubr.f32.gmra.mrb[0].mxu0 %v3279
        %v3350 = vpop.f32.mrb[0].mxu0
        %v3351 = vadd.f32 0.0, %v3350
        %v3352 = vpop.f32.mrb[0].mxu0
        %3353 = vmatprep.mubr.f32.mxu0 0.0
        %3354 = vmatmul.mubr.f32.gmra.mrb[0].mxu0 %v3282
        %v3355 = vpop.f32.mrb[0].mxu0
        %v3356 = vadd.f32 0.0, %v3355
        %v3357 = vpop.f32.mrb[0].mxu0
        %3358 = vdwg.mxu0
        %s3359 = scalar_lea.vmem %s4, 192
        %v3360 = vld [vmem:[%s3359] sm:$0xff]
        %v3361 = vld [vmem:[%s3359 + $0x8] sm:$0xff]
        %v3362 = vld [vmem:[%s3359 + $0x10] sm:$0xff]
        %v3363 = vld [vmem:[%s3359 + $0x18] sm:$0xff]
        %v3365 = vsel %vm2424, %v3351, 0
        %v3368 = vsel %vm2424, %v3356, 0
        %3370 = vmatprep.subr.mxu0 0.0
        %3371 = vmatpush1.msra.mxu0 %v3360
        %3372 = vmatprep.subr.mxu0 0.0
        %3373 = vmatpush1.msra.mxu0 %v3361
        %3374 = vmatprep.subr.mxu0 0.0
        %3375 = vmatpush1.msra.mxu0 %v3362
        %3376 = vmatprep.subr.mxu0 0.0
        %3377 = vmatpush1.msra.mxu0 %v3363
        %3378 = vmatprep.subr.mxu0 0.0
        %3379 = vmatpush1.msra.mxu0 0.0
        %3380 = vmatprep.subr.mxu0 0.0
        %3381 = vmatpush1.msra.mxu0 0.0
        %3382 = vmatprep.subr.mxu0 0.0
        %3383 = vmatpush1.msra.mxu0 0.0
        %3384 = vmatprep.subr.mxu0 0.0
        %3385 = vmatpush1.msra.mxu0 0.0
        %3386 = vmatprep.subr.mxu0 0.0
        %3387 = vmatpush1.msra.mxu0 0.0
        %3388 = vmatprep.subr.mxu0 0.0
        %3389 = vmatpush1.msra.mxu0 0.0
        %3390 = vmatprep.subr.mxu0 0.0
        %3391 = vmatpush1.msra.mxu0 0.0
        %3392 = vmatprep.subr.mxu0 0.0
        %3393 = vmatpush1.msra.mxu0 0.0
        %3394 = vmatprep.subr.mxu0 0.0
        %3395 = vmatpush1.msra.mxu0 0.0
        %3396 = vmatprep.subr.mxu0 0.0
        %3397 = vmatpush1.msra.mxu0 0.0
        %3398 = vmatprep.subr.mxu0 0.0
        %3399 = vmatpush1.msra.mxu0 0.0
        %3400 = vmatprep.subr.mxu0 0.0
        %3401 = vmatpush1.msra.mxu0 0.0
        %3402 = vmatprep.subr.mxu0 0.0
        %3403 = vmatpush1.msra.mxu0 0.0
        %3404 = vmatprep.subr.mxu0 0.0
        %3405 = vmatpush1.msra.mxu0 0.0
        %3406 = vmatprep.subr.mxu0 0.0
        %3407 = vmatpush1.msra.mxu0 0.0
        %3408 = vmatprep.subr.mxu0 0.0
        %3409 = vmatpush1.msra.mxu0 0.0
        %3410 = vmatprep.subr.mxu0 0.0
        %3411 = vmatpush1.msra.mxu0 0.0
        %3412 = vmatprep.subr.mxu0 0.0
        %3413 = vmatpush1.msra.mxu0 0.0
        %3414 = vmatprep.subr.mxu0 0.0
        %3415 = vmatpush1.msra.mxu0 0.0
        %3416 = vmatprep.subr.mxu0 0.0
        %3417 = vmatpush1.msra.mxu0 0.0
        %3418 = vmatprep.subr.mxu0 0.0
        %3419 = vmatpush1.msra.mxu0 0.0
        %3420 = vmatprep.subr.mxu0 0.0
        %3421 = vmatpush1.msra.mxu0 0.0
        %3422 = vmatprep.subr.mxu0 0.0
        %3423 = vmatpush1.msra.mxu0 0.0
        %3424 = vmatprep.subr.mxu0 0.0
        %3425 = vmatpush1.msra.mxu0 0.0
        %3426 = vmatprep.subr.mxu0 0.0
        %3427 = vmatpush1.msra.mxu0 0.0
        %3428 = vmatprep.subr.mxu0 0.0
        %3429 = vmatpush1.msra.mxu0 0.0
        %3430 = vmatprep.subr.mxu0 0.0
        %3431 = vmatpush1.msra.mxu0 0.0
        %3432 = vmatprep.subr.mxu0 0.0
        %3433 = vmatpush1.msra.mxu0 0.0
        %3434 = vmatprep.mubr.f32.mxu0 0.0
        %3435 = vmatmul.mubr.f32.gmra.mrb[0].mxu0 %v3365
        %v3436 = vpop.f32.mrb[0].mxu0
        %v3437 = vadd.f32 0.0, %v3436
        %v3438 = vpop.f32.mrb[0].mxu0
        %3439 = vmatprep.mubr.f32.mxu0 0.0
        %3440 = vmatmul.mubr.f32.gmra.mrb[0].mxu0 %v3368
        %v3441 = vpop.f32.mrb[0].mxu0
        %v3442 = vadd.f32 0.0, %v3441
        %v3443 = vpop.f32.mrb[0].mxu0
        %3444 = vdwg.mxu0
        %v3445 = vadd.f32 %v3273, %v3437
        %v3446 = vadd.f32 %v3274, %v3442
        %s3447 = scalar_lea.vmem %s3, 112
        %v3448 = vld [vmem:[%s3447] sm:$0xff]
        %v3449 = vld [vmem:[%s3447 + $0x8] sm:$0x1]
        %v3451 = vsel %vm2249, %v3448, 0
        %v3454 = vsel %vm2249, %v3449, 0
        %3456 = vmatprep.subr.mxu0 0.0
        %3457 = vmatpush1.msra.mxu0 %v2239
        %3458 = vmatprep.subr.mxu0 0.0
        %3459 = vmatpush1.msra.mxu0 %v2240
        %3460 = vmatprep.subr.mxu0 0.0
        %3461 = vmatpush1.msra.mxu0 %v2241
        %3462 = vmatprep.subr.mxu0 0.0
        %3463 = vmatpush1.msra.mxu0 %v2242
        %3464 = vmatprep.subr.mxu0 0.0
        %3465 = vmatpush1.msra.mxu0 %v2243
        %3466 = vmatprep.subr.mxu0 0.0
        %3467 = vmatpush1.msra.mxu0 %v2244
        %3468 = vmatprep.subr.mxu0 0.0
        %3469 = vmatpush1.msra.mxu0 %v2245
        %3470 = vmatprep.subr.mxu0 0.0
        %3471 = vmatpush1.msra.mxu0 %v2246
        %3472 = vmatprep.subr.mxu0 0.0
        %3473 = vmatpush1.msra.mxu0 0.0
        %3474 = vmatprep.subr.mxu0 0.0
        %3475 = vmatpush1.msra.mxu0 0.0
        %3476 = vmatprep.subr.mxu0 0.0
        %3477 = vmatpush1.msra.mxu0 0.0
        %3478 = vmatprep.subr.mxu0 0.0
        %3479 = vmatpush1.msra.mxu0 0.0
        %3480 = vmatprep.subr.mxu0 0.0
        %3481 = vmatpush1.msra.mxu0 0.0
        %3482 = vmatprep.subr.mxu0 0.0
        %3483 = vmatpush1.msra.mxu0 0.0
        %3484 = vmatprep.subr.mxu0 0.0
        %3485 = vmatpush1.msra.mxu0 0.0
        %3486 = vmatprep.subr.mxu0 0.0
        %3487 = vmatpush1.msra.mxu0 0.0
        %3488 = vmatprep.subr.mxu0 0.0
        %3489 = vmatpush1.msra.mxu0 0.0
        %3490 = vmatprep.subr.mxu0 0.0
        %3491 = vmatpush1.msra.mxu0 0.0
        %3492 = vmatprep.subr.mxu0 0.0
        %3493 = vmatpush1.msra.mxu0 0.0
        %3494 = vmatprep.subr.mxu0 0.0
        %3495 = vmatpush1.msra.mxu0 0.0
        %3496 = vmatprep.subr.mxu0 0.0
        %3497 = vmatpush1.msra.mxu0 0.0
        %3498 = vmatprep.subr.mxu0 0.0
        %3499 = vmatpush1.msra.mxu0 0.0
        %3500 = vmatprep.subr.mxu0 0.0
        %3501 = vmatpush1.msra.mxu0 0.0
        %3502 = vmatprep.subr.mxu0 0.0
        %3503 = vmatpush1.msra.mxu0 0.0
        %3504 = vmatprep.subr.mxu0 0.0
        %3505 = vmatpush1.msra.mxu0 0.0
        %3506 = vmatprep.subr.mxu0 0.0
        %3507 = vmatpush1.msra.mxu0 0.0
        %3508 = vmatprep.subr.mxu0 0.0
        %3509 = vmatpush1.msra.mxu0 0.0
        %3510 = vmatprep.subr.mxu0 0.0
        %3511 = vmatpush1.msra.mxu0 0.0
        %3512 = vmatprep.subr.mxu0 0.0
        %3513 = vmatpush1.msra.mxu0 0.0
        %3514 = vmatprep.subr.mxu0 0.0
        %3515 = vmatpush1.msra.mxu0 0.0
        %3516 = vmatprep.subr.mxu0 0.0
        %3517 = vmatpush1.msra.mxu0 0.0
        %3518 = vmatprep.subr.mxu0 0.0
        %3519 = vmatpush1.msra.mxu0 0.0
        %3520 = vmatprep.mubr.f32.mxu0 0.0
        %3521 = vmatmul.mubr.f32.gmra.mrb[0].mxu0 %v3451
        %v3522 = vpop.f32.mrb[0].mxu0
        %v3523 = vadd.f32 0.0, %v3522
        %v3524 = vpop.f32.mrb[0].mxu0
        %3525 = vmatprep.mubr.f32.mxu0 0.0
        %3526 = vmatmul.mubr.f32.gmra.mrb[0].mxu0 %v3454
        %v3527 = vpop.f32.mrb[0].mxu0
        %v3528 = vadd.f32 0.0, %v3527
        %v3529 = vpop.f32.mrb[0].mxu0
        %3530 = vdwg.mxu0
        %s3531 = scalar_lea.vmem %s4, 224
        %v3532 = vld [vmem:[%s3531] sm:$0xff]
        %v3533 = vld [vmem:[%s3531 + $0x8] sm:$0xff]
        %v3534 = vld [vmem:[%s3531 + $0x10] sm:$0xff]
        %v3535 = vld [vmem:[%s3531 + $0x18] sm:$0xff]
        %v3537 = vsel %vm2424, %v3523, 0
        %v3540 = vsel %vm2424, %v3528, 0
        %3542 = vmatprep.subr.mxu0 0.0
        %3543 = vmatpush1.msra.mxu0 %v3532
        %3544 = vmatprep.subr.mxu0 0.0
        %3545 = vmatpush1.msra.mxu0 %v3533
        %3546 = vmatprep.subr.mxu0 0.0
        %3547 = vmatpush1.msra.mxu0 %v3534
        %3548 = vmatprep.subr.mxu0 0.0
        %3549 = vmatpush1.msra.mxu0 %v3535
        %3550 = vmatprep.subr.mxu0 0.0
        %3551 = vmatpush1.msra.mxu0 0.0
        %3552 = vmatprep.subr.mxu0 0.0
        %3553 = vmatpush1.msra.mxu0 0.0
        %3554 = vmatprep.subr.mxu0 0.0
        %3555 = vmatpush1.msra.mxu0 0.0
        %3556 = vmatprep.subr.mxu0 0.0
        %3557 = vmatpush1.msra.mxu0 0.0
        %3558 = vmatprep.subr.mxu0 0.0
        %3559 = vmatpush1.msra.mxu0 0.0
        %3560 = vmatprep.subr.mxu0 0.0
        %3561 = vmatpush1.msra.mxu0 0.0
        %3562 = vmatprep.subr.mxu0 0.0
        %3563 = vmatpush1.msra.mxu0 0.0
        %3564 = vmatprep.subr.mxu0 0.0
        %3565 = vmatpush1.msra.mxu0 0.0
        %3566 = vmatprep.subr.mxu0 0.0
        %3567 = vmatpush1.msra.mxu0 0.0
        %3568 = vmatprep.subr.mxu0 0.0
        %3569 = vmatpush1.msra.mxu0 0.0
        %3570 = vmatprep.subr.mxu0 0.0
        %3571 = vmatpush1.msra.mxu0 0.0
        %3572 = vmatprep.subr.mxu0 0.0
        %3573 = vmatpush1.msra.mxu0 0.0
        %3574 = vmatprep.subr.mxu0 0.0
        %3575 = vmatpush1.msra.mxu0 0.0
        %3576 = vmatprep.subr.mxu0 0.0
        %3577 = vmatpush1.msra.mxu0 0.0
        %3578 = vmatprep.subr.mxu0 0.0
        %3579 = vmatpush1.msra.mxu0 0.0
        %3580 = vmatprep.subr.mxu0 0.0
        %3581 = vmatpush1.msra.mxu0 0.0
        %3582 = vmatprep.subr.mxu0 0.0
        %3583 = vmatpush1.msra.mxu0 0.0
        %3584 = vmatprep.subr.mxu0 0.0
        %3585 = vmatpush1.msra.mxu0 0.0
        %3586 = vmatprep.subr.mxu0 0.0
        %3587 = vmatpush1.msra.mxu0 0.0
        %3588 = vmatprep.subr.mxu0 0.0
        %3589 = vmatpush1.msra.mxu0 0.0
        %3590 = vmatprep.subr.mxu0 0.0
        %3591 = vmatpush1.msra.mxu0 0.0
        %3592 = vmatprep.subr.mxu0 0.0
        %3593 = vmatpush1.msra.mxu0 0.0
        %3594 = vmatprep.subr.mxu0 0.0
        %3595 = vmatpush1.msra.mxu0 0.0
        %3596 = vmatprep.subr.mxu0 0.0
        %3597 = vmatpush1.msra.mxu0 0.0
        %3598 = vmatprep.subr.mxu0 0.0
        %3599 = vmatpush1.msra.mxu0 0.0
        %3600 = vmatprep.subr.mxu0 0.0
        %3601 = vmatpush1.msra.mxu0 0.0
        %3602 = vmatprep.subr.mxu0 0.0
        %3603 = vmatpush1.msra.mxu0 0.0
        %3604 = vmatprep.subr.mxu0 0.0
        %3605 = vmatpush1.msra.mxu0 0.0
        %3606 = vmatprep.mubr.f32.mxu0 0.0
        %3607 = vmatmul.mubr.f32.gmra.mrb[0].mxu0 %v3537
        %v3608 = vpop.f32.mrb[0].mxu0
        %v3609 = vadd.f32 0.0, %v3608
        %v3610 = vpop.f32.mrb[0].mxu0
        %3611 = vmatprep.mubr.f32.mxu0 0.0
        %3612 = vmatmul.mubr.f32.gmra.mrb[0].mxu0 %v3540
        %v3613 = vpop.f32.mrb[0].mxu0
        %v3614 = vadd.f32 0.0, %v3613
        %v3615 = vpop.f32.mrb[0].mxu0
        %3616 = vdwg.mxu0
        %v3617 = vadd.f32 %v3445, %v3609
        %v3618 = vadd.f32 %v3446, %v3614
        %s3619 = scalar_lea.vmem %s3, 128
        %v3620 = vld [vmem:[%s3619] sm:$0xff]
        %v3621 = vld [vmem:[%s3619 + $0x8] sm:$0x1]
        %v3623 = vsel %vm2249, %v3620, 0
        %v3626 = vsel %vm2249, %v3621, 0
        %3628 = vmatprep.subr.mxu0 0.0
        %3629 = vmatpush1.msra.mxu0 %v2239
        %3630 = vmatprep.subr.mxu0 0.0
        %3631 = vmatpush1.msra.mxu0 %v2240
        %3632 = vmatprep.subr.mxu0 0.0
        %3633 = vmatpush1.msra.mxu0 %v2241
        %3634 = vmatprep.subr.mxu0 0.0
        %3635 = vmatpush1.msra.mxu0 %v2242
        %3636 = vmatprep.subr.mxu0 0.0
        %3637 = vmatpush1.msra.mxu0 %v2243
        %3638 = vmatprep.subr.mxu0 0.0
        %3639 = vmatpush1.msra.mxu0 %v2244
        %3640 = vmatprep.subr.mxu0 0.0
        %3641 = vmatpush1.msra.mxu0 %v2245
        %3642 = vmatprep.subr.mxu0 0.0
        %3643 = vmatpush1.msra.mxu0 %v2246
        %3644 = vmatprep.subr.mxu0 0.0
        %3645 = vmatpush1.msra.mxu0 0.0
        %3646 = vmatprep.subr.mxu0 0.0
        %3647 = vmatpush1.msra.mxu0 0.0
        %3648 = vmatprep.subr.mxu0 0.0
        %3649 = vmatpush1.msra.mxu0 0.0
        %3650 = vmatprep.subr.mxu0 0.0
        %3651 = vmatpush1.msra.mxu0 0.0
        %3652 = vmatprep.subr.mxu0 0.0
        %3653 = vmatpush1.msra.mxu0 0.0
        %3654 = vmatprep.subr.mxu0 0.0
        %3655 = vmatpush1.msra.mxu0 0.0
        %3656 = vmatprep.subr.mxu0 0.0
        %3657 = vmatpush1.msra.mxu0 0.0
        %3658 = vmatprep.subr.mxu0 0.0
        %3659 = vmatpush1.msra.mxu0 0.0
        %3660 = vmatprep.subr.mxu0 0.0
        %3661 = vmatpush1.msra.mxu0 0.0
        %3662 = vmatprep.subr.mxu0 0.0
        %3663 = vmatpush1.msra.mxu0 0.0
        %3664 = vmatprep.subr.mxu0 0.0
        %3665 = vmatpush1.msra.mxu0 0.0
        %3666 = vmatprep.subr.mxu0 0.0
        %3667 = vmatpush1.msra.mxu0 0.0
        %3668 = vmatprep.subr.mxu0 0.0
        %3669 = vmatpush1.msra.mxu0 0.0
        %3670 = vmatprep.subr.mxu0 0.0
        %3671 = vmatpush1.msra.mxu0 0.0
        %3672 = vmatprep.subr.mxu0 0.0
        %3673 = vmatpush1.msra.mxu0 0.0
        %3674 = vmatprep.subr.mxu0 0.0
        %3675 = vmatpush1.msra.mxu0 0.0
        %3676 = vmatprep.subr.mxu0 0.0
        %3677 = vmatpush1.msra.mxu0 0.0
        %3678 = vmatprep.subr.mxu0 0.0
        %3679 = vmatpush1.msra.mxu0 0.0
        %3680 = vmatprep.subr.mxu0 0.0
        %3681 = vmatpush1.msra.mxu0 0.0
        %3682 = vmatprep.subr.mxu0 0.0
        %3683 = vmatpush1.msra.mxu0 0.0
        %3684 = vmatprep.subr.mxu0 0.0
        %3685 = vmatpush1.msra.mxu0 0.0
        %3686 = vmatprep.subr.mxu0 0.0
        %3687 = vmatpush1.msra.mxu0 0.0
        %3688 = vmatprep.subr.mxu0 0.0
        %3689 = vmatpush1.msra.mxu0 0.0
        %3690 = vmatprep.subr.mxu0 0.0
        %3691 = vmatpush1.msra.mxu0 0.0
        %3692 = vmatprep.mubr.f32.mxu0 0.0
        %3693 = vmatmul.mubr.f32.gmra.mrb[0].mxu0 %v3623
        %v3694 = vpop.f32.mrb[0].mxu0
        %v3695 = vadd.f32 0.0, %v3694
        %v3696 = vpop.f32.mrb[0].mxu0
        %3697 = vmatprep.mubr.f32.mxu0 0.0
        %3698 = vmatmul.mubr.f32.gmra.mrb[0].mxu0 %v3626
        %v3699 = vpop.f32.mrb[0].mxu0
        %v3700 = vadd.f32 0.0, %v3699
        %v3701 = vpop.f32.mrb[0].mxu0
        %3702 = vdwg.mxu0
        %s3703 = scalar_lea.vmem %s4, 256
        %v3704 = vld [vmem:[%s3703] sm:$0xff]
        %v3705 = vld [vmem:[%s3703 + $0x8] sm:$0xff]
        %v3706 = vld [vmem:[%s3703 + $0x10] sm:$0xff]
        %v3707 = vld [vmem:[%s3703 + $0x18] sm:$0xff]
        %v3709 = vsel %vm2424, %v3695, 0
        %v3712 = vsel %vm2424, %v3700, 0
        %3714 = vmatprep.subr.mxu0 0.0
        %3715 = vmatpush1.msra.mxu0 %v3704
        %3716 = vmatprep.subr.mxu0 0.0
        %3717 = vmatpush1.msra.mxu0 %v3705
        %3718 = vmatprep.subr.mxu0 0.0
        %3719 = vmatpush1.msra.mxu0 %v3706
        %3720 = vmatprep.subr.mxu0 0.0
        %3721 = vmatpush1.msra.mxu0 %v3707
        %3722 = vmatprep.subr.mxu0 0.0
        %3723 = vmatpush1.msra.mxu0 0.0
        %3724 = vmatprep.subr.mxu0 0.0
        %3725 = vmatpush1.msra.mxu0 0.0
        %3726 = vmatprep.subr.mxu0 0.0
        %3727 = vmatpush1.msra.mxu0 0.0
        %3728 = vmatprep.subr.mxu0 0.0
        %3729 = vmatpush1.msra.mxu0 0.0
        %3730 = vmatprep.subr.mxu0 0.0
        %3731 = vmatpush1.msra.mxu0 0.0
        %3732 = vmatprep.subr.mxu0 0.0
        %3733 = vmatpush1.msra.mxu0 0.0
        %3734 = vmatprep.subr.mxu0 0.0
        %3735 = vmatpush1.msra.mxu0 0.0
        %3736 = vmatprep.subr.mxu0 0.0
        %3737 = vmatpush1.msra.mxu0 0.0
        %3738 = vmatprep.subr.mxu0 0.0
        %3739 = vmatpush1.msra.mxu0 0.0
        %3740 = vmatprep.subr.mxu0 0.0
        %3741 = vmatpush1.msra.mxu0 0.0
        %3742 = vmatprep.subr.mxu0 0.0
        %3743 = vmatpush1.msra.mxu0 0.0
        %3744 = vmatprep.subr.mxu0 0.0
        %3745 = vmatpush1.msra.mxu0 0.0
        %3746 = vmatprep.subr.mxu0 0.0
        %3747 = vmatpush1.msra.mxu0 0.0
        %3748 = vmatprep.subr.mxu0 0.0
        %3749 = vmatpush1.msra.mxu0 0.0
        %3750 = vmatprep.subr.mxu0 0.0
        %3751 = vmatpush1.msra.mxu0 0.0
        %3752 = vmatprep.subr.mxu0 0.0
        %3753 = vmatpush1.msra.mxu0 0.0
        %3754 = vmatprep.subr.mxu0 0.0
        %3755 = vmatpush1.msra.mxu0 0.0
        %3756 = vmatprep.subr.mxu0 0.0
        %3757 = vmatpush1.msra.mxu0 0.0
        %3758 = vmatprep.subr.mxu0 0.0
        %3759 = vmatpush1.msra.mxu0 0.0
        %3760 = vmatprep.subr.mxu0 0.0
        %3761 = vmatpush1.msra.mxu0 0.0
        %3762 = vmatprep.subr.mxu0 0.0
        %3763 = vmatpush1.msra.mxu0 0.0
        %3764 = vmatprep.subr.mxu0 0.0
        %3765 = vmatpush1.msra.mxu0 0.0
        %3766 = vmatprep.subr.mxu0 0.0
        %3767 = vmatpush1.msra.mxu0 0.0
        %3768 = vmatprep.subr.mxu0 0.0
        %3769 = vmatpush1.msra.mxu0 0.0
        %3770 = vmatprep.subr.mxu0 0.0
        %3771 = vmatpush1.msra.mxu0 0.0
        %3772 = vmatprep.subr.mxu0 0.0
        %3773 = vmatpush1.msra.mxu0 0.0
        %3774 = vmatprep.subr.mxu0 0.0
        %3775 = vmatpush1.msra.mxu0 0.0
        %3776 = vmatprep.subr.mxu0 0.0
        %3777 = vmatpush1.msra.mxu0 0.0
        %3778 = vmatprep.mubr.f32.mxu0 0.0
        %3779 = vmatmul.mubr.f32.gmra.mrb[0].mxu0 %v3709
        %v3780 = vpop.f32.mrb[0].mxu0
        %v3781 = vadd.f32 0.0, %v3780
        %v3782 = vpop.f32.mrb[0].mxu0
        %3783 = vmatprep.mubr.f32.mxu0 0.0
        %3784 = vmatmul.mubr.f32.gmra.mrb[0].mxu0 %v3712
        %v3785 = vpop.f32.mrb[0].mxu0
        %v3786 = vadd.f32 0.0, %v3785
        %v3787 = vpop.f32.mrb[0].mxu0
        %3788 = vdwg.mxu0
        %v3789 = vadd.f32 %v3617, %v3781
        %v3790 = vadd.f32 %v3618, %v3786
        %s3791 = scalar_lea.vmem %s3, 144
        %v3792 = vld [vmem:[%s3791] sm:$0xff]
        %v3793 = vld [vmem:[%s3791 + $0x8] sm:$0x1]
        %v3795 = vsel %vm2249, %v3792, 0
        %v3798 = vsel %vm2249, %v3793, 0
        %3800 = vmatprep.subr.mxu0 0.0
        %3801 = vmatpush1.msra.mxu0 %v2239
        %3802 = vmatprep.subr.mxu0 0.0
        %3803 = vmatpush1.msra.mxu0 %v2240
        %3804 = vmatprep.subr.mxu0 0.0
        %3805 = vmatpush1.msra.mxu0 %v2241
        %3806 = vmatprep.subr.mxu0 0.0
        %3807 = vmatpush1.msra.mxu0 %v2242
        %3808 = vmatprep.subr.mxu0 0.0
        %3809 = vmatpush1.msra.mxu0 %v2243
        %3810 = vmatprep.subr.mxu0 0.0
        %3811 = vmatpush1.msra.mxu0 %v2244
        %3812 = vmatprep.subr.mxu0 0.0
        %3813 = vmatpush1.msra.mxu0 %v2245
        %3814 = vmatprep.subr.mxu0 0.0
        %3815 = vmatpush1.msra.mxu0 %v2246
        %3816 = vmatprep.subr.mxu0 0.0
        %3817 = vmatpush1.msra.mxu0 0.0
        %3818 = vmatprep.subr.mxu0 0.0
        %3819 = vmatpush1.msra.mxu0 0.0
        %3820 = vmatprep.subr.mxu0 0.0
        %3821 = vmatpush1.msra.mxu0 0.0
        %3822 = vmatprep.subr.mxu0 0.0
        %3823 = vmatpush1.msra.mxu0 0.0
        %3824 = vmatprep.subr.mxu0 0.0
        %3825 = vmatpush1.msra.mxu0 0.0
        %3826 = vmatprep.subr.mxu0 0.0
        %3827 = vmatpush1.msra.mxu0 0.0
        %3828 = vmatprep.subr.mxu0 0.0
        %3829 = vmatpush1.msra.mxu0 0.0
        %3830 = vmatprep.subr.mxu0 0.0
        %3831 = vmatpush1.msra.mxu0 0.0
        %3832 = vmatprep.subr.mxu0 0.0
        %3833 = vmatpush1.msra.mxu0 0.0
        %3834 = vmatprep.subr.mxu0 0.0
        %3835 = vmatpush1.msra.mxu0 0.0
        %3836 = vmatprep.subr.mxu0 0.0
        %3837 = vmatpush1.msra.mxu0 0.0
        %3838 = vmatprep.subr.mxu0 0.0
        %3839 = vmatpush1.msra.mxu0 0.0
        %3840 = vmatprep.subr.mxu0 0.0
        %3841 = vmatpush1.msra.mxu0 0.0
        %3842 = vmatprep.subr.mxu0 0.0
        %3843 = vmatpush1.msra.mxu0 0.0
        %3844 = vmatprep.subr.mxu0 0.0
        %3845 = vmatpush1.msra.mxu0 0.0
        %3846 = vmatprep.subr.mxu0 0.0
        %3847 = vmatpush1.msra.mxu0 0.0
        %3848 = vmatprep.subr.mxu0 0.0
        %3849 = vmatpush1.msra.mxu0 0.0
        %3850 = vmatprep.subr.mxu0 0.0
        %3851 = vmatpush1.msra.mxu0 0.0
        %3852 = vmatprep.subr.mxu0 0.0
        %3853 = vmatpush1.msra.mxu0 0.0
        %3854 = vmatprep.subr.mxu0 0.0
        %3855 = vmatpush1.msra.mxu0 0.0
        %3856 = vmatprep.subr.mxu0 0.0
        %3857 = vmatpush1.msra.mxu0 0.0
        %3858 = vmatprep.subr.mxu0 0.0
        %3859 = vmatpush1.msra.mxu0 0.0
        %3860 = vmatprep.subr.mxu0 0.0
        %3861 = vmatpush1.msra.mxu0 0.0
        %3862 = vmatprep.subr.mxu0 0.0
        %3863 = vmatpush1.msra.mxu0 0.0
        %3864 = vmatprep.mubr.f32.mxu0 0.0
        %3865 = vmatmul.mubr.f32.gmra.mrb[0].mxu0 %v3795
        %v3866 = vpop.f32.mrb[0].mxu0
        %v3867 = vadd.f32 0.0, %v3866
        %v3868 = vpop.f32.mrb[0].mxu0
        %3869 = vmatprep.mubr.f32.mxu0 0.0
        %3870 = vmatmul.mubr.f32.gmra.mrb[0].mxu0 %v3798
        %v3871 = vpop.f32.mrb[0].mxu0
        %v3872 = vadd.f32 0.0, %v3871
        %v3873 = vpop.f32.mrb[0].mxu0
        %3874 = vdwg.mxu0
        %s3875 = scalar_lea.vmem %s4, 288
        %v3876 = vld [vmem:[%s3875] sm:$0xff]
        %v3877 = vld [vmem:[%s3875 + $0x8] sm:$0xff]
        %v3878 = vld [vmem:[%s3875 + $0x10] sm:$0xff]
        %v3879 = vld [vmem:[%s3875 + $0x18] sm:$0xff]
        %v3881 = vsel %vm2424, %v3867, 0
        %v3884 = vsel %vm2424, %v3872, 0
        %3886 = vmatprep.subr.mxu0 0.0
        %3887 = vmatpush1.msra.mxu0 %v3876
        %3888 = vmatprep.subr.mxu0 0.0
        %3889 = vmatpush1.msra.mxu0 %v3877
        %3890 = vmatprep.subr.mxu0 0.0
        %3891 = vmatpush1.msra.mxu0 %v3878
        %3892 = vmatprep.subr.mxu0 0.0
        %3893 = vmatpush1.msra.mxu0 %v3879
        %3894 = vmatprep.subr.mxu0 0.0
        %3895 = vmatpush1.msra.mxu0 0.0
        %3896 = vmatprep.subr.mxu0 0.0
        %3897 = vmatpush1.msra.mxu0 0.0
        %3898 = vmatprep.subr.mxu0 0.0
        %3899 = vmatpush1.msra.mxu0 0.0
        %3900 = vmatprep.subr.mxu0 0.0
        %3901 = vmatpush1.msra.mxu0 0.0
        %3902 = vmatprep.subr.mxu0 0.0
        %3903 = vmatpush1.msra.mxu0 0.0
        %3904 = vmatprep.subr.mxu0 0.0
        %3905 = vmatpush1.msra.mxu0 0.0
        %3906 = vmatprep.subr.mxu0 0.0
        %3907 = vmatpush1.msra.mxu0 0.0
        %3908 = vmatprep.subr.mxu0 0.0
        %3909 = vmatpush1.msra.mxu0 0.0
        %3910 = vmatprep.subr.mxu0 0.0
        %3911 = vmatpush1.msra.mxu0 0.0
        %3912 = vmatprep.subr.mxu0 0.0
        %3913 = vmatpush1.msra.mxu0 0.0
        %3914 = vmatprep.subr.mxu0 0.0
        %3915 = vmatpush1.msra.mxu0 0.0
        %3916 = vmatprep.subr.mxu0 0.0
        %3917 = vmatpush1.msra.mxu0 0.0
        %3918 = vmatprep.subr.mxu0 0.0
        %3919 = vmatpush1.msra.mxu0 0.0
        %3920 = vmatprep.subr.mxu0 0.0
        %3921 = vmatpush1.msra.mxu0 0.0
        %3922 = vmatprep.subr.mxu0 0.0
        %3923 = vmatpush1.msra.mxu0 0.0
        %3924 = vmatprep.subr.mxu0 0.0
        %3925 = vmatpush1.msra.mxu0 0.0
        %3926 = vmatprep.subr.mxu0 0.0
        %3927 = vmatpush1.msra.mxu0 0.0
        %3928 = vmatprep.subr.mxu0 0.0
        %3929 = vmatpush1.msra.mxu0 0.0
        %3930 = vmatprep.subr.mxu0 0.0
        %3931 = vmatpush1.msra.mxu0 0.0
        %3932 = vmatprep.subr.mxu0 0.0
        %3933 = vmatpush1.msra.mxu0 0.0
        %3934 = vmatprep.subr.mxu0 0.0
        %3935 = vmatpush1.msra.mxu0 0.0
        %3936 = vmatprep.subr.mxu0 0.0
        %3937 = vmatpush1.msra.mxu0 0.0
        %3938 = vmatprep.subr.mxu0 0.0
        %3939 = vmatpush1.msra.mxu0 0.0
        %3940 = vmatprep.subr.mxu0 0.0
        %3941 = vmatpush1.msra.mxu0 0.0
        %3942 = vmatprep.subr.mxu0 0.0
        %3943 = vmatpush1.msra.mxu0 0.0
        %3944 = vmatprep.subr.mxu0 0.0
        %3945 = vmatpush1.msra.mxu0 0.0
        %3946 = vmatprep.subr.mxu0 0.0
        %3947 = vmatpush1.msra.mxu0 0.0
        %3948 = vmatprep.subr.mxu0 0.0
        %3949 = vmatpush1.msra.mxu0 0.0
        %3950 = vmatprep.mubr.f32.mxu0 0.0
        %3951 = vmatmul.mubr.f32.gmra.mrb[0].mxu0 %v3881
        %v3952 = vpop.f32.mrb[0].mxu0
        %v3953 = vadd.f32 0.0, %v3952
        %v3954 = vpop.f32.mrb[0].mxu0
        %3955 = vmatprep.mubr.f32.mxu0 0.0
        %3956 = vmatmul.mubr.f32.gmra.mrb[0].mxu0 %v3884
        %v3957 = vpop.f32.mrb[0].mxu0
        %v3958 = vadd.f32 0.0, %v3957
        %v3959 = vpop.f32.mrb[0].mxu0
        %3960 = vdwg.mxu0
        %v3961 = vadd.f32 %v3789, %v3953
        %v3962 = vadd.f32 %v3790, %v3958
        %s3963 = scalar_lea.vmem %s3, 160
        %v3964 = vld [vmem:[%s3963] sm:$0xff]
        %v3965 = vld [vmem:[%s3963 + $0x8] sm:$0x1]
        %v3967 = vsel %vm2249, %v3964, 0
        %v3970 = vsel %vm2249, %v3965, 0
        %3972 = vmatprep.subr.mxu0 0.0
        %3973 = vmatpush1.msra.mxu0 %v2239
        %3974 = vmatprep.subr.mxu0 0.0
        %3975 = vmatpush1.msra.mxu0 %v2240
        %3976 = vmatprep.subr.mxu0 0.0
        %3977 = vmatpush1.msra.mxu0 %v2241
        %3978 = vmatprep.subr.mxu0 0.0
        %3979 = vmatpush1.msra.mxu0 %v2242
        %3980 = vmatprep.subr.mxu0 0.0
        %3981 = vmatpush1.msra.mxu0 %v2243
        %3982 = vmatprep.subr.mxu0 0.0
        %3983 = vmatpush1.msra.mxu0 %v2244
        %3984 = vmatprep.subr.mxu0 0.0
        %3985 = vmatpush1.msra.mxu0 %v2245
        %3986 = vmatprep.subr.mxu0 0.0
        %3987 = vmatpush1.msra.mxu0 %v2246
        %3988 = vmatprep.subr.mxu0 0.0
        %3989 = vmatpush1.msra.mxu0 0.0
        %3990 = vmatprep.subr.mxu0 0.0
        %3991 = vmatpush1.msra.mxu0 0.0
        %3992 = vmatprep.subr.mxu0 0.0
        %3993 = vmatpush1.msra.mxu0 0.0
        %3994 = vmatprep.subr.mxu0 0.0
        %3995 = vmatpush1.msra.mxu0 0.0
        %3996 = vmatprep.subr.mxu0 0.0
        %3997 = vmatpush1.msra.mxu0 0.0
        %3998 = vmatprep.subr.mxu0 0.0
        %3999 = vmatpush1.msra.mxu0 0.0
        %4000 = vmatprep.subr.mxu0 0.0
        %4001 = vmatpush1.msra.mxu0 0.0
        %4002 = vmatprep.subr.mxu0 0.0
        %4003 = vmatpush1.msra.mxu0 0.0
        %4004 = vmatprep.subr.mxu0 0.0
        %4005 = vmatpush1.msra.mxu0 0.0
        %4006 = vmatprep.subr.mxu0 0.0
        %4007 = vmatpush1.msra.mxu0 0.0
        %4008 = vmatprep.subr.mxu0 0.0
        %4009 = vmatpush1.msra.mxu0 0.0
        %4010 = vmatprep.subr.mxu0 0.0
        %4011 = vmatpush1.msra.mxu0 0.0
        %4012 = vmatprep.subr.mxu0 0.0
        %4013 = vmatpush1.msra.mxu0 0.0
        %4014 = vmatprep.subr.mxu0 0.0
        %4015 = vmatpush1.msra.mxu0 0.0
        %4016 = vmatprep.subr.mxu0 0.0
        %4017 = vmatpush1.msra.mxu0 0.0
        %4018 = vmatprep.subr.mxu0 0.0
        %4019 = vmatpush1.msra.mxu0 0.0
        %4020 = vmatprep.subr.mxu0 0.0
        %4021 = vmatpush1.msra.mxu0 0.0
        %4022 = vmatprep.subr.mxu0 0.0
        %4023 = vmatpush1.msra.mxu0 0.0
        %4024 = vmatprep.subr.mxu0 0.0
        %4025 = vmatpush1.msra.mxu0 0.0
        %4026 = vmatprep.subr.mxu0 0.0
        %4027 = vmatpush1.msra.mxu0 0.0
        %4028 = vmatprep.subr.mxu0 0.0
        %4029 = vmatpush1.msra.mxu0 0.0
        %4030 = vmatprep.subr.mxu0 0.0
        %4031 = vmatpush1.msra.mxu0 0.0
        %4032 = vmatprep.subr.mxu0 0.0
        %4033 = vmatpush1.msra.mxu0 0.0
        %4034 = vmatprep.subr.mxu0 0.0
        %4035 = vmatpush1.msra.mxu0 0.0
        %4036 = vmatprep.mubr.f32.mxu0 0.0
        %4037 = vmatmul.mubr.f32.gmra.mrb[0].mxu0 %v3967
        %v4038 = vpop.f32.mrb[0].mxu0
        %v4039 = vadd.f32 0.0, %v4038
        %v4040 = vpop.f32.mrb[0].mxu0
        %4041 = vmatprep.mubr.f32.mxu0 0.0
        %4042 = vmatmul.mubr.f32.gmra.mrb[0].mxu0 %v3970
        %v4043 = vpop.f32.mrb[0].mxu0
        %v4044 = vadd.f32 0.0, %v4043
        %v4045 = vpop.f32.mrb[0].mxu0
        %4046 = vdwg.mxu0
        %s4047 = scalar_lea.vmem %s4, 320
        %v4048 = vld [vmem:[%s4047] sm:$0xff]
        %v4049 = vld [vmem:[%s4047 + $0x8] sm:$0xff]
        %v4050 = vld [vmem:[%s4047 + $0x10] sm:$0xff]
        %v4051 = vld [vmem:[%s4047 + $0x18] sm:$0xff]
        %v4053 = vsel %vm2424, %v4039, 0
        %v4056 = vsel %vm2424, %v4044, 0
        %4058 = vmatprep.subr.mxu0 0.0
        %4059 = vmatpush1.msra.mxu0 %v4048
        %4060 = vmatprep.subr.mxu0 0.0
        %4061 = vmatpush1.msra.mxu0 %v4049
        %4062 = vmatprep.subr.mxu0 0.0
        %4063 = vmatpush1.msra.mxu0 %v4050
        %4064 = vmatprep.subr.mxu0 0.0
        %4065 = vmatpush1.msra.mxu0 %v4051
        %4066 = vmatprep.subr.mxu0 0.0
        %4067 = vmatpush1.msra.mxu0 0.0
        %4068 = vmatprep.subr.mxu0 0.0
        %4069 = vmatpush1.msra.mxu0 0.0
        %4070 = vmatprep.subr.mxu0 0.0
        %4071 = vmatpush1.msra.mxu0 0.0
        %4072 = vmatprep.subr.mxu0 0.0
        %4073 = vmatpush1.msra.mxu0 0.0
        %4074 = vmatprep.subr.mxu0 0.0
        %4075 = vmatpush1.msra.mxu0 0.0
        %4076 = vmatprep.subr.mxu0 0.0
        %4077 = vmatpush1.msra.mxu0 0.0
        %4078 = vmatprep.subr.mxu0 0.0
        %4079 = vmatpush1.msra.mxu0 0.0
        %4080 = vmatprep.subr.mxu0 0.0
        %4081 = vmatpush1.msra.mxu0 0.0
        %4082 = vmatprep.subr.mxu0 0.0
        %4083 = vmatpush1.msra.mxu0 0.0
        %4084 = vmatprep.subr.mxu0 0.0
        %4085 = vmatpush1.msra.mxu0 0.0
        %4086 = vmatprep.subr.mxu0 0.0
        %4087 = vmatpush1.msra.mxu0 0.0
        %4088 = vmatprep.subr.mxu0 0.0
        %4089 = vmatpush1.msra.mxu0 0.0
        %4090 = vmatprep.subr.mxu0 0.0
        %4091 = vmatpush1.msra.mxu0 0.0
        %4092 = vmatprep.subr.mxu0 0.0
        %4093 = vmatpush1.msra.mxu0 0.0
        %4094 = vmatprep.subr.mxu0 0.0
        %4095 = vmatpush1.msra.mxu0 0.0
        %4096 = vmatprep.subr.mxu0 0.0
        %4097 = vmatpush1.msra.mxu0 0.0
        %4098 = vmatprep.subr.mxu0 0.0
        %4099 = vmatpush1.msra.mxu0 0.0
        %4100 = vmatprep.subr.mxu0 0.0
        %4101 = vmatpush1.msra.mxu0 0.0
        %4102 = vmatprep.subr.mxu0 0.0
        %4103 = vmatpush1.msra.mxu0 0.0
        %4104 = vmatprep.subr.mxu0 0.0
        %4105 = vmatpush1.msra.mxu0 0.0
        %4106 = vmatprep.subr.mxu0 0.0
        %4107 = vmatpush1.msra.mxu0 0.0
        %4108 = vmatprep.subr.mxu0 0.0
        %4109 = vmatpush1.msra.mxu0 0.0
        %4110 = vmatprep.subr.mxu0 0.0
        %4111 = vmatpush1.msra.mxu0 0.0
        %4112 = vmatprep.subr.mxu0 0.0
        %4113 = vmatpush1.msra.mxu0 0.0
        %4114 = vmatprep.subr.mxu0 0.0
        %4115 = vmatpush1.msra.mxu0 0.0
        %4116 = vmatprep.subr.mxu0 0.0
        %4117 = vmatpush1.msra.mxu0 0.0
        %4118 = vmatprep.subr.mxu0 0.0
        %4119 = vmatpush1.msra.mxu0 0.0
        %4120 = vmatprep.subr.mxu0 0.0
        %4121 = vmatpush1.msra.mxu0 0.0
        %4122 = vmatprep.mubr.f32.mxu0 0.0
        %4123 = vmatmul.mubr.f32.gmra.mrb[0].mxu0 %v4053
        %v4124 = vpop.f32.mrb[0].mxu0
        %v4125 = vadd.f32 0.0, %v4124
        %v4126 = vpop.f32.mrb[0].mxu0
        %4127 = vmatprep.mubr.f32.mxu0 0.0
        %4128 = vmatmul.mubr.f32.gmra.mrb[0].mxu0 %v4056
        %v4129 = vpop.f32.mrb[0].mxu0
        %v4130 = vadd.f32 0.0, %v4129
        %v4131 = vpop.f32.mrb[0].mxu0
        %4132 = vdwg.mxu0
        %v4133 = vadd.f32 %v3961, %v4125
        %v4134 = vadd.f32 %v3962, %v4130
        %s4135 = scalar_lea.vmem %s3, 176
        %v4136 = vld [vmem:[%s4135] sm:$0xff]
        %v4137 = vld [vmem:[%s4135 + $0x8] sm:$0x1]
        %v4139 = vsel %vm2249, %v4136, 0
        %v4142 = vsel %vm2249, %v4137, 0
        %4144 = vmatprep.subr.mxu0 0.0
        %4145 = vmatpush1.msra.mxu0 %v2239
        %4146 = vmatprep.subr.mxu0 0.0
        %4147 = vmatpush1.msra.mxu0 %v2240
        %4148 = vmatprep.subr.mxu0 0.0
        %4149 = vmatpush1.msra.mxu0 %v2241
        %4150 = vmatprep.subr.mxu0 0.0
        %4151 = vmatpush1.msra.mxu0 %v2242
        %4152 = vmatprep.subr.mxu0 0.0
        %4153 = vmatpush1.msra.mxu0 %v2243
        %4154 = vmatprep.subr.mxu0 0.0
        %4155 = vmatpush1.msra.mxu0 %v2244
        %4156 = vmatprep.subr.mxu0 0.0
        %4157 = vmatpush1.msra.mxu0 %v2245
        %4158 = vmatprep.subr.mxu0 0.0
        %4159 = vmatpush1.msra.mxu0 %v2246
        %4160 = vmatprep.subr.mxu0 0.0
        %4161 = vmatpush1.msra.mxu0 0.0
        %4162 = vmatprep.subr.mxu0 0.0
        %4163 = vmatpush1.msra.mxu0 0.0
        %4164 = vmatprep.subr.mxu0 0.0
        %4165 = vmatpush1.msra.mxu0 0.0
        %4166 = vmatprep.subr.mxu0 0.0
        %4167 = vmatpush1.msra.mxu0 0.0
        %4168 = vmatprep.subr.mxu0 0.0
        %4169 = vmatpush1.msra.mxu0 0.0
        %4170 = vmatprep.subr.mxu0 0.0
        %4171 = vmatpush1.msra.mxu0 0.0
        %4172 = vmatprep.subr.mxu0 0.0
        %4173 = vmatpush1.msra.mxu0 0.0
        %4174 = vmatprep.subr.mxu0 0.0
        %4175 = vmatpush1.msra.mxu0 0.0
        %4176 = vmatprep.subr.mxu0 0.0
        %4177 = vmatpush1.msra.mxu0 0.0
        %4178 = vmatprep.subr.mxu0 0.0
        %4179 = vmatpush1.msra.mxu0 0.0
        %4180 = vmatprep.subr.mxu0 0.0
        %4181 = vmatpush1.msra.mxu0 0.0
        %4182 = vmatprep.subr.mxu0 0.0
        %4183 = vmatpush1.msra.mxu0 0.0
        %4184 = vmatprep.subr.mxu0 0.0
        %4185 = vmatpush1.msra.mxu0 0.0
        %4186 = vmatprep.subr.mxu0 0.0
        %4187 = vmatpush1.msra.mxu0 0.0
        %4188 = vmatprep.subr.mxu0 0.0
        %4189 = vmatpush1.msra.mxu0 0.0
        %4190 = vmatprep.subr.mxu0 0.0
        %4191 = vmatpush1.msra.mxu0 0.0
        %4192 = vmatprep.subr.mxu0 0.0
        %4193 = vmatpush1.msra.mxu0 0.0
        %4194 = vmatprep.subr.mxu0 0.0
        %4195 = vmatpush1.msra.mxu0 0.0
        %4196 = vmatprep.subr.mxu0 0.0
        %4197 = vmatpush1.msra.mxu0 0.0
        %4198 = vmatprep.subr.mxu0 0.0
        %4199 = vmatpush1.msra.mxu0 0.0
        %4200 = vmatprep.subr.mxu0 0.0
        %4201 = vmatpush1.msra.mxu0 0.0
        %4202 = vmatprep.subr.mxu0 0.0
        %4203 = vmatpush1.msra.mxu0 0.0
        %4204 = vmatprep.subr.mxu0 0.0
        %4205 = vmatpush1.msra.mxu0 0.0
        %4206 = vmatprep.subr.mxu0 0.0
        %4207 = vmatpush1.msra.mxu0 0.0
        %4208 = vmatprep.mubr.f32.mxu0 0.0
        %4209 = vmatmul.mubr.f32.gmra.mrb[0].mxu0 %v4139
        %v4210 = vpop.f32.mrb[0].mxu0
        %v4211 = vadd.f32 0.0, %v4210
        %v4212 = vpop.f32.mrb[0].mxu0
        %4213 = vmatprep.mubr.f32.mxu0 0.0
        %4214 = vmatmul.mubr.f32.gmra.mrb[0].mxu0 %v4142
        %v4215 = vpop.f32.mrb[0].mxu0
        %v4216 = vadd.f32 0.0, %v4215
        %v4217 = vpop.f32.mrb[0].mxu0
        %4218 = vdwg.mxu0
        %s4219 = scalar_lea.vmem %s4, 352
        %v4220 = vld [vmem:[%s4219] sm:$0xff]
        %v4221 = vld [vmem:[%s4219 + $0x8] sm:$0xff]
        %v4222 = vld [vmem:[%s4219 + $0x10] sm:$0xff]
        %v4223 = vld [vmem:[%s4219 + $0x18] sm:$0xff]
        %v4225 = vsel %vm2424, %v4211, 0
        %v4228 = vsel %vm2424, %v4216, 0
        %4230 = vmatprep.subr.mxu0 0.0
        %4231 = vmatpush1.msra.mxu0 %v4220
        %4232 = vmatprep.subr.mxu0 0.0
        %4233 = vmatpush1.msra.mxu0 %v4221
        %4234 = vmatprep.subr.mxu0 0.0
        %4235 = vmatpush1.msra.mxu0 %v4222
        %4236 = vmatprep.subr.mxu0 0.0
        %4237 = vmatpush1.msra.mxu0 %v4223
        %4238 = vmatprep.subr.mxu0 0.0
        %4239 = vmatpush1.msra.mxu0 0.0
        %4240 = vmatprep.subr.mxu0 0.0
        %4241 = vmatpush1.msra.mxu0 0.0
        %4242 = vmatprep.subr.mxu0 0.0
        %4243 = vmatpush1.msra.mxu0 0.0
        %4244 = vmatprep.subr.mxu0 0.0
        %4245 = vmatpush1.msra.mxu0 0.0
        %4246 = vmatprep.subr.mxu0 0.0
        %4247 = vmatpush1.msra.mxu0 0.0
        %4248 = vmatprep.subr.mxu0 0.0
        %4249 = vmatpush1.msra.mxu0 0.0
        %4250 = vmatprep.subr.mxu0 0.0
        %4251 = vmatpush1.msra.mxu0 0.0
        %4252 = vmatprep.subr.mxu0 0.0
        %4253 = vmatpush1.msra.mxu0 0.0
        %4254 = vmatprep.subr.mxu0 0.0
        %4255 = vmatpush1.msra.mxu0 0.0
        %4256 = vmatprep.subr.mxu0 0.0
        %4257 = vmatpush1.msra.mxu0 0.0
        %4258 = vmatprep.subr.mxu0 0.0
        %4259 = vmatpush1.msra.mxu0 0.0
        %4260 = vmatprep.subr.mxu0 0.0
        %4261 = vmatpush1.msra.mxu0 0.0
        %4262 = vmatprep.subr.mxu0 0.0
        %4263 = vmatpush1.msra.mxu0 0.0
        %4264 = vmatprep.subr.mxu0 0.0
        %4265 = vmatpush1.msra.mxu0 0.0
        %4266 = vmatprep.subr.mxu0 0.0
        %4267 = vmatpush1.msra.mxu0 0.0
        %4268 = vmatprep.subr.mxu0 0.0
        %4269 = vmatpush1.msra.mxu0 0.0
        %4270 = vmatprep.subr.mxu0 0.0
        %4271 = vmatpush1.msra.mxu0 0.0
        %4272 = vmatprep.subr.mxu0 0.0
        %4273 = vmatpush1.msra.mxu0 0.0
        %4274 = vmatprep.subr.mxu0 0.0
        %4275 = vmatpush1.msra.mxu0 0.0
        %4276 = vmatprep.subr.mxu0 0.0
        %4277 = vmatpush1.msra.mxu0 0.0
        %4278 = vmatprep.subr.mxu0 0.0
        %4279 = vmatpush1.msra.mxu0 0.0
        %4280 = vmatprep.subr.mxu0 0.0
        %4281 = vmatpush1.msra.mxu0 0.0
        %4282 = vmatprep.subr.mxu0 0.0
        %4283 = vmatpush1.msra.mxu0 0.0
        %4284 = vmatprep.subr.mxu0 0.0
        %4285 = vmatpush1.msra.mxu0 0.0
        %4286 = vmatprep.subr.mxu0 0.0
        %4287 = vmatpush1.msra.mxu0 0.0
        %4288 = vmatprep.subr.mxu0 0.0
        %4289 = vmatpush1.msra.mxu0 0.0
        %4290 = vmatprep.subr.mxu0 0.0
        %4291 = vmatpush1.msra.mxu0 0.0
        %4292 = vmatprep.subr.mxu0 0.0
        %4293 = vmatpush1.msra.mxu0 0.0
        %4294 = vmatprep.mubr.f32.mxu0 0.0
        %4295 = vmatmul.mubr.f32.gmra.mrb[0].mxu0 %v4225
        %v4296 = vpop.f32.mrb[0].mxu0
        %v4297 = vadd.f32 0.0, %v4296
        %v4298 = vpop.f32.mrb[0].mxu0
        %4299 = vmatprep.mubr.f32.mxu0 0.0
        %4300 = vmatmul.mubr.f32.gmra.mrb[0].mxu0 %v4228
        %v4301 = vpop.f32.mrb[0].mxu0
        %v4302 = vadd.f32 0.0, %v4301
        %v4303 = vpop.f32.mrb[0].mxu0
        %4304 = vdwg.mxu0
        %v4305 = vadd.f32 %v4133, %v4297
        %v4306 = vadd.f32 %v4134, %v4302
        %s4307 = scalar_lea.vmem %s3, 192
        %v4308 = vld [vmem:[%s4307] sm:$0xff]
        %v4309 = vld [vmem:[%s4307 + $0x8] sm:$0x1]
        %v4311 = vsel %vm2249, %v4308, 0
        %v4314 = vsel %vm2249, %v4309, 0
        %4316 = vmatprep.subr.mxu0 0.0
        %4317 = vmatpush1.msra.mxu0 %v2239
        %4318 = vmatprep.subr.mxu0 0.0
        %4319 = vmatpush1.msra.mxu0 %v2240
        %4320 = vmatprep.subr.mxu0 0.0
        %4321 = vmatpush1.msra.mxu0 %v2241
        %4322 = vmatprep.subr.mxu0 0.0
        %4323 = vmatpush1.msra.mxu0 %v2242
        %4324 = vmatprep.subr.mxu0 0.0
        %4325 = vmatpush1.msra.mxu0 %v2243
        %4326 = vmatprep.subr.mxu0 0.0
        %4327 = vmatpush1.msra.mxu0 %v2244
        %4328 = vmatprep.subr.mxu0 0.0
        %4329 = vmatpush1.msra.mxu0 %v2245
        %4330 = vmatprep.subr.mxu0 0.0
        %4331 = vmatpush1.msra.mxu0 %v2246
        %4332 = vmatprep.subr.mxu0 0.0
        %4333 = vmatpush1.msra.mxu0 0.0
        %4334 = vmatprep.subr.mxu0 0.0
        %4335 = vmatpush1.msra.mxu0 0.0
        %4336 = vmatprep.subr.mxu0 0.0
        %4337 = vmatpush1.msra.mxu0 0.0
        %4338 = vmatprep.subr.mxu0 0.0
        %4339 = vmatpush1.msra.mxu0 0.0
        %4340 = vmatprep.subr.mxu0 0.0
        %4341 = vmatpush1.msra.mxu0 0.0
        %4342 = vmatprep.subr.mxu0 0.0
        %4343 = vmatpush1.msra.mxu0 0.0
        %4344 = vmatprep.subr.mxu0 0.0
        %4345 = vmatpush1.msra.mxu0 0.0
        %4346 = vmatprep.subr.mxu0 0.0
        %4347 = vmatpush1.msra.mxu0 0.0
        %4348 = vmatprep.subr.mxu0 0.0
        %4349 = vmatpush1.msra.mxu0 0.0
        %4350 = vmatprep.subr.mxu0 0.0
        %4351 = vmatpush1.msra.mxu0 0.0
        %4352 = vmatprep.subr.mxu0 0.0
        %4353 = vmatpush1.msra.mxu0 0.0
        %4354 = vmatprep.subr.mxu0 0.0
        %4355 = vmatpush1.msra.mxu0 0.0
        %4356 = vmatprep.subr.mxu0 0.0
        %4357 = vmatpush1.msra.mxu0 0.0
        %4358 = vmatprep.subr.mxu0 0.0
        %4359 = vmatpush1.msra.mxu0 0.0
        %4360 = vmatprep.subr.mxu0 0.0
        %4361 = vmatpush1.msra.mxu0 0.0
        %4362 = vmatprep.subr.mxu0 0.0
        %4363 = vmatpush1.msra.mxu0 0.0
        %4364 = vmatprep.subr.mxu0 0.0
        %4365 = vmatpush1.msra.mxu0 0.0
        %4366 = vmatprep.subr.mxu0 0.0
        %4367 = vmatpush1.msra.mxu0 0.0
        %4368 = vmatprep.subr.mxu0 0.0
        %4369 = vmatpush1.msra.mxu0 0.0
        %4370 = vmatprep.subr.mxu0 0.0
        %4371 = vmatpush1.msra.mxu0 0.0
        %4372 = vmatprep.subr.mxu0 0.0
        %4373 = vmatpush1.msra.mxu0 0.0
        %4374 = vmatprep.subr.mxu0 0.0
        %4375 = vmatpush1.msra.mxu0 0.0
        %4376 = vmatprep.subr.mxu0 0.0
        %4377 = vmatpush1.msra.mxu0 0.0
        %4378 = vmatprep.subr.mxu0 0.0
        %4379 = vmatpush1.msra.mxu0 0.0
        %4380 = vmatprep.mubr.f32.mxu0 0.0
        %4381 = vmatmul.mubr.f32.gmra.mrb[0].mxu0 %v4311
        %v4382 = vpop.f32.mrb[0].mxu0
        %v4383 = vadd.f32 0.0, %v4382
        %v4384 = vpop.f32.mrb[0].mxu0
        %4385 = vmatprep.mubr.f32.mxu0 0.0
        %4386 = vmatmul.mubr.f32.gmra.mrb[0].mxu0 %v4314
        %v4387 = vpop.f32.mrb[0].mxu0
        %v4388 = vadd.f32 0.0, %v4387
        %v4389 = vpop.f32.mrb[0].mxu0
        %4390 = vdwg.mxu0
        %s4391 = scalar_lea.vmem %s4, 384
        %v4392 = vld [vmem:[%s4391] sm:$0xff]
        %v4393 = vld [vmem:[%s4391 + $0x8] sm:$0xff]
        %v4394 = vld [vmem:[%s4391 + $0x10] sm:$0xff]
        %v4395 = vld [vmem:[%s4391 + $0x18] sm:$0xff]
        %v4397 = vsel %vm2424, %v4383, 0
        %v4400 = vsel %vm2424, %v4388, 0
        %4402 = vmatprep.subr.mxu0 0.0
        %4403 = vmatpush1.msra.mxu0 %v4392
        %4404 = vmatprep.subr.mxu0 0.0
        %4405 = vmatpush1.msra.mxu0 %v4393
        %4406 = vmatprep.subr.mxu0 0.0
        %4407 = vmatpush1.msra.mxu0 %v4394
        %4408 = vmatprep.subr.mxu0 0.0
        %4409 = vmatpush1.msra.mxu0 %v4395
        %4410 = vmatprep.subr.mxu0 0.0
        %4411 = vmatpush1.msra.mxu0 0.0
        %4412 = vmatprep.subr.mxu0 0.0
        %4413 = vmatpush1.msra.mxu0 0.0
        %4414 = vmatprep.subr.mxu0 0.0
        %4415 = vmatpush1.msra.mxu0 0.0
        %4416 = vmatprep.subr.mxu0 0.0
        %4417 = vmatpush1.msra.mxu0 0.0
        %4418 = vmatprep.subr.mxu0 0.0
        %4419 = vmatpush1.msra.mxu0 0.0
        %4420 = vmatprep.subr.mxu0 0.0
        %4421 = vmatpush1.msra.mxu0 0.0
        %4422 = vmatprep.subr.mxu0 0.0
        %4423 = vmatpush1.msra.mxu0 0.0
        %4424 = vmatprep.subr.mxu0 0.0
        %4425 = vmatpush1.msra.mxu0 0.0
        %4426 = vmatprep.subr.mxu0 0.0
        %4427 = vmatpush1.msra.mxu0 0.0
        %4428 = vmatprep.subr.mxu0 0.0
        %4429 = vmatpush1.msra.mxu0 0.0
        %4430 = vmatprep.subr.mxu0 0.0
        %4431 = vmatpush1.msra.mxu0 0.0
        %4432 = vmatprep.subr.mxu0 0.0
        %4433 = vmatpush1.msra.mxu0 0.0
        %4434 = vmatprep.subr.mxu0 0.0
        %4435 = vmatpush1.msra.mxu0 0.0
        %4436 = vmatprep.subr.mxu0 0.0
        %4437 = vmatpush1.msra.mxu0 0.0
        %4438 = vmatprep.subr.mxu0 0.0
        %4439 = vmatpush1.msra.mxu0 0.0
        %4440 = vmatprep.subr.mxu0 0.0
        %4441 = vmatpush1.msra.mxu0 0.0
        %4442 = vmatprep.subr.mxu0 0.0
        %4443 = vmatpush1.msra.mxu0 0.0
        %4444 = vmatprep.subr.mxu0 0.0
        %4445 = vmatpush1.msra.mxu0 0.0
        %4446 = vmatprep.subr.mxu0 0.0
        %4447 = vmatpush1.msra.mxu0 0.0
        %4448 = vmatprep.subr.mxu0 0.0
        %4449 = vmatpush1.msra.mxu0 0.0
        %4450 = vmatprep.subr.mxu0 0.0
        %4451 = vmatpush1.msra.mxu0 0.0
        %4452 = vmatprep.subr.mxu0 0.0
        %4453 = vmatpush1.msra.mxu0 0.0
        %4454 = vmatprep.subr.mxu0 0.0
        %4455 = vmatpush1.msra.mxu0 0.0
        %4456 = vmatprep.subr.mxu0 0.0
        %4457 = vmatpush1.msra.mxu0 0.0
        %4458 = vmatprep.subr.mxu0 0.0
        %4459 = vmatpush1.msra.mxu0 0.0
        %4460 = vmatprep.subr.mxu0 0.0
        %4461 = vmatpush1.msra.mxu0 0.0
        %4462 = vmatprep.subr.mxu0 0.0
        %4463 = vmatpush1.msra.mxu0 0.0
        %4464 = vmatprep.subr.mxu0 0.0
        %4465 = vmatpush1.msra.mxu0 0.0
        %4466 = vmatprep.mubr.f32.mxu0 0.0
        %4467 = vmatmul.mubr.f32.gmra.mrb[0].mxu0 %v4397
        %v4468 = vpop.f32.mrb[0].mxu0
        %v4469 = vadd.f32 0.0, %v4468
        %v4470 = vpop.f32.mrb[0].mxu0
        %4471 = vmatprep.mubr.f32.mxu0 0.0
        %4472 = vmatmul.mubr.f32.gmra.mrb[0].mxu0 %v4400
        %v4473 = vpop.f32.mrb[0].mxu0
        %v4474 = vadd.f32 0.0, %v4473
        %v4475 = vpop.f32.mrb[0].mxu0
        %4476 = vdwg.mxu0
        %v4477 = vadd.f32 %v4305, %v4469
        %v4478 = vadd.f32 %v4306, %v4474
        %s4479 = scalar_lea.vmem %s3, 208
        %v4480 = vld [vmem:[%s4479] sm:$0xff]
        %v4481 = vld [vmem:[%s4479 + $0x8] sm:$0x1]
        %v4483 = vsel %vm2249, %v4480, 0
        %v4486 = vsel %vm2249, %v4481, 0
        %4488 = vmatprep.subr.mxu0 0.0
        %4489 = vmatpush1.msra.mxu0 %v2239
        %4490 = vmatprep.subr.mxu0 0.0
        %4491 = vmatpush1.msra.mxu0 %v2240
        %4492 = vmatprep.subr.mxu0 0.0
        %4493 = vmatpush1.msra.mxu0 %v2241
        %4494 = vmatprep.subr.mxu0 0.0
        %4495 = vmatpush1.msra.mxu0 %v2242
        %4496 = vmatprep.subr.mxu0 0.0
        %4497 = vmatpush1.msra.mxu0 %v2243
        %4498 = vmatprep.subr.mxu0 0.0
        %4499 = vmatpush1.msra.mxu0 %v2244
        %4500 = vmatprep.subr.mxu0 0.0
        %4501 = vmatpush1.msra.mxu0 %v2245
        %4502 = vmatprep.subr.mxu0 0.0
        %4503 = vmatpush1.msra.mxu0 %v2246
        %4504 = vmatprep.subr.mxu0 0.0
        %4505 = vmatpush1.msra.mxu0 0.0
        %4506 = vmatprep.subr.mxu0 0.0
        %4507 = vmatpush1.msra.mxu0 0.0
        %4508 = vmatprep.subr.mxu0 0.0
        %4509 = vmatpush1.msra.mxu0 0.0
        %4510 = vmatprep.subr.mxu0 0.0
        %4511 = vmatpush1.msra.mxu0 0.0
        %4512 = vmatprep.subr.mxu0 0.0
        %4513 = vmatpush1.msra.mxu0 0.0
        %4514 = vmatprep.subr.mxu0 0.0
        %4515 = vmatpush1.msra.mxu0 0.0
        %4516 = vmatprep.subr.mxu0 0.0
        %4517 = vmatpush1.msra.mxu0 0.0
        %4518 = vmatprep.subr.mxu0 0.0
        %4519 = vmatpush1.msra.mxu0 0.0
        %4520 = vmatprep.subr.mxu0 0.0
        %4521 = vmatpush1.msra.mxu0 0.0
        %4522 = vmatprep.subr.mxu0 0.0
        %4523 = vmatpush1.msra.mxu0 0.0
        %4524 = vmatprep.subr.mxu0 0.0
        %4525 = vmatpush1.msra.mxu0 0.0
        %4526 = vmatprep.subr.mxu0 0.0
        %4527 = vmatpush1.msra.mxu0 0.0
        %4528 = vmatprep.subr.mxu0 0.0
        %4529 = vmatpush1.msra.mxu0 0.0
        %4530 = vmatprep.subr.mxu0 0.0
        %4531 = vmatpush1.msra.mxu0 0.0
        %4532 = vmatprep.subr.mxu0 0.0
        %4533 = vmatpush1.msra.mxu0 0.0
        %4534 = vmatprep.subr.mxu0 0.0
        %4535 = vmatpush1.msra.mxu0 0.0
        %4536 = vmatprep.subr.mxu0 0.0
        %4537 = vmatpush1.msra.mxu0 0.0
        %4538 = vmatprep.subr.mxu0 0.0
        %4539 = vmatpush1.msra.mxu0 0.0
        %4540 = vmatprep.subr.mxu0 0.0
        %4541 = vmatpush1.msra.mxu0 0.0
        %4542 = vmatprep.subr.mxu0 0.0
        %4543 = vmatpush1.msra.mxu0 0.0
        %4544 = vmatprep.subr.mxu0 0.0
        %4545 = vmatpush1.msra.mxu0 0.0
        %4546 = vmatprep.subr.mxu0 0.0
        %4547 = vmatpush1.msra.mxu0 0.0
        %4548 = vmatprep.subr.mxu0 0.0
        %4549 = vmatpush1.msra.mxu0 0.0
        %4550 = vmatprep.subr.mxu0 0.0
        %4551 = vmatpush1.msra.mxu0 0.0
        %4552 = vmatprep.mubr.f32.mxu0 0.0
        %4553 = vmatmul.mubr.f32.gmra.mrb[0].mxu0 %v4483
        %v4554 = vpop.f32.mrb[0].mxu0
        %v4555 = vadd.f32 0.0, %v4554
        %v4556 = vpop.f32.mrb[0].mxu0
        %4557 = vmatprep.mubr.f32.mxu0 0.0
        %4558 = vmatmul.mubr.f32.gmra.mrb[0].mxu0 %v4486
        %v4559 = vpop.f32.mrb[0].mxu0
        %v4560 = vadd.f32 0.0, %v4559
        %v4561 = vpop.f32.mrb[0].mxu0
        %4562 = vdwg.mxu0
        %s4563 = scalar_lea.vmem %s4, 416
        %v4564 = vld [vmem:[%s4563] sm:$0xff]
        %v4565 = vld [vmem:[%s4563 + $0x8] sm:$0xff]
        %v4566 = vld [vmem:[%s4563 + $0x10] sm:$0xff]
        %v4567 = vld [vmem:[%s4563 + $0x18] sm:$0xff]
        %v4569 = vsel %vm2424, %v4555, 0
        %v4572 = vsel %vm2424, %v4560, 0
        %4574 = vmatprep.subr.mxu0 0.0
        %4575 = vmatpush1.msra.mxu0 %v4564
        %4576 = vmatprep.subr.mxu0 0.0
        %4577 = vmatpush1.msra.mxu0 %v4565
        %4578 = vmatprep.subr.mxu0 0.0
        %4579 = vmatpush1.msra.mxu0 %v4566
        %4580 = vmatprep.subr.mxu0 0.0
        %4581 = vmatpush1.msra.mxu0 %v4567
        %4582 = vmatprep.subr.mxu0 0.0
        %4583 = vmatpush1.msra.mxu0 0.0
        %4584 = vmatprep.subr.mxu0 0.0
        %4585 = vmatpush1.msra.mxu0 0.0
        %4586 = vmatprep.subr.mxu0 0.0
        %4587 = vmatpush1.msra.mxu0 0.0
        %4588 = vmatprep.subr.mxu0 0.0
        %4589 = vmatpush1.msra.mxu0 0.0
        %4590 = vmatprep.subr.mxu0 0.0
        %4591 = vmatpush1.msra.mxu0 0.0
        %4592 = vmatprep.subr.mxu0 0.0
        %4593 = vmatpush1.msra.mxu0 0.0
        %4594 = vmatprep.subr.mxu0 0.0
        %4595 = vmatpush1.msra.mxu0 0.0
        %4596 = vmatprep.subr.mxu0 0.0
        %4597 = vmatpush1.msra.mxu0 0.0
        %4598 = vmatprep.subr.mxu0 0.0
        %4599 = vmatpush1.msra.mxu0 0.0
        %4600 = vmatprep.subr.mxu0 0.0
        %4601 = vmatpush1.msra.mxu0 0.0
        %4602 = vmatprep.subr.mxu0 0.0
        %4603 = vmatpush1.msra.mxu0 0.0
        %4604 = vmatprep.subr.mxu0 0.0
        %4605 = vmatpush1.msra.mxu0 0.0
        %4606 = vmatprep.subr.mxu0 0.0
        %4607 = vmatpush1.msra.mxu0 0.0
        %4608 = vmatprep.subr.mxu0 0.0
        %4609 = vmatpush1.msra.mxu0 0.0
        %4610 = vmatprep.subr.mxu0 0.0
        %4611 = vmatpush1.msra.mxu0 0.0
        %4612 = vmatprep.subr.mxu0 0.0
        %4613 = vmatpush1.msra.mxu0 0.0
        %4614 = vmatprep.subr.mxu0 0.0
        %4615 = vmatpush1.msra.mxu0 0.0
        %4616 = vmatprep.subr.mxu0 0.0
        %4617 = vmatpush1.msra.mxu0 0.0
        %4618 = vmatprep.subr.mxu0 0.0
        %4619 = vmatpush1.msra.mxu0 0.0
        %4620 = vmatprep.subr.mxu0 0.0
        %4621 = vmatpush1.msra.mxu0 0.0
        %4622 = vmatprep.subr.mxu0 0.0
        %4623 = vmatpush1.msra.mxu0 0.0
        %4624 = vmatprep.subr.mxu0 0.0
        %4625 = vmatpush1.msra.mxu0 0.0
        %4626 = vmatprep.subr.mxu0 0.0
        %4627 = vmatpush1.msra.mxu0 0.0
        %4628 = vmatprep.subr.mxu0 0.0
        %4629 = vmatpush1.msra.mxu0 0.0
        %4630 = vmatprep.subr.mxu0 0.0
        %4631 = vmatpush1.msra.mxu0 0.0
        %4632 = vmatprep.subr.mxu0 0.0
        %4633 = vmatpush1.msra.mxu0 0.0
        %4634 = vmatprep.subr.mxu0 0.0
        %4635 = vmatpush1.msra.mxu0 0.0
        %4636 = vmatprep.subr.mxu0 0.0
        %4637 = vmatpush1.msra.mxu0 0.0
        %4638 = vmatprep.mubr.f32.mxu0 0.0
        %4639 = vmatmul.mubr.f32.gmra.mrb[0].mxu0 %v4569
        %v4640 = vpop.f32.mrb[0].mxu0
        %v4641 = vadd.f32 0.0, %v4640
        %v4642 = vpop.f32.mrb[0].mxu0
        %4643 = vmatprep.mubr.f32.mxu0 0.0
        %4644 = vmatmul.mubr.f32.gmra.mrb[0].mxu0 %v4572
        %v4645 = vpop.f32.mrb[0].mxu0
        %v4646 = vadd.f32 0.0, %v4645
        %v4647 = vpop.f32.mrb[0].mxu0
        %4648 = vdwg.mxu0
        %v4649 = vadd.f32 %v4477, %v4641
        %v4650 = vadd.f32 %v4478, %v4646
        %s4651 = scalar_lea.vmem %s3, 224
        %v4652 = vld [vmem:[%s4651] sm:$0xff]
        %v4653 = vld [vmem:[%s4651 + $0x8] sm:$0x1]
        %v4655 = vsel %vm2249, %v4652, 0
        %v4658 = vsel %vm2249, %v4653, 0
        %4660 = vmatprep.subr.mxu0 0.0
        %4661 = vmatpush1.msra.mxu0 %v2239
        %4662 = vmatprep.subr.mxu0 0.0
        %4663 = vmatpush1.msra.mxu0 %v2240
        %4664 = vmatprep.subr.mxu0 0.0
        %4665 = vmatpush1.msra.mxu0 %v2241
        %4666 = vmatprep.subr.mxu0 0.0
        %4667 = vmatpush1.msra.mxu0 %v2242
        %4668 = vmatprep.subr.mxu0 0.0
        %4669 = vmatpush1.msra.mxu0 %v2243
        %4670 = vmatprep.subr.mxu0 0.0
        %4671 = vmatpush1.msra.mxu0 %v2244
        %4672 = vmatprep.subr.mxu0 0.0
        %4673 = vmatpush1.msra.mxu0 %v2245
        %4674 = vmatprep.subr.mxu0 0.0
        %4675 = vmatpush1.msra.mxu0 %v2246
        %4676 = vmatprep.subr.mxu0 0.0
        %4677 = vmatpush1.msra.mxu0 0.0
        %4678 = vmatprep.subr.mxu0 0.0
        %4679 = vmatpush1.msra.mxu0 0.0
        %4680 = vmatprep.subr.mxu0 0.0
        %4681 = vmatpush1.msra.mxu0 0.0
        %4682 = vmatprep.subr.mxu0 0.0
        %4683 = vmatpush1.msra.mxu0 0.0
        %4684 = vmatprep.subr.mxu0 0.0
        %4685 = vmatpush1.msra.mxu0 0.0
        %4686 = vmatprep.subr.mxu0 0.0
        %4687 = vmatpush1.msra.mxu0 0.0
        %4688 = vmatprep.subr.mxu0 0.0
        %4689 = vmatpush1.msra.mxu0 0.0
        %4690 = vmatprep.subr.mxu0 0.0
        %4691 = vmatpush1.msra.mxu0 0.0
        %4692 = vmatprep.subr.mxu0 0.0
        %4693 = vmatpush1.msra.mxu0 0.0
        %4694 = vmatprep.subr.mxu0 0.0
        %4695 = vmatpush1.msra.mxu0 0.0
        %4696 = vmatprep.subr.mxu0 0.0
        %4697 = vmatpush1.msra.mxu0 0.0
        %4698 = vmatprep.subr.mxu0 0.0
        %4699 = vmatpush1.msra.mxu0 0.0
        %4700 = vmatprep.subr.mxu0 0.0
        %4701 = vmatpush1.msra.mxu0 0.0
        %4702 = vmatprep.subr.mxu0 0.0
        %4703 = vmatpush1.msra.mxu0 0.0
        %4704 = vmatprep.subr.mxu0 0.0
        %4705 = vmatpush1.msra.mxu0 0.0
        %4706 = vmatprep.subr.mxu0 0.0
        %4707 = vmatpush1.msra.mxu0 0.0
        %4708 = vmatprep.subr.mxu0 0.0
        %4709 = vmatpush1.msra.mxu0 0.0
        %4710 = vmatprep.subr.mxu0 0.0
        %4711 = vmatpush1.msra.mxu0 0.0
        %4712 = vmatprep.subr.mxu0 0.0
        %4713 = vmatpush1.msra.mxu0 0.0
        %4714 = vmatprep.subr.mxu0 0.0
        %4715 = vmatpush1.msra.mxu0 0.0
        %4716 = vmatprep.subr.mxu0 0.0
        %4717 = vmatpush1.msra.mxu0 0.0
        %4718 = vmatprep.subr.mxu0 0.0
        %4719 = vmatpush1.msra.mxu0 0.0
        %4720 = vmatprep.subr.mxu0 0.0
        %4721 = vmatpush1.msra.mxu0 0.0
        %4722 = vmatprep.subr.mxu0 0.0
        %4723 = vmatpush1.msra.mxu0 0.0
        %4724 = vmatprep.mubr.f32.mxu0 0.0
        %4725 = vmatmul.mubr.f32.gmra.mrb[0].mxu0 %v4655
        %v4726 = vpop.f32.mrb[0].mxu0
        %v4727 = vadd.f32 0.0, %v4726
        %v4728 = vpop.f32.mrb[0].mxu0
        %4729 = vmatprep.mubr.f32.mxu0 0.0
        %4730 = vmatmul.mubr.f32.gmra.mrb[0].mxu0 %v4658
        %v4731 = vpop.f32.mrb[0].mxu0
        %v4732 = vadd.f32 0.0, %v4731
        %v4733 = vpop.f32.mrb[0].mxu0
        %4734 = vdwg.mxu0
        %s4735 = scalar_lea.vmem %s4, 448
        %v4736 = vld [vmem:[%s4735] sm:$0xff]
        %v4737 = vld [vmem:[%s4735 + $0x8] sm:$0xff]
        %v4738 = vld [vmem:[%s4735 + $0x10] sm:$0xff]
        %v4739 = vld [vmem:[%s4735 + $0x18] sm:$0xff]
        %v4741 = vsel %vm2424, %v4727, 0
        %v4744 = vsel %vm2424, %v4732, 0
        %4746 = vmatprep.subr.mxu0 0.0
        %4747 = vmatpush1.msra.mxu0 %v4736
        %4748 = vmatprep.subr.mxu0 0.0
        %4749 = vmatpush1.msra.mxu0 %v4737
        %4750 = vmatprep.subr.mxu0 0.0
        %4751 = vmatpush1.msra.mxu0 %v4738
        %4752 = vmatprep.subr.mxu0 0.0
        %4753 = vmatpush1.msra.mxu0 %v4739
        %4754 = vmatprep.subr.mxu0 0.0
        %4755 = vmatpush1.msra.mxu0 0.0
        %4756 = vmatprep.subr.mxu0 0.0
        %4757 = vmatpush1.msra.mxu0 0.0
        %4758 = vmatprep.subr.mxu0 0.0
        %4759 = vmatpush1.msra.mxu0 0.0
        %4760 = vmatprep.subr.mxu0 0.0
        %4761 = vmatpush1.msra.mxu0 0.0
        %4762 = vmatprep.subr.mxu0 0.0
        %4763 = vmatpush1.msra.mxu0 0.0
        %4764 = vmatprep.subr.mxu0 0.0
        %4765 = vmatpush1.msra.mxu0 0.0
        %4766 = vmatprep.subr.mxu0 0.0
        %4767 = vmatpush1.msra.mxu0 0.0
        %4768 = vmatprep.subr.mxu0 0.0
        %4769 = vmatpush1.msra.mxu0 0.0
        %4770 = vmatprep.subr.mxu0 0.0
        %4771 = vmatpush1.msra.mxu0 0.0
        %4772 = vmatprep.subr.mxu0 0.0
        %4773 = vmatpush1.msra.mxu0 0.0
        %4774 = vmatprep.subr.mxu0 0.0
        %4775 = vmatpush1.msra.mxu0 0.0
        %4776 = vmatprep.subr.mxu0 0.0
        %4777 = vmatpush1.msra.mxu0 0.0
        %4778 = vmatprep.subr.mxu0 0.0
        %4779 = vmatpush1.msra.mxu0 0.0
        %4780 = vmatprep.subr.mxu0 0.0
        %4781 = vmatpush1.msra.mxu0 0.0
        %4782 = vmatprep.subr.mxu0 0.0
        %4783 = vmatpush1.msra.mxu0 0.0
        %4784 = vmatprep.subr.mxu0 0.0
        %4785 = vmatpush1.msra.mxu0 0.0
        %4786 = vmatprep.subr.mxu0 0.0
        %4787 = vmatpush1.msra.mxu0 0.0
        %4788 = vmatprep.subr.mxu0 0.0
        %4789 = vmatpush1.msra.mxu0 0.0
        %4790 = vmatprep.subr.mxu0 0.0
        %4791 = vmatpush1.msra.mxu0 0.0
        %4792 = vmatprep.subr.mxu0 0.0
        %4793 = vmatpush1.msra.mxu0 0.0
        %4794 = vmatprep.subr.mxu0 0.0
        %4795 = vmatpush1.msra.mxu0 0.0
        %4796 = vmatprep.subr.mxu0 0.0
        %4797 = vmatpush1.msra.mxu0 0.0
        %4798 = vmatprep.subr.mxu0 0.0
        %4799 = vmatpush1.msra.mxu0 0.0
        %4800 = vmatprep.subr.mxu0 0.0
        %4801 = vmatpush1.msra.mxu0 0.0
        %4802 = vmatprep.subr.mxu0 0.0
        %4803 = vmatpush1.msra.mxu0 0.0
        %4804 = vmatprep.subr.mxu0 0.0
        %4805 = vmatpush1.msra.mxu0 0.0
        %4806 = vmatprep.subr.mxu0 0.0
        %4807 = vmatpush1.msra.mxu0 0.0
        %4808 = vmatprep.subr.mxu0 0.0
        %4809 = vmatpush1.msra.mxu0 0.0
        %4810 = vmatprep.mubr.f32.mxu0 0.0
        %4811 = vmatmul.mubr.f32.gmra.mrb[0].mxu0 %v4741
        %v4812 = vpop.f32.mrb[0].mxu0
        %v4813 = vadd.f32 0.0, %v4812
        %v4814 = vpop.f32.mrb[0].mxu0
        %4815 = vmatprep.mubr.f32.mxu0 0.0
        %4816 = vmatmul.mubr.f32.gmra.mrb[0].mxu0 %v4744
        %v4817 = vpop.f32.mrb[0].mxu0
        %v4818 = vadd.f32 0.0, %v4817
        %v4819 = vpop.f32.mrb[0].mxu0
        %4820 = vdwg.mxu0
        %v4821 = vadd.f32 %v4649, %v4813
        %v4822 = vadd.f32 %v4650, %v4818
        %s4823 = scalar_lea.vmem %s3, 240
        %v4824 = vld [vmem:[%s4823] sm:$0xff]
        %v4825 = vld [vmem:[%s4823 + $0x8] sm:$0x1]
        %v4827 = vsel %vm2249, %v4824, 0
        %v4830 = vsel %vm2249, %v4825, 0
        %4832 = vmatprep.subr.mxu0 0.0
        %4833 = vmatpush1.msra.mxu0 %v2239
        %4834 = vmatprep.subr.mxu0 0.0
        %4835 = vmatpush1.msra.mxu0 %v2240
        %4836 = vmatprep.subr.mxu0 0.0
        %4837 = vmatpush1.msra.mxu0 %v2241
        %4838 = vmatprep.subr.mxu0 0.0
        %4839 = vmatpush1.msra.mxu0 %v2242
        %4840 = vmatprep.subr.mxu0 0.0
        %4841 = vmatpush1.msra.mxu0 %v2243
        %4842 = vmatprep.subr.mxu0 0.0
        %4843 = vmatpush1.msra.mxu0 %v2244
        %4844 = vmatprep.subr.mxu0 0.0
        %4845 = vmatpush1.msra.mxu0 %v2245
        %4846 = vmatprep.subr.mxu0 0.0
        %4847 = vmatpush1.msra.mxu0 %v2246
        %4848 = vmatprep.subr.mxu0 0.0
        %4849 = vmatpush1.msra.mxu0 0.0
        %4850 = vmatprep.subr.mxu0 0.0
        %4851 = vmatpush1.msra.mxu0 0.0
        %4852 = vmatprep.subr.mxu0 0.0
        %4853 = vmatpush1.msra.mxu0 0.0
        %4854 = vmatprep.subr.mxu0 0.0
        %4855 = vmatpush1.msra.mxu0 0.0
        %4856 = vmatprep.subr.mxu0 0.0
        %4857 = vmatpush1.msra.mxu0 0.0
        %4858 = vmatprep.subr.mxu0 0.0
        %4859 = vmatpush1.msra.mxu0 0.0
        %4860 = vmatprep.subr.mxu0 0.0
        %4861 = vmatpush1.msra.mxu0 0.0
        %4862 = vmatprep.subr.mxu0 0.0
        %4863 = vmatpush1.msra.mxu0 0.0
        %4864 = vmatprep.subr.mxu0 0.0
        %4865 = vmatpush1.msra.mxu0 0.0
        %4866 = vmatprep.subr.mxu0 0.0
        %4867 = vmatpush1.msra.mxu0 0.0
        %4868 = vmatprep.subr.mxu0 0.0
        %4869 = vmatpush1.msra.mxu0 0.0
        %4870 = vmatprep.subr.mxu0 0.0
        %4871 = vmatpush1.msra.mxu0 0.0
        %4872 = vmatprep.subr.mxu0 0.0
        %4873 = vmatpush1.msra.mxu0 0.0
        %4874 = vmatprep.subr.mxu0 0.0
        %4875 = vmatpush1.msra.mxu0 0.0
        %4876 = vmatprep.subr.mxu0 0.0
        %4877 = vmatpush1.msra.mxu0 0.0
        %4878 = vmatprep.subr.mxu0 0.0
        %4879 = vmatpush1.msra.mxu0 0.0
        %4880 = vmatprep.subr.mxu0 0.0
        %4881 = vmatpush1.msra.mxu0 0.0
        %4882 = vmatprep.subr.mxu0 0.0
        %4883 = vmatpush1.msra.mxu0 0.0
        %4884 = vmatprep.subr.mxu0 0.0
        %4885 = vmatpush1.msra.mxu0 0.0
        %4886 = vmatprep.subr.mxu0 0.0
        %4887 = vmatpush1.msra.mxu0 0.0
        %4888 = vmatprep.subr.mxu0 0.0
        %4889 = vmatpush1.msra.mxu0 0.0
        %4890 = vmatprep.subr.mxu0 0.0
        %4891 = vmatpush1.msra.mxu0 0.0
        %4892 = vmatprep.subr.mxu0 0.0
        %4893 = vmatpush1.msra.mxu0 0.0
        %4894 = vmatprep.subr.mxu0 0.0
        %4895 = vmatpush1.msra.mxu0 0.0
        %4896 = vmatprep.mubr.f32.mxu0 0.0
        %4897 = vmatmul.mubr.f32.gmra.mrb[0].mxu0 %v4827
        %v4898 = vpop.f32.mrb[0].mxu0
        %v4899 = vadd.f32 0.0, %v4898
        %v4900 = vpop.f32.mrb[0].mxu0
        %4901 = vmatprep.mubr.f32.mxu0 0.0
        %4902 = vmatmul.mubr.f32.gmra.mrb[0].mxu0 %v4830
        %v4903 = vpop.f32.mrb[0].mxu0
        %v4904 = vadd.f32 0.0, %v4903
        %v4905 = vpop.f32.mrb[0].mxu0
        %4906 = vdwg.mxu0
        %s4907 = scalar_lea.vmem %s4, 480
        %v4908 = vld [vmem:[%s4907] sm:$0xff]
        %v4909 = vld [vmem:[%s4907 + $0x8] sm:$0xff]
        %v4910 = vld [vmem:[%s4907 + $0x10] sm:$0xff]
        %v4911 = vld [vmem:[%s4907 + $0x18] sm:$0xff]
        %v4913 = vsel %vm2424, %v4899, 0
        %v4916 = vsel %vm2424, %v4904, 0
        %4918 = vmatprep.subr.mxu0 0.0
        %4919 = vmatpush1.msra.mxu0 %v4908
        %4920 = vmatprep.subr.mxu0 0.0
        %4921 = vmatpush1.msra.mxu0 %v4909
        %4922 = vmatprep.subr.mxu0 0.0
        %4923 = vmatpush1.msra.mxu0 %v4910
        %4924 = vmatprep.subr.mxu0 0.0
        %4925 = vmatpush1.msra.mxu0 %v4911
        %4926 = vmatprep.subr.mxu0 0.0
        %4927 = vmatpush1.msra.mxu0 0.0
        %4928 = vmatprep.subr.mxu0 0.0
        %4929 = vmatpush1.msra.mxu0 0.0
        %4930 = vmatprep.subr.mxu0 0.0
        %4931 = vmatpush1.msra.mxu0 0.0
        %4932 = vmatprep.subr.mxu0 0.0
        %4933 = vmatpush1.msra.mxu0 0.0
        %4934 = vmatprep.subr.mxu0 0.0
        %4935 = vmatpush1.msra.mxu0 0.0
        %4936 = vmatprep.subr.mxu0 0.0
        %4937 = vmatpush1.msra.mxu0 0.0
        %4938 = vmatprep.subr.mxu0 0.0
        %4939 = vmatpush1.msra.mxu0 0.0
        %4940 = vmatprep.subr.mxu0 0.0
        %4941 = vmatpush1.msra.mxu0 0.0
        %4942 = vmatprep.subr.mxu0 0.0
        %4943 = vmatpush1.msra.mxu0 0.0
        %4944 = vmatprep.subr.mxu0 0.0
        %4945 = vmatpush1.msra.mxu0 0.0
        %4946 = vmatprep.subr.mxu0 0.0
        %4947 = vmatpush1.msra.mxu0 0.0
        %4948 = vmatprep.subr.mxu0 0.0
        %4949 = vmatpush1.msra.mxu0 0.0
        %4950 = vmatprep.subr.mxu0 0.0
        %4951 = vmatpush1.msra.mxu0 0.0
        %4952 = vmatprep.subr.mxu0 0.0
        %4953 = vmatpush1.msra.mxu0 0.0
        %4954 = vmatprep.subr.mxu0 0.0
        %4955 = vmatpush1.msra.mxu0 0.0
        %4956 = vmatprep.subr.mxu0 0.0
        %4957 = vmatpush1.msra.mxu0 0.0
        %4958 = vmatprep.subr.mxu0 0.0
        %4959 = vmatpush1.msra.mxu0 0.0
        %4960 = vmatprep.subr.mxu0 0.0
        %4961 = vmatpush1.msra.mxu0 0.0
        %4962 = vmatprep.subr.mxu0 0.0
        %4963 = vmatpush1.msra.mxu0 0.0
        %4964 = vmatprep.subr.mxu0 0.0
        %4965 = vmatpush1.msra.mxu0 0.0
        %4966 = vmatprep.subr.mxu0 0.0
        %4967 = vmatpush1.msra.mxu0 0.0
        %4968 = vmatprep.subr.mxu0 0.0
        %4969 = vmatpush1.msra.mxu0 0.0
        %4970 = vmatprep.subr.mxu0 0.0
        %4971 = vmatpush1.msra.mxu0 0.0
        %4972 = vmatprep.subr.mxu0 0.0
        %4973 = vmatpush1.msra.mxu0 0.0
        %4974 = vmatprep.subr.mxu0 0.0
        %4975 = vmatpush1.msra.mxu0 0.0
        %4976 = vmatprep.subr.mxu0 0.0
        %4977 = vmatpush1.msra.mxu0 0.0
        %4978 = vmatprep.subr.mxu0 0.0
        %4979 = vmatpush1.msra.mxu0 0.0
        %4980 = vmatprep.subr.mxu0 0.0
        %4981 = vmatpush1.msra.mxu0 0.0
        %4982 = vmatprep.mubr.f32.mxu0 0.0
        %4983 = vmatmul.mubr.f32.gmra.mrb[0].mxu0 %v4913
        %v4984 = vpop.f32.mrb[0].mxu0
        %v4985 = vadd.f32 0.0, %v4984
        %v4986 = vpop.f32.mrb[0].mxu0
        %4987 = vmatprep.mubr.f32.mxu0 0.0
        %4988 = vmatmul.mubr.f32.gmra.mrb[0].mxu0 %v4916
        %v4989 = vpop.f32.mrb[0].mxu0
        %v4990 = vadd.f32 0.0, %v4989
        %v4991 = vpop.f32.mrb[0].mxu0
        %4992 = vdwg.mxu0
        %v4993 = vadd.f32 %v4821, %v4985
        %v4994 = vadd.f32 %v4822, %v4990
        %v4995 = vld [vmem:[%s5] sm:$0x1]
        %v4997 = vlaneseq
        %v4998 = vshrl.u32 %v4997, 7
        %v4999 = vsub.s32 0, %v4998
        %v5000 = vrot.slane %v4995, %v4999
        %v5002 = vadd.f32 %v4993, %v5000
        %v5003 = vadd.f32 %v4994, %v5000
        %v5004 = vmax.f32 %v5002, 0.0
        %v5005 = vmax.f32 %v5003, 0.0
        %v5006 = vld [vmem:[%s6] sm:$0xff]
        %v5007 = vld [vmem:[%s6 + $0x8] sm:$0xff]
        %v5008 = vld [vmem:[%s6 + $0x10] sm:$0xff]
        %v5009 = vld [vmem:[%s6 + $0x18] sm:$0xff]
        %v5010 = vld [vmem:[%s6 + $0x20] sm:$0xff]
        %v5011 = vld [vmem:[%s6 + $0x28] sm:$0xff]
        %v5012 = vld [vmem:[%s6 + $0x30] sm:$0xff]
        %v5013 = vld [vmem:[%s6 + $0x38] sm:$0xff]
        %s5014 = scalar_lea.vmem %s6, 64
        %v5015 = vld [vmem:[%s5014] sm:$0xff]
        %v5016 = vld [vmem:[%s5014 + $0x8] sm:$0xff]
        %v5017 = vld [vmem:[%s5014 + $0x10] sm:$0xff]
        %v5018 = vld [vmem:[%s5014 + $0x18] sm:$0xff]
        %v5019 = vld [vmem:[%s5014 + $0x20] sm:$0xff]
        %v5020 = vld [vmem:[%s5014 + $0x28] sm:$0xff]
        %v5021 = vld [vmem:[%s5014 + $0x30] sm:$0xff]
        %v5022 = vld [vmem:[%s5014 + $0x38] sm:$0xff]
        %v5024 = vrot.slane %v5004, 1
        %v5025 = vsel %vm2249, %v5024, 0
        %5027 = vmatprep.subr.mxu0 0.0
        %5028 = vmatpush1.msra.mxu0 %v5015
        %5029 = vmatprep.subr.mxu0 0.0
        %5030 = vmatpush1.msra.mxu0 %v5016
        %5031 = vmatprep.subr.mxu0 0.0
        %5032 = vmatpush1.msra.mxu0 %v5017
        %5033 = vmatprep.subr.mxu0 0.0
        %5034 = vmatpush1.msra.mxu0 %v5018
        %5035 = vmatprep.subr.mxu0 0.0
        %5036 = vmatpush1.msra.mxu0 %v5019
        %5037 = vmatprep.subr.mxu0 0.0
        %5038 = vmatpush1.msra.mxu0 %v5020
        %5039 = vmatprep.subr.mxu0 0.0
        %5040 = vmatpush1.msra.mxu0 %v5021
        %5041 = vmatprep.subr.mxu0 0.0
        %5042 = vmatpush1.msra.mxu0 %v5022
        %5043 = vmatprep.subr.mxu0 0.0
        %5044 = vmatpush1.msra.mxu0 0.0
        %5045 = vmatprep.subr.mxu0 0.0
        %5046 = vmatpush1.msra.mxu0 0.0
        %5047 = vmatprep.subr.mxu0 0.0
        %5048 = vmatpush1.msra.mxu0 0.0
        %5049 = vmatprep.subr.mxu0 0.0
        %5050 = vmatpush1.msra.mxu0 0.0
        %5051 = vmatprep.subr.mxu0 0.0
        %5052 = vmatpush1.msra.mxu0 0.0
        %5053 = vmatprep.subr.mxu0 0.0
        %5054 = vmatpush1.msra.mxu0 0.0
        %5055 = vmatprep.subr.mxu0 0.0
        %5056 = vmatpush1.msra.mxu0 0.0
        %5057 = vmatprep.subr.mxu0 0.0
        %5058 = vmatpush1.msra.mxu0 0.0
        %5059 = vmatprep.subr.mxu0 0.0
        %5060 = vmatpush1.msra.mxu0 0.0
        %5061 = vmatprep.subr.mxu0 0.0
        %5062 = vmatpush1.msra.mxu0 0.0
        %5063 = vmatprep.subr.mxu0 0.0
        %5064 = vmatpush1.msra.mxu0 0.0
        %5065 = vmatprep.subr.mxu0 0.0
        %5066 = vmatpush1.msra.mxu0 0.0
        %5067 = vmatprep.subr.mxu0 0.0
        %5068 = vmatpush1.msra.mxu0 0.0
        %5069 = vmatprep.subr.mxu0 0.0
        %5070 = vmatpush1.msra.mxu0 0.0
        %5071 = vmatprep.subr.mxu0 0.0
        %5072 = vmatpush1.msra.mxu0 0.0
        %5073 = vmatprep.subr.mxu0 0.0
        %5074 = vmatpush1.msra.mxu0 0.0
        %5075 = vmatprep.subr.mxu0 0.0
        %5076 = vmatpush1.msra.mxu0 0.0
        %5077 = vmatprep.subr.mxu0 0.0
        %5078 = vmatpush1.msra.mxu0 0.0
        %5079 = vmatprep.subr.mxu0 0.0
        %5080 = vmatpush1.msra.mxu0 0.0
        %5081 = vmatprep.subr.mxu0 0.0
        %5082 = vmatpush1.msra.mxu0 0.0
        %5083 = vmatprep.subr.mxu0 0.0
        %5084 = vmatpush1.msra.mxu0 0.0
        %5085 = vmatprep.subr.mxu0 0.0
        %5086 = vmatpush1.msra.mxu0 0.0
        %5087 = vmatprep.subr.mxu0 0.0
        %5088 = vmatpush1.msra.mxu0 0.0
        %5089 = vmatprep.subr.mxu0 0.0
        %5090 = vmatpush1.msra.mxu0 0.0
        %5091 = vmatprep.mubr.f32.mxu0 0.0
        %5092 = vmatmul.mubr.f32.gmra.mrb[0].mxu0 %v5025
        %v5093 = vpop.f32.mrb[0].mxu0
        %v5094 = vadd.f32 0.0, %v5093
        %v5095 = vpop.f32.mrb[0].mxu0
        %5096 = vdwg.mxu0
        %v5097 = vsel %vm2249, %v5004, 0
        %5099 = vmatprep.subr.mxu0 0.0
        %5100 = vmatpush1.msra.mxu0 %v5006
        %5101 = vmatprep.subr.mxu0 0.0
        %5102 = vmatpush1.msra.mxu0 %v5007
        %5103 = vmatprep.subr.mxu0 0.0
        %5104 = vmatpush1.msra.mxu0 %v5008
        %5105 = vmatprep.subr.mxu0 0.0
        %5106 = vmatpush1.msra.mxu0 %v5009
        %5107 = vmatprep.subr.mxu0 0.0
        %5108 = vmatpush1.msra.mxu0 %v5010
        %5109 = vmatprep.subr.mxu0 0.0
        %5110 = vmatpush1.msra.mxu0 %v5011
        %5111 = vmatprep.subr.mxu0 0.0
        %5112 = vmatpush1.msra.mxu0 %v5012
        %5113 = vmatprep.subr.mxu0 0.0
        %5114 = vmatpush1.msra.mxu0 %v5013
        %5115 = vmatprep.subr.mxu0 0.0
        %5116 = vmatpush1.msra.mxu0 0.0
        %5117 = vmatprep.subr.mxu0 0.0
        %5118 = vmatpush1.msra.mxu0 0.0
        %5119 = vmatprep.subr.mxu0 0.0
        %5120 = vmatpush1.msra.mxu0 0.0
        %5121 = vmatprep.subr.mxu0 0.0
        %5122 = vmatpush1.msra.mxu0 0.0
        %5123 = vmatprep.subr.mxu0 0.0
        %5124 = vmatpush1.msra.mxu0 0.0
        %5125 = vmatprep.subr.mxu0 0.0
        %5126 = vmatpush1.msra.mxu0 0.0
        %5127 = vmatprep.subr.mxu0 0.0
        %5128 = vmatpush1.msra.mxu0 0.0
        %5129 = vmatprep.subr.mxu0 0.0
        %5130 = vmatpush1.msra.mxu0 0.0
        %5131 = vmatprep.subr.mxu0 0.0
        %5132 = vmatpush1.msra.mxu0 0.0
        %5133 = vmatprep.subr.mxu0 0.0
        %5134 = vmatpush1.msra.mxu0 0.0
        %5135 = vmatprep.subr.mxu0 0.0
        %5136 = vmatpush1.msra.mxu0 0.0
        %5137 = vmatprep.subr.mxu0 0.0
        %5138 = vmatpush1.msra.mxu0 0.0
        %5139 = vmatprep.subr.mxu0 0.0
        %5140 = vmatpush1.msra.mxu0 0.0
        %5141 = vmatprep.subr.mxu0 0.0
        %5142 = vmatpush1.msra.mxu0 0.0
        %5143 = vmatprep.subr.mxu0 0.0
        %5144 = vmatpush1.msra.mxu0 0.0
        %5145 = vmatprep.subr.mxu0 0.0
        %5146 = vmatpush1.msra.mxu0 0.0
        %5147 = vmatprep.subr.mxu0 0.0
        %5148 = vmatpush1.msra.mxu0 0.0
        %5149 = vmatprep.subr.mxu0 0.0
        %5150 = vmatpush1.msra.mxu0 0.0
        %5151 = vmatprep.subr.mxu0 0.0
        %5152 = vmatpush1.msra.mxu0 0.0
        %5153 = vmatprep.subr.mxu0 0.0
        %5154 = vmatpush1.msra.mxu0 0.0
        %5155 = vmatprep.subr.mxu0 0.0
        %5156 = vmatpush1.msra.mxu0 0.0
        %5157 = vmatprep.subr.mxu0 0.0
        %5158 = vmatpush1.msra.mxu0 0.0
        %5159 = vmatprep.subr.mxu0 0.0
        %5160 = vmatpush1.msra.mxu0 0.0
        %5161 = vmatprep.subr.mxu0 0.0
        %5162 = vmatpush1.msra.mxu0 0.0
        %5163 = vmatprep.mubr.f32.mxu0 0.0
        %5164 = vmatmul.mubr.f32.gmra.mrb[0].mxu0 %v5097
        %v5165 = vpop.f32.mrb[0].mxu0
        %v5166 = vadd.f32 %v5094, %v5165
        %v5167 = vpop.f32.mrb[0].mxu0
        %5168 = vdwg.mxu0
        %s5169 = scalar_lea.vmem %s6, 128
        %v5170 = vld [vmem:[%s5169] sm:$0xff]
        %v5171 = vld [vmem:[%s5169 + $0x8] sm:$0xff]
        %v5172 = vld [vmem:[%s5169 + $0x10] sm:$0xff]
        %v5173 = vld [vmem:[%s5169 + $0x18] sm:$0xff]
        %v5174 = vld [vmem:[%s5169 + $0x20] sm:$0xff]
        %v5175 = vld [vmem:[%s5169 + $0x28] sm:$0xff]
        %v5176 = vld [vmem:[%s5169 + $0x30] sm:$0xff]
        %v5177 = vld [vmem:[%s5169 + $0x38] sm:$0xff]
        %v5178 = vrot.slane %v5004, 2
        %v5179 = vsel %vm2249, %v5178, 0
        %5181 = vmatprep.subr.mxu0 0.0
        %5182 = vmatpush1.msra.mxu0 %v5170
        %5183 = vmatprep.subr.mxu0 0.0
        %5184 = vmatpush1.msra.mxu0 %v5171
        %5185 = vmatprep.subr.mxu0 0.0
        %5186 = vmatpush1.msra.mxu0 %v5172
        %5187 = vmatprep.subr.mxu0 0.0
        %5188 = vmatpush1.msra.mxu0 %v5173
        %5189 = vmatprep.subr.mxu0 0.0
        %5190 = vmatpush1.msra.mxu0 %v5174
        %5191 = vmatprep.subr.mxu0 0.0
        %5192 = vmatpush1.msra.mxu0 %v5175
        %5193 = vmatprep.subr.mxu0 0.0
        %5194 = vmatpush1.msra.mxu0 %v5176
        %5195 = vmatprep.subr.mxu0 0.0
        %5196 = vmatpush1.msra.mxu0 %v5177
        %5197 = vmatprep.subr.mxu0 0.0
        %5198 = vmatpush1.msra.mxu0 0.0
        %5199 = vmatprep.subr.mxu0 0.0
        %5200 = vmatpush1.msra.mxu0 0.0
        %5201 = vmatprep.subr.mxu0 0.0
        %5202 = vmatpush1.msra.mxu0 0.0
        %5203 = vmatprep.subr.mxu0 0.0
        %5204 = vmatpush1.msra.mxu0 0.0
        %5205 = vmatprep.subr.mxu0 0.0
        %5206 = vmatpush1.msra.mxu0 0.0
        %5207 = vmatprep.subr.mxu0 0.0
        %5208 = vmatpush1.msra.mxu0 0.0
        %5209 = vmatprep.subr.mxu0 0.0
        %5210 = vmatpush1.msra.mxu0 0.0
        %5211 = vmatprep.subr.mxu0 0.0
        %5212 = vmatpush1.msra.mxu0 0.0
        %5213 = vmatprep.subr.mxu0 0.0
        %5214 = vmatpush1.msra.mxu0 0.0
        %5215 = vmatprep.subr.mxu0 0.0
        %5216 = vmatpush1.msra.mxu0 0.0
        %5217 = vmatprep.subr.mxu0 0.0
        %5218 = vmatpush1.msra.mxu0 0.0
        %5219 = vmatprep.subr.mxu0 0.0
        %5220 = vmatpush1.msra.mxu0 0.0
        %5221 = vmatprep.subr.mxu0 0.0
        %5222 = vmatpush1.msra.mxu0 0.0
        %5223 = vmatprep.subr.mxu0 0.0
        %5224 = vmatpush1.msra.mxu0 0.0
        %5225 = vmatprep.subr.mxu0 0.0
        %5226 = vmatpush1.msra.mxu0 0.0
        %5227 = vmatprep.subr.mxu0 0.0
        %5228 = vmatpush1.msra.mxu0 0.0
        %5229 = vmatprep.subr.mxu0 0.0
        %5230 = vmatpush1.msra.mxu0 0.0
        %5231 = vmatprep.subr.mxu0 0.0
        %5232 = vmatpush1.msra.mxu0 0.0
        %5233 = vmatprep.subr.mxu0 0.0
        %5234 = vmatpush1.msra.mxu0 0.0
        %5235 = vmatprep.subr.mxu0 0.0
        %5236 = vmatpush1.msra.mxu0 0.0
        %5237 = vmatprep.subr.mxu0 0.0
        %5238 = vmatpush1.msra.mxu0 0.0
        %5239 = vmatprep.subr.mxu0 0.0
        %5240 = vmatpush1.msra.mxu0 0.0
        %5241 = vmatprep.subr.mxu0 0.0
        %5242 = vmatpush1.msra.mxu0 0.0
        %5243 = vmatprep.subr.mxu0 0.0
        %5244 = vmatpush1.msra.mxu0 0.0
        %5245 = vmatprep.mubr.f32.mxu0 0.0
        %5246 = vmatmul.mubr.f32.gmra.mrb[0].mxu0 %v5179
        %v5247 = vpop.f32.mrb[0].mxu0
        %v5248 = vadd.f32 0.0, %v5247
        %v5249 = vpop.f32.mrb[0].mxu0
        %5250 = vdwg.mxu0
        %v5251 = vadd.f32 %v5166, %v5248
        %s5252 = scalar_lea.vmem %s6, 192
        %v5253 = vld [vmem:[%s5252] sm:$0xff]
        %v5254 = vld [vmem:[%s5252 + $0x8] sm:$0xff]
        %v5255 = vld [vmem:[%s5252 + $0x10] sm:$0xff]
        %v5256 = vld [vmem:[%s5252 + $0x18] sm:$0xff]
        %v5257 = vld [vmem:[%s5252 + $0x20] sm:$0xff]
        %v5258 = vld [vmem:[%s5252 + $0x28] sm:$0xff]
        %v5259 = vld [vmem:[%s5252 + $0x30] sm:$0xff]
        %v5260 = vld [vmem:[%s5252 + $0x38] sm:$0xff]
        %v5261 = vrot.slane %v5004, 3
        %v5262 = vsel %vm2249, %v5261, 0
        %5264 = vmatprep.subr.mxu0 0.0
        %5265 = vmatpush1.msra.mxu0 %v5253
        %5266 = vmatprep.subr.mxu0 0.0
        %5267 = vmatpush1.msra.mxu0 %v5254
        %5268 = vmatprep.subr.mxu0 0.0
        %5269 = vmatpush1.msra.mxu0 %v5255
        %5270 = vmatprep.subr.mxu0 0.0
        %5271 = vmatpush1.msra.mxu0 %v5256
        %5272 = vmatprep.subr.mxu0 0.0
        %5273 = vmatpush1.msra.mxu0 %v5257
        %5274 = vmatprep.subr.mxu0 0.0
        %5275 = vmatpush1.msra.mxu0 %v5258
        %5276 = vmatprep.subr.mxu0 0.0
        %5277 = vmatpush1.msra.mxu0 %v5259
        %5278 = vmatprep.subr.mxu0 0.0
        %5279 = vmatpush1.msra.mxu0 %v5260
        %5280 = vmatprep.subr.mxu0 0.0
        %5281 = vmatpush1.msra.mxu0 0.0
        %5282 = vmatprep.subr.mxu0 0.0
        %5283 = vmatpush1.msra.mxu0 0.0
        %5284 = vmatprep.subr.mxu0 0.0
        %5285 = vmatpush1.msra.mxu0 0.0
        %5286 = vmatprep.subr.mxu0 0.0
        %5287 = vmatpush1.msra.mxu0 0.0
        %5288 = vmatprep.subr.mxu0 0.0
        %5289 = vmatpush1.msra.mxu0 0.0
        %5290 = vmatprep.subr.mxu0 0.0
        %5291 = vmatpush1.msra.mxu0 0.0
        %5292 = vmatprep.subr.mxu0 0.0
        %5293 = vmatpush1.msra.mxu0 0.0
        %5294 = vmatprep.subr.mxu0 0.0
        %5295 = vmatpush1.msra.mxu0 0.0
        %5296 = vmatprep.subr.mxu0 0.0
        %5297 = vmatpush1.msra.mxu0 0.0
        %5298 = vmatprep.subr.mxu0 0.0
        %5299 = vmatpush1.msra.mxu0 0.0
        %5300 = vmatprep.subr.mxu0 0.0
        %5301 = vmatpush1.msra.mxu0 0.0
        %5302 = vmatprep.subr.mxu0 0.0
        %5303 = vmatpush1.msra.mxu0 0.0
        %5304 = vmatprep.subr.mxu0 0.0
        %5305 = vmatpush1.msra.mxu0 0.0
        %5306 = vmatprep.subr.mxu0 0.0
        %5307 = vmatpush1.msra.mxu0 0.0
        %5308 = vmatprep.subr.mxu0 0.0
        %5309 = vmatpush1.msra.mxu0 0.0
        %5310 = vmatprep.subr.mxu0 0.0
        %5311 = vmatpush1.msra.mxu0 0.0
        %5312 = vmatprep.subr.mxu0 0.0
        %5313 = vmatpush1.msra.mxu0 0.0
        %5314 = vmatprep.subr.mxu0 0.0
        %5315 = vmatpush1.msra.mxu0 0.0
        %5316 = vmatprep.subr.mxu0 0.0
        %5317 = vmatpush1.msra.mxu0 0.0
        %5318 = vmatprep.subr.mxu0 0.0
        %5319 = vmatpush1.msra.mxu0 0.0
        %5320 = vmatprep.subr.mxu0 0.0
        %5321 = vmatpush1.msra.mxu0 0.0
        %5322 = vmatprep.subr.mxu0 0.0
        %5323 = vmatpush1.msra.mxu0 0.0
        %5324 = vmatprep.subr.mxu0 0.0
        %5325 = vmatpush1.msra.mxu0 0.0
        %5326 = vmatprep.subr.mxu0 0.0
        %5327 = vmatpush1.msra.mxu0 0.0
        %5328 = vmatprep.mubr.f32.mxu0 0.0
        %5329 = vmatmul.mubr.f32.gmra.mrb[0].mxu0 %v5262
        %v5330 = vpop.f32.mrb[0].mxu0
        %v5331 = vadd.f32 0.0, %v5330
        %v5332 = vpop.f32.mrb[0].mxu0
        %5333 = vdwg.mxu0
        %v5334 = vadd.f32 %v5251, %v5331
        %s5335 = scalar_lea.vmem %s6, 256
        %v5336 = vld [vmem:[%s5335] sm:$0xff]
        %v5337 = vld [vmem:[%s5335 + $0x8] sm:$0xff]
        %v5338 = vld [vmem:[%s5335 + $0x10] sm:$0xff]
        %v5339 = vld [vmem:[%s5335 + $0x18] sm:$0xff]
        %v5340 = vld [vmem:[%s5335 + $0x20] sm:$0xff]
        %v5341 = vld [vmem:[%s5335 + $0x28] sm:$0xff]
        %v5342 = vld [vmem:[%s5335 + $0x30] sm:$0xff]
        %v5343 = vld [vmem:[%s5335 + $0x38] sm:$0xff]
        %v5344 = vrot.slane %v5004, 4
        %v5345 = vsel %vm2249, %v5344, 0
        %5347 = vmatprep.subr.mxu0 0.0
        %5348 = vmatpush1.msra.mxu0 %v5336
        %5349 = vmatprep.subr.mxu0 0.0
        %5350 = vmatpush1.msra.mxu0 %v5337
        %5351 = vmatprep.subr.mxu0 0.0
        %5352 = vmatpush1.msra.mxu0 %v5338
        %5353 = vmatprep.subr.mxu0 0.0
        %5354 = vmatpush1.msra.mxu0 %v5339
        %5355 = vmatprep.subr.mxu0 0.0
        %5356 = vmatpush1.msra.mxu0 %v5340
        %5357 = vmatprep.subr.mxu0 0.0
        %5358 = vmatpush1.msra.mxu0 %v5341
        %5359 = vmatprep.subr.mxu0 0.0
        %5360 = vmatpush1.msra.mxu0 %v5342
        %5361 = vmatprep.subr.mxu0 0.0
        %5362 = vmatpush1.msra.mxu0 %v5343
        %5363 = vmatprep.subr.mxu0 0.0
        %5364 = vmatpush1.msra.mxu0 0.0
        %5365 = vmatprep.subr.mxu0 0.0
        %5366 = vmatpush1.msra.mxu0 0.0
        %5367 = vmatprep.subr.mxu0 0.0
        %5368 = vmatpush1.msra.mxu0 0.0
        %5369 = vmatprep.subr.mxu0 0.0
        %5370 = vmatpush1.msra.mxu0 0.0
        %5371 = vmatprep.subr.mxu0 0.0
        %5372 = vmatpush1.msra.mxu0 0.0
        %5373 = vmatprep.subr.mxu0 0.0
        %5374 = vmatpush1.msra.mxu0 0.0
        %5375 = vmatprep.subr.mxu0 0.0
        %5376 = vmatpush1.msra.mxu0 0.0
        %5377 = vmatprep.subr.mxu0 0.0
        %5378 = vmatpush1.msra.mxu0 0.0
        %5379 = vmatprep.subr.mxu0 0.0
        %5380 = vmatpush1.msra.mxu0 0.0
        %5381 = vmatprep.subr.mxu0 0.0
        %5382 = vmatpush1.msra.mxu0 0.0
        %5383 = vmatprep.subr.mxu0 0.0
        %5384 = vmatpush1.msra.mxu0 0.0
        %5385 = vmatprep.subr.mxu0 0.0
        %5386 = vmatpush1.msra.mxu0 0.0
        %5387 = vmatprep.subr.mxu0 0.0
        %5388 = vmatpush1.msra.mxu0 0.0
        %5389 = vmatprep.subr.mxu0 0.0
        %5390 = vmatpush1.msra.mxu0 0.0
        %5391 = vmatprep.subr.mxu0 0.0
        %5392 = vmatpush1.msra.mxu0 0.0
        %5393 = vmatprep.subr.mxu0 0.0
        %5394 = vmatpush1.msra.mxu0 0.0
        %5395 = vmatprep.subr.mxu0 0.0
        %5396 = vmatpush1.msra.mxu0 0.0
        %5397 = vmatprep.subr.mxu0 0.0
        %5398 = vmatpush1.msra.mxu0 0.0
        %5399 = vmatprep.subr.mxu0 0.0
        %5400 = vmatpush1.msra.mxu0 0.0
        %5401 = vmatprep.subr.mxu0 0.0
        %5402 = vmatpush1.msra.mxu0 0.0
        %5403 = vmatprep.subr.mxu0 0.0
        %5404 = vmatpush1.msra.mxu0 0.0
        %5405 = vmatprep.subr.mxu0 0.0
        %5406 = vmatpush1.msra.mxu0 0.0
        %5407 = vmatprep.subr.mxu0 0.0
        %5408 = vmatpush1.msra.mxu0 0.0
        %5409 = vmatprep.subr.mxu0 0.0
        %5410 = vmatpush1.msra.mxu0 0.0
        %5411 = vmatprep.mubr.f32.mxu0 0.0
        %5412 = vmatmul.mubr.f32.gmra.mrb[0].mxu0 %v5345
        %v5413 = vpop.f32.mrb[0].mxu0
        %v5414 = vadd.f32 0.0, %v5413
        %v5415 = vpop.f32.mrb[0].mxu0
        %5416 = vdwg.mxu0
        %v5417 = vadd.f32 %v5334, %v5414
        %s5418 = scalar_lea.vmem %s6, 320
        %v5419 = vld [vmem:[%s5418] sm:$0xff]
        %v5420 = vld [vmem:[%s5418 + $0x8] sm:$0xff]
        %v5421 = vld [vmem:[%s5418 + $0x10] sm:$0xff]
        %v5422 = vld [vmem:[%s5418 + $0x18] sm:$0xff]
        %v5423 = vld [vmem:[%s5418 + $0x20] sm:$0xff]
        %v5424 = vld [vmem:[%s5418 + $0x28] sm:$0xff]
        %v5425 = vld [vmem:[%s5418 + $0x30] sm:$0xff]
        %v5426 = vld [vmem:[%s5418 + $0x38] sm:$0xff]
        %v5427 = vrot.slane %v5004, 5
        %v5428 = vsel %vm2249, %v5427, 0
        %5430 = vmatprep.subr.mxu0 0.0
        %5431 = vmatpush1.msra.mxu0 %v5419
        %5432 = vmatprep.subr.mxu0 0.0
        %5433 = vmatpush1.msra.mxu0 %v5420
        %5434 = vmatprep.subr.mxu0 0.0
        %5435 = vmatpush1.msra.mxu0 %v5421
        %5436 = vmatprep.subr.mxu0 0.0
        %5437 = vmatpush1.msra.mxu0 %v5422
        %5438 = vmatprep.subr.mxu0 0.0
        %5439 = vmatpush1.msra.mxu0 %v5423
        %5440 = vmatprep.subr.mxu0 0.0
        %5441 = vmatpush1.msra.mxu0 %v5424
        %5442 = vmatprep.subr.mxu0 0.0
        %5443 = vmatpush1.msra.mxu0 %v5425
        %5444 = vmatprep.subr.mxu0 0.0
        %5445 = vmatpush1.msra.mxu0 %v5426
        %5446 = vmatprep.subr.mxu0 0.0
        %5447 = vmatpush1.msra.mxu0 0.0
        %5448 = vmatprep.subr.mxu0 0.0
        %5449 = vmatpush1.msra.mxu0 0.0
        %5450 = vmatprep.subr.mxu0 0.0
        %5451 = vmatpush1.msra.mxu0 0.0
        %5452 = vmatprep.subr.mxu0 0.0
        %5453 = vmatpush1.msra.mxu0 0.0
        %5454 = vmatprep.subr.mxu0 0.0
        %5455 = vmatpush1.msra.mxu0 0.0
        %5456 = vmatprep.subr.mxu0 0.0
        %5457 = vmatpush1.msra.mxu0 0.0
        %5458 = vmatprep.subr.mxu0 0.0
        %5459 = vmatpush1.msra.mxu0 0.0
        %5460 = vmatprep.subr.mxu0 0.0
        %5461 = vmatpush1.msra.mxu0 0.0
        %5462 = vmatprep.subr.mxu0 0.0
        %5463 = vmatpush1.msra.mxu0 0.0
        %5464 = vmatprep.subr.mxu0 0.0
        %5465 = vmatpush1.msra.mxu0 0.0
        %5466 = vmatprep.subr.mxu0 0.0
        %5467 = vmatpush1.msra.mxu0 0.0
        %5468 = vmatprep.subr.mxu0 0.0
        %5469 = vmatpush1.msra.mxu0 0.0
        %5470 = vmatprep.subr.mxu0 0.0
        %5471 = vmatpush1.msra.mxu0 0.0
        %5472 = vmatprep.subr.mxu0 0.0
        %5473 = vmatpush1.msra.mxu0 0.0
        %5474 = vmatprep.subr.mxu0 0.0
        %5475 = vmatpush1.msra.mxu0 0.0
        %5476 = vmatprep.subr.mxu0 0.0
        %5477 = vmatpush1.msra.mxu0 0.0
        %5478 = vmatprep.subr.mxu0 0.0
        %5479 = vmatpush1.msra.mxu0 0.0
        %5480 = vmatprep.subr.mxu0 0.0
        %5481 = vmatpush1.msra.mxu0 0.0
        %5482 = vmatprep.subr.mxu0 0.0
        %5483 = vmatpush1.msra.mxu0 0.0
        %5484 = vmatprep.subr.mxu0 0.0
        %5485 = vmatpush1.msra.mxu0 0.0
        %5486 = vmatprep.subr.mxu0 0.0
        %5487 = vmatpush1.msra.mxu0 0.0
        %5488 = vmatprep.subr.mxu0 0.0
        %5489 = vmatpush1.msra.mxu0 0.0
        %5490 = vmatprep.subr.mxu0 0.0
        %5491 = vmatpush1.msra.mxu0 0.0
        %5492 = vmatprep.subr.mxu0 0.0
        %5493 = vmatpush1.msra.mxu0 0.0
        %5494 = vmatprep.mubr.f32.mxu0 0.0
        %5495 = vmatmul.mubr.f32.gmra.mrb[0].mxu0 %v5428
        %v5496 = vpop.f32.mrb[0].mxu0
        %v5497 = vadd.f32 0.0, %v5496
        %v5498 = vpop.f32.mrb[0].mxu0
        %5499 = vdwg.mxu0
        %v5500 = vadd.f32 %v5417, %v5497
        %s5501 = scalar_lea.vmem %s6, 384
        %v5502 = vld [vmem:[%s5501] sm:$0xff]
        %v5503 = vld [vmem:[%s5501 + $0x8] sm:$0xff]
        %v5504 = vld [vmem:[%s5501 + $0x10] sm:$0xff]
        %v5505 = vld [vmem:[%s5501 + $0x18] sm:$0xff]
        %v5506 = vld [vmem:[%s5501 + $0x20] sm:$0xff]
        %v5507 = vld [vmem:[%s5501 + $0x28] sm:$0xff]
        %v5508 = vld [vmem:[%s5501 + $0x30] sm:$0xff]
        %v5509 = vld [vmem:[%s5501 + $0x38] sm:$0xff]
        %v5510 = vrot.slane %v5004, 6
        %v5511 = vsel %vm2249, %v5510, 0
        %5513 = vmatprep.subr.mxu0 0.0
        %5514 = vmatpush1.msra.mxu0 %v5502
        %5515 = vmatprep.subr.mxu0 0.0
        %5516 = vmatpush1.msra.mxu0 %v5503
        %5517 = vmatprep.subr.mxu0 0.0
        %5518 = vmatpush1.msra.mxu0 %v5504
        %5519 = vmatprep.subr.mxu0 0.0
        %5520 = vmatpush1.msra.mxu0 %v5505
        %5521 = vmatprep.subr.mxu0 0.0
        %5522 = vmatpush1.msra.mxu0 %v5506
        %5523 = vmatprep.subr.mxu0 0.0
        %5524 = vmatpush1.msra.mxu0 %v5507
        %5525 = vmatprep.subr.mxu0 0.0
        %5526 = vmatpush1.msra.mxu0 %v5508
        %5527 = vmatprep.subr.mxu0 0.0
        %5528 = vmatpush1.msra.mxu0 %v5509
        %5529 = vmatprep.subr.mxu0 0.0
        %5530 = vmatpush1.msra.mxu0 0.0
        %5531 = vmatprep.subr.mxu0 0.0
        %5532 = vmatpush1.msra.mxu0 0.0
        %5533 = vmatprep.subr.mxu0 0.0
        %5534 = vmatpush1.msra.mxu0 0.0
        %5535 = vmatprep.subr.mxu0 0.0
        %5536 = vmatpush1.msra.mxu0 0.0
        %5537 = vmatprep.subr.mxu0 0.0
        %5538 = vmatpush1.msra.mxu0 0.0
        %5539 = vmatprep.subr.mxu0 0.0
        %5540 = vmatpush1.msra.mxu0 0.0
        %5541 = vmatprep.subr.mxu0 0.0
        %5542 = vmatpush1.msra.mxu0 0.0
        %5543 = vmatprep.subr.mxu0 0.0
        %5544 = vmatpush1.msra.mxu0 0.0
        %5545 = vmatprep.subr.mxu0 0.0
        %5546 = vmatpush1.msra.mxu0 0.0
        %5547 = vmatprep.subr.mxu0 0.0
        %5548 = vmatpush1.msra.mxu0 0.0
        %5549 = vmatprep.subr.mxu0 0.0
        %5550 = vmatpush1.msra.mxu0 0.0
        %5551 = vmatprep.subr.mxu0 0.0
        %5552 = vmatpush1.msra.mxu0 0.0
        %5553 = vmatprep.subr.mxu0 0.0
        %5554 = vmatpush1.msra.mxu0 0.0
        %5555 = vmatprep.subr.mxu0 0.0
        %5556 = vmatpush1.msra.mxu0 0.0
        %5557 = vmatprep.subr.mxu0 0.0
        %5558 = vmatpush1.msra.mxu0 0.0
        %5559 = vmatprep.subr.mxu0 0.0
        %5560 = vmatpush1.msra.mxu0 0.0
        %5561 = vmatprep.subr.mxu0 0.0
        %5562 = vmatpush1.msra.mxu0 0.0
        %5563 = vmatprep.subr.mxu0 0.0
        %5564 = vmatpush1.msra.mxu0 0.0
        %5565 = vmatprep.subr.mxu0 0.0
        %5566 = vmatpush1.msra.mxu0 0.0
        %5567 = vmatprep.subr.mxu0 0.0
        %5568 = vmatpush1.msra.mxu0 0.0
        %5569 = vmatprep.subr.mxu0 0.0
        %5570 = vmatpush1.msra.mxu0 0.0
        %5571 = vmatprep.subr.mxu0 0.0
        %5572 = vmatpush1.msra.mxu0 0.0
        %5573 = vmatprep.subr.mxu0 0.0
        %5574 = vmatpush1.msra.mxu0 0.0
        %5575 = vmatprep.subr.mxu0 0.0
        %5576 = vmatpush1.msra.mxu0 0.0
        %5577 = vmatprep.mubr.f32.mxu0 0.0
        %5578 = vmatmul.mubr.f32.gmra.mrb[0].mxu0 %v5511
        %v5579 = vpop.f32.mrb[0].mxu0
        %v5580 = vadd.f32 0.0, %v5579
        %v5581 = vpop.f32.mrb[0].mxu0
        %5582 = vdwg.mxu0
        %v5583 = vadd.f32 %v5500, %v5580
        %s5584 = scalar_lea.vmem %s6, 448
        %v5585 = vld [vmem:[%s5584] sm:$0xff]
        %v5586 = vld [vmem:[%s5584 + $0x8] sm:$0xff]
        %v5587 = vld [vmem:[%s5584 + $0x10] sm:$0xff]
        %v5588 = vld [vmem:[%s5584 + $0x18] sm:$0xff]
        %v5589 = vld [vmem:[%s5584 + $0x20] sm:$0xff]
        %v5590 = vld [vmem:[%s5584 + $0x28] sm:$0xff]
        %v5591 = vld [vmem:[%s5584 + $0x30] sm:$0xff]
        %v5592 = vld [vmem:[%s5584 + $0x38] sm:$0xff]
        %v5593 = vrot.slane %v5004, 7
        %v5594 = vsel %vm2249, %v5593, 0
        %5596 = vmatprep.subr.mxu0 0.0
        %5597 = vmatpush1.msra.mxu0 %v5585
        %5598 = vmatprep.subr.mxu0 0.0
        %5599 = vmatpush1.msra.mxu0 %v5586
        %5600 = vmatprep.subr.mxu0 0.0
        %5601 = vmatpush1.msra.mxu0 %v5587
        %5602 = vmatprep.subr.mxu0 0.0
        %5603 = vmatpush1.msra.mxu0 %v5588
        %5604 = vmatprep.subr.mxu0 0.0
        %5605 = vmatpush1.msra.mxu0 %v5589
        %5606 = vmatprep.subr.mxu0 0.0
        %5607 = vmatpush1.msra.mxu0 %v5590
        %5608 = vmatprep.subr.mxu0 0.0
        %5609 = vmatpush1.msra.mxu0 %v5591
        %5610 = vmatprep.subr.mxu0 0.0
        %5611 = vmatpush1.msra.mxu0 %v5592
        %5612 = vmatprep.subr.mxu0 0.0
        %5613 = vmatpush1.msra.mxu0 0.0
        %5614 = vmatprep.subr.mxu0 0.0
        %5615 = vmatpush1.msra.mxu0 0.0
        %5616 = vmatprep.subr.mxu0 0.0
        %5617 = vmatpush1.msra.mxu0 0.0
        %5618 = vmatprep.subr.mxu0 0.0
        %5619 = vmatpush1.msra.mxu0 0.0
        %5620 = vmatprep.subr.mxu0 0.0
        %5621 = vmatpush1.msra.mxu0 0.0
        %5622 = vmatprep.subr.mxu0 0.0
        %5623 = vmatpush1.msra.mxu0 0.0
        %5624 = vmatprep.subr.mxu0 0.0
        %5625 = vmatpush1.msra.mxu0 0.0
        %5626 = vmatprep.subr.mxu0 0.0
        %5627 = vmatpush1.msra.mxu0 0.0
        %5628 = vmatprep.subr.mxu0 0.0
        %5629 = vmatpush1.msra.mxu0 0.0
        %5630 = vmatprep.subr.mxu0 0.0
        %5631 = vmatpush1.msra.mxu0 0.0
        %5632 = vmatprep.subr.mxu0 0.0
        %5633 = vmatpush1.msra.mxu0 0.0
        %5634 = vmatprep.subr.mxu0 0.0
        %5635 = vmatpush1.msra.mxu0 0.0
        %5636 = vmatprep.subr.mxu0 0.0
        %5637 = vmatpush1.msra.mxu0 0.0
        %5638 = vmatprep.subr.mxu0 0.0
        %5639 = vmatpush1.msra.mxu0 0.0
        %5640 = vmatprep.subr.mxu0 0.0
        %5641 = vmatpush1.msra.mxu0 0.0
        %5642 = vmatprep.subr.mxu0 0.0
        %5643 = vmatpush1.msra.mxu0 0.0
        %5644 = vmatprep.subr.mxu0 0.0
        %5645 = vmatpush1.msra.mxu0 0.0
        %5646 = vmatprep.subr.mxu0 0.0
        %5647 = vmatpush1.msra.mxu0 0.0
        %5648 = vmatprep.subr.mxu0 0.0
        %5649 = vmatpush1.msra.mxu0 0.0
        %5650 = vmatprep.subr.mxu0 0.0
        %5651 = vmatpush1.msra.mxu0 0.0
        %5652 = vmatprep.subr.mxu0 0.0
        %5653 = vmatpush1.msra.mxu0 0.0
        %5654 = vmatprep.subr.mxu0 0.0
        %5655 = vmatpush1.msra.mxu0 0.0
        %5656 = vmatprep.subr.mxu0 0.0
        %5657 = vmatpush1.msra.mxu0 0.0
        %5658 = vmatprep.subr.mxu0 0.0
        %5659 = vmatpush1.msra.mxu0 0.0
        %5660 = vmatprep.mubr.f32.mxu0 0.0
        %5661 = vmatmul.mubr.f32.gmra.mrb[0].mxu0 %v5594
        %v5662 = vpop.f32.mrb[0].mxu0
        %v5663 = vadd.f32 0.0, %v5662
        %v5664 = vpop.f32.mrb[0].mxu0
        %5665 = vdwg.mxu0
        %v5666 = vadd.f32 %v5583, %v5663
        %s5667 = scalar_lea.vmem %s6, 512
        %v5668 = vld [vmem:[%s5667] sm:$0xff]
        %v5669 = vld [vmem:[%s5667 + $0x8] sm:$0xff]
        %v5670 = vld [vmem:[%s5667 + $0x10] sm:$0xff]
        %v5671 = vld [vmem:[%s5667 + $0x18] sm:$0xff]
        %v5672 = vld [vmem:[%s5667 + $0x20] sm:$0xff]
        %v5673 = vld [vmem:[%s5667 + $0x28] sm:$0xff]
        %v5674 = vld [vmem:[%s5667 + $0x30] sm:$0xff]
        %v5675 = vld [vmem:[%s5667 + $0x38] sm:$0xff]
        %v5677 = vsel %vm2249, %v5005, 0
        %5679 = vmatprep.subr.mxu0 0.0
        %5680 = vmatpush1.msra.mxu0 %v5668
        %5681 = vmatprep.subr.mxu0 0.0
        %5682 = vmatpush1.msra.mxu0 %v5669
        %5683 = vmatprep.subr.mxu0 0.0
        %5684 = vmatpush1.msra.mxu0 %v5670
        %5685 = vmatprep.subr.mxu0 0.0
        %5686 = vmatpush1.msra.mxu0 %v5671
        %5687 = vmatprep.subr.mxu0 0.0
        %5688 = vmatpush1.msra.mxu0 %v5672
        %5689 = vmatprep.subr.mxu0 0.0
        %5690 = vmatpush1.msra.mxu0 %v5673
        %5691 = vmatprep.subr.mxu0 0.0
        %5692 = vmatpush1.msra.mxu0 %v5674
        %5693 = vmatprep.subr.mxu0 0.0
        %5694 = vmatpush1.msra.mxu0 %v5675
        %5695 = vmatprep.subr.mxu0 0.0
        %5696 = vmatpush1.msra.mxu0 0.0
        %5697 = vmatprep.subr.mxu0 0.0
        %5698 = vmatpush1.msra.mxu0 0.0
        %5699 = vmatprep.subr.mxu0 0.0
        %5700 = vmatpush1.msra.mxu0 0.0
        %5701 = vmatprep.subr.mxu0 0.0
        %5702 = vmatpush1.msra.mxu0 0.0
        %5703 = vmatprep.subr.mxu0 0.0
        %5704 = vmatpush1.msra.mxu0 0.0
        %5705 = vmatprep.subr.mxu0 0.0
        %5706 = vmatpush1.msra.mxu0 0.0
        %5707 = vmatprep.subr.mxu0 0.0
        %5708 = vmatpush1.msra.mxu0 0.0
        %5709 = vmatprep.subr.mxu0 0.0
        %5710 = vmatpush1.msra.mxu0 0.0
        %5711 = vmatprep.subr.mxu0 0.0
        %5712 = vmatpush1.msra.mxu0 0.0
        %5713 = vmatprep.subr.mxu0 0.0
        %5714 = vmatpush1.msra.mxu0 0.0
        %5715 = vmatprep.subr.mxu0 0.0
        %5716 = vmatpush1.msra.mxu0 0.0
        %5717 = vmatprep.subr.mxu0 0.0
        %5718 = vmatpush1.msra.mxu0 0.0
        %5719 = vmatprep.subr.mxu0 0.0
        %5720 = vmatpush1.msra.mxu0 0.0
        %5721 = vmatprep.subr.mxu0 0.0
        %5722 = vmatpush1.msra.mxu0 0.0
        %5723 = vmatprep.subr.mxu0 0.0
        %5724 = vmatpush1.msra.mxu0 0.0
        %5725 = vmatprep.subr.mxu0 0.0
        %5726 = vmatpush1.msra.mxu0 0.0
        %5727 = vmatprep.subr.mxu0 0.0
        %5728 = vmatpush1.msra.mxu0 0.0
        %5729 = vmatprep.subr.mxu0 0.0
        %5730 = vmatpush1.msra.mxu0 0.0
        %5731 = vmatprep.subr.mxu0 0.0
        %5732 = vmatpush1.msra.mxu0 0.0
        %5733 = vmatprep.subr.mxu0 0.0
        %5734 = vmatpush1.msra.mxu0 0.0
        %5735 = vmatprep.subr.mxu0 0.0
        %5736 = vmatpush1.msra.mxu0 0.0
        %5737 = vmatprep.subr.mxu0 0.0
        %5738 = vmatpush1.msra.mxu0 0.0
        %5739 = vmatprep.subr.mxu0 0.0
        %5740 = vmatpush1.msra.mxu0 0.0
        %5741 = vmatprep.subr.mxu0 0.0
        %5742 = vmatpush1.msra.mxu0 0.0
        %5743 = vmatprep.mubr.f32.mxu0 0.0
        %5744 = vmatmul.mubr.f32.gmra.mrb[0].mxu0 %v5677
        %v5745 = vpop.f32.mrb[0].mxu0
        %v5746 = vadd.f32 0.0, %v5745
        %v5747 = vpop.f32.mrb[0].mxu0
        %5748 = vdwg.mxu0
        %v5749 = vadd.f32 %v5666, %v5746
        %v5750 = vld [vmem:[%s7] sm:$0x1]
        %v5751 = vadd.f32 %v5749, %v5750
        %v5752 = vmax.f32 %v5751, 0.0
        %vm5753 = vcmask 516096
        %5754 = vst.msk [vmem:[%s297] sm:$0x1] %vm5753, %v5752
        %s5755 = sand.u32 %s203, 1
        %s5756 = scalar_lea.sflag [#allocation3], %s5755
        %s5757 = sand.u32 %s203, 1
        %s5758 = scalar_lea.vmem [#allocation2], %s5757
        // Predicated region
        $region53: #{dqn_base_forward.3} parent=51 // pred_check
          %p5759 = pneg %p213
        $region54: #{dqn_base_forward.3} parent=51 // pred_check_branch
          %5761 = sbr.rel (%p5759) target = $region56
        $region55: #{dqn_base_forward.3} parent=51 // pred_region
          %s5763 = ssub.s32 16, 16
          %5764 = vsyncadd %s5756, %s5763
          %s5765 = smul.addr %s22, 16
          %s5766 = scalar_lea.hbm %s8, %s5765
          %s5768 = sshll.u32 %s5758, 4
          %s5769 = int_to_ptr.vmem [resolvable:$true] %s5768
          %5771 = dma.vmem_to_hbm [thread:$0]  %s5769, 16, %s5766, %s5756
        $region56: #{dqn_base_forward.3} parent=51 // pred_fallthru
          _
      $region52: #{dqn_base_forward.3} parent=5 // pred_fallthru
        _
      %p5772 = scmp.le.s32.totalorder 2, %s17
      // Predicated region
      $region57: #{dqn_base_forward.3} parent=5 // pred_check
        %p5773 = pneg %p5772
      $region58: #{dqn_base_forward.3} parent=5 // pred_check_branch
        %5775 = sbr.rel (%p5773) target = $region60
      $region59: #{dqn_base_forward.3} parent=5 // pred_region
        %s5776 = ssub.s32 %s17, 2
        // Predicated region
        $region61: #{dqn_base_forward.3} parent=59 // pred_check
          %p5777 = pneg %p219
        $region62: #{dqn_base_forward.3} parent=59 // pred_check_branch
          %5779 = sbr.rel (%p5777) target = $region64
        $region63: #{dqn_base_forward.3} parent=59 // pred_region
          %s5780 = sand.u32 %s204, 1
          %s5781 = scalar_lea.sflag [#allocation3], %s5780
          %s5782 = sand.u32 %s204, 1
          %s5783 = scalar_lea.vmem [#allocation2], %s5782
          %5784 = dma.done %s5781, 16
        $region64: #{dqn_base_forward.3} parent=59 // pred_fallthru
          _
      $region60: #{dqn_base_forward.3} parent=5 // pred_fallthru
        _
    $region6: #{dqn_base_forward.3} parent=1 // loop_footer
      %s21 = sadd.s32 1, %s17
    $region7: #{dqn_base_forward.3} parent=1 // loop_footer_branch
      %16 = sbr.rel target = $region3
    $region8: #{dqn_base_forward.3} parent=1 // loop_exit
      _
    %5785 = vsyncpa [#allocation3], 1
    %s5786 = scalar_lea.sflag [#allocation3], 1
    %5787 = vsyncpa %s5786, 1

</llo_original>
